<compile_context>
chip_gen: v7x
topology: tpu7x:2x2x1
jax: 0.10.0
libtpu: 0.0.40
codegen_flags: <defaults>
</compile_context>

<pallas_src>
import jax
import jax.numpy as jnp
from jax.experimental import pallas as pl
from jax.experimental.pallas import tpu as pltpu

BN_EPS = 1e-5
LANE = 128


def _round_up(n, m=LANE):
    return ((n + m - 1) // m) * m


# ----------------------------------------------------------------------------
# Kernel
# ----------------------------------------------------------------------------
def _make_vae_kernel(n_enc, n_dec, batch, d, dl, matmul_dtype):
    inv_n = 1.0 / float(batch)

    def mm(h, w):
        # MXU boundary: cast LHS to the matmul dtype (weights are pre-cast in
        # the wrapper); accumulate in f32.
        return jnp.dot(h.astype(matmul_dtype), w,
                       preferred_element_type=jnp.float32)

    def _linear_bn_relu(h, w, g, beta):
        # Linear (bias dropped: exactly cancelled by train-mode BatchNorm)
        # -> BatchNorm1d (training mode, biased variance) -> ReLU.
        y = mm(h, w)
        # One-pass batch stats.  NOTE: E[y^2]-mean^2 can cancel when
        # |mean| >> std; the clamp hides it.  Switch to a shifted two-pass
        # form if activation magnitudes grow.
        s = jnp.sum(y, axis=0, keepdims=True)
        ss = jnp.sum(y * y, axis=0, keepdims=True)
        mean = s * inv_n
        var = jnp.maximum(ss * inv_n - mean * mean, 0.0)
        # Fold the BN affine at [1,D]; only 2 broadcast ops on [N,D].
        scale = g * jax.lax.rsqrt(var + BN_EPS)
        shift = beta - mean * scale
        return jnp.maximum(y * scale + shift, 0.0)

    def kernel(x_ref, eps_ref, wstack_ref, whead_ref, vec_ref,
               recons_ref, head_ref):
        def vec_row(r, width):
            # static, lane-aligned slice -> [1, width] row of the packed table
            return vec_ref[r:r + 1, :width]

        # ----- encoder -----
        h = x_ref[...]
        for i in range(n_enc):
            h = _linear_bn_relu(h, wstack_ref[i],
                                vec_row(2 * i, d), vec_row(2 * i + 1, d))

        # ----- fused latent heads: [mu | logvar] in one MXU matmul -----
        head = mm(h, whead_ref[...]) + vec_row(2 * n_enc, 2 * dl)
        head_ref[...] = head                    # lane-dense [N, 2*dl] store
        mu = head[:, :dl]
        logvar = head[:, dl:]

        # ----- reparameterize: z = eps * exp(0.5*logvar) + mu  (f32) -----
        z = eps_ref[...] * jnp.exp(0.5 * logvar) + mu
        if dl < d:                               # pad latent back to width d
            z = jnp.concatenate(
                [z, jnp.zeros((z.shape[0], d - dl), jnp.float32)], axis=1)

        # ----- decoder -----
        h = z
        base = 2 * n_enc + 1
        for i in range(n_dec):
            h = _linear_bn_relu(h, wstack_ref[n_enc + i],
                                vec_row(base + 2 * i, d),
                                vec_row(base + 2 * i + 1, d))

        # ----- final linear (bias kept: no BN follows) -----
        recons_ref[...] = (mm(h, wstack_ref[n_enc + n_dec])
                           + vec_row(base + 2 * n_dec, d))

    return kernel


# ----------------------------------------------------------------------------
# Parameters (deterministic synthetic init; Linear weights stored as [in, out])
# ----------------------------------------------------------------------------
def init_vae_params(key, input_features, latent_dim, hidden_dims):
    params = {}

    def linear(key, fin, fout):
        k1, k2 = jax.random.split(key)
        scale = 1.0 / jnp.sqrt(jnp.float32(fin))
        w = jax.random.uniform(k1, (fin, fout), jnp.float32, -scale, scale)
        b = jax.random.uniform(k2, (1, fout), jnp.float32, -scale, scale)
        return w, b

    def bn(key, fout):
        k1, k2 = jax.random.split(key)
        g = 1.0 + 0.1 * jax.random.normal(k1, (1, fout), jnp.float32)
        be = 0.1 * jax.random.normal(k2, (1, fout), jnp.float32)
        return g, be

    keys = jax.random.split(key, 64)
    ki = 0

    enc = []
    fin = input_features
    for h in hidden_dims:
        w, b = linear(keys[ki], fin, h); ki += 1
        g, be = bn(keys[ki], h); ki += 1
        enc.append((w, b, g, be))
        fin = h
    params["encoder"] = enc

    params["fc_mu"] = linear(keys[ki], hidden_dims[-1], latent_dim); ki += 1
    params["fc_var"] = linear(keys[ki], hidden_dims[-1], latent_dim); ki += 1

    dec_dims = list(reversed(hidden_dims))
    dec = []
    fin = latent_dim
    for h in dec_dims:
        w, b = linear(keys[ki], fin, h); ki += 1
        g, be = bn(keys[ki], h); ki += 1
        dec.append((w, b, g, be))
        fin = h
    params["decoder"] = dec

    params["final"] = linear(keys[ki], dec_dims[-1], input_features); ki += 1
    return params


# ----------------------------------------------------------------------------
# Wrapper: pack/pad operands, call the kernel, unpack outputs
# ----------------------------------------------------------------------------
def vae_forward(x, eps, params, matmul_dtype=jnp.bfloat16):
    """Returns [recons, input, mu, log_var] like VanillaVAE.forward."""
    n_enc = len(params["encoder"])
    n_dec = len(params["decoder"])
    N, F = x.shape
    L = params["fc_mu"][0].shape[1]
    hidden = [w.shape[1] for (w, _, _, _) in params["encoder"]]

    # Common lane-aligned width (multiple of 128) for all feature dims,
    # plus a trimmed lane-aligned width for the latent heads.
    D = max(_round_up(d) for d in [F, L] + hidden)
    Dl = _round_up(L)
    VW = max(D, 2 * Dl)          # packed per-feature table width

    def padf(a, rows, cols, dtype=jnp.float32):
        a = a.astype(jnp.float32)
        a = jnp.pad(a, ((0, rows - a.shape[0]), (0, cols - a.shape[1])))
        return a.astype(dtype)

    # --- stacked square weights (matmul dtype): encoder..., decoder..., final
    ws = [padf(w, D, D, matmul_dtype) for (w, _, _, _) in params["encoder"]]
    ws += [padf(w, D, D, matmul_dtype) for (w, _, _, _) in params["decoder"]]
    ws.append(padf(params["final"][0], D, D, matmul_dtype))
    w_stack = jnp.stack(ws, axis=0)                       # [n_layers, D, D]

    # --- fused latent-head weight [D, 2*Dl] = [W_mu | W_var] ---
    w_head = jnp.concatenate([padf(params["fc_mu"][0], D, Dl, matmul_dtype),
                              padf(params["fc_var"][0], D, Dl, matmul_dtype)],
                             axis=1)

    # --- packed per-feature f32 vectors [R, VW] -------------------------------
    # Linear biases feeding BatchNorm are dropped (BN cancels them exactly);
    # only gamma/beta per BN layer, the fused head bias and the final bias.
    rows = []
    for (_, _, g, be) in params["encoder"]:
        rows += [padf(g, 1, VW), padf(be, 1, VW)]
    head_b = jnp.concatenate([padf(params["fc_mu"][1], 1, Dl),
                              padf(params["fc_var"][1], 1, Dl)], axis=1)
    rows.append(padf(head_b, 1, VW))
    for (_, _, g, be) in params["decoder"]:
        rows += [padf(g, 1, VW), padf(be, 1, VW)]
    rows.append(padf(params["final"][1], 1, VW))
    vecs = jnp.concatenate(rows, axis=0)                  # [R, VW]

    x_pad = padf(x, N, D)
    eps_pad = padf(eps, N, Dl)

    kernel = _make_vae_kernel(n_enc, n_dec, N, D, Dl, matmul_dtype)

    # Advisory cost estimate for XLA scheduling.
    n_mat = n_enc + n_dec + 1
    flops = int(2 * N * (n_mat * D * D + D * 2 * Dl))
    transcendentals = int((n_enc + n_dec) * D + N * Dl)   # rsqrt per BN + exp
    operand_bytes = int(sum(a.size * a.dtype.itemsize
                            for a in (x_pad, eps_pad, w_stack, w_head, vecs))
                        + 4 * N * D + 4 * N * 2 * Dl)

    # Tight VMEM budget: operands/outputs + a handful of [N,D] f32 activation
    # temporaries, with 2x headroom.  Well under v7x's 64 MiB VMEM.
    footprint = operand_bytes + 8 * N * D * 4
    vmem_limit = int(min(48 * 1024 * 1024,
                         max(8 * 1024 * 1024, 2 * footprint)))

    vmem = pl.BlockSpec(memory_space=pltpu.MemorySpace.VMEM)
    recons_pad, head = pl.pallas_call(
        kernel,
        out_shape=(jax.ShapeDtypeStruct((N, D), jnp.float32),
                   jax.ShapeDtypeStruct((N, 2 * Dl), jnp.float32)),
        in_specs=[vmem] * 5,
        out_specs=(vmem, vmem),
        compiler_params=pltpu.CompilerParams(vmem_limit_bytes=vmem_limit),
        cost_estimate=pl.CostEstimate(flops=flops,
                                      transcendentals=transcendentals,
                                      bytes_accessed=operand_bytes),
    )(x_pad, eps_pad, w_stack, w_head, vecs)

    recons = recons_pad[:, :F]
    mu = head[:, :L]
    logvar = head[:, Dl:Dl + L]
    return [recons, x, mu, logvar]


# ----------------------------------------------------------------------------
# Pure-JAX reference (mirrors the PyTorch module, training-mode BN).
# `matmul_dtype` lets us check the bf16 kernel against a reference with the
# same MXU-boundary casting, and the f32-mode kernel against full f32.
# ----------------------------------------------------------------------------
def _reference_forward(x, eps, params, matmul_dtype=jnp.float32):
    def mm(a, b):
        return jnp.dot(a.astype(matmul_dtype), b.astype(matmul_dtype),
                       preferred_element_type=jnp.float32)

    def lbr(h, w, b, g, be):
        y = mm(h, w) + b
        m = jnp.mean(y, axis=0, keepdims=True)
        v = jnp.mean((y - m) ** 2, axis=0, keepdims=True)
        return jnp.maximum((y - m) / jnp.sqrt(v + BN_EPS) * g + be, 0.0)

    h = x
    for (w, b, g, be) in params["encoder"]:
        h = lbr(h, w, b, g, be)
    mu = mm(h, params["fc_mu"][0]) + params["fc_mu"][1]
    logvar = mm(h, params["fc_var"][0]) + params["fc_var"][1]
    z = eps * jnp.exp(0.5 * logvar) + mu
    h = z
    for (w, b, g, be) in params["decoder"]:
        h = lbr(h, w, b, g, be)
    recons = mm(h, params["final"][0]) + params["final"][1]
    return recons, mu, logvar


if __name__ == "__main__":
    # Batch sized so launch overhead / weight DMA are amortized and the MXU
    # streams full 128-row LHS tiles (BatchNorm needs whole-batch stats, so
    # the batch stays resident in one VMEM block).  Feature dims stay small,
    # matching the module's [N x F] vector usage.
    N = 1024
    input_features = 32
    latent_dim = 16
    hidden_dims = [64, 48, 32]

    key = jax.random.PRNGKey(0)
    k_param, k_x, k_eps = jax.random.split(key, 3)

    params = init_vae_params(k_param, input_features, latent_dim, hidden_dims)
    x = jax.random.normal(k_x, (N, input_features), jnp.float32)
    # eps plays the role of torch.randn_like(std) inside reparameterize().
    eps = jax.random.normal(k_eps, (N, latent_dim), jnp.float32)

    # Default (performance) path: bf16 MXU operands, f32 accumulation + BN.
    recons, x_out, mu, logvar = vae_forward(x, eps, params)
    jax.block_until_ready((recons, x_out, mu, logvar))
    assert recons.shape == (N, input_features)
    assert mu.shape == (N, latent_dim) and logvar.shape == (N, latent_dim)

    # (1) Structural check: f32-mode kernel vs. full-f32 reference (tight).
    r32, _, m32, lv32 = vae_forward(x, eps, params, matmul_dtype=jnp.float32)
    r_ref, mu_ref, lv_ref = _reference_forward(x, eps, params, jnp.float32)
    assert jnp.allclose(r32, r_ref, atol=1e-3, rtol=1e-3)
    assert jnp.allclose(m32, mu_ref, atol=1e-3, rtol=1e-3)
    assert jnp.allclose(lv32, lv_ref, atol=1e-3, rtol=1e-3)

    # (2) bf16 path vs. a reference using the same MXU-boundary casting.
    r_bf, mu_bf, lv_bf = _reference_forward(x, eps, params, jnp.bfloat16)
    assert jnp.allclose(recons, r_bf, atol=2e-2, rtol=2e-2)
    assert jnp.allclose(mu, mu_bf, atol=2e-2, rtol=2e-2)
    assert jnp.allclose(logvar, lv_bf, atol=2e-2, rtol=2e-2)

    print("KERNEL_OK")
</pallas_src>

<mosaic_0001>
module attributes {stable_mosaic.version = 11 : i64} {
  func.func @kernel(%arg0: memref<1024x128xf32, #tpu.memory_space<vmem>>, %arg1: memref<1024x128xf32, #tpu.memory_space<vmem>>, %arg2: memref<7x128x128xbf16, #tpu.memory_space<vmem>>, %arg3: memref<128x256xbf16, #tpu.memory_space<vmem>>, %arg4: memref<14x256xf32, #tpu.memory_space<vmem>>, %arg5: memref<1024x128xf32, #tpu.memory_space<vmem>>, %arg6: memref<1024x256xf32, #tpu.memory_space<vmem>>) attributes {dimension_semantics = [], scalar_prefetch = 0 : i64, scratch_operands = 0 : i64, tpu.core_type = #tpu.core_type<tc>} {
    %c0 = arith.constant 0 : index
    %c0_0 = arith.constant 0 : index
    %0 = vector.load %arg0[%c0, %c0_0] : memref<1024x128xf32, #tpu.memory_space<vmem>>, vector<1024x128xf32>
    %c0_1 = arith.constant 0 : index
    %c0_2 = arith.constant 0 : index
    %c0_3 = arith.constant 0 : index
    %1 = vector.load %arg2[%c0_1, %c0_2, %c0_3] : memref<7x128x128xbf16, #tpu.memory_space<vmem>>, vector<1x128x128xbf16>
    %2 = vector.shape_cast %1 : vector<1x128x128xbf16> to vector<128x128xbf16>
    %c0_4 = arith.constant 0 : index
    %c0_5 = arith.constant 0 : index
    %3 = vector.load %arg4[%c0_4, %c0_5] : memref<14x256xf32, #tpu.memory_space<vmem>>, vector<1x128xf32>
    %c1 = arith.constant 1 : index
    %c0_6 = arith.constant 0 : index
    %4 = vector.load %arg4[%c1, %c0_6] : memref<14x256xf32, #tpu.memory_space<vmem>>, vector<1x128xf32>
    %5 = arith.truncf %0 : vector<1024x128xf32> to vector<1024x128xbf16>
    %cst = arith.constant dense<0.000000e+00> : vector<1024x128xf32>
    %6 = tpu.matmul %5, %2, %cst {dimension_numbers = #tpu.dot_dimension_numbers<[1], [0], [0], [1], [0, 0, 1, 1], [], []>} : vector<1024x128xbf16>, vector<128x128xbf16>, vector<1024x128xf32> -> vector<1024x128xf32>
    %cst_7 = arith.constant dense<0.000000e+00> : vector<128xf32>
    %7 = vector.multi_reduction <add>, %6, %cst_7 [0] : vector<1024x128xf32> to vector<128xf32>
    %8 = vector.shape_cast %7 : vector<128xf32> to vector<1x128xf32>
    %9 = arith.mulf %6, %6 : vector<1024x128xf32>
    %cst_8 = arith.constant dense<0.000000e+00> : vector<128xf32>
    %10 = vector.multi_reduction <add>, %9, %cst_8 [0] : vector<1024x128xf32> to vector<128xf32>
    %11 = vector.shape_cast %10 : vector<128xf32> to vector<1x128xf32>
    %cst_9 = arith.constant 9.765625E-4 : f32
    %12 = vector.broadcast %cst_9 : f32 to vector<1x128xf32>
    %13 = arith.mulf %8, %12 : vector<1x128xf32>
    %cst_10 = arith.constant 9.765625E-4 : f32
    %14 = vector.broadcast %cst_10 : f32 to vector<1x128xf32>
    %15 = arith.mulf %11, %14 : vector<1x128xf32>
    %16 = arith.mulf %13, %13 : vector<1x128xf32>
    %17 = arith.subf %15, %16 : vector<1x128xf32>
    %cst_11 = arith.constant 0.000000e+00 : f32
    %18 = vector.broadcast %cst_11 : f32 to vector<1x128xf32>
    %19 = arith.maximumf %17, %18 : vector<1x128xf32>
    %cst_12 = arith.constant 9.99999974E-6 : f32
    %20 = vector.broadcast %cst_12 : f32 to vector<1x128xf32>
    %21 = arith.addf %19, %20 : vector<1x128xf32>
    %22 = math.rsqrt %21 : vector<1x128xf32>
    %23 = arith.mulf %3, %22 : vector<1x128xf32>
    %24 = arith.mulf %13, %23 : vector<1x128xf32>
    %25 = arith.subf %4, %24 : vector<1x128xf32>
    %26 = vector.broadcast %23 : vector<1x128xf32> to vector<1024x128xf32>
    %27 = arith.mulf %6, %26 : vector<1024x128xf32>
    %28 = vector.broadcast %25 : vector<1x128xf32> to vector<1024x128xf32>
    %29 = arith.addf %27, %28 : vector<1024x128xf32>
    %cst_13 = arith.constant 0.000000e+00 : f32
    %30 = vector.broadcast %cst_13 : f32 to vector<1024x128xf32>
    %31 = arith.maximumf %29, %30 : vector<1024x128xf32>
    %c1_14 = arith.constant 1 : index
    %c0_15 = arith.constant 0 : index
    %c0_16 = arith.constant 0 : index
    %32 = vector.load %arg2[%c1_14, %c0_15, %c0_16] : memref<7x128x128xbf16, #tpu.memory_space<vmem>>, vector<1x128x128xbf16>
    %33 = vector.shape_cast %32 : vector<1x128x128xbf16> to vector<128x128xbf16>
    %c2 = arith.constant 2 : index
    %c0_17 = arith.constant 0 : index
    %34 = vector.load %arg4[%c2, %c0_17] : memref<14x256xf32, #tpu.memory_space<vmem>>, vector<1x128xf32>
    %c3 = arith.constant 3 : index
    %c0_18 = arith.constant 0 : index
    %35 = vector.load %arg4[%c3, %c0_18] : memref<14x256xf32, #tpu.memory_space<vmem>>, vector<1x128xf32>
    %36 = arith.truncf %31 : vector<1024x128xf32> to vector<1024x128xbf16>
    %cst_19 = arith.constant dense<0.000000e+00> : vector<1024x128xf32>
    %37 = tpu.matmul %36, %33, %cst_19 {dimension_numbers = #tpu.dot_dimension_numbers<[1], [0], [0], [1], [0, 0, 1, 1], [], []>} : vector<1024x128xbf16>, vector<128x128xbf16>, vector<1024x128xf32> -> vector<1024x128xf32>
    %cst_20 = arith.constant dense<0.000000e+00> : vector<128xf32>
    %38 = vector.multi_reduction <add>, %37, %cst_20 [0] : vector<1024x128xf32> to vector<128xf32>
    %39 = vector.shape_cast %38 : vector<128xf32> to vector<1x128xf32>
    %40 = arith.mulf %37, %37 : vector<1024x128xf32>
    %cst_21 = arith.constant dense<0.000000e+00> : vector<128xf32>
    %41 = vector.multi_reduction <add>, %40, %cst_21 [0] : vector<1024x128xf32> to vector<128xf32>
    %42 = vector.shape_cast %41 : vector<128xf32> to vector<1x128xf32>
    %cst_22 = arith.constant 9.765625E-4 : f32
    %43 = vector.broadcast %cst_22 : f32 to vector<1x128xf32>
    %44 = arith.mulf %39, %43 : vector<1x128xf32>
    %cst_23 = arith.constant 9.765625E-4 : f32
    %45 = vector.broadcast %cst_23 : f32 to vector<1x128xf32>
    %46 = arith.mulf %42, %45 : vector<1x128xf32>
    %47 = arith.mulf %44, %44 : vector<1x128xf32>
    %48 = arith.subf %46, %47 : vector<1x128xf32>
    %cst_24 = arith.constant 0.000000e+00 : f32
    %49 = vector.broadcast %cst_24 : f32 to vector<1x128xf32>
    %50 = arith.maximumf %48, %49 : vector<1x128xf32>
    %cst_25 = arith.constant 9.99999974E-6 : f32
    %51 = vector.broadcast %cst_25 : f32 to vector<1x128xf32>
    %52 = arith.addf %50, %51 : vector<1x128xf32>
    %53 = math.rsqrt %52 : vector<1x128xf32>
    %54 = arith.mulf %34, %53 : vector<1x128xf32>
    %55 = arith.mulf %44, %54 : vector<1x128xf32>
    %56 = arith.subf %35, %55 : vector<1x128xf32>
    %57 = vector.broadcast %54 : vector<1x128xf32> to vector<1024x128xf32>
    %58 = arith.mulf %37, %57 : vector<1024x128xf32>
    %59 = vector.broadcast %56 : vector<1x128xf32> to vector<1024x128xf32>
    %60 = arith.addf %58, %59 : vector<1024x128xf32>
    %cst_26 = arith.constant 0.000000e+00 : f32
    %61 = vector.broadcast %cst_26 : f32 to vector<1024x128xf32>
    %62 = arith.maximumf %60, %61 : vector<1024x128xf32>
    %c2_27 = arith.constant 2 : index
    %c0_28 = arith.constant 0 : index
    %c0_29 = arith.constant 0 : index
    %63 = vector.load %arg2[%c2_27, %c0_28, %c0_29] : memref<7x128x128xbf16, #tpu.memory_space<vmem>>, vector<1x128x128xbf16>
    %64 = vector.shape_cast %63 : vector<1x128x128xbf16> to vector<128x128xbf16>
    %c4 = arith.constant 4 : index
    %c0_30 = arith.constant 0 : index
    %65 = vector.load %arg4[%c4, %c0_30] : memref<14x256xf32, #tpu.memory_space<vmem>>, vector<1x128xf32>
    %c5 = arith.constant 5 : index
    %c0_31 = arith.constant 0 : index
    %66 = vector.load %arg4[%c5, %c0_31] : memref<14x256xf32, #tpu.memory_space<vmem>>, vector<1x128xf32>
    %67 = arith.truncf %62 : vector<1024x128xf32> to vector<1024x128xbf16>
    %cst_32 = arith.constant dense<0.000000e+00> : vector<1024x128xf32>
    %68 = tpu.matmul %67, %64, %cst_32 {dimension_numbers = #tpu.dot_dimension_numbers<[1], [0], [0], [1], [0, 0, 1, 1], [], []>} : vector<1024x128xbf16>, vector<128x128xbf16>, vector<1024x128xf32> -> vector<1024x128xf32>
    %cst_33 = arith.constant dense<0.000000e+00> : vector<128xf32>
    %69 = vector.multi_reduction <add>, %68, %cst_33 [0] : vector<1024x128xf32> to vector<128xf32>
    %70 = vector.shape_cast %69 : vector<128xf32> to vector<1x128xf32>
    %71 = arith.mulf %68, %68 : vector<1024x128xf32>
    %cst_34 = arith.constant dense<0.000000e+00> : vector<128xf32>
    %72 = vector.multi_reduction <add>, %71, %cst_34 [0] : vector<1024x128xf32> to vector<128xf32>
    %73 = vector.shape_cast %72 : vector<128xf32> to vector<1x128xf32>
    %cst_35 = arith.constant 9.765625E-4 : f32
    %74 = vector.broadcast %cst_35 : f32 to vector<1x128xf32>
    %75 = arith.mulf %70, %74 : vector<1x128xf32>
    %cst_36 = arith.constant 9.765625E-4 : f32
    %76 = vector.broadcast %cst_36 : f32 to vector<1x128xf32>
    %77 = arith.mulf %73, %76 : vector<1x128xf32>
    %78 = arith.mulf %75, %75 : vector<1x128xf32>
    %79 = arith.subf %77, %78 : vector<1x128xf32>
    %cst_37 = arith.constant 0.000000e+00 : f32
    %80 = vector.broadcast %cst_37 : f32 to vector<1x128xf32>
    %81 = arith.maximumf %79, %80 : vector<1x128xf32>
    %cst_38 = arith.constant 9.99999974E-6 : f32
    %82 = vector.broadcast %cst_38 : f32 to vector<1x128xf32>
    %83 = arith.addf %81, %82 : vector<1x128xf32>
    %84 = math.rsqrt %83 : vector<1x128xf32>
    %85 = arith.mulf %65, %84 : vector<1x128xf32>
    %86 = arith.mulf %75, %85 : vector<1x128xf32>
    %87 = arith.subf %66, %86 : vector<1x128xf32>
    %88 = vector.broadcast %85 : vector<1x128xf32> to vector<1024x128xf32>
    %89 = arith.mulf %68, %88 : vector<1024x128xf32>
    %90 = vector.broadcast %87 : vector<1x128xf32> to vector<1024x128xf32>
    %91 = arith.addf %89, %90 : vector<1024x128xf32>
    %cst_39 = arith.constant 0.000000e+00 : f32
    %92 = vector.broadcast %cst_39 : f32 to vector<1024x128xf32>
    %93 = arith.maximumf %91, %92 : vector<1024x128xf32>
    %c0_40 = arith.constant 0 : index
    %c0_41 = arith.constant 0 : index
    %94 = vector.load %arg3[%c0_40, %c0_41] : memref<128x256xbf16, #tpu.memory_space<vmem>>, vector<128x256xbf16>
    %95 = arith.truncf %93 : vector<1024x128xf32> to vector<1024x128xbf16>
    %cst_42 = arith.constant dense<0.000000e+00> : vector<1024x256xf32>
    %96 = tpu.matmul %95, %94, %cst_42 {dimension_numbers = #tpu.dot_dimension_numbers<[1], [0], [0], [1], [0, 0, 1, 1], [], []>} : vector<1024x128xbf16>, vector<128x256xbf16>, vector<1024x256xf32> -> vector<1024x256xf32>
    %c6 = arith.constant 6 : index
    %c0_43 = arith.constant 0 : index
    %97 = vector.load %arg4[%c6, %c0_43] : memref<14x256xf32, #tpu.memory_space<vmem>>, vector<1x256xf32>
    %98 = vector.broadcast %97 : vector<1x256xf32> to vector<1024x256xf32>
    %99 = arith.addf %96, %98 : vector<1024x256xf32>
    %c0_44 = arith.constant 0 : index
    %c0_45 = arith.constant 0 : index
    %100 = vector.load %arg6[%c0_44, %c0_45] : memref<1024x256xf32, #tpu.memory_space<vmem>>, vector<1024x256xf32>
    tpu.vector_store %arg6[%c0_44, %c0_45], %99 {strides = array<i32>} : memref<1024x256xf32, #tpu.memory_space<vmem>>, vector<1024x256xf32>,
    %101 = vector.extract_strided_slice %99 {offsets = [0, 0], sizes = [1024, 128], strides = [1, 1]} : vector<1024x256xf32> to vector<1024x128xf32>
    %102 = vector.extract_strided_slice %99 {offsets = [0, 128], sizes = [1024, 128], strides = [1, 1]} : vector<1024x256xf32> to vector<1024x128xf32>
    %c0_46 = arith.constant 0 : index
    %c0_47 = arith.constant 0 : index
    %103 = vector.load %arg1[%c0_46, %c0_47] : memref<1024x128xf32, #tpu.memory_space<vmem>>, vector<1024x128xf32>
    %cst_48 = arith.constant 5.000000e-01 : f32
    %104 = vector.broadcast %cst_48 : f32 to vector<1024x128xf32>
    %105 = arith.mulf %104, %102 : vector<1024x128xf32>
    %106 = math.exp %105 : vector<1024x128xf32>
    %107 = arith.mulf %103, %106 : vector<1024x128xf32>
    %108 = arith.addf %107, %101 : vector<1024x128xf32>
    %c3_49 = arith.constant 3 : index
    %c0_50 = arith.constant 0 : index
    %c0_51 = arith.constant 0 : index
    %109 = vector.load %arg2[%c3_49, %c0_50, %c0_51] : memref<7x128x128xbf16, #tpu.memory_space<vmem>>, vector<1x128x128xbf16>
    %110 = vector.shape_cast %109 : vector<1x128x128xbf16> to vector<128x128xbf16>
    %c7 = arith.constant 7 : index
    %c0_52 = arith.constant 0 : index
    %111 = vector.load %arg4[%c7, %c0_52] : memref<14x256xf32, #tpu.memory_space<vmem>>, vector<1x128xf32>
    %c8 = arith.constant 8 : index
    %c0_53 = arith.constant 0 : index
    %112 = vector.load %arg4[%c8, %c0_53] : memref<14x256xf32, #tpu.memory_space<vmem>>, vector<1x128xf32>
    %113 = arith.truncf %108 : vector<1024x128xf32> to vector<1024x128xbf16>
    %cst_54 = arith.constant dense<0.000000e+00> : vector<1024x128xf32>
    %114 = tpu.matmul %113, %110, %cst_54 {dimension_numbers = #tpu.dot_dimension_numbers<[1], [0], [0], [1], [0, 0, 1, 1], [], []>} : vector<1024x128xbf16>, vector<128x128xbf16>, vector<1024x128xf32> -> vector<1024x128xf32>
    %cst_55 = arith.constant dense<0.000000e+00> : vector<128xf32>
    %115 = vector.multi_reduction <add>, %114, %cst_55 [0] : vector<1024x128xf32> to vector<128xf32>
    %116 = vector.shape_cast %115 : vector<128xf32> to vector<1x128xf32>
    %117 = arith.mulf %114, %114 : vector<1024x128xf32>
    %cst_56 = arith.constant dense<0.000000e+00> : vector<128xf32>
    %118 = vector.multi_reduction <add>, %117, %cst_56 [0] : vector<1024x128xf32> to vector<128xf32>
    %119 = vector.shape_cast %118 : vector<128xf32> to vector<1x128xf32>
    %cst_57 = arith.constant 9.765625E-4 : f32
    %120 = vector.broadcast %cst_57 : f32 to vector<1x128xf32>
    %121 = arith.mulf %116, %120 : vector<1x128xf32>
    %cst_58 = arith.constant 9.765625E-4 : f32
    %122 = vector.broadcast %cst_58 : f32 to vector<1x128xf32>
    %123 = arith.mulf %119, %122 : vector<1x128xf32>
    %124 = arith.mulf %121, %121 : vector<1x128xf32>
    %125 = arith.subf %123, %124 : vector<1x128xf32>
    %cst_59 = arith.constant 0.000000e+00 : f32
    %126 = vector.broadcast %cst_59 : f32 to vector<1x128xf32>
    %127 = arith.maximumf %125, %126 : vector<1x128xf32>
    %cst_60 = arith.constant 9.99999974E-6 : f32
    %128 = vector.broadcast %cst_60 : f32 to vector<1x128xf32>
    %129 = arith.addf %127, %128 : vector<1x128xf32>
    %130 = math.rsqrt %129 : vector<1x128xf32>
    %131 = arith.mulf %111, %130 : vector<1x128xf32>
    %132 = arith.mulf %121, %131 : vector<1x128xf32>
    %133 = arith.subf %112, %132 : vector<1x128xf32>
    %134 = vector.broadcast %131 : vector<1x128xf32> to vector<1024x128xf32>
    %135 = arith.mulf %114, %134 : vector<1024x128xf32>
    %136 = vector.broadcast %133 : vector<1x128xf32> to vector<1024x128xf32>
    %137 = arith.addf %135, %136 : vector<1024x128xf32>
    %cst_61 = arith.constant 0.000000e+00 : f32
    %138 = vector.broadcast %cst_61 : f32 to vector<1024x128xf32>
    %139 = arith.maximumf %137, %138 : vector<1024x128xf32>
    %c4_62 = arith.constant 4 : index
    %c0_63 = arith.constant 0 : index
    %c0_64 = arith.constant 0 : index
    %140 = vector.load %arg2[%c4_62, %c0_63, %c0_64] : memref<7x128x128xbf16, #tpu.memory_space<vmem>>, vector<1x128x128xbf16>
    %141 = vector.shape_cast %140 : vector<1x128x128xbf16> to vector<128x128xbf16>
    %c9 = arith.constant 9 : index
    %c0_65 = arith.constant 0 : index
    %142 = vector.load %arg4[%c9, %c0_65] : memref<14x256xf32, #tpu.memory_space<vmem>>, vector<1x128xf32>
    %c10 = arith.constant 10 : index
    %c0_66 = arith.constant 0 : index
    %143 = vector.load %arg4[%c10, %c0_66] : memref<14x256xf32, #tpu.memory_space<vmem>>, vector<1x128xf32>
    %144 = arith.truncf %139 : vector<1024x128xf32> to vector<1024x128xbf16>
    %cst_67 = arith.constant dense<0.000000e+00> : vector<1024x128xf32>
    %145 = tpu.matmul %144, %141, %cst_67 {dimension_numbers = #tpu.dot_dimension_numbers<[1], [0], [0], [1], [0, 0, 1, 1], [], []>} : vector<1024x128xbf16>, vector<128x128xbf16>, vector<1024x128xf32> -> vector<1024x128xf32>
    %cst_68 = arith.constant dense<0.000000e+00> : vector<128xf32>
    %146 = vector.multi_reduction <add>, %145, %cst_68 [0] : vector<1024x128xf32> to vector<128xf32>
    %147 = vector.shape_cast %146 : vector<128xf32> to vector<1x128xf32>
    %148 = arith.mulf %145, %145 : vector<1024x128xf32>
    %cst_69 = arith.constant dense<0.000000e+00> : vector<128xf32>
    %149 = vector.multi_reduction <add>, %148, %cst_69 [0] : vector<1024x128xf32> to vector<128xf32>
    %150 = vector.shape_cast %149 : vector<128xf32> to vector<1x128xf32>
    %cst_70 = arith.constant 9.765625E-4 : f32
    %151 = vector.broadcast %cst_70 : f32 to vector<1x128xf32>
    %152 = arith.mulf %147, %151 : vector<1x128xf32>
    %cst_71 = arith.constant 9.765625E-4 : f32
    %153 = vector.broadcast %cst_71 : f32 to vector<1x128xf32>
    %154 = arith.mulf %150, %153 : vector<1x128xf32>
    %155 = arith.mulf %152, %152 : vector<1x128xf32>
    %156 = arith.subf %154, %155 : vector<1x128xf32>
    %cst_72 = arith.constant 0.000000e+00 : f32
    %157 = vector.broadcast %cst_72 : f32 to vector<1x128xf32>
    %158 = arith.maximumf %156, %157 : vector<1x128xf32>
    %cst_73 = arith.constant 9.99999974E-6 : f32
    %159 = vector.broadcast %cst_73 : f32 to vector<1x128xf32>
    %160 = arith.addf %158, %159 : vector<1x128xf32>
    %161 = math.rsqrt %160 : vector<1x128xf32>
    %162 = arith.mulf %142, %161 : vector<1x128xf32>
    %163 = arith.mulf %152, %162 : vector<1x128xf32>
    %164 = arith.subf %143, %163 : vector<1x128xf32>
    %165 = vector.broadcast %162 : vector<1x128xf32> to vector<1024x128xf32>
    %166 = arith.mulf %145, %165 : vector<1024x128xf32>
    %167 = vector.broadcast %164 : vector<1x128xf32> to vector<1024x128xf32>
    %168 = arith.addf %166, %167 : vector<1024x128xf32>
    %cst_74 = arith.constant 0.000000e+00 : f32
    %169 = vector.broadcast %cst_74 : f32 to vector<1024x128xf32>
    %170 = arith.maximumf %168, %169 : vector<1024x128xf32>
    %c5_75 = arith.constant 5 : index
    %c0_76 = arith.constant 0 : index
    %c0_77 = arith.constant 0 : index
    %171 = vector.load %arg2[%c5_75, %c0_76, %c0_77] : memref<7x128x128xbf16, #tpu.memory_space<vmem>>, vector<1x128x128xbf16>
    %172 = vector.shape_cast %171 : vector<1x128x128xbf16> to vector<128x128xbf16>
    %c11 = arith.constant 11 : index
    %c0_78 = arith.constant 0 : index
    %173 = vector.load %arg4[%c11, %c0_78] : memref<14x256xf32, #tpu.memory_space<vmem>>, vector<1x128xf32>
    %c12 = arith.constant 12 : index
    %c0_79 = arith.constant 0 : index
    %174 = vector.load %arg4[%c12, %c0_79] : memref<14x256xf32, #tpu.memory_space<vmem>>, vector<1x128xf32>
    %175 = arith.truncf %170 : vector<1024x128xf32> to vector<1024x128xbf16>
    %cst_80 = arith.constant dense<0.000000e+00> : vector<1024x128xf32>
    %176 = tpu.matmul %175, %172, %cst_80 {dimension_numbers = #tpu.dot_dimension_numbers<[1], [0], [0], [1], [0, 0, 1, 1], [], []>} : vector<1024x128xbf16>, vector<128x128xbf16>, vector<1024x128xf32> -> vector<1024x128xf32>
    %cst_81 = arith.constant dense<0.000000e+00> : vector<128xf32>
    %177 = vector.multi_reduction <add>, %176, %cst_81 [0] : vector<1024x128xf32> to vector<128xf32>
    %178 = vector.shape_cast %177 : vector<128xf32> to vector<1x128xf32>
    %179 = arith.mulf %176, %176 : vector<1024x128xf32>
    %cst_82 = arith.constant dense<0.000000e+00> : vector<128xf32>
    %180 = vector.multi_reduction <add>, %179, %cst_82 [0] : vector<1024x128xf32> to vector<128xf32>
    %181 = vector.shape_cast %180 : vector<128xf32> to vector<1x128xf32>
    %cst_83 = arith.constant 9.765625E-4 : f32
    %182 = vector.broadcast %cst_83 : f32 to vector<1x128xf32>
    %183 = arith.mulf %178, %182 : vector<1x128xf32>
    %cst_84 = arith.constant 9.765625E-4 : f32
    %184 = vector.broadcast %cst_84 : f32 to vector<1x128xf32>
    %185 = arith.mulf %181, %184 : vector<1x128xf32>
    %186 = arith.mulf %183, %183 : vector<1x128xf32>
    %187 = arith.subf %185, %186 : vector<1x128xf32>
    %cst_85 = arith.constant 0.000000e+00 : f32
    %188 = vector.broadcast %cst_85 : f32 to vector<1x128xf32>
    %189 = arith.maximumf %187, %188 : vector<1x128xf32>
    %cst_86 = arith.constant 9.99999974E-6 : f32
    %190 = vector.broadcast %cst_86 : f32 to vector<1x128xf32>
    %191 = arith.addf %189, %190 : vector<1x128xf32>
    %192 = math.rsqrt %191 : vector<1x128xf32>
    %193 = arith.mulf %173, %192 : vector<1x128xf32>
    %194 = arith.mulf %183, %193 : vector<1x128xf32>
    %195 = arith.subf %174, %194 : vector<1x128xf32>
    %196 = vector.broadcast %193 : vector<1x128xf32> to vector<1024x128xf32>
    %197 = arith.mulf %176, %196 : vector<1024x128xf32>
    %198 = vector.broadcast %195 : vector<1x128xf32> to vector<1024x128xf32>
    %199 = arith.addf %197, %198 : vector<1024x128xf32>
    %cst_87 = arith.constant 0.000000e+00 : f32
    %200 = vector.broadcast %cst_87 : f32 to vector<1024x128xf32>
    %201 = arith.maximumf %199, %200 : vector<1024x128xf32>
    %c6_88 = arith.constant 6 : index
    %c0_89 = arith.constant 0 : index
    %c0_90 = arith.constant 0 : index
    %202 = vector.load %arg2[%c6_88, %c0_89, %c0_90] : memref<7x128x128xbf16, #tpu.memory_space<vmem>>, vector<1x128x128xbf16>
    %203 = vector.shape_cast %202 : vector<1x128x128xbf16> to vector<128x128xbf16>
    %204 = arith.truncf %201 : vector<1024x128xf32> to vector<1024x128xbf16>
    %cst_91 = arith.constant dense<0.000000e+00> : vector<1024x128xf32>
    %205 = tpu.matmul %204, %203, %cst_91 {dimension_numbers = #tpu.dot_dimension_numbers<[1], [0], [0], [1], [0, 0, 1, 1], [], []>} : vector<1024x128xbf16>, vector<128x128xbf16>, vector<1024x128xf32> -> vector<1024x128xf32>
    %c13 = arith.constant 13 : index
    %c0_92 = arith.constant 0 : index
    %206 = vector.load %arg4[%c13, %c0_92] : memref<14x256xf32, #tpu.memory_space<vmem>>, vector<1x128xf32>
    %207 = vector.broadcast %206 : vector<1x128xf32> to vector<1024x128xf32>
    %208 = arith.addf %205, %207 : vector<1024x128xf32>
    %c0_93 = arith.constant 0 : index
    %c0_94 = arith.constant 0 : index
    %209 = vector.load %arg5[%c0_93, %c0_94] : memref<1024x128xf32, #tpu.memory_space<vmem>>, vector<1024x128xf32>
    tpu.vector_store %arg5[%c0_93, %c0_94], %208 {strides = array<i32>} : memref<1024x128xf32, #tpu.memory_space<vmem>>, vector<1024x128xf32>,
    return
  }
}

</mosaic_0001>

<llo_original>
// kernel: tpu_custom_call.1
$region0: #{tpu_custom_call.1}
  #allocation0 [shape = 'u32[]', space=smem, size = 0x4, offset = 0x4, fixed_abs, tag = 'smem constant byte address 0x4 - core index']
  #allocation1 [shape = 'u32[144,128]{1,0:T(1,128)}', space=vmem, size = 0x12000, scoped, tag = 'internal scratch']
  %s0 = inlined_call_operand.hbm [shape: f32[1024,128], index: 0, kind: input, shape index: {}]
  %s1 = inlined_call_operand.hbm [shape: f32[1024,128], index: 1, kind: input, shape index: {}]
  %s2 = inlined_call_operand.hbm [shape: bf16[7,128,128], index: 2, kind: input, shape index: {}]
  %s3 = inlined_call_operand.hbm [shape: bf16[128,256], index: 3, kind: input, shape index: {}]
  %s4 = inlined_call_operand.hbm [shape: f32[14,256], index: 4, kind: input, shape index: {}]
  %s5 = inlined_call_operand.hbm [shape: f32[1024,128], index: 5, kind: output, shape index: {0}]
  %s6 = inlined_call_operand.hbm [shape: f32[1024,256], index: 6, kind: output, shape index: {1}]
  %7 = xla_tuple %s5, %s6
  %s8 = sld [smem:[#allocation0]]
  $region58: #{tpu_custom_call.1} parent=0
    _
  %s10 = ssub.s32 1, %s8
  %s11 = scalar_select 0, %s10, %s8
  $region1: #{tpu_custom_call.1} parent=0
    #allocation2 [shape = 'u8[524288]{0}', space=vmem, size = 0x80000, scoped, tag = 'input window, operand 0, single buffered']
    #allocation3 [shape = 's32[1]{0}', space=sflag, size = 0x4, scoped, tag = 'scoped memory for tpu_custom_call.1']
    #allocation4 [shape = 's32[1]{0}', space=sflag, size = 0x4, scoped, tag = 'scoped memory for tpu_custom_call.1']
    #allocation5 [shape = 'u8[524288]{0}', space=vmem, size = 0x80000, scoped, tag = 'input window, operand 1, single buffered']
    #allocation6 [shape = 's32[1]{0}', space=sflag, size = 0x4, scoped, tag = 'scoped memory for tpu_custom_call.1']
    #allocation7 [shape = 'u8[229376]{0}', space=vmem, size = 0x38000, scoped, tag = 'input window, operand 2, single buffered']
    #allocation8 [shape = 'u8[65536]{0}', space=vmem, size = 0x10000, scoped, tag = 'input window, operand 3, single buffered']
    #allocation9 [shape = 's32[1]{0}', space=sflag, size = 0x4, scoped, tag = 'scoped memory for tpu_custom_call.1']
    #allocation10 [shape = 'u8[16384]{0}', space=vmem, size = 0x4000, scoped, tag = 'input window, operand 4, single buffered']
    #allocation11 [shape = 'u8[524288]{0}', space=vmem, size = 0x80000, scoped, tag = 'output window, operand 0, single buffered']
    #allocation12 [shape = 'u8[1048576]{0}', space=vmem, size = 0x100000, scoped, tag = 'output window, operand 1, single buffered']
    #allocation13 [shape = 's32[1]{0}', space=sflag, size = 0x4, scoped, tag = 'scoped memory for tpu_custom_call.1']
    %12 = vsyncpa [#allocation3], 0
    %13 = vsyncpa [#allocation6], 0
    %14 = vsyncpa [#allocation9], 0
    %15 = vsyncpa [#allocation4], 0
    %16 = vsyncpa [#allocation13], 0
    // Predicated region
    $region2: #{tpu_custom_call.1} parent=1 // pred_check
      _
    $region3: #{tpu_custom_call.1} parent=1 // pred_check_branch
      %18 = sbr.rel (0) target = $region5
    $region4: #{tpu_custom_call.1} parent=1 // pred_region
      %s20 = ssub.s32 16384, 16384
      %21 = vsyncadd [#allocation3], %s20
      %s22 = sshll.u32 [#allocation2], 4
      %s23 = int_to_ptr.vmem [resolvable:$true] %s22
      %28 = dma.hbm_to_vmem [thread:$0]  %s0, 16384, %s23, [#allocation3], 128, 128, 8
    $region5: #{tpu_custom_call.1} parent=1 // pred_fallthru
      _
    // Predicated region
    $region6: #{tpu_custom_call.1} parent=1 // pred_check
      _
    $region7: #{tpu_custom_call.1} parent=1 // pred_check_branch
      %30 = sbr.rel (0) target = $region9
    $region8: #{tpu_custom_call.1} parent=1 // pred_region
      %s32 = ssub.s32 16384, 16384
      %33 = vsyncadd [#allocation6], %s32
      %s34 = sshll.u32 [#allocation5], 4
      %s35 = int_to_ptr.vmem [resolvable:$true] %s34
      %40 = dma.hbm_to_vmem [thread:$0]  %s1, 16384, %s35, [#allocation6], 128, 128, 8
    $region9: #{tpu_custom_call.1} parent=1 // pred_fallthru
      _
    // Predicated region
    $region10: #{tpu_custom_call.1} parent=1 // pred_check
      _
    $region11: #{tpu_custom_call.1} parent=1 // pred_check_branch
      %42 = sbr.rel (0) target = $region13
    $region12: #{tpu_custom_call.1} parent=1 // pred_region
      %s44 = ssub.s32 7168, 7168
      %45 = vsyncadd [#allocation6], %s44
      %s46 = sshll.u32 [#allocation7], 4
      %s47 = int_to_ptr.vmem [resolvable:$true] %s46
      %52 = dma.hbm_to_vmem [thread:$0]  %s2, 7168, %s47, [#allocation6], 64, 64, 4
    $region13: #{tpu_custom_call.1} parent=1 // pred_fallthru
      _
    // Predicated region
    $region14: #{tpu_custom_call.1} parent=1 // pred_check
      _
    $region15: #{tpu_custom_call.1} parent=1 // pred_check_branch
      %54 = sbr.rel (0) target = $region17
    $region16: #{tpu_custom_call.1} parent=1 // pred_region
      %s56 = ssub.s32 2048, 2048
      %57 = vsyncadd [#allocation9], %s56
      %s58 = sshll.u32 [#allocation8], 4
      %s59 = int_to_ptr.vmem [resolvable:$true] %s58
      %64 = dma.hbm_to_vmem [thread:$0]  %s3, 2048, %s59, [#allocation9], 128, 128, 8
    $region17: #{tpu_custom_call.1} parent=1 // pred_fallthru
      _
    // Predicated region
    $region18: #{tpu_custom_call.1} parent=1 // pred_check
      _
    $region19: #{tpu_custom_call.1} parent=1 // pred_check_branch
      %66 = sbr.rel (0) target = $region21
    $region20: #{tpu_custom_call.1} parent=1 // pred_region
      %s68 = ssub.s32 512, 512
      %69 = vsyncadd [#allocation9], %s68
      %s70 = sshll.u32 [#allocation10], 4
      %s71 = int_to_ptr.vmem [resolvable:$true] %s70
      %76 = dma.hbm_to_vmem [thread:$0]  %s4, 512, %s71, [#allocation9], 256, 256, 16
    $region21: #{tpu_custom_call.1} parent=1 // pred_fallthru
      _
    // Predicated region
    $region22: #{tpu_custom_call.1} parent=1 // pred_check
      _
    $region23: #{tpu_custom_call.1} parent=1 // pred_check_branch
      %78 = sbr.rel (0) target = $region25
    $region24: #{tpu_custom_call.1} parent=1 // pred_region
      %79 = dma.done [#allocation3], 16384
    $region25: #{tpu_custom_call.1} parent=1 // pred_fallthru
      _
    // Predicated region
    $region26: #{tpu_custom_call.1} parent=1 // pred_check
      _
    $region27: #{tpu_custom_call.1} parent=1 // pred_check_branch
      %81 = sbr.rel (0) target = $region29
    $region28: #{tpu_custom_call.1} parent=1 // pred_region
      %82 = dma.done [#allocation6], 16384
    $region29: #{tpu_custom_call.1} parent=1 // pred_fallthru
      _
    // Predicated region
    $region30: #{tpu_custom_call.1} parent=1 // pred_check
      _
    $region31: #{tpu_custom_call.1} parent=1 // pred_check_branch
      %84 = sbr.rel (0) target = $region33
    $region32: #{tpu_custom_call.1} parent=1 // pred_region
      %85 = dma.done [#allocation6], 7168
    $region33: #{tpu_custom_call.1} parent=1 // pred_fallthru
      _
    // Predicated region
    $region34: #{tpu_custom_call.1} parent=1 // pred_check
      _
    $region35: #{tpu_custom_call.1} parent=1 // pred_check_branch
      %87 = sbr.rel (0) target = $region37
    $region36: #{tpu_custom_call.1} parent=1 // pred_region
      %88 = dma.done [#allocation9], 2048
    $region37: #{tpu_custom_call.1} parent=1 // pred_fallthru
      _
    // Predicated region
    $region38: #{tpu_custom_call.1} parent=1 // pred_check
      _
    $region39: #{tpu_custom_call.1} parent=1 // pred_check_branch
      %90 = sbr.rel (0) target = $region41
    $region40: #{tpu_custom_call.1} parent=1 // pred_region
      %91 = dma.done [#allocation9], 512
    $region41: #{tpu_custom_call.1} parent=1 // pred_fallthru
      _
    %v93 = vld [vmem:[#allocation2] sm:$0xff]
    %v94 = vld [vmem:[#allocation2 + $0x8] sm:$0xff]
    %v95 = vld [vmem:[#allocation2 + $0x10] sm:$0xff]
    %v96 = vld [vmem:[#allocation2 + $0x18] sm:$0xff]
    %v97 = vld [vmem:[#allocation2 + $0x20] sm:$0xff]
    %v98 = vld [vmem:[#allocation2 + $0x28] sm:$0xff]
    %v99 = vld [vmem:[#allocation2 + $0x30] sm:$0xff]
    %v100 = vld [vmem:[#allocation2 + $0x38] sm:$0xff]
    %v101 = vld [vmem:[#allocation2 + $0x40] sm:$0xff]
    %v102 = vld [vmem:[#allocation2 + $0x48] sm:$0xff]
    %v103 = vld [vmem:[#allocation2 + $0x50] sm:$0xff]
    %v104 = vld [vmem:[#allocation2 + $0x58] sm:$0xff]
    %v105 = vld [vmem:[#allocation2 + $0x60] sm:$0xff]
    %v106 = vld [vmem:[#allocation2 + $0x68] sm:$0xff]
    %v107 = vld [vmem:[#allocation2 + $0x70] sm:$0xff]
    %v108 = vld [vmem:[#allocation2 + $0x78] sm:$0xff]
    %v109 = vld [vmem:[#allocation2 + $0x80] sm:$0xff]
    %v110 = vld [vmem:[#allocation2 + $0x88] sm:$0xff]
    %v111 = vld [vmem:[#allocation2 + $0x90] sm:$0xff]
    %v112 = vld [vmem:[#allocation2 + $0x98] sm:$0xff]
    %v113 = vld [vmem:[#allocation2 + $0xa0] sm:$0xff]
    %v114 = vld [vmem:[#allocation2 + $0xa8] sm:$0xff]
    %v115 = vld [vmem:[#allocation2 + $0xb0] sm:$0xff]
    %v116 = vld [vmem:[#allocation2 + $0xb8] sm:$0xff]
    %v117 = vld [vmem:[#allocation2 + $0xc0] sm:$0xff]
    %v118 = vld [vmem:[#allocation2 + $0xc8] sm:$0xff]
    %v119 = vld [vmem:[#allocation2 + $0xd0] sm:$0xff]
    %v120 = vld [vmem:[#allocation2 + $0xd8] sm:$0xff]
    %v121 = vld [vmem:[#allocation2 + $0xe0] sm:$0xff]
    %v122 = vld [vmem:[#allocation2 + $0xe8] sm:$0xff]
    %v123 = vld [vmem:[#allocation2 + $0xf0] sm:$0xff]
    %v124 = vld [vmem:[#allocation2 + $0xf8] sm:$0xff]
    %v125 = vld [vmem:[#allocation2 + $0x100] sm:$0xff]
    %v126 = vld [vmem:[#allocation2 + $0x108] sm:$0xff]
    %v127 = vld [vmem:[#allocation2 + $0x110] sm:$0xff]
    %v128 = vld [vmem:[#allocation2 + $0x118] sm:$0xff]
    %v129 = vld [vmem:[#allocation2 + $0x120] sm:$0xff]
    %v130 = vld [vmem:[#allocation2 + $0x128] sm:$0xff]
    %v131 = vld [vmem:[#allocation2 + $0x130] sm:$0xff]
    %v132 = vld [vmem:[#allocation2 + $0x138] sm:$0xff]
    %v133 = vld [vmem:[#allocation2 + $0x140] sm:$0xff]
    %v134 = vld [vmem:[#allocation2 + $0x148] sm:$0xff]
    %v135 = vld [vmem:[#allocation2 + $0x150] sm:$0xff]
    %v136 = vld [vmem:[#allocation2 + $0x158] sm:$0xff]
    %v137 = vld [vmem:[#allocation2 + $0x160] sm:$0xff]
    %v138 = vld [vmem:[#allocation2 + $0x168] sm:$0xff]
    %v139 = vld [vmem:[#allocation2 + $0x170] sm:$0xff]
    %v140 = vld [vmem:[#allocation2 + $0x178] sm:$0xff]
    %v141 = vld [vmem:[#allocation2 + $0x180] sm:$0xff]
    %v142 = vld [vmem:[#allocation2 + $0x188] sm:$0xff]
    %v143 = vld [vmem:[#allocation2 + $0x190] sm:$0xff]
    %v144 = vld [vmem:[#allocation2 + $0x198] sm:$0xff]
    %v145 = vld [vmem:[#allocation2 + $0x1a0] sm:$0xff]
    %v146 = vld [vmem:[#allocation2 + $0x1a8] sm:$0xff]
    %v147 = vld [vmem:[#allocation2 + $0x1b0] sm:$0xff]
    %v148 = vld [vmem:[#allocation2 + $0x1b8] sm:$0xff]
    %v149 = vld [vmem:[#allocation2 + $0x1c0] sm:$0xff]
    %v150 = vld [vmem:[#allocation2 + $0x1c8] sm:$0xff]
    %v151 = vld [vmem:[#allocation2 + $0x1d0] sm:$0xff]
    %v152 = vld [vmem:[#allocation2 + $0x1d8] sm:$0xff]
    %v153 = vld [vmem:[#allocation2 + $0x1e0] sm:$0xff]
    %v154 = vld [vmem:[#allocation2 + $0x1e8] sm:$0xff]
    %v155 = vld [vmem:[#allocation2 + $0x1f0] sm:$0xff]
    %v156 = vld [vmem:[#allocation2 + $0x1f8] sm:$0xff]
    %v157 = vld [vmem:[#allocation2 + $0x200] sm:$0xff]
    %v158 = vld [vmem:[#allocation2 + $0x208] sm:$0xff]
    %v159 = vld [vmem:[#allocation2 + $0x210] sm:$0xff]
    %v160 = vld [vmem:[#allocation2 + $0x218] sm:$0xff]
    %v161 = vld [vmem:[#allocation2 + $0x220] sm:$0xff]
    %v162 = vld [vmem:[#allocation2 + $0x228] sm:$0xff]
    %v163 = vld [vmem:[#allocation2 + $0x230] sm:$0xff]
    %v164 = vld [vmem:[#allocation2 + $0x238] sm:$0xff]
    %v165 = vld [vmem:[#allocation2 + $0x240] sm:$0xff]
    %v166 = vld [vmem:[#allocation2 + $0x248] sm:$0xff]
    %v167 = vld [vmem:[#allocation2 + $0x250] sm:$0xff]
    %v168 = vld [vmem:[#allocation2 + $0x258] sm:$0xff]
    %v169 = vld [vmem:[#allocation2 + $0x260] sm:$0xff]
    %v170 = vld [vmem:[#allocation2 + $0x268] sm:$0xff]
    %v171 = vld [vmem:[#allocation2 + $0x270] sm:$0xff]
    %v172 = vld [vmem:[#allocation2 + $0x278] sm:$0xff]
    %v173 = vld [vmem:[#allocation2 + $0x280] sm:$0xff]
    %v174 = vld [vmem:[#allocation2 + $0x288] sm:$0xff]
    %v175 = vld [vmem:[#allocation2 + $0x290] sm:$0xff]
    %v176 = vld [vmem:[#allocation2 + $0x298] sm:$0xff]
    %v177 = vld [vmem:[#allocation2 + $0x2a0] sm:$0xff]
    %v178 = vld [vmem:[#allocation2 + $0x2a8] sm:$0xff]
    %v179 = vld [vmem:[#allocation2 + $0x2b0] sm:$0xff]
    %v180 = vld [vmem:[#allocation2 + $0x2b8] sm:$0xff]
    %v181 = vld [vmem:[#allocation2 + $0x2c0] sm:$0xff]
    %v182 = vld [vmem:[#allocation2 + $0x2c8] sm:$0xff]
    %v183 = vld [vmem:[#allocation2 + $0x2d0] sm:$0xff]
    %v184 = vld [vmem:[#allocation2 + $0x2d8] sm:$0xff]
    %v185 = vld [vmem:[#allocation2 + $0x2e0] sm:$0xff]
    %v186 = vld [vmem:[#allocation2 + $0x2e8] sm:$0xff]
    %v187 = vld [vmem:[#allocation2 + $0x2f0] sm:$0xff]
    %v188 = vld [vmem:[#allocation2 + $0x2f8] sm:$0xff]
    %v189 = vld [vmem:[#allocation2 + $0x300] sm:$0xff]
    %v190 = vld [vmem:[#allocation2 + $0x308] sm:$0xff]
    %v191 = vld [vmem:[#allocation2 + $0x310] sm:$0xff]
    %v192 = vld [vmem:[#allocation2 + $0x318] sm:$0xff]
    %v193 = vld [vmem:[#allocation2 + $0x320] sm:$0xff]
    %v194 = vld [vmem:[#allocation2 + $0x328] sm:$0xff]
    %v195 = vld [vmem:[#allocation2 + $0x330] sm:$0xff]
    %v196 = vld [vmem:[#allocation2 + $0x338] sm:$0xff]
    %v197 = vld [vmem:[#allocation2 + $0x340] sm:$0xff]
    %v198 = vld [vmem:[#allocation2 + $0x348] sm:$0xff]
    %v199 = vld [vmem:[#allocation2 + $0x350] sm:$0xff]
    %v200 = vld [vmem:[#allocation2 + $0x358] sm:$0xff]
    %v201 = vld [vmem:[#allocation2 + $0x360] sm:$0xff]
    %v202 = vld [vmem:[#allocation2 + $0x368] sm:$0xff]
    %v203 = vld [vmem:[#allocation2 + $0x370] sm:$0xff]
    %v204 = vld [vmem:[#allocation2 + $0x378] sm:$0xff]
    %v205 = vld [vmem:[#allocation2 + $0x380] sm:$0xff]
    %v206 = vld [vmem:[#allocation2 + $0x388] sm:$0xff]
    %v207 = vld [vmem:[#allocation2 + $0x390] sm:$0xff]
    %v208 = vld [vmem:[#allocation2 + $0x398] sm:$0xff]
    %v209 = vld [vmem:[#allocation2 + $0x3a0] sm:$0xff]
    %v210 = vld [vmem:[#allocation2 + $0x3a8] sm:$0xff]
    %v211 = vld [vmem:[#allocation2 + $0x3b0] sm:$0xff]
    %v212 = vld [vmem:[#allocation2 + $0x3b8] sm:$0xff]
    %v213 = vld [vmem:[#allocation2 + $0x3c0] sm:$0xff]
    %v214 = vld [vmem:[#allocation2 + $0x3c8] sm:$0xff]
    %v215 = vld [vmem:[#allocation2 + $0x3d0] sm:$0xff]
    %v216 = vld [vmem:[#allocation2 + $0x3d8] sm:$0xff]
    %v217 = vld [vmem:[#allocation2 + $0x3e0] sm:$0xff]
    %v218 = vld [vmem:[#allocation2 + $0x3e8] sm:$0xff]
    %v219 = vld [vmem:[#allocation2 + $0x3f0] sm:$0xff]
    %v220 = vld [vmem:[#allocation2 + $0x3f8] sm:$0xff]
    %v221 = vld [vmem:[#allocation7] sm:$0xf]
    %v222 = vld [vmem:[#allocation7 + $0x4] sm:$0xf]
    %v223 = vld [vmem:[#allocation7 + $0x8] sm:$0xf]
    %v224 = vld [vmem:[#allocation7 + $0xc] sm:$0xf]
    %v225 = vld [vmem:[#allocation7 + $0x10] sm:$0xf]
    %v226 = vld [vmem:[#allocation7 + $0x14] sm:$0xf]
    %v227 = vld [vmem:[#allocation7 + $0x18] sm:$0xf]
    %v228 = vld [vmem:[#allocation7 + $0x1c] sm:$0xf]
    %v229 = vld [vmem:[#allocation7 + $0x20] sm:$0xf]
    %v230 = vld [vmem:[#allocation7 + $0x24] sm:$0xf]
    %v231 = vld [vmem:[#allocation7 + $0x28] sm:$0xf]
    %v232 = vld [vmem:[#allocation7 + $0x2c] sm:$0xf]
    %v233 = vld [vmem:[#allocation7 + $0x30] sm:$0xf]
    %v234 = vld [vmem:[#allocation7 + $0x34] sm:$0xf]
    %v235 = vld [vmem:[#allocation7 + $0x38] sm:$0xf]
    %v236 = vld [vmem:[#allocation7 + $0x3c] sm:$0xf]
    %v237 = vld [vmem:[#allocation10] ss:$0 sm:$0xff]
    %v238 = vld [vmem:[#allocation10 + $0x1] ss:$0 sm:$0xff]
    %v239 = vpack.c.bf16 %v94, %v93
    %v240 = vpack.c.bf16 %v96, %v95
    %v241 = vpack.c.bf16 %v98, %v97
    %v242 = vpack.c.bf16 %v100, %v99
    %v243 = vpack.c.bf16 %v102, %v101
    %v244 = vpack.c.bf16 %v104, %v103
    %v245 = vpack.c.bf16 %v106, %v105
    %v246 = vpack.c.bf16 %v108, %v107
    %v247 = vpack.c.bf16 %v110, %v109
    %v248 = vpack.c.bf16 %v112, %v111
    %v249 = vpack.c.bf16 %v114, %v113
    %v250 = vpack.c.bf16 %v116, %v115
    %v251 = vpack.c.bf16 %v118, %v117
    %v252 = vpack.c.bf16 %v120, %v119
    %v253 = vpack.c.bf16 %v122, %v121
    %v254 = vpack.c.bf16 %v124, %v123
    %v255 = vpack.c.bf16 %v126, %v125
    %v256 = vpack.c.bf16 %v128, %v127
    %v257 = vpack.c.bf16 %v130, %v129
    %v258 = vpack.c.bf16 %v132, %v131
    %v259 = vpack.c.bf16 %v134, %v133
    %v260 = vpack.c.bf16 %v136, %v135
    %v261 = vpack.c.bf16 %v138, %v137
    %v262 = vpack.c.bf16 %v140, %v139
    %v263 = vpack.c.bf16 %v142, %v141
    %v264 = vpack.c.bf16 %v144, %v143
    %v265 = vpack.c.bf16 %v146, %v145
    %v266 = vpack.c.bf16 %v148, %v147
    %v267 = vpack.c.bf16 %v150, %v149
    %v268 = vpack.c.bf16 %v152, %v151
    %v269 = vpack.c.bf16 %v154, %v153
    %v270 = vpack.c.bf16 %v156, %v155
    %v271 = vpack.c.bf16 %v158, %v157
    %v272 = vpack.c.bf16 %v160, %v159
    %v273 = vpack.c.bf16 %v162, %v161
    %v274 = vpack.c.bf16 %v164, %v163
    %v275 = vpack.c.bf16 %v166, %v165
    %v276 = vpack.c.bf16 %v168, %v167
    %v277 = vpack.c.bf16 %v170, %v169
    %v278 = vpack.c.bf16 %v172, %v171
    %v279 = vpack.c.bf16 %v174, %v173
    %v280 = vpack.c.bf16 %v176, %v175
    %v281 = vpack.c.bf16 %v178, %v177
    %v282 = vpack.c.bf16 %v180, %v179
    %v283 = vpack.c.bf16 %v182, %v181
    %v284 = vpack.c.bf16 %v184, %v183
    %v285 = vpack.c.bf16 %v186, %v185
    %v286 = vpack.c.bf16 %v188, %v187
    %v287 = vpack.c.bf16 %v190, %v189
    %v288 = vpack.c.bf16 %v192, %v191
    %v289 = vpack.c.bf16 %v194, %v193
    %v290 = vpack.c.bf16 %v196, %v195
    %v291 = vpack.c.bf16 %v198, %v197
    %v292 = vpack.c.bf16 %v200, %v199
    %v293 = vpack.c.bf16 %v202, %v201
    %v294 = vpack.c.bf16 %v204, %v203
    %v295 = vpack.c.bf16 %v206, %v205
    %v296 = vpack.c.bf16 %v208, %v207
    %v297 = vpack.c.bf16 %v210, %v209
    %v298 = vpack.c.bf16 %v212, %v211
    %v299 = vpack.c.bf16 %v214, %v213
    %v300 = vpack.c.bf16 %v216, %v215
    %v301 = vpack.c.bf16 %v218, %v217
    %v302 = vpack.c.bf16 %v220, %v219
    %v319 = vunpack.c.l.b16 %v221
    %v320 = vunpack.c.l.b16 %v222
    %v321 = vunpack.c.l.b16 %v223
    %v322 = vunpack.c.l.b16 %v224
    %v323 = vunpack.c.l.b16 %v225
    %v324 = vunpack.c.l.b16 %v226
    %v325 = vunpack.c.l.b16 %v227
    %v326 = vunpack.c.l.b16 %v228
    %v327 = vunpack.c.l.b16 %v229
    %v328 = vunpack.c.l.b16 %v230
    %v329 = vunpack.c.l.b16 %v231
    %v330 = vunpack.c.l.b16 %v232
    %v331 = vunpack.c.l.b16 %v233
    %v332 = vunpack.c.l.b16 %v234
    %v333 = vunpack.c.l.b16 %v235
    %v334 = vunpack.c.l.b16 %v236
    %v335 = vpack.c.b16 %v320, %v319
    %v336 = vpack.c.b16 %v322, %v321
    %v337 = vpack.c.b16 %v324, %v323
    %v338 = vpack.c.b16 %v326, %v325
    %v339 = vpack.c.b16 %v328, %v327
    %v340 = vpack.c.b16 %v330, %v329
    %v341 = vpack.c.b16 %v332, %v331
    %v342 = vpack.c.b16 %v334, %v333
    %351 = vmatprep.subr.bf16.mxu0 0
    %352 = vmatpush1.bf16.msra.mxu0 %v335
    %353 = vmatprep.subr.bf16.mxu0 0
    %354 = vmatpush1.bf16.msra.mxu0 %v336
    %355 = vmatprep.subr.bf16.mxu0 0
    %356 = vmatpush1.bf16.msra.mxu0 %v337
    %357 = vmatprep.subr.bf16.mxu0 0
    %358 = vmatpush1.bf16.msra.mxu0 %v338
    %359 = vmatprep.subr.bf16.mxu0 0
    %360 = vmatpush1.bf16.msra.mxu0 %v339
    %361 = vmatprep.subr.bf16.mxu0 0
    %362 = vmatpush1.bf16.msra.mxu0 %v340
    %363 = vmatprep.subr.bf16.mxu0 0
    %364 = vmatpush1.bf16.msra.mxu0 %v341
    %365 = vmatprep.subr.bf16.mxu0 0
    %366 = vmatpush1.bf16.msra.mxu0 %v342
    %367 = vmatprep.subr.bf16.mxu0 0
    %368 = vmatpush1.bf16.msra.mxu0 0
    %369 = vmatprep.subr.bf16.mxu0 0
    %370 = vmatpush1.bf16.msra.mxu0 0
    %371 = vmatprep.subr.bf16.mxu0 0
    %372 = vmatpush1.bf16.msra.mxu0 0
    %373 = vmatprep.subr.bf16.mxu0 0
    %374 = vmatpush1.bf16.msra.mxu0 0
    %375 = vmatprep.subr.bf16.mxu0 0
    %376 = vmatpush1.bf16.msra.mxu0 0
    %377 = vmatprep.subr.bf16.mxu0 0
    %378 = vmatpush1.bf16.msra.mxu0 0
    %379 = vmatprep.subr.bf16.mxu0 0
    %380 = vmatpush1.bf16.msra.mxu0 0
    %381 = vmatprep.subr.bf16.mxu0 0
    %382 = vmatpush1.bf16.msra.mxu0 0
    %383 = vmatprep.mubr.bf16.mxu0 0
    %384 = vmatmul.mubr.bf16.gmra.mrb[0].mxu0 %v239
    %v385 = vpop.f32.mrb[0].mxu0
    %v386 = vadd.f32 0.0, %v385
    %v387 = vpop.f32.mrb[0].mxu0
    %v388 = vpop.f32.mrb[0].mxu0
    %v389 = vadd.f32 0.0, %v388
    %v390 = vpop.f32.mrb[0].mxu0
    %391 = vmatprep.mubr.bf16.mxu0 0
    %392 = vmatmul.mubr.bf16.gmra.mrb[0].mxu0 %v240
    %v393 = vpop.f32.mrb[0].mxu0
    %v394 = vadd.f32 0.0, %v393
    %v395 = vpop.f32.mrb[0].mxu0
    %v396 = vpop.f32.mrb[0].mxu0
    %v397 = vadd.f32 0.0, %v396
    %v398 = vpop.f32.mrb[0].mxu0
    %399 = vmatprep.mubr.bf16.mxu0 0
    %400 = vmatmul.mubr.bf16.gmra.mrb[0].mxu0 %v241
    %v401 = vpop.f32.mrb[0].mxu0
    %v402 = vadd.f32 0.0, %v401
    %v403 = vpop.f32.mrb[0].mxu0
    %v404 = vpop.f32.mrb[0].mxu0
    %v405 = vadd.f32 0.0, %v404
    %v406 = vpop.f32.mrb[0].mxu0
    %407 = vmatprep.mubr.bf16.mxu0 0
    %408 = vmatmul.mubr.bf16.gmra.mrb[0].mxu0 %v242
    %v409 = vpop.f32.mrb[0].mxu0
    %v410 = vadd.f32 0.0, %v409
    %v411 = vpop.f32.mrb[0].mxu0
    %v412 = vpop.f32.mrb[0].mxu0
    %v413 = vadd.f32 0.0, %v412
    %v414 = vpop.f32.mrb[0].mxu0
    %415 = vmatprep.mubr.bf16.mxu0 0
    %416 = vmatmul.mubr.bf16.gmra.mrb[0].mxu0 %v243
    %v417 = vpop.f32.mrb[0].mxu0
    %v418 = vadd.f32 0.0, %v417
    %v419 = vpop.f32.mrb[0].mxu0
    %v420 = vpop.f32.mrb[0].mxu0
    %v421 = vadd.f32 0.0, %v420
    %v422 = vpop.f32.mrb[0].mxu0
    %423 = vmatprep.mubr.bf16.mxu0 0
    %424 = vmatmul.mubr.bf16.gmra.mrb[0].mxu0 %v244
    %v425 = vpop.f32.mrb[0].mxu0
    %v426 = vadd.f32 0.0, %v425
    %v427 = vpop.f32.mrb[0].mxu0
    %v428 = vpop.f32.mrb[0].mxu0
    %v429 = vadd.f32 0.0, %v428
    %v430 = vpop.f32.mrb[0].mxu0
    %431 = vmatprep.mubr.bf16.mxu0 0
    %432 = vmatmul.mubr.bf16.gmra.mrb[0].mxu0 %v245
    %v433 = vpop.f32.mrb[0].mxu0
    %v434 = vadd.f32 0.0, %v433
    %v435 = vpop.f32.mrb[0].mxu0
    %v436 = vpop.f32.mrb[0].mxu0
    %v437 = vadd.f32 0.0, %v436
    %v438 = vpop.f32.mrb[0].mxu0
    %439 = vmatprep.mubr.bf16.mxu0 0
    %440 = vmatmul.mubr.bf16.gmra.mrb[0].mxu0 %v246
    %v441 = vpop.f32.mrb[0].mxu0
    %v442 = vadd.f32 0.0, %v441
    %v443 = vpop.f32.mrb[0].mxu0
    %v444 = vpop.f32.mrb[0].mxu0
    %v445 = vadd.f32 0.0, %v444
    %v446 = vpop.f32.mrb[0].mxu0
    %447 = vmatprep.mubr.bf16.mxu0 0
    %448 = vmatmul.mubr.bf16.gmra.mrb[0].mxu0 %v247
    %v449 = vpop.f32.mrb[0].mxu0
    %v450 = vadd.f32 0.0, %v449
    %v451 = vpop.f32.mrb[0].mxu0
    %v452 = vpop.f32.mrb[0].mxu0
    %v453 = vadd.f32 0.0, %v452
    %v454 = vpop.f32.mrb[0].mxu0
    %455 = vmatprep.mubr.bf16.mxu0 0
    %456 = vmatmul.mubr.bf16.gmra.mrb[0].mxu0 %v248
    %v457 = vpop.f32.mrb[0].mxu0
    %v458 = vadd.f32 0.0, %v457
    %v459 = vpop.f32.mrb[0].mxu0
    %v460 = vpop.f32.mrb[0].mxu0
    %v461 = vadd.f32 0.0, %v460
    %v462 = vpop.f32.mrb[0].mxu0
    %463 = vmatprep.mubr.bf16.mxu0 0
    %464 = vmatmul.mubr.bf16.gmra.mrb[0].mxu0 %v249
    %v465 = vpop.f32.mrb[0].mxu0
    %v466 = vadd.f32 0.0, %v465
    %v467 = vpop.f32.mrb[0].mxu0
    %v468 = vpop.f32.mrb[0].mxu0
    %v469 = vadd.f32 0.0, %v468
    %v470 = vpop.f32.mrb[0].mxu0
    %471 = vmatprep.mubr.bf16.mxu0 0
    %472 = vmatmul.mubr.bf16.gmra.mrb[0].mxu0 %v250
    %v473 = vpop.f32.mrb[0].mxu0
    %v474 = vadd.f32 0.0, %v473
    %v475 = vpop.f32.mrb[0].mxu0
    %v476 = vpop.f32.mrb[0].mxu0
    %v477 = vadd.f32 0.0, %v476
    %v478 = vpop.f32.mrb[0].mxu0
    %479 = vmatprep.mubr.bf16.mxu0 0
    %480 = vmatmul.mubr.bf16.gmra.mrb[0].mxu0 %v251
    %v481 = vpop.f32.mrb[0].mxu0
    %v482 = vadd.f32 0.0, %v481
    %v483 = vpop.f32.mrb[0].mxu0
    %v484 = vpop.f32.mrb[0].mxu0
    %v485 = vadd.f32 0.0, %v484
    %v486 = vpop.f32.mrb[0].mxu0
    %487 = vmatprep.mubr.bf16.mxu0 0
    %488 = vmatmul.mubr.bf16.gmra.mrb[0].mxu0 %v252
    %v489 = vpop.f32.mrb[0].mxu0
    %v490 = vadd.f32 0.0, %v489
    %v491 = vpop.f32.mrb[0].mxu0
    %v492 = vpop.f32.mrb[0].mxu0
    %v493 = vadd.f32 0.0, %v492
    %v494 = vpop.f32.mrb[0].mxu0
    %495 = vmatprep.mubr.bf16.mxu0 0
    %496 = vmatmul.mubr.bf16.gmra.mrb[0].mxu0 %v253
    %v497 = vpop.f32.mrb[0].mxu0
    %v498 = vadd.f32 0.0, %v497
    %v499 = vpop.f32.mrb[0].mxu0
    %v500 = vpop.f32.mrb[0].mxu0
    %v501 = vadd.f32 0.0, %v500
    %v502 = vpop.f32.mrb[0].mxu0
    %503 = vmatprep.mubr.bf16.mxu0 0
    %504 = vmatmul.mubr.bf16.gmra.mrb[0].mxu0 %v254
    %v505 = vpop.f32.mrb[0].mxu0
    %v506 = vadd.f32 0.0, %v505
    %v507 = vpop.f32.mrb[0].mxu0
    %v508 = vpop.f32.mrb[0].mxu0
    %v509 = vadd.f32 0.0, %v508
    %v510 = vpop.f32.mrb[0].mxu0
    %511 = vmatprep.mubr.bf16.mxu0 0
    %512 = vmatmul.mubr.bf16.gmra.mrb[0].mxu0 %v255
    %v513 = vpop.f32.mrb[0].mxu0
    %v514 = vadd.f32 0.0, %v513
    %v515 = vpop.f32.mrb[0].mxu0
    %v516 = vpop.f32.mrb[0].mxu0
    %v517 = vadd.f32 0.0, %v516
    %v518 = vpop.f32.mrb[0].mxu0
    %519 = vmatprep.mubr.bf16.mxu0 0
    %520 = vmatmul.mubr.bf16.gmra.mrb[0].mxu0 %v256
    %v521 = vpop.f32.mrb[0].mxu0
    %v522 = vadd.f32 0.0, %v521
    %v523 = vpop.f32.mrb[0].mxu0
    %v524 = vpop.f32.mrb[0].mxu0
    %v525 = vadd.f32 0.0, %v524
    %v526 = vpop.f32.mrb[0].mxu0
    %527 = vmatprep.mubr.bf16.mxu0 0
    %528 = vmatmul.mubr.bf16.gmra.mrb[0].mxu0 %v257
    %v529 = vpop.f32.mrb[0].mxu0
    %v530 = vadd.f32 0.0, %v529
    %v531 = vpop.f32.mrb[0].mxu0
    %v532 = vpop.f32.mrb[0].mxu0
    %v533 = vadd.f32 0.0, %v532
    %v534 = vpop.f32.mrb[0].mxu0
    %535 = vmatprep.mubr.bf16.mxu0 0
    %536 = vmatmul.mubr.bf16.gmra.mrb[0].mxu0 %v258
    %v537 = vpop.f32.mrb[0].mxu0
    %v538 = vadd.f32 0.0, %v537
    %v539 = vpop.f32.mrb[0].mxu0
    %v540 = vpop.f32.mrb[0].mxu0
    %v541 = vadd.f32 0.0, %v540
    %v542 = vpop.f32.mrb[0].mxu0
    %543 = vmatprep.mubr.bf16.mxu0 0
    %544 = vmatmul.mubr.bf16.gmra.mrb[0].mxu0 %v259
    %v545 = vpop.f32.mrb[0].mxu0
    %v546 = vadd.f32 0.0, %v545
    %v547 = vpop.f32.mrb[0].mxu0
    %v548 = vpop.f32.mrb[0].mxu0
    %v549 = vadd.f32 0.0, %v548
    %v550 = vpop.f32.mrb[0].mxu0
    %551 = vmatprep.mubr.bf16.mxu0 0
    %552 = vmatmul.mubr.bf16.gmra.mrb[0].mxu0 %v260
    %v553 = vpop.f32.mrb[0].mxu0
    %v554 = vadd.f32 0.0, %v553
    %v555 = vpop.f32.mrb[0].mxu0
    %v556 = vpop.f32.mrb[0].mxu0
    %v557 = vadd.f32 0.0, %v556
    %v558 = vpop.f32.mrb[0].mxu0
    %559 = vmatprep.mubr.bf16.mxu0 0
    %560 = vmatmul.mubr.bf16.gmra.mrb[0].mxu0 %v261
    %v561 = vpop.f32.mrb[0].mxu0
    %v562 = vadd.f32 0.0, %v561
    %v563 = vpop.f32.mrb[0].mxu0
    %v564 = vpop.f32.mrb[0].mxu0
    %v565 = vadd.f32 0.0, %v564
    %v566 = vpop.f32.mrb[0].mxu0
    %567 = vmatprep.mubr.bf16.mxu0 0
    %568 = vmatmul.mubr.bf16.gmra.mrb[0].mxu0 %v262
    %v569 = vpop.f32.mrb[0].mxu0
    %v570 = vadd.f32 0.0, %v569
    %v571 = vpop.f32.mrb[0].mxu0
    %v572 = vpop.f32.mrb[0].mxu0
    %v573 = vadd.f32 0.0, %v572
    %v574 = vpop.f32.mrb[0].mxu0
    %575 = vmatprep.mubr.bf16.mxu0 0
    %576 = vmatmul.mubr.bf16.gmra.mrb[0].mxu0 %v263
    %v577 = vpop.f32.mrb[0].mxu0
    %v578 = vadd.f32 0.0, %v577
    %v579 = vpop.f32.mrb[0].mxu0
    %v580 = vpop.f32.mrb[0].mxu0
    %v581 = vadd.f32 0.0, %v580
    %v582 = vpop.f32.mrb[0].mxu0
    %583 = vmatprep.mubr.bf16.mxu0 0
    %584 = vmatmul.mubr.bf16.gmra.mrb[0].mxu0 %v264
    %v585 = vpop.f32.mrb[0].mxu0
    %v586 = vadd.f32 0.0, %v585
    %v587 = vpop.f32.mrb[0].mxu0
    %v588 = vpop.f32.mrb[0].mxu0
    %v589 = vadd.f32 0.0, %v588
    %v590 = vpop.f32.mrb[0].mxu0
    %591 = vmatprep.mubr.bf16.mxu0 0
    %592 = vmatmul.mubr.bf16.gmra.mrb[0].mxu0 %v265
    %v593 = vpop.f32.mrb[0].mxu0
    %v594 = vadd.f32 0.0, %v593
    %v595 = vpop.f32.mrb[0].mxu0
    %v596 = vpop.f32.mrb[0].mxu0
    %v597 = vadd.f32 0.0, %v596
    %v598 = vpop.f32.mrb[0].mxu0
    %599 = vmatprep.mubr.bf16.mxu0 0
    %600 = vmatmul.mubr.bf16.gmra.mrb[0].mxu0 %v266
    %v601 = vpop.f32.mrb[0].mxu0
    %v602 = vadd.f32 0.0, %v601
    %v603 = vpop.f32.mrb[0].mxu0
    %v604 = vpop.f32.mrb[0].mxu0
    %v605 = vadd.f32 0.0, %v604
    %v606 = vpop.f32.mrb[0].mxu0
    %607 = vmatprep.mubr.bf16.mxu0 0
    %608 = vmatmul.mubr.bf16.gmra.mrb[0].mxu0 %v267
    %v609 = vpop.f32.mrb[0].mxu0
    %v610 = vadd.f32 0.0, %v609
    %v611 = vpop.f32.mrb[0].mxu0
    %v612 = vpop.f32.mrb[0].mxu0
    %v613 = vadd.f32 0.0, %v612
    %v614 = vpop.f32.mrb[0].mxu0
    %615 = vmatprep.mubr.bf16.mxu0 0
    %616 = vmatmul.mubr.bf16.gmra.mrb[0].mxu0 %v268
    %v617 = vpop.f32.mrb[0].mxu0
    %v618 = vadd.f32 0.0, %v617
    %v619 = vpop.f32.mrb[0].mxu0
    %v620 = vpop.f32.mrb[0].mxu0
    %v621 = vadd.f32 0.0, %v620
    %v622 = vpop.f32.mrb[0].mxu0
    %623 = vmatprep.mubr.bf16.mxu0 0
    %624 = vmatmul.mubr.bf16.gmra.mrb[0].mxu0 %v269
    %v625 = vpop.f32.mrb[0].mxu0
    %v626 = vadd.f32 0.0, %v625
    %v627 = vpop.f32.mrb[0].mxu0
    %v628 = vpop.f32.mrb[0].mxu0
    %v629 = vadd.f32 0.0, %v628
    %v630 = vpop.f32.mrb[0].mxu0
    %631 = vmatprep.mubr.bf16.mxu0 0
    %632 = vmatmul.mubr.bf16.gmra.mrb[0].mxu0 %v270
    %v633 = vpop.f32.mrb[0].mxu0
    %v634 = vadd.f32 0.0, %v633
    %v635 = vpop.f32.mrb[0].mxu0
    %v636 = vpop.f32.mrb[0].mxu0
    %v637 = vadd.f32 0.0, %v636
    %v638 = vpop.f32.mrb[0].mxu0
    %639 = vmatprep.mubr.bf16.mxu0 0
    %640 = vmatmul.mubr.bf16.gmra.mrb[0].mxu0 %v271
    %v641 = vpop.f32.mrb[0].mxu0
    %v642 = vadd.f32 0.0, %v641
    %v643 = vpop.f32.mrb[0].mxu0
    %v644 = vpop.f32.mrb[0].mxu0
    %v645 = vadd.f32 0.0, %v644
    %v646 = vpop.f32.mrb[0].mxu0
    %647 = vmatprep.mubr.bf16.mxu0 0
    %648 = vmatmul.mubr.bf16.gmra.mrb[0].mxu0 %v272
    %v649 = vpop.f32.mrb[0].mxu0
    %v650 = vadd.f32 0.0, %v649
    %v651 = vpop.f32.mrb[0].mxu0
    %v652 = vpop.f32.mrb[0].mxu0
    %v653 = vadd.f32 0.0, %v652
    %v654 = vpop.f32.mrb[0].mxu0
    %655 = vmatprep.mubr.bf16.mxu0 0
    %656 = vmatmul.mubr.bf16.gmra.mrb[0].mxu0 %v273
    %v657 = vpop.f32.mrb[0].mxu0
    %v658 = vadd.f32 0.0, %v657
    %v659 = vpop.f32.mrb[0].mxu0
    %v660 = vpop.f32.mrb[0].mxu0
    %v661 = vadd.f32 0.0, %v660
    %v662 = vpop.f32.mrb[0].mxu0
    %663 = vmatprep.mubr.bf16.mxu0 0
    %664 = vmatmul.mubr.bf16.gmra.mrb[0].mxu0 %v274
    %v665 = vpop.f32.mrb[0].mxu0
    %v666 = vadd.f32 0.0, %v665
    %v667 = vpop.f32.mrb[0].mxu0
    %v668 = vpop.f32.mrb[0].mxu0
    %v669 = vadd.f32 0.0, %v668
    %v670 = vpop.f32.mrb[0].mxu0
    %671 = vmatprep.mubr.bf16.mxu0 0
    %672 = vmatmul.mubr.bf16.gmra.mrb[0].mxu0 %v275
    %v673 = vpop.f32.mrb[0].mxu0
    %v674 = vadd.f32 0.0, %v673
    %v675 = vpop.f32.mrb[0].mxu0
    %v676 = vpop.f32.mrb[0].mxu0
    %v677 = vadd.f32 0.0, %v676
    %v678 = vpop.f32.mrb[0].mxu0
    %679 = vmatprep.mubr.bf16.mxu0 0
    %680 = vmatmul.mubr.bf16.gmra.mrb[0].mxu0 %v276
    %v681 = vpop.f32.mrb[0].mxu0
    %v682 = vadd.f32 0.0, %v681
    %v683 = vpop.f32.mrb[0].mxu0
    %v684 = vpop.f32.mrb[0].mxu0
    %v685 = vadd.f32 0.0, %v684
    %v686 = vpop.f32.mrb[0].mxu0
    %687 = vmatprep.mubr.bf16.mxu0 0
    %688 = vmatmul.mubr.bf16.gmra.mrb[0].mxu0 %v277
    %v689 = vpop.f32.mrb[0].mxu0
    %v690 = vadd.f32 0.0, %v689
    %v691 = vpop.f32.mrb[0].mxu0
    %v692 = vpop.f32.mrb[0].mxu0
    %v693 = vadd.f32 0.0, %v692
    %v694 = vpop.f32.mrb[0].mxu0
    %695 = vmatprep.mubr.bf16.mxu0 0
    %696 = vmatmul.mubr.bf16.gmra.mrb[0].mxu0 %v278
    %v697 = vpop.f32.mrb[0].mxu0
    %v698 = vadd.f32 0.0, %v697
    %v699 = vpop.f32.mrb[0].mxu0
    %v700 = vpop.f32.mrb[0].mxu0
    %v701 = vadd.f32 0.0, %v700
    %v702 = vpop.f32.mrb[0].mxu0
    %703 = vmatprep.mubr.bf16.mxu0 0
    %704 = vmatmul.mubr.bf16.gmra.mrb[0].mxu0 %v279
    %v705 = vpop.f32.mrb[0].mxu0
    %v706 = vadd.f32 0.0, %v705
    %v707 = vpop.f32.mrb[0].mxu0
    %v708 = vpop.f32.mrb[0].mxu0
    %v709 = vadd.f32 0.0, %v708
    %v710 = vpop.f32.mrb[0].mxu0
    %711 = vmatprep.mubr.bf16.mxu0 0
    %712 = vmatmul.mubr.bf16.gmra.mrb[0].mxu0 %v280
    %v713 = vpop.f32.mrb[0].mxu0
    %v714 = vadd.f32 0.0, %v713
    %v715 = vpop.f32.mrb[0].mxu0
    %v716 = vpop.f32.mrb[0].mxu0
    %v717 = vadd.f32 0.0, %v716
    %v718 = vpop.f32.mrb[0].mxu0
    %719 = vmatprep.mubr.bf16.mxu0 0
    %720 = vmatmul.mubr.bf16.gmra.mrb[0].mxu0 %v281
    %v721 = vpop.f32.mrb[0].mxu0
    %v722 = vadd.f32 0.0, %v721
    %v723 = vpop.f32.mrb[0].mxu0
    %v724 = vpop.f32.mrb[0].mxu0
    %v725 = vadd.f32 0.0, %v724
    %v726 = vpop.f32.mrb[0].mxu0
    %727 = vmatprep.mubr.bf16.mxu0 0
    %728 = vmatmul.mubr.bf16.gmra.mrb[0].mxu0 %v282
    %v729 = vpop.f32.mrb[0].mxu0
    %v730 = vadd.f32 0.0, %v729
    %v731 = vpop.f32.mrb[0].mxu0
    %v732 = vpop.f32.mrb[0].mxu0
    %v733 = vadd.f32 0.0, %v732
    %v734 = vpop.f32.mrb[0].mxu0
    %735 = vmatprep.mubr.bf16.mxu0 0
    %736 = vmatmul.mubr.bf16.gmra.mrb[0].mxu0 %v283
    %v737 = vpop.f32.mrb[0].mxu0
    %v738 = vadd.f32 0.0, %v737
    %v739 = vpop.f32.mrb[0].mxu0
    %v740 = vpop.f32.mrb[0].mxu0
    %v741 = vadd.f32 0.0, %v740
    %v742 = vpop.f32.mrb[0].mxu0
    %743 = vmatprep.mubr.bf16.mxu0 0
    %744 = vmatmul.mubr.bf16.gmra.mrb[0].mxu0 %v284
    %v745 = vpop.f32.mrb[0].mxu0
    %v746 = vadd.f32 0.0, %v745
    %v747 = vpop.f32.mrb[0].mxu0
    %v748 = vpop.f32.mrb[0].mxu0
    %v749 = vadd.f32 0.0, %v748
    %v750 = vpop.f32.mrb[0].mxu0
    %751 = vmatprep.mubr.bf16.mxu0 0
    %752 = vmatmul.mubr.bf16.gmra.mrb[0].mxu0 %v285
    %v753 = vpop.f32.mrb[0].mxu0
    %v754 = vadd.f32 0.0, %v753
    %v755 = vpop.f32.mrb[0].mxu0
    %v756 = vpop.f32.mrb[0].mxu0
    %v757 = vadd.f32 0.0, %v756
    %v758 = vpop.f32.mrb[0].mxu0
    %759 = vmatprep.mubr.bf16.mxu0 0
    %760 = vmatmul.mubr.bf16.gmra.mrb[0].mxu0 %v286
    %v761 = vpop.f32.mrb[0].mxu0
    %v762 = vadd.f32 0.0, %v761
    %v763 = vpop.f32.mrb[0].mxu0
    %v764 = vpop.f32.mrb[0].mxu0
    %v765 = vadd.f32 0.0, %v764
    %v766 = vpop.f32.mrb[0].mxu0
    %767 = vmatprep.mubr.bf16.mxu0 0
    %768 = vmatmul.mubr.bf16.gmra.mrb[0].mxu0 %v287
    %v769 = vpop.f32.mrb[0].mxu0
    %v770 = vadd.f32 0.0, %v769
    %v771 = vpop.f32.mrb[0].mxu0
    %v772 = vpop.f32.mrb[0].mxu0
    %v773 = vadd.f32 0.0, %v772
    %v774 = vpop.f32.mrb[0].mxu0
    %775 = vmatprep.mubr.bf16.mxu0 0
    %776 = vmatmul.mubr.bf16.gmra.mrb[0].mxu0 %v288
    %v777 = vpop.f32.mrb[0].mxu0
    %v778 = vadd.f32 0.0, %v777
    %v779 = vpop.f32.mrb[0].mxu0
    %v780 = vpop.f32.mrb[0].mxu0
    %v781 = vadd.f32 0.0, %v780
    %v782 = vpop.f32.mrb[0].mxu0
    %783 = vmatprep.mubr.bf16.mxu0 0
    %784 = vmatmul.mubr.bf16.gmra.mrb[0].mxu0 %v289
    %v785 = vpop.f32.mrb[0].mxu0
    %v786 = vadd.f32 0.0, %v785
    %v787 = vpop.f32.mrb[0].mxu0
    %v788 = vpop.f32.mrb[0].mxu0
    %v789 = vadd.f32 0.0, %v788
    %v790 = vpop.f32.mrb[0].mxu0
    %791 = vmatprep.mubr.bf16.mxu0 0
    %792 = vmatmul.mubr.bf16.gmra.mrb[0].mxu0 %v290
    %v793 = vpop.f32.mrb[0].mxu0
    %v794 = vadd.f32 0.0, %v793
    %v795 = vpop.f32.mrb[0].mxu0
    %v796 = vpop.f32.mrb[0].mxu0
    %v797 = vadd.f32 0.0, %v796
    %v798 = vpop.f32.mrb[0].mxu0
    %799 = vmatprep.mubr.bf16.mxu0 0
    %800 = vmatmul.mubr.bf16.gmra.mrb[0].mxu0 %v291
    %v801 = vpop.f32.mrb[0].mxu0
    %v802 = vadd.f32 0.0, %v801
    %v803 = vpop.f32.mrb[0].mxu0
    %v804 = vpop.f32.mrb[0].mxu0
    %v805 = vadd.f32 0.0, %v804
    %v806 = vpop.f32.mrb[0].mxu0
    %807 = vmatprep.mubr.bf16.mxu0 0
    %808 = vmatmul.mubr.bf16.gmra.mrb[0].mxu0 %v292
    %v809 = vpop.f32.mrb[0].mxu0
    %v810 = vadd.f32 0.0, %v809
    %v811 = vpop.f32.mrb[0].mxu0
    %v812 = vpop.f32.mrb[0].mxu0
    %v813 = vadd.f32 0.0, %v812
    %v814 = vpop.f32.mrb[0].mxu0
    %815 = vmatprep.mubr.bf16.mxu0 0
    %816 = vmatmul.mubr.bf16.gmra.mrb[0].mxu0 %v293
    %v817 = vpop.f32.mrb[0].mxu0
    %v818 = vadd.f32 0.0, %v817
    %v819 = vpop.f32.mrb[0].mxu0
    %v820 = vpop.f32.mrb[0].mxu0
    %v821 = vadd.f32 0.0, %v820
    %v822 = vpop.f32.mrb[0].mxu0
    %823 = vmatprep.mubr.bf16.mxu0 0
    %824 = vmatmul.mubr.bf16.gmra.mrb[0].mxu0 %v294
    %v825 = vpop.f32.mrb[0].mxu0
    %v826 = vadd.f32 0.0, %v825
    %v827 = vpop.f32.mrb[0].mxu0
    %v828 = vpop.f32.mrb[0].mxu0
    %v829 = vadd.f32 0.0, %v828
    %v830 = vpop.f32.mrb[0].mxu0
    %831 = vmatprep.mubr.bf16.mxu0 0
    %832 = vmatmul.mubr.bf16.gmra.mrb[0].mxu0 %v295
    %v833 = vpop.f32.mrb[0].mxu0
    %v834 = vadd.f32 0.0, %v833
    %v835 = vpop.f32.mrb[0].mxu0
    %v836 = vpop.f32.mrb[0].mxu0
    %v837 = vadd.f32 0.0, %v836
    %v838 = vpop.f32.mrb[0].mxu0
    %839 = vmatprep.mubr.bf16.mxu0 0
    %840 = vmatmul.mubr.bf16.gmra.mrb[0].mxu0 %v296
    %v841 = vpop.f32.mrb[0].mxu0
    %v842 = vadd.f32 0.0, %v841
    %v843 = vpop.f32.mrb[0].mxu0
    %v844 = vpop.f32.mrb[0].mxu0
    %v845 = vadd.f32 0.0, %v844
    %v846 = vpop.f32.mrb[0].mxu0
    %847 = vmatprep.mubr.bf16.mxu0 0
    %848 = vmatmul.mubr.bf16.gmra.mrb[0].mxu0 %v297
    %v849 = vpop.f32.mrb[0].mxu0
    %v850 = vadd.f32 0.0, %v849
    %v851 = vpop.f32.mrb[0].mxu0
    %v852 = vpop.f32.mrb[0].mxu0
    %v853 = vadd.f32 0.0, %v852
    %v854 = vpop.f32.mrb[0].mxu0
    %855 = vmatprep.mubr.bf16.mxu0 0
    %856 = vmatmul.mubr.bf16.gmra.mrb[0].mxu0 %v298
    %v857 = vpop.f32.mrb[0].mxu0
    %v858 = vadd.f32 0.0, %v857
    %v859 = vpop.f32.mrb[0].mxu0
    %v860 = vpop.f32.mrb[0].mxu0
    %v861 = vadd.f32 0.0, %v860
    %v862 = vpop.f32.mrb[0].mxu0
    %863 = vmatprep.mubr.bf16.mxu0 0
    %864 = vmatmul.mubr.bf16.gmra.mrb[0].mxu0 %v299
    %v865 = vpop.f32.mrb[0].mxu0
    %v866 = vadd.f32 0.0, %v865
    %v867 = vpop.f32.mrb[0].mxu0
    %v868 = vpop.f32.mrb[0].mxu0
    %v869 = vadd.f32 0.0, %v868
    %v870 = vpop.f32.mrb[0].mxu0
    %871 = vmatprep.mubr.bf16.mxu0 0
    %872 = vmatmul.mubr.bf16.gmra.mrb[0].mxu0 %v300
    %v873 = vpop.f32.mrb[0].mxu0
    %v874 = vadd.f32 0.0, %v873
    %v875 = vpop.f32.mrb[0].mxu0
    %v876 = vpop.f32.mrb[0].mxu0
    %v877 = vadd.f32 0.0, %v876
    %v878 = vpop.f32.mrb[0].mxu0
    %879 = vmatprep.mubr.bf16.mxu0 0
    %880 = vmatmul.mubr.bf16.gmra.mrb[0].mxu0 %v301
    %v881 = vpop.f32.mrb[0].mxu0
    %v882 = vadd.f32 0.0, %v881
    %v883 = vpop.f32.mrb[0].mxu0
    %v884 = vpop.f32.mrb[0].mxu0
    %v885 = vadd.f32 0.0, %v884
    %v886 = vpop.f32.mrb[0].mxu0
    %887 = vmatprep.mubr.bf16.mxu0 0
    %888 = vmatmul.mubr.bf16.gmra.mrb[0].mxu0 %v302
    %v889 = vpop.f32.mrb[0].mxu0
    %v890 = vadd.f32 0.0, %v889
    %v891 = vpop.f32.mrb[0].mxu0
    %v892 = vpop.f32.mrb[0].mxu0
    %v893 = vadd.f32 0.0, %v892
    %v894 = vpop.f32.mrb[0].mxu0
    %895 = vdwg.mxu0
    %v896 = vadd.f32 %v386, %v389
    %v897 = vadd.f32 %v896, %v394
    %v898 = vadd.f32 %v897, %v397
    %v899 = vadd.f32 %v898, %v402
    %v900 = vadd.f32 %v899, %v405
    %v901 = vadd.f32 %v900, %v410
    %v902 = vadd.f32 %v901, %v413
    %v903 = vadd.f32 %v902, %v418
    %v904 = vadd.f32 %v903, %v421
    %v905 = vadd.f32 %v904, %v426
    %v906 = vadd.f32 %v905, %v429
    %v907 = vadd.f32 %v906, %v434
    %v908 = vadd.f32 %v907, %v437
    %v909 = vadd.f32 %v908, %v442
    %v910 = vadd.f32 %v909, %v445
    %v911 = vadd.f32 %v910, %v450
    %v912 = vadd.f32 %v911, %v453
    %v913 = vadd.f32 %v912, %v458
    %v914 = vadd.f32 %v913, %v461
    %v915 = vadd.f32 %v914, %v466
    %v916 = vadd.f32 %v915, %v469
    %v917 = vadd.f32 %v916, %v474
    %v918 = vadd.f32 %v917, %v477
    %v919 = vadd.f32 %v918, %v482
    %v920 = vadd.f32 %v919, %v485
    %v921 = vadd.f32 %v920, %v490
    %v922 = vadd.f32 %v921, %v493
    %v923 = vadd.f32 %v922, %v498
    %v924 = vadd.f32 %v923, %v501
    %v925 = vadd.f32 %v924, %v506
    %v926 = vadd.f32 %v925, %v509
    %v927 = vadd.f32 %v926, %v514
    %v928 = vadd.f32 %v927, %v517
    %v929 = vadd.f32 %v928, %v522
    %v930 = vadd.f32 %v929, %v525
    %v931 = vadd.f32 %v930, %v530
    %v932 = vadd.f32 %v931, %v533
    %v933 = vadd.f32 %v932, %v538
    %v934 = vadd.f32 %v933, %v541
    %v935 = vadd.f32 %v934, %v546
    %v936 = vadd.f32 %v935, %v549
    %v937 = vadd.f32 %v936, %v554
    %v938 = vadd.f32 %v937, %v557
    %v939 = vadd.f32 %v938, %v562
    %v940 = vadd.f32 %v939, %v565
    %v941 = vadd.f32 %v940, %v570
    %v942 = vadd.f32 %v941, %v573
    %v943 = vadd.f32 %v942, %v578
    %v944 = vadd.f32 %v943, %v581
    %v945 = vadd.f32 %v944, %v586
    %v946 = vadd.f32 %v945, %v589
    %v947 = vadd.f32 %v946, %v594
    %v948 = vadd.f32 %v947, %v597
    %v949 = vadd.f32 %v948, %v602
    %v950 = vadd.f32 %v949, %v605
    %v951 = vadd.f32 %v950, %v610
    %v952 = vadd.f32 %v951, %v613
    %v953 = vadd.f32 %v952, %v618
    %v954 = vadd.f32 %v953, %v621
    %v955 = vadd.f32 %v954, %v626
    %v956 = vadd.f32 %v955, %v629
    %v957 = vadd.f32 %v956, %v634
    %v958 = vadd.f32 %v957, %v637
    %v959 = vadd.f32 %v958, %v642
    %v960 = vadd.f32 %v959, %v645
    %v961 = vadd.f32 %v960, %v650
    %v962 = vadd.f32 %v961, %v653
    %v963 = vadd.f32 %v962, %v658
    %v964 = vadd.f32 %v963, %v661
    %v965 = vadd.f32 %v964, %v666
    %v966 = vadd.f32 %v965, %v669
    %v967 = vadd.f32 %v966, %v674
    %v968 = vadd.f32 %v967, %v677
    %v969 = vadd.f32 %v968, %v682
    %v970 = vadd.f32 %v969, %v685
    %v971 = vadd.f32 %v970, %v690
    %v972 = vadd.f32 %v971, %v693
    %v973 = vadd.f32 %v972, %v698
    %v974 = vadd.f32 %v973, %v701
    %v975 = vadd.f32 %v974, %v706
    %v976 = vadd.f32 %v975, %v709
    %v977 = vadd.f32 %v976, %v714
    %v978 = vadd.f32 %v977, %v717
    %v979 = vadd.f32 %v978, %v722
    %v980 = vadd.f32 %v979, %v725
    %v981 = vadd.f32 %v980, %v730
    %v982 = vadd.f32 %v981, %v733
    %v983 = vadd.f32 %v982, %v738
    %v984 = vadd.f32 %v983, %v741
    %v985 = vadd.f32 %v984, %v746
    %v986 = vadd.f32 %v985, %v749
    %v987 = vadd.f32 %v986, %v754
    %v988 = vadd.f32 %v987, %v757
    %v989 = vadd.f32 %v988, %v762
    %v990 = vadd.f32 %v989, %v765
    %v991 = vadd.f32 %v990, %v770
    %v992 = vadd.f32 %v991, %v773
    %v993 = vadd.f32 %v992, %v778
    %v994 = vadd.f32 %v993, %v781
    %v995 = vadd.f32 %v994, %v786
    %v996 = vadd.f32 %v995, %v789
    %v997 = vadd.f32 %v996, %v794
    %v998 = vadd.f32 %v997, %v797
    %v999 = vadd.f32 %v998, %v802
    %v1000 = vadd.f32 %v999, %v805
    %v1001 = vadd.f32 %v1000, %v810
    %v1002 = vadd.f32 %v1001, %v813
    %v1003 = vadd.f32 %v1002, %v818
    %v1004 = vadd.f32 %v1003, %v821
    %v1005 = vadd.f32 %v1004, %v826
    %v1006 = vadd.f32 %v1005, %v829
    %v1007 = vadd.f32 %v1006, %v834
    %v1008 = vadd.f32 %v1007, %v837
    %v1009 = vadd.f32 %v1008, %v842
    %v1010 = vadd.f32 %v1009, %v845
    %v1011 = vadd.f32 %v1010, %v850
    %v1012 = vadd.f32 %v1011, %v853
    %v1013 = vadd.f32 %v1012, %v858
    %v1014 = vadd.f32 %v1013, %v861
    %v1015 = vadd.f32 %v1014, %v866
    %v1016 = vadd.f32 %v1015, %v869
    %v1017 = vadd.f32 %v1016, %v874
    %v1018 = vadd.f32 %v1017, %v877
    %v1019 = vadd.f32 %v1018, %v882
    %v1020 = vadd.f32 %v1019, %v885
    %v1021 = vadd.f32 %v1020, %v890
    %v1022 = vadd.f32 %v1021, %v893
    %v1023 = vrot.slane %v1022, 4
    %v1024 = vadd.f32 %v1022, %v1023
    %v1025 = vrot.slane %v1024, 2
    %v1026 = vadd.f32 %v1024, %v1025
    %v1027 = vrot.slane %v1026, 1
    %v1028 = vadd.f32 %v1026, %v1027
    %v1029 = vmul.f32 %v386, %v386
    %v1030 = vmul.f32 %v389, %v389
    %v1031 = vmul.f32 %v394, %v394
    %v1032 = vmul.f32 %v397, %v397
    %v1033 = vmul.f32 %v402, %v402
    %v1034 = vmul.f32 %v405, %v405
    %v1035 = vmul.f32 %v410, %v410
    %v1036 = vmul.f32 %v413, %v413
    %v1037 = vmul.f32 %v418, %v418
    %v1038 = vmul.f32 %v421, %v421
    %v1039 = vmul.f32 %v426, %v426
    %v1040 = vmul.f32 %v429, %v429
    %v1041 = vmul.f32 %v434, %v434
    %v1042 = vmul.f32 %v437, %v437
    %v1043 = vmul.f32 %v442, %v442
    %v1044 = vmul.f32 %v445, %v445
    %v1045 = vmul.f32 %v450, %v450
    %v1046 = vmul.f32 %v453, %v453
    %v1047 = vmul.f32 %v458, %v458
    %v1048 = vmul.f32 %v461, %v461
    %v1049 = vmul.f32 %v466, %v466
    %v1050 = vmul.f32 %v469, %v469
    %v1051 = vmul.f32 %v474, %v474
    %v1052 = vmul.f32 %v477, %v477
    %v1053 = vmul.f32 %v482, %v482
    %v1054 = vmul.f32 %v485, %v485
    %v1055 = vmul.f32 %v490, %v490
    %v1056 = vmul.f32 %v493, %v493
    %v1057 = vmul.f32 %v498, %v498
    %v1058 = vmul.f32 %v501, %v501
    %v1059 = vmul.f32 %v506, %v506
    %v1060 = vmul.f32 %v509, %v509
    %v1061 = vmul.f32 %v514, %v514
    %v1062 = vmul.f32 %v517, %v517
    %v1063 = vmul.f32 %v522, %v522
    %v1064 = vmul.f32 %v525, %v525
    %v1065 = vmul.f32 %v530, %v530
    %v1066 = vmul.f32 %v533, %v533
    %v1067 = vmul.f32 %v538, %v538
    %v1068 = vmul.f32 %v541, %v541
    %v1069 = vmul.f32 %v546, %v546
    %v1070 = vmul.f32 %v549, %v549
    %v1071 = vmul.f32 %v554, %v554
    %v1072 = vmul.f32 %v557, %v557
    %v1073 = vmul.f32 %v562, %v562
    %v1074 = vmul.f32 %v565, %v565
    %v1075 = vmul.f32 %v570, %v570
    %v1076 = vmul.f32 %v573, %v573
    %v1077 = vmul.f32 %v578, %v578
    %v1078 = vmul.f32 %v581, %v581
    %v1079 = vmul.f32 %v586, %v586
    %v1080 = vmul.f32 %v589, %v589
    %v1081 = vmul.f32 %v594, %v594
    %v1082 = vmul.f32 %v597, %v597
    %v1083 = vmul.f32 %v602, %v602
    %v1084 = vmul.f32 %v605, %v605
    %v1085 = vmul.f32 %v610, %v610
    %v1086 = vmul.f32 %v613, %v613
    %v1087 = vmul.f32 %v618, %v618
    %v1088 = vmul.f32 %v621, %v621
    %v1089 = vmul.f32 %v626, %v626
    %v1090 = vmul.f32 %v629, %v629
    %v1091 = vmul.f32 %v634, %v634
    %v1092 = vmul.f32 %v637, %v637
    %v1093 = vmul.f32 %v642, %v642
    %v1094 = vmul.f32 %v645, %v645
    %v1095 = vmul.f32 %v650, %v650
    %v1096 = vmul.f32 %v653, %v653
    %v1097 = vmul.f32 %v658, %v658
    %v1098 = vmul.f32 %v661, %v661
    %v1099 = vmul.f32 %v666, %v666
    %v1100 = vmul.f32 %v669, %v669
    %v1101 = vmul.f32 %v674, %v674
    %v1102 = vmul.f32 %v677, %v677
    %v1103 = vmul.f32 %v682, %v682
    %v1104 = vmul.f32 %v685, %v685
    %v1105 = vmul.f32 %v690, %v690
    %v1106 = vmul.f32 %v693, %v693
    %v1107 = vmul.f32 %v698, %v698
    %v1108 = vmul.f32 %v701, %v701
    %v1109 = vmul.f32 %v706, %v706
    %v1110 = vmul.f32 %v709, %v709
    %v1111 = vmul.f32 %v714, %v714
    %v1112 = vmul.f32 %v717, %v717
    %v1113 = vmul.f32 %v722, %v722
    %v1114 = vmul.f32 %v725, %v725
    %v1115 = vmul.f32 %v730, %v730
    %v1116 = vmul.f32 %v733, %v733
    %v1117 = vmul.f32 %v738, %v738
    %v1118 = vmul.f32 %v741, %v741
    %v1119 = vmul.f32 %v746, %v746
    %v1120 = vmul.f32 %v749, %v749
    %v1121 = vmul.f32 %v754, %v754
    %v1122 = vmul.f32 %v757, %v757
    %v1123 = vmul.f32 %v762, %v762
    %v1124 = vmul.f32 %v765, %v765
    %v1125 = vmul.f32 %v770, %v770
    %v1126 = vmul.f32 %v773, %v773
    %v1127 = vmul.f32 %v778, %v778
    %v1128 = vmul.f32 %v781, %v781
    %v1129 = vmul.f32 %v786, %v786
    %v1130 = vmul.f32 %v789, %v789
    %v1131 = vmul.f32 %v794, %v794
    %v1132 = vmul.f32 %v797, %v797
    %v1133 = vmul.f32 %v802, %v802
    %v1134 = vmul.f32 %v805, %v805
    %v1135 = vmul.f32 %v810, %v810
    %v1136 = vmul.f32 %v813, %v813
    %v1137 = vmul.f32 %v818, %v818
    %v1138 = vmul.f32 %v821, %v821
    %v1139 = vmul.f32 %v826, %v826
    %v1140 = vmul.f32 %v829, %v829
    %v1141 = vmul.f32 %v834, %v834
    %v1142 = vmul.f32 %v837, %v837
    %v1143 = vmul.f32 %v842, %v842
    %v1144 = vmul.f32 %v845, %v845
    %v1145 = vmul.f32 %v850, %v850
    %v1146 = vmul.f32 %v853, %v853
    %v1147 = vmul.f32 %v858, %v858
    %v1148 = vmul.f32 %v861, %v861
    %v1149 = vmul.f32 %v866, %v866
    %v1150 = vmul.f32 %v869, %v869
    %v1151 = vmul.f32 %v874, %v874
    %v1152 = vmul.f32 %v877, %v877
    %v1153 = vmul.f32 %v882, %v882
    %v1154 = vmul.f32 %v885, %v885
    %v1155 = vmul.f32 %v890, %v890
    %v1156 = vmul.f32 %v893, %v893
    %v1157 = vadd.f32 %v1029, %v1030
    %v1158 = vadd.f32 %v1157, %v1031
    %v1159 = vadd.f32 %v1158, %v1032
    %v1160 = vadd.f32 %v1159, %v1033
    %v1161 = vadd.f32 %v1160, %v1034
    %v1162 = vadd.f32 %v1161, %v1035
    %v1163 = vadd.f32 %v1162, %v1036
    %v1164 = vadd.f32 %v1163, %v1037
    %v1165 = vadd.f32 %v1164, %v1038
    %v1166 = vadd.f32 %v1165, %v1039
    %v1167 = vadd.f32 %v1166, %v1040
    %v1168 = vadd.f32 %v1167, %v1041
    %v1169 = vadd.f32 %v1168, %v1042
    %v1170 = vadd.f32 %v1169, %v1043
    %v1171 = vadd.f32 %v1170, %v1044
    %v1172 = vadd.f32 %v1171, %v1045
    %v1173 = vadd.f32 %v1172, %v1046
    %v1174 = vadd.f32 %v1173, %v1047
    %v1175 = vadd.f32 %v1174, %v1048
    %v1176 = vadd.f32 %v1175, %v1049
    %v1177 = vadd.f32 %v1176, %v1050
    %v1178 = vadd.f32 %v1177, %v1051
    %v1179 = vadd.f32 %v1178, %v1052
    %v1180 = vadd.f32 %v1179, %v1053
    %v1181 = vadd.f32 %v1180, %v1054
    %v1182 = vadd.f32 %v1181, %v1055
    %v1183 = vadd.f32 %v1182, %v1056
    %v1184 = vadd.f32 %v1183, %v1057
    %v1185 = vadd.f32 %v1184, %v1058
    %v1186 = vadd.f32 %v1185, %v1059
    %v1187 = vadd.f32 %v1186, %v1060
    %v1188 = vadd.f32 %v1187, %v1061
    %v1189 = vadd.f32 %v1188, %v1062
    %v1190 = vadd.f32 %v1189, %v1063
    %v1191 = vadd.f32 %v1190, %v1064
    %v1192 = vadd.f32 %v1191, %v1065
    %v1193 = vadd.f32 %v1192, %v1066
    %v1194 = vadd.f32 %v1193, %v1067
    %v1195 = vadd.f32 %v1194, %v1068
    %v1196 = vadd.f32 %v1195, %v1069
    %v1197 = vadd.f32 %v1196, %v1070
    %v1198 = vadd.f32 %v1197, %v1071
    %v1199 = vadd.f32 %v1198, %v1072
    %v1200 = vadd.f32 %v1199, %v1073
    %v1201 = vadd.f32 %v1200, %v1074
    %v1202 = vadd.f32 %v1201, %v1075
    %v1203 = vadd.f32 %v1202, %v1076
    %v1204 = vadd.f32 %v1203, %v1077
    %v1205 = vadd.f32 %v1204, %v1078
    %v1206 = vadd.f32 %v1205, %v1079
    %v1207 = vadd.f32 %v1206, %v1080
    %v1208 = vadd.f32 %v1207, %v1081
    %v1209 = vadd.f32 %v1208, %v1082
    %v1210 = vadd.f32 %v1209, %v1083
    %v1211 = vadd.f32 %v1210, %v1084
    %v1212 = vadd.f32 %v1211, %v1085
    %v1213 = vadd.f32 %v1212, %v1086
    %v1214 = vadd.f32 %v1213, %v1087
    %v1215 = vadd.f32 %v1214, %v1088
    %v1216 = vadd.f32 %v1215, %v1089
    %v1217 = vadd.f32 %v1216, %v1090
    %v1218 = vadd.f32 %v1217, %v1091
    %v1219 = vadd.f32 %v1218, %v1092
    %v1220 = vadd.f32 %v1219, %v1093
    %v1221 = vadd.f32 %v1220, %v1094
    %v1222 = vadd.f32 %v1221, %v1095
    %v1223 = vadd.f32 %v1222, %v1096
    %v1224 = vadd.f32 %v1223, %v1097
    %v1225 = vadd.f32 %v1224, %v1098
    %v1226 = vadd.f32 %v1225, %v1099
    %v1227 = vadd.f32 %v1226, %v1100
    %v1228 = vadd.f32 %v1227, %v1101
    %v1229 = vadd.f32 %v1228, %v1102
    %v1230 = vadd.f32 %v1229, %v1103
    %v1231 = vadd.f32 %v1230, %v1104
    %v1232 = vadd.f32 %v1231, %v1105
    %v1233 = vadd.f32 %v1232, %v1106
    %v1234 = vadd.f32 %v1233, %v1107
    %v1235 = vadd.f32 %v1234, %v1108
    %v1236 = vadd.f32 %v1235, %v1109
    %v1237 = vadd.f32 %v1236, %v1110
    %v1238 = vadd.f32 %v1237, %v1111
    %v1239 = vadd.f32 %v1238, %v1112
    %v1240 = vadd.f32 %v1239, %v1113
    %v1241 = vadd.f32 %v1240, %v1114
    %v1242 = vadd.f32 %v1241, %v1115
    %v1243 = vadd.f32 %v1242, %v1116
    %v1244 = vadd.f32 %v1243, %v1117
    %v1245 = vadd.f32 %v1244, %v1118
    %v1246 = vadd.f32 %v1245, %v1119
    %v1247 = vadd.f32 %v1246, %v1120
    %v1248 = vadd.f32 %v1247, %v1121
    %v1249 = vadd.f32 %v1248, %v1122
    %v1250 = vadd.f32 %v1249, %v1123
    %v1251 = vadd.f32 %v1250, %v1124
    %v1252 = vadd.f32 %v1251, %v1125
    %v1253 = vadd.f32 %v1252, %v1126
    %v1254 = vadd.f32 %v1253, %v1127
    %v1255 = vadd.f32 %v1254, %v1128
    %v1256 = vadd.f32 %v1255, %v1129
    %v1257 = vadd.f32 %v1256, %v1130
    %v1258 = vadd.f32 %v1257, %v1131
    %v1259 = vadd.f32 %v1258, %v1132
    %v1260 = vadd.f32 %v1259, %v1133
    %v1261 = vadd.f32 %v1260, %v1134
    %v1262 = vadd.f32 %v1261, %v1135
    %v1263 = vadd.f32 %v1262, %v1136
    %v1264 = vadd.f32 %v1263, %v1137
    %v1265 = vadd.f32 %v1264, %v1138
    %v1266 = vadd.f32 %v1265, %v1139
    %v1267 = vadd.f32 %v1266, %v1140
    %v1268 = vadd.f32 %v1267, %v1141
    %v1269 = vadd.f32 %v1268, %v1142
    %v1270 = vadd.f32 %v1269, %v1143
    %v1271 = vadd.f32 %v1270, %v1144
    %v1272 = vadd.f32 %v1271, %v1145
    %v1273 = vadd.f32 %v1272, %v1146
    %v1274 = vadd.f32 %v1273, %v1147
    %v1275 = vadd.f32 %v1274, %v1148
    %v1276 = vadd.f32 %v1275, %v1149
    %v1277 = vadd.f32 %v1276, %v1150
    %v1278 = vadd.f32 %v1277, %v1151
    %v1279 = vadd.f32 %v1278, %v1152
    %v1280 = vadd.f32 %v1279, %v1153
    %v1281 = vadd.f32 %v1280, %v1154
    %v1282 = vadd.f32 %v1281, %v1155
    %v1283 = vadd.f32 %v1282, %v1156
    %v1284 = vrot.slane %v1283, 4
    %v1285 = vadd.f32 %v1283, %v1284
    %v1286 = vrot.slane %v1285, 2
    %v1287 = vadd.f32 %v1285, %v1286
    %v1288 = vrot.slane %v1287, 1
    %v1289 = vadd.f32 %v1287, %v1288
    %v1290 = vmul.f32 %v1028, 0.0009765625
    %v1291 = vmul.f32 %v1289, 0.0009765625
    %v1292 = vmul.f32 %v1290, %v1290
    %v1293 = vsub.f32 %v1291, %v1292
    %v1294 = vmax.f32 %v1293, 0.0
    %v1295 = vadd.f32 %v1294, 1e-05
    %v1296 = vrsqrt.pop %v1295
    %v1297 = vmul.f32 %v237, %v1296
    %v1298 = vmul.f32 %v1290, %v1297
    %v1299 = vsub.f32 %v238, %v1298
    %v1300 = vmul.f32 %v386, %v1297
    %v1301 = vmul.f32 %v389, %v1297
    %v1302 = vmul.f32 %v394, %v1297
    %v1303 = vmul.f32 %v397, %v1297
    %v1304 = vmul.f32 %v402, %v1297
    %v1305 = vmul.f32 %v405, %v1297
    %v1306 = vmul.f32 %v410, %v1297
    %v1307 = vmul.f32 %v413, %v1297
    %v1308 = vmul.f32 %v418, %v1297
    %v1309 = vmul.f32 %v421, %v1297
    %v1310 = vmul.f32 %v426, %v1297
    %v1311 = vmul.f32 %v429, %v1297
    %v1312 = vmul.f32 %v434, %v1297
    %v1313 = vmul.f32 %v437, %v1297
    %v1314 = vmul.f32 %v442, %v1297
    %v1315 = vmul.f32 %v445, %v1297
    %v1316 = vmul.f32 %v450, %v1297
    %v1317 = vmul.f32 %v453, %v1297
    %v1318 = vmul.f32 %v458, %v1297
    %v1319 = vmul.f32 %v461, %v1297
    %v1320 = vmul.f32 %v466, %v1297
    %v1321 = vmul.f32 %v469, %v1297
    %v1322 = vmul.f32 %v474, %v1297
    %v1323 = vmul.f32 %v477, %v1297
    %v1324 = vmul.f32 %v482, %v1297
    %v1325 = vmul.f32 %v485, %v1297
    %v1326 = vmul.f32 %v490, %v1297
    %v1327 = vmul.f32 %v493, %v1297
    %v1328 = vmul.f32 %v498, %v1297
    %v1329 = vmul.f32 %v501, %v1297
    %v1330 = vmul.f32 %v506, %v1297
    %v1331 = vmul.f32 %v509, %v1297
    %v1332 = vmul.f32 %v514, %v1297
    %v1333 = vmul.f32 %v517, %v1297
    %v1334 = vmul.f32 %v522, %v1297
    %v1335 = vmul.f32 %v525, %v1297
    %v1336 = vmul.f32 %v530, %v1297
    %v1337 = vmul.f32 %v533, %v1297
    %v1338 = vmul.f32 %v538, %v1297
    %v1339 = vmul.f32 %v541, %v1297
    %v1340 = vmul.f32 %v546, %v1297
    %v1341 = vmul.f32 %v549, %v1297
    %v1342 = vmul.f32 %v554, %v1297
    %v1343 = vmul.f32 %v557, %v1297
    %v1344 = vmul.f32 %v562, %v1297
    %v1345 = vmul.f32 %v565, %v1297
    %v1346 = vmul.f32 %v570, %v1297
    %v1347 = vmul.f32 %v573, %v1297
    %v1348 = vmul.f32 %v578, %v1297
    %v1349 = vmul.f32 %v581, %v1297
    %v1350 = vmul.f32 %v586, %v1297
    %v1351 = vmul.f32 %v589, %v1297
    %v1352 = vmul.f32 %v594, %v1297
    %v1353 = vmul.f32 %v597, %v1297
    %v1354 = vmul.f32 %v602, %v1297
    %v1355 = vmul.f32 %v605, %v1297
    %v1356 = vmul.f32 %v610, %v1297
    %v1357 = vmul.f32 %v613, %v1297
    %v1358 = vmul.f32 %v618, %v1297
    %v1359 = vmul.f32 %v621, %v1297
    %v1360 = vmul.f32 %v626, %v1297
    %v1361 = vmul.f32 %v629, %v1297
    %v1362 = vmul.f32 %v634, %v1297
    %v1363 = vmul.f32 %v637, %v1297
    %v1364 = vmul.f32 %v642, %v1297
    %v1365 = vmul.f32 %v645, %v1297
    %v1366 = vmul.f32 %v650, %v1297
    %v1367 = vmul.f32 %v653, %v1297
    %v1368 = vmul.f32 %v658, %v1297
    %v1369 = vmul.f32 %v661, %v1297
    %v1370 = vmul.f32 %v666, %v1297
    %v1371 = vmul.f32 %v669, %v1297
    %v1372 = vmul.f32 %v674, %v1297
    %v1373 = vmul.f32 %v677, %v1297
    %v1374 = vmul.f32 %v682, %v1297
    %v1375 = vmul.f32 %v685, %v1297
    %v1376 = vmul.f32 %v690, %v1297
    %v1377 = vmul.f32 %v693, %v1297
    %v1378 = vmul.f32 %v698, %v1297
    %v1379 = vmul.f32 %v701, %v1297
    %v1380 = vmul.f32 %v706, %v1297
    %v1381 = vmul.f32 %v709, %v1297
    %v1382 = vmul.f32 %v714, %v1297
    %v1383 = vmul.f32 %v717, %v1297
    %v1384 = vmul.f32 %v722, %v1297
    %v1385 = vmul.f32 %v725, %v1297
    %v1386 = vmul.f32 %v730, %v1297
    %v1387 = vmul.f32 %v733, %v1297
    %v1388 = vmul.f32 %v738, %v1297
    %v1389 = vmul.f32 %v741, %v1297
    %v1390 = vmul.f32 %v746, %v1297
    %v1391 = vmul.f32 %v749, %v1297
    %v1392 = vmul.f32 %v754, %v1297
    %v1393 = vmul.f32 %v757, %v1297
    %v1394 = vmul.f32 %v762, %v1297
    %v1395 = vmul.f32 %v765, %v1297
    %v1396 = vmul.f32 %v770, %v1297
    %v1397 = vmul.f32 %v773, %v1297
    %v1398 = vmul.f32 %v778, %v1297
    %v1399 = vmul.f32 %v781, %v1297
    %v1400 = vmul.f32 %v786, %v1297
    %v1401 = vmul.f32 %v789, %v1297
    %v1402 = vmul.f32 %v794, %v1297
    %v1403 = vmul.f32 %v797, %v1297
    %v1404 = vmul.f32 %v802, %v1297
    %v1405 = vmul.f32 %v805, %v1297
    %v1406 = vmul.f32 %v810, %v1297
    %v1407 = vmul.f32 %v813, %v1297
    %v1408 = vmul.f32 %v818, %v1297
    %v1409 = vmul.f32 %v821, %v1297
    %v1410 = vmul.f32 %v826, %v1297
    %v1411 = vmul.f32 %v829, %v1297
    %v1412 = vmul.f32 %v834, %v1297
    %v1413 = vmul.f32 %v837, %v1297
    %v1414 = vmul.f32 %v842, %v1297
    %v1415 = vmul.f32 %v845, %v1297
    %v1416 = vmul.f32 %v850, %v1297
    %v1417 = vmul.f32 %v853, %v1297
    %v1418 = vmul.f32 %v858, %v1297
    %v1419 = vmul.f32 %v861, %v1297
    %v1420 = vmul.f32 %v866, %v1297
    %v1421 = vmul.f32 %v869, %v1297
    %v1422 = vmul.f32 %v874, %v1297
    %v1423 = vmul.f32 %v877, %v1297
    %v1424 = vmul.f32 %v882, %v1297
    %v1425 = vmul.f32 %v885, %v1297
    %v1426 = vmul.f32 %v890, %v1297
    %v1427 = vmul.f32 %v893, %v1297
    %v1428 = vadd.f32 %v1300, %v1299
    %v1429 = vadd.f32 %v1301, %v1299
    %v1430 = vadd.f32 %v1302, %v1299
    %v1431 = vadd.f32 %v1303, %v1299
    %v1432 = vadd.f32 %v1304, %v1299
    %v1433 = vadd.f32 %v1305, %v1299
    %v1434 = vadd.f32 %v1306, %v1299
    %v1435 = vadd.f32 %v1307, %v1299
    %v1436 = vadd.f32 %v1308, %v1299
    %v1437 = vadd.f32 %v1309, %v1299
    %v1438 = vadd.f32 %v1310, %v1299
    %v1439 = vadd.f32 %v1311, %v1299
    %v1440 = vadd.f32 %v1312, %v1299
    %v1441 = vadd.f32 %v1313, %v1299
    %v1442 = vadd.f32 %v1314, %v1299
    %v1443 = vadd.f32 %v1315, %v1299
    %v1444 = vadd.f32 %v1316, %v1299
    %v1445 = vadd.f32 %v1317, %v1299
    %v1446 = vadd.f32 %v1318, %v1299
    %v1447 = vadd.f32 %v1319, %v1299
    %v1448 = vadd.f32 %v1320, %v1299
    %v1449 = vadd.f32 %v1321, %v1299
    %v1450 = vadd.f32 %v1322, %v1299
    %v1451 = vadd.f32 %v1323, %v1299
    %v1452 = vadd.f32 %v1324, %v1299
    %v1453 = vadd.f32 %v1325, %v1299
    %v1454 = vadd.f32 %v1326, %v1299
    %v1455 = vadd.f32 %v1327, %v1299
    %v1456 = vadd.f32 %v1328, %v1299
    %v1457 = vadd.f32 %v1329, %v1299
    %v1458 = vadd.f32 %v1330, %v1299
    %v1459 = vadd.f32 %v1331, %v1299
    %v1460 = vadd.f32 %v1332, %v1299
    %v1461 = vadd.f32 %v1333, %v1299
    %v1462 = vadd.f32 %v1334, %v1299
    %v1463 = vadd.f32 %v1335, %v1299
    %v1464 = vadd.f32 %v1336, %v1299
    %v1465 = vadd.f32 %v1337, %v1299
    %v1466 = vadd.f32 %v1338, %v1299
    %v1467 = vadd.f32 %v1339, %v1299
    %v1468 = vadd.f32 %v1340, %v1299
    %v1469 = vadd.f32 %v1341, %v1299
    %v1470 = vadd.f32 %v1342, %v1299
    %v1471 = vadd.f32 %v1343, %v1299
    %v1472 = vadd.f32 %v1344, %v1299
    %v1473 = vadd.f32 %v1345, %v1299
    %v1474 = vadd.f32 %v1346, %v1299
    %v1475 = vadd.f32 %v1347, %v1299
    %v1476 = vadd.f32 %v1348, %v1299
    %v1477 = vadd.f32 %v1349, %v1299
    %v1478 = vadd.f32 %v1350, %v1299
    %v1479 = vadd.f32 %v1351, %v1299
    %v1480 = vadd.f32 %v1352, %v1299
    %v1481 = vadd.f32 %v1353, %v1299
    %v1482 = vadd.f32 %v1354, %v1299
    %v1483 = vadd.f32 %v1355, %v1299
    %v1484 = vadd.f32 %v1356, %v1299
    %v1485 = vadd.f32 %v1357, %v1299
    %v1486 = vadd.f32 %v1358, %v1299
    %v1487 = vadd.f32 %v1359, %v1299
    %v1488 = vadd.f32 %v1360, %v1299
    %v1489 = vadd.f32 %v1361, %v1299
    %v1490 = vadd.f32 %v1362, %v1299
    %v1491 = vadd.f32 %v1363, %v1299
    %v1492 = vadd.f32 %v1364, %v1299
    %v1493 = vadd.f32 %v1365, %v1299
    %v1494 = vadd.f32 %v1366, %v1299
    %v1495 = vadd.f32 %v1367, %v1299
    %v1496 = vadd.f32 %v1368, %v1299
    %v1497 = vadd.f32 %v1369, %v1299
    %v1498 = vadd.f32 %v1370, %v1299
    %v1499 = vadd.f32 %v1371, %v1299
    %v1500 = vadd.f32 %v1372, %v1299
    %v1501 = vadd.f32 %v1373, %v1299
    %v1502 = vadd.f32 %v1374, %v1299
    %v1503 = vadd.f32 %v1375, %v1299
    %v1504 = vadd.f32 %v1376, %v1299
    %v1505 = vadd.f32 %v1377, %v1299
    %v1506 = vadd.f32 %v1378, %v1299
    %v1507 = vadd.f32 %v1379, %v1299
    %v1508 = vadd.f32 %v1380, %v1299
    %v1509 = vadd.f32 %v1381, %v1299
    %v1510 = vadd.f32 %v1382, %v1299
    %v1511 = vadd.f32 %v1383, %v1299
    %v1512 = vadd.f32 %v1384, %v1299
    %v1513 = vadd.f32 %v1385, %v1299
    %v1514 = vadd.f32 %v1386, %v1299
    %v1515 = vadd.f32 %v1387, %v1299
    %v1516 = vadd.f32 %v1388, %v1299
    %v1517 = vadd.f32 %v1389, %v1299
    %v1518 = vadd.f32 %v1390, %v1299
    %v1519 = vadd.f32 %v1391, %v1299
    %v1520 = vadd.f32 %v1392, %v1299
    %v1521 = vadd.f32 %v1393, %v1299
    %v1522 = vadd.f32 %v1394, %v1299
    %v1523 = vadd.f32 %v1395, %v1299
    %v1524 = vadd.f32 %v1396, %v1299
    %v1525 = vadd.f32 %v1397, %v1299
    %v1526 = vadd.f32 %v1398, %v1299
    %v1527 = vadd.f32 %v1399, %v1299
    %v1528 = vadd.f32 %v1400, %v1299
    %v1529 = vadd.f32 %v1401, %v1299
    %v1530 = vadd.f32 %v1402, %v1299
    %v1531 = vadd.f32 %v1403, %v1299
    %v1532 = vadd.f32 %v1404, %v1299
    %v1533 = vadd.f32 %v1405, %v1299
    %v1534 = vadd.f32 %v1406, %v1299
    %v1535 = vadd.f32 %v1407, %v1299
    %v1536 = vadd.f32 %v1408, %v1299
    %v1537 = vadd.f32 %v1409, %v1299
    %v1538 = vadd.f32 %v1410, %v1299
    %v1539 = vadd.f32 %v1411, %v1299
    %v1540 = vadd.f32 %v1412, %v1299
    %v1541 = vadd.f32 %v1413, %v1299
    %v1542 = vadd.f32 %v1414, %v1299
    %v1543 = vadd.f32 %v1415, %v1299
    %v1544 = vadd.f32 %v1416, %v1299
    %v1545 = vadd.f32 %v1417, %v1299
    %v1546 = vadd.f32 %v1418, %v1299
    %v1547 = vadd.f32 %v1419, %v1299
    %v1548 = vadd.f32 %v1420, %v1299
    %v1549 = vadd.f32 %v1421, %v1299
    %v1550 = vadd.f32 %v1422, %v1299
    %v1551 = vadd.f32 %v1423, %v1299
    %v1552 = vadd.f32 %v1424, %v1299
    %v1553 = vadd.f32 %v1425, %v1299
    %v1554 = vadd.f32 %v1426, %v1299
    %v1555 = vadd.f32 %v1427, %v1299
    %v1556 = vmax.f32 %v1428, 0.0
    %v1557 = vmax.f32 %v1429, 0.0
    %v1558 = vmax.f32 %v1430, 0.0
    %v1559 = vmax.f32 %v1431, 0.0
    %v1560 = vmax.f32 %v1432, 0.0
    %v1561 = vmax.f32 %v1433, 0.0
    %v1562 = vmax.f32 %v1434, 0.0
    %v1563 = vmax.f32 %v1435, 0.0
    %v1564 = vmax.f32 %v1436, 0.0
    %v1565 = vmax.f32 %v1437, 0.0
    %v1566 = vmax.f32 %v1438, 0.0
    %v1567 = vmax.f32 %v1439, 0.0
    %v1568 = vmax.f32 %v1440, 0.0
    %v1569 = vmax.f32 %v1441, 0.0
    %v1570 = vmax.f32 %v1442, 0.0
    %v1571 = vmax.f32 %v1443, 0.0
    %v1572 = vmax.f32 %v1444, 0.0
    %v1573 = vmax.f32 %v1445, 0.0
    %v1574 = vmax.f32 %v1446, 0.0
    %v1575 = vmax.f32 %v1447, 0.0
    %v1576 = vmax.f32 %v1448, 0.0
    %v1577 = vmax.f32 %v1449, 0.0
    %v1578 = vmax.f32 %v1450, 0.0
    %v1579 = vmax.f32 %v1451, 0.0
    %v1580 = vmax.f32 %v1452, 0.0
    %v1581 = vmax.f32 %v1453, 0.0
    %v1582 = vmax.f32 %v1454, 0.0
    %v1583 = vmax.f32 %v1455, 0.0
    %v1584 = vmax.f32 %v1456, 0.0
    %v1585 = vmax.f32 %v1457, 0.0
    %v1586 = vmax.f32 %v1458, 0.0
    %v1587 = vmax.f32 %v1459, 0.0
    %v1588 = vmax.f32 %v1460, 0.0
    %v1589 = vmax.f32 %v1461, 0.0
    %v1590 = vmax.f32 %v1462, 0.0
    %v1591 = vmax.f32 %v1463, 0.0
    %v1592 = vmax.f32 %v1464, 0.0
    %v1593 = vmax.f32 %v1465, 0.0
    %v1594 = vmax.f32 %v1466, 0.0
    %v1595 = vmax.f32 %v1467, 0.0
    %v1596 = vmax.f32 %v1468, 0.0
    %v1597 = vmax.f32 %v1469, 0.0
    %v1598 = vmax.f32 %v1470, 0.0
    %v1599 = vmax.f32 %v1471, 0.0
    %v1600 = vmax.f32 %v1472, 0.0
    %v1601 = vmax.f32 %v1473, 0.0
    %v1602 = vmax.f32 %v1474, 0.0
    %v1603 = vmax.f32 %v1475, 0.0
    %v1604 = vmax.f32 %v1476, 0.0
    %v1605 = vmax.f32 %v1477, 0.0
    %v1606 = vmax.f32 %v1478, 0.0
    %v1607 = vmax.f32 %v1479, 0.0
    %v1608 = vmax.f32 %v1480, 0.0
    %v1609 = vmax.f32 %v1481, 0.0
    %v1610 = vmax.f32 %v1482, 0.0
    %v1611 = vmax.f32 %v1483, 0.0
    %v1612 = vmax.f32 %v1484, 0.0
    %v1613 = vmax.f32 %v1485, 0.0
    %v1614 = vmax.f32 %v1486, 0.0
    %v1615 = vmax.f32 %v1487, 0.0
    %v1616 = vmax.f32 %v1488, 0.0
    %v1617 = vmax.f32 %v1489, 0.0
    %v1618 = vmax.f32 %v1490, 0.0
    %v1619 = vmax.f32 %v1491, 0.0
    %v1620 = vmax.f32 %v1492, 0.0
    %v1621 = vmax.f32 %v1493, 0.0
    %v1622 = vmax.f32 %v1494, 0.0
    %v1623 = vmax.f32 %v1495, 0.0
    %v1624 = vmax.f32 %v1496, 0.0
    %v1625 = vmax.f32 %v1497, 0.0
    %v1626 = vmax.f32 %v1498, 0.0
    %v1627 = vmax.f32 %v1499, 0.0
    %v1628 = vmax.f32 %v1500, 0.0
    %v1629 = vmax.f32 %v1501, 0.0
    %v1630 = vmax.f32 %v1502, 0.0
    %v1631 = vmax.f32 %v1503, 0.0
    %v1632 = vmax.f32 %v1504, 0.0
    %v1633 = vmax.f32 %v1505, 0.0
    %v1634 = vmax.f32 %v1506, 0.0
    %v1635 = vmax.f32 %v1507, 0.0
    %v1636 = vmax.f32 %v1508, 0.0
    %v1637 = vmax.f32 %v1509, 0.0
    %v1638 = vmax.f32 %v1510, 0.0
    %v1639 = vmax.f32 %v1511, 0.0
    %v1640 = vmax.f32 %v1512, 0.0
    %v1641 = vmax.f32 %v1513, 0.0
    %v1642 = vmax.f32 %v1514, 0.0
    %v1643 = vmax.f32 %v1515, 0.0
    %v1644 = vmax.f32 %v1516, 0.0
    %v1645 = vmax.f32 %v1517, 0.0
    %v1646 = vmax.f32 %v1518, 0.0
    %v1647 = vmax.f32 %v1519, 0.0
    %v1648 = vmax.f32 %v1520, 0.0
    %v1649 = vmax.f32 %v1521, 0.0
    %v1650 = vmax.f32 %v1522, 0.0
    %v1651 = vmax.f32 %v1523, 0.0
    %v1652 = vmax.f32 %v1524, 0.0
    %v1653 = vmax.f32 %v1525, 0.0
    %v1654 = vmax.f32 %v1526, 0.0
    %v1655 = vmax.f32 %v1527, 0.0
    %v1656 = vmax.f32 %v1528, 0.0
    %v1657 = vmax.f32 %v1529, 0.0
    %v1658 = vmax.f32 %v1530, 0.0
    %v1659 = vmax.f32 %v1531, 0.0
    %v1660 = vmax.f32 %v1532, 0.0
    %v1661 = vmax.f32 %v1533, 0.0
    %v1662 = vmax.f32 %v1534, 0.0
    %v1663 = vmax.f32 %v1535, 0.0
    %v1664 = vmax.f32 %v1536, 0.0
    %v1665 = vmax.f32 %v1537, 0.0
    %v1666 = vmax.f32 %v1538, 0.0
    %v1667 = vmax.f32 %v1539, 0.0
    %v1668 = vmax.f32 %v1540, 0.0
    %v1669 = vmax.f32 %v1541, 0.0
    %v1670 = vmax.f32 %v1542, 0.0
    %v1671 = vmax.f32 %v1543, 0.0
    %v1672 = vmax.f32 %v1544, 0.0
    %v1673 = vmax.f32 %v1545, 0.0
    %v1674 = vmax.f32 %v1546, 0.0
    %v1675 = vmax.f32 %v1547, 0.0
    %v1676 = vmax.f32 %v1548, 0.0
    %v1677 = vmax.f32 %v1549, 0.0
    %v1678 = vmax.f32 %v1550, 0.0
    %v1679 = vmax.f32 %v1551, 0.0
    %v1680 = vmax.f32 %v1552, 0.0
    %v1681 = vmax.f32 %v1553, 0.0
    %v1682 = vmax.f32 %v1554, 0.0
    %v1683 = vmax.f32 %v1555, 0.0
    %s1684 = scalar_lea.vmem [#allocation7], 64
    %v1685 = vld [vmem:[%s1684] sm:$0xf]
    %v1686 = vld [vmem:[%s1684 + $0x4] sm:$0xf]
    %v1687 = vld [vmem:[%s1684 + $0x8] sm:$0xf]
    %v1688 = vld [vmem:[%s1684 + $0xc] sm:$0xf]
    %v1689 = vld [vmem:[%s1684 + $0x10] sm:$0xf]
    %v1690 = vld [vmem:[%s1684 + $0x14] sm:$0xf]
    %v1691 = vld [vmem:[%s1684 + $0x18] sm:$0xf]
    %v1692 = vld [vmem:[%s1684 + $0x1c] sm:$0xf]
    %v1693 = vld [vmem:[%s1684 + $0x20] sm:$0xf]
    %v1694 = vld [vmem:[%s1684 + $0x24] sm:$0xf]
    %v1695 = vld [vmem:[%s1684 + $0x28] sm:$0xf]
    %v1696 = vld [vmem:[%s1684 + $0x2c] sm:$0xf]
    %v1697 = vld [vmem:[%s1684 + $0x30] sm:$0xf]
    %v1698 = vld [vmem:[%s1684 + $0x34] sm:$0xf]
    %v1699 = vld [vmem:[%s1684 + $0x38] sm:$0xf]
    %v1700 = vld [vmem:[%s1684 + $0x3c] sm:$0xf]
    %v1701 = vld [vmem:[#allocation10 + $0x2] ss:$0 sm:$0xff]
    %v1702 = vld [vmem:[#allocation10 + $0x3] ss:$0 sm:$0xff]
    %v1703 = vpack.c.bf16 %v1557, %v1556
    %v1704 = vpack.c.bf16 %v1559, %v1558
    %v1705 = vpack.c.bf16 %v1561, %v1560
    %v1706 = vpack.c.bf16 %v1563, %v1562
    %v1707 = vpack.c.bf16 %v1565, %v1564
    %v1708 = vpack.c.bf16 %v1567, %v1566
    %v1709 = vpack.c.bf16 %v1569, %v1568
    %v1710 = vpack.c.bf16 %v1571, %v1570
    %v1711 = vpack.c.bf16 %v1573, %v1572
    %v1712 = vpack.c.bf16 %v1575, %v1574
    %v1713 = vpack.c.bf16 %v1577, %v1576
    %v1714 = vpack.c.bf16 %v1579, %v1578
    %v1715 = vpack.c.bf16 %v1581, %v1580
    %v1716 = vpack.c.bf16 %v1583, %v1582
    %v1717 = vpack.c.bf16 %v1585, %v1584
    %v1718 = vpack.c.bf16 %v1587, %v1586
    %v1719 = vpack.c.bf16 %v1589, %v1588
    %v1720 = vpack.c.bf16 %v1591, %v1590
    %v1721 = vpack.c.bf16 %v1593, %v1592
    %v1722 = vpack.c.bf16 %v1595, %v1594
    %v1723 = vpack.c.bf16 %v1597, %v1596
    %v1724 = vpack.c.bf16 %v1599, %v1598
    %v1725 = vpack.c.bf16 %v1601, %v1600
    %v1726 = vpack.c.bf16 %v1603, %v1602
    %v1727 = vpack.c.bf16 %v1605, %v1604
    %v1728 = vpack.c.bf16 %v1607, %v1606
    %v1729 = vpack.c.bf16 %v1609, %v1608
    %v1730 = vpack.c.bf16 %v1611, %v1610
    %v1731 = vpack.c.bf16 %v1613, %v1612
    %v1732 = vpack.c.bf16 %v1615, %v1614
    %v1733 = vpack.c.bf16 %v1617, %v1616
    %v1734 = vpack.c.bf16 %v1619, %v1618
    %v1735 = vpack.c.bf16 %v1621, %v1620
    %v1736 = vpack.c.bf16 %v1623, %v1622
    %v1737 = vpack.c.bf16 %v1625, %v1624
    %v1738 = vpack.c.bf16 %v1627, %v1626
    %v1739 = vpack.c.bf16 %v1629, %v1628
    %v1740 = vpack.c.bf16 %v1631, %v1630
    %v1741 = vpack.c.bf16 %v1633, %v1632
    %v1742 = vpack.c.bf16 %v1635, %v1634
    %v1743 = vpack.c.bf16 %v1637, %v1636
    %v1744 = vpack.c.bf16 %v1639, %v1638
    %v1745 = vpack.c.bf16 %v1641, %v1640
    %v1746 = vpack.c.bf16 %v1643, %v1642
    %v1747 = vpack.c.bf16 %v1645, %v1644
    %v1748 = vpack.c.bf16 %v1647, %v1646
    %v1749 = vpack.c.bf16 %v1649, %v1648
    %v1750 = vpack.c.bf16 %v1651, %v1650
    %v1751 = vpack.c.bf16 %v1653, %v1652
    %v1752 = vpack.c.bf16 %v1655, %v1654
    %v1753 = vpack.c.bf16 %v1657, %v1656
    %v1754 = vpack.c.bf16 %v1659, %v1658
    %v1755 = vpack.c.bf16 %v1661, %v1660
    %v1756 = vpack.c.bf16 %v1663, %v1662
    %v1757 = vpack.c.bf16 %v1665, %v1664
    %v1758 = vpack.c.bf16 %v1667, %v1666
    %v1759 = vpack.c.bf16 %v1669, %v1668
    %v1760 = vpack.c.bf16 %v1671, %v1670
    %v1761 = vpack.c.bf16 %v1673, %v1672
    %v1762 = vpack.c.bf16 %v1675, %v1674
    %v1763 = vpack.c.bf16 %v1677, %v1676
    %v1764 = vpack.c.bf16 %v1679, %v1678
    %v1765 = vpack.c.bf16 %v1681, %v1680
    %v1766 = vpack.c.bf16 %v1683, %v1682
    %v1783 = vunpack.c.l.b16 %v1685
    %v1784 = vunpack.c.l.b16 %v1686
    %v1785 = vunpack.c.l.b16 %v1687
    %v1786 = vunpack.c.l.b16 %v1688
    %v1787 = vunpack.c.l.b16 %v1689
    %v1788 = vunpack.c.l.b16 %v1690
    %v1789 = vunpack.c.l.b16 %v1691
    %v1790 = vunpack.c.l.b16 %v1692
    %v1791 = vunpack.c.l.b16 %v1693
    %v1792 = vunpack.c.l.b16 %v1694
    %v1793 = vunpack.c.l.b16 %v1695
    %v1794 = vunpack.c.l.b16 %v1696
    %v1795 = vunpack.c.l.b16 %v1697
    %v1796 = vunpack.c.l.b16 %v1698
    %v1797 = vunpack.c.l.b16 %v1699
    %v1798 = vunpack.c.l.b16 %v1700
    %v1799 = vpack.c.b16 %v1784, %v1783
    %v1800 = vpack.c.b16 %v1786, %v1785
    %v1801 = vpack.c.b16 %v1788, %v1787
    %v1802 = vpack.c.b16 %v1790, %v1789
    %v1803 = vpack.c.b16 %v1792, %v1791
    %v1804 = vpack.c.b16 %v1794, %v1793
    %v1805 = vpack.c.b16 %v1796, %v1795
    %v1806 = vpack.c.b16 %v1798, %v1797
    %1815 = vmatprep.subr.bf16.mxu0 0
    %1816 = vmatpush1.bf16.msra.mxu0 %v1799
    %1817 = vmatprep.subr.bf16.mxu0 0
    %1818 = vmatpush1.bf16.msra.mxu0 %v1800
    %1819 = vmatprep.subr.bf16.mxu0 0
    %1820 = vmatpush1.bf16.msra.mxu0 %v1801
    %1821 = vmatprep.subr.bf16.mxu0 0
    %1822 = vmatpush1.bf16.msra.mxu0 %v1802
    %1823 = vmatprep.subr.bf16.mxu0 0
    %1824 = vmatpush1.bf16.msra.mxu0 %v1803
    %1825 = vmatprep.subr.bf16.mxu0 0
    %1826 = vmatpush1.bf16.msra.mxu0 %v1804
    %1827 = vmatprep.subr.bf16.mxu0 0
    %1828 = vmatpush1.bf16.msra.mxu0 %v1805
    %1829 = vmatprep.subr.bf16.mxu0 0
    %1830 = vmatpush1.bf16.msra.mxu0 %v1806
    %1831 = vmatprep.subr.bf16.mxu0 0
    %1832 = vmatpush1.bf16.msra.mxu0 0
    %1833 = vmatprep.subr.bf16.mxu0 0
    %1834 = vmatpush1.bf16.msra.mxu0 0
    %1835 = vmatprep.subr.bf16.mxu0 0
    %1836 = vmatpush1.bf16.msra.mxu0 0
    %1837 = vmatprep.subr.bf16.mxu0 0
    %1838 = vmatpush1.bf16.msra.mxu0 0
    %1839 = vmatprep.subr.bf16.mxu0 0
    %1840 = vmatpush1.bf16.msra.mxu0 0
    %1841 = vmatprep.subr.bf16.mxu0 0
    %1842 = vmatpush1.bf16.msra.mxu0 0
    %1843 = vmatprep.subr.bf16.mxu0 0
    %1844 = vmatpush1.bf16.msra.mxu0 0
    %1845 = vmatprep.subr.bf16.mxu0 0
    %1846 = vmatpush1.bf16.msra.mxu0 0
    %1847 = vmatprep.mubr.bf16.mxu0 0
    %1848 = vmatmul.mubr.bf16.gmra.mrb[0].mxu0 %v1703
    %v1849 = vpop.f32.mrb[0].mxu0
    %v1850 = vadd.f32 0.0, %v1849
    %v1851 = vpop.f32.mrb[0].mxu0
    %v1852 = vpop.f32.mrb[0].mxu0
    %v1853 = vadd.f32 0.0, %v1852
    %v1854 = vpop.f32.mrb[0].mxu0
    %1855 = vmatprep.mubr.bf16.mxu0 0
    %1856 = vmatmul.mubr.bf16.gmra.mrb[0].mxu0 %v1704
    %v1857 = vpop.f32.mrb[0].mxu0
    %v1858 = vadd.f32 0.0, %v1857
    %v1859 = vpop.f32.mrb[0].mxu0
    %v1860 = vpop.f32.mrb[0].mxu0
    %v1861 = vadd.f32 0.0, %v1860
    %v1862 = vpop.f32.mrb[0].mxu0
    %1863 = vmatprep.mubr.bf16.mxu0 0
    %1864 = vmatmul.mubr.bf16.gmra.mrb[0].mxu0 %v1705
    %v1865 = vpop.f32.mrb[0].mxu0
    %v1866 = vadd.f32 0.0, %v1865
    %v1867 = vpop.f32.mrb[0].mxu0
    %v1868 = vpop.f32.mrb[0].mxu0
    %v1869 = vadd.f32 0.0, %v1868
    %v1870 = vpop.f32.mrb[0].mxu0
    %1871 = vmatprep.mubr.bf16.mxu0 0
    %1872 = vmatmul.mubr.bf16.gmra.mrb[0].mxu0 %v1706
    %v1873 = vpop.f32.mrb[0].mxu0
    %v1874 = vadd.f32 0.0, %v1873
    %v1875 = vpop.f32.mrb[0].mxu0
    %v1876 = vpop.f32.mrb[0].mxu0
    %v1877 = vadd.f32 0.0, %v1876
    %v1878 = vpop.f32.mrb[0].mxu0
    %1879 = vmatprep.mubr.bf16.mxu0 0
    %1880 = vmatmul.mubr.bf16.gmra.mrb[0].mxu0 %v1707
    %v1881 = vpop.f32.mrb[0].mxu0
    %v1882 = vadd.f32 0.0, %v1881
    %v1883 = vpop.f32.mrb[0].mxu0
    %v1884 = vpop.f32.mrb[0].mxu0
    %v1885 = vadd.f32 0.0, %v1884
    %v1886 = vpop.f32.mrb[0].mxu0
    %1887 = vmatprep.mubr.bf16.mxu0 0
    %1888 = vmatmul.mubr.bf16.gmra.mrb[0].mxu0 %v1708
    %v1889 = vpop.f32.mrb[0].mxu0
    %v1890 = vadd.f32 0.0, %v1889
    %v1891 = vpop.f32.mrb[0].mxu0
    %v1892 = vpop.f32.mrb[0].mxu0
    %v1893 = vadd.f32 0.0, %v1892
    %v1894 = vpop.f32.mrb[0].mxu0
    %1895 = vmatprep.mubr.bf16.mxu0 0
    %1896 = vmatmul.mubr.bf16.gmra.mrb[0].mxu0 %v1709
    %v1897 = vpop.f32.mrb[0].mxu0
    %v1898 = vadd.f32 0.0, %v1897
    %v1899 = vpop.f32.mrb[0].mxu0
    %v1900 = vpop.f32.mrb[0].mxu0
    %v1901 = vadd.f32 0.0, %v1900
    %v1902 = vpop.f32.mrb[0].mxu0
    %1903 = vmatprep.mubr.bf16.mxu0 0
    %1904 = vmatmul.mubr.bf16.gmra.mrb[0].mxu0 %v1710
    %v1905 = vpop.f32.mrb[0].mxu0
    %v1906 = vadd.f32 0.0, %v1905
    %v1907 = vpop.f32.mrb[0].mxu0
    %v1908 = vpop.f32.mrb[0].mxu0
    %v1909 = vadd.f32 0.0, %v1908
    %v1910 = vpop.f32.mrb[0].mxu0
    %1911 = vmatprep.mubr.bf16.mxu0 0
    %1912 = vmatmul.mubr.bf16.gmra.mrb[0].mxu0 %v1711
    %v1913 = vpop.f32.mrb[0].mxu0
    %v1914 = vadd.f32 0.0, %v1913
    %v1915 = vpop.f32.mrb[0].mxu0
    %v1916 = vpop.f32.mrb[0].mxu0
    %v1917 = vadd.f32 0.0, %v1916
    %v1918 = vpop.f32.mrb[0].mxu0
    %1919 = vmatprep.mubr.bf16.mxu0 0
    %1920 = vmatmul.mubr.bf16.gmra.mrb[0].mxu0 %v1712
    %v1921 = vpop.f32.mrb[0].mxu0
    %v1922 = vadd.f32 0.0, %v1921
    %v1923 = vpop.f32.mrb[0].mxu0
    %v1924 = vpop.f32.mrb[0].mxu0
    %v1925 = vadd.f32 0.0, %v1924
    %v1926 = vpop.f32.mrb[0].mxu0
    %1927 = vmatprep.mubr.bf16.mxu0 0
    %1928 = vmatmul.mubr.bf16.gmra.mrb[0].mxu0 %v1713
    %v1929 = vpop.f32.mrb[0].mxu0
    %v1930 = vadd.f32 0.0, %v1929
    %v1931 = vpop.f32.mrb[0].mxu0
    %v1932 = vpop.f32.mrb[0].mxu0
    %v1933 = vadd.f32 0.0, %v1932
    %v1934 = vpop.f32.mrb[0].mxu0
    %1935 = vmatprep.mubr.bf16.mxu0 0
    %1936 = vmatmul.mubr.bf16.gmra.mrb[0].mxu0 %v1714
    %v1937 = vpop.f32.mrb[0].mxu0
    %v1938 = vadd.f32 0.0, %v1937
    %v1939 = vpop.f32.mrb[0].mxu0
    %v1940 = vpop.f32.mrb[0].mxu0
    %v1941 = vadd.f32 0.0, %v1940
    %v1942 = vpop.f32.mrb[0].mxu0
    %1943 = vmatprep.mubr.bf16.mxu0 0
    %1944 = vmatmul.mubr.bf16.gmra.mrb[0].mxu0 %v1715
    %v1945 = vpop.f32.mrb[0].mxu0
    %v1946 = vadd.f32 0.0, %v1945
    %v1947 = vpop.f32.mrb[0].mxu0
    %v1948 = vpop.f32.mrb[0].mxu0
    %v1949 = vadd.f32 0.0, %v1948
    %v1950 = vpop.f32.mrb[0].mxu0
    %1951 = vmatprep.mubr.bf16.mxu0 0
    %1952 = vmatmul.mubr.bf16.gmra.mrb[0].mxu0 %v1716
    %v1953 = vpop.f32.mrb[0].mxu0
    %v1954 = vadd.f32 0.0, %v1953
    %v1955 = vpop.f32.mrb[0].mxu0
    %v1956 = vpop.f32.mrb[0].mxu0
    %v1957 = vadd.f32 0.0, %v1956
    %v1958 = vpop.f32.mrb[0].mxu0
    %1959 = vmatprep.mubr.bf16.mxu0 0
    %1960 = vmatmul.mubr.bf16.gmra.mrb[0].mxu0 %v1717
    %v1961 = vpop.f32.mrb[0].mxu0
    %v1962 = vadd.f32 0.0, %v1961
    %v1963 = vpop.f32.mrb[0].mxu0
    %v1964 = vpop.f32.mrb[0].mxu0
    %v1965 = vadd.f32 0.0, %v1964
    %v1966 = vpop.f32.mrb[0].mxu0
    %1967 = vmatprep.mubr.bf16.mxu0 0
    %1968 = vmatmul.mubr.bf16.gmra.mrb[0].mxu0 %v1718
    %v1969 = vpop.f32.mrb[0].mxu0
    %v1970 = vadd.f32 0.0, %v1969
    %v1971 = vpop.f32.mrb[0].mxu0
    %v1972 = vpop.f32.mrb[0].mxu0
    %v1973 = vadd.f32 0.0, %v1972
    %v1974 = vpop.f32.mrb[0].mxu0
    %1975 = vmatprep.mubr.bf16.mxu0 0
    %1976 = vmatmul.mubr.bf16.gmra.mrb[0].mxu0 %v1719
    %v1977 = vpop.f32.mrb[0].mxu0
    %v1978 = vadd.f32 0.0, %v1977
    %v1979 = vpop.f32.mrb[0].mxu0
    %v1980 = vpop.f32.mrb[0].mxu0
    %v1981 = vadd.f32 0.0, %v1980
    %v1982 = vpop.f32.mrb[0].mxu0
    %1983 = vmatprep.mubr.bf16.mxu0 0
    %1984 = vmatmul.mubr.bf16.gmra.mrb[0].mxu0 %v1720
    %v1985 = vpop.f32.mrb[0].mxu0
    %v1986 = vadd.f32 0.0, %v1985
    %v1987 = vpop.f32.mrb[0].mxu0
    %v1988 = vpop.f32.mrb[0].mxu0
    %v1989 = vadd.f32 0.0, %v1988
    %v1990 = vpop.f32.mrb[0].mxu0
    %1991 = vmatprep.mubr.bf16.mxu0 0
    %1992 = vmatmul.mubr.bf16.gmra.mrb[0].mxu0 %v1721
    %v1993 = vpop.f32.mrb[0].mxu0
    %v1994 = vadd.f32 0.0, %v1993
    %v1995 = vpop.f32.mrb[0].mxu0
    %v1996 = vpop.f32.mrb[0].mxu0
    %v1997 = vadd.f32 0.0, %v1996
    %v1998 = vpop.f32.mrb[0].mxu0
    %1999 = vmatprep.mubr.bf16.mxu0 0
    %2000 = vmatmul.mubr.bf16.gmra.mrb[0].mxu0 %v1722
    %v2001 = vpop.f32.mrb[0].mxu0
    %v2002 = vadd.f32 0.0, %v2001
    %v2003 = vpop.f32.mrb[0].mxu0
    %v2004 = vpop.f32.mrb[0].mxu0
    %v2005 = vadd.f32 0.0, %v2004
    %v2006 = vpop.f32.mrb[0].mxu0
    %2007 = vmatprep.mubr.bf16.mxu0 0
    %2008 = vmatmul.mubr.bf16.gmra.mrb[0].mxu0 %v1723
    %v2009 = vpop.f32.mrb[0].mxu0
    %v2010 = vadd.f32 0.0, %v2009
    %v2011 = vpop.f32.mrb[0].mxu0
    %v2012 = vpop.f32.mrb[0].mxu0
    %v2013 = vadd.f32 0.0, %v2012
    %v2014 = vpop.f32.mrb[0].mxu0
    %2015 = vmatprep.mubr.bf16.mxu0 0
    %2016 = vmatmul.mubr.bf16.gmra.mrb[0].mxu0 %v1724
    %v2017 = vpop.f32.mrb[0].mxu0
    %v2018 = vadd.f32 0.0, %v2017
    %v2019 = vpop.f32.mrb[0].mxu0
    %v2020 = vpop.f32.mrb[0].mxu0
    %v2021 = vadd.f32 0.0, %v2020
    %v2022 = vpop.f32.mrb[0].mxu0
    %2023 = vmatprep.mubr.bf16.mxu0 0
    %2024 = vmatmul.mubr.bf16.gmra.mrb[0].mxu0 %v1725
    %v2025 = vpop.f32.mrb[0].mxu0
    %v2026 = vadd.f32 0.0, %v2025
    %v2027 = vpop.f32.mrb[0].mxu0
    %v2028 = vpop.f32.mrb[0].mxu0
    %v2029 = vadd.f32 0.0, %v2028
    %v2030 = vpop.f32.mrb[0].mxu0
    %2031 = vmatprep.mubr.bf16.mxu0 0
    %2032 = vmatmul.mubr.bf16.gmra.mrb[0].mxu0 %v1726
    %v2033 = vpop.f32.mrb[0].mxu0
    %v2034 = vadd.f32 0.0, %v2033
    %v2035 = vpop.f32.mrb[0].mxu0
    %v2036 = vpop.f32.mrb[0].mxu0
    %v2037 = vadd.f32 0.0, %v2036
    %v2038 = vpop.f32.mrb[0].mxu0
    %2039 = vmatprep.mubr.bf16.mxu0 0
    %2040 = vmatmul.mubr.bf16.gmra.mrb[0].mxu0 %v1727
    %v2041 = vpop.f32.mrb[0].mxu0
    %v2042 = vadd.f32 0.0, %v2041
    %v2043 = vpop.f32.mrb[0].mxu0
    %v2044 = vpop.f32.mrb[0].mxu0
    %v2045 = vadd.f32 0.0, %v2044
    %v2046 = vpop.f32.mrb[0].mxu0
    %2047 = vmatprep.mubr.bf16.mxu0 0
    %2048 = vmatmul.mubr.bf16.gmra.mrb[0].mxu0 %v1728
    %v2049 = vpop.f32.mrb[0].mxu0
    %v2050 = vadd.f32 0.0, %v2049
    %v2051 = vpop.f32.mrb[0].mxu0
    %v2052 = vpop.f32.mrb[0].mxu0
    %v2053 = vadd.f32 0.0, %v2052
    %v2054 = vpop.f32.mrb[0].mxu0
    %2055 = vmatprep.mubr.bf16.mxu0 0
    %2056 = vmatmul.mubr.bf16.gmra.mrb[0].mxu0 %v1729
    %v2057 = vpop.f32.mrb[0].mxu0
    %v2058 = vadd.f32 0.0, %v2057
    %v2059 = vpop.f32.mrb[0].mxu0
    %v2060 = vpop.f32.mrb[0].mxu0
    %v2061 = vadd.f32 0.0, %v2060
    %v2062 = vpop.f32.mrb[0].mxu0
    %2063 = vmatprep.mubr.bf16.mxu0 0
    %2064 = vmatmul.mubr.bf16.gmra.mrb[0].mxu0 %v1730
    %v2065 = vpop.f32.mrb[0].mxu0
    %v2066 = vadd.f32 0.0, %v2065
    %v2067 = vpop.f32.mrb[0].mxu0
    %v2068 = vpop.f32.mrb[0].mxu0
    %v2069 = vadd.f32 0.0, %v2068
    %v2070 = vpop.f32.mrb[0].mxu0
    %2071 = vmatprep.mubr.bf16.mxu0 0
    %2072 = vmatmul.mubr.bf16.gmra.mrb[0].mxu0 %v1731
    %v2073 = vpop.f32.mrb[0].mxu0
    %v2074 = vadd.f32 0.0, %v2073
    %v2075 = vpop.f32.mrb[0].mxu0
    %v2076 = vpop.f32.mrb[0].mxu0
    %v2077 = vadd.f32 0.0, %v2076
    %v2078 = vpop.f32.mrb[0].mxu0
    %2079 = vmatprep.mubr.bf16.mxu0 0
    %2080 = vmatmul.mubr.bf16.gmra.mrb[0].mxu0 %v1732
    %v2081 = vpop.f32.mrb[0].mxu0
    %v2082 = vadd.f32 0.0, %v2081
    %v2083 = vpop.f32.mrb[0].mxu0
    %v2084 = vpop.f32.mrb[0].mxu0
    %v2085 = vadd.f32 0.0, %v2084
    %v2086 = vpop.f32.mrb[0].mxu0
    %2087 = vmatprep.mubr.bf16.mxu0 0
    %2088 = vmatmul.mubr.bf16.gmra.mrb[0].mxu0 %v1733
    %v2089 = vpop.f32.mrb[0].mxu0
    %v2090 = vadd.f32 0.0, %v2089
    %v2091 = vpop.f32.mrb[0].mxu0
    %v2092 = vpop.f32.mrb[0].mxu0
    %v2093 = vadd.f32 0.0, %v2092
    %v2094 = vpop.f32.mrb[0].mxu0
    %2095 = vmatprep.mubr.bf16.mxu0 0
    %2096 = vmatmul.mubr.bf16.gmra.mrb[0].mxu0 %v1734
    %v2097 = vpop.f32.mrb[0].mxu0
    %v2098 = vadd.f32 0.0, %v2097
    %v2099 = vpop.f32.mrb[0].mxu0
    %v2100 = vpop.f32.mrb[0].mxu0
    %v2101 = vadd.f32 0.0, %v2100
    %v2102 = vpop.f32.mrb[0].mxu0
    %2103 = vmatprep.mubr.bf16.mxu0 0
    %2104 = vmatmul.mubr.bf16.gmra.mrb[0].mxu0 %v1735
    %v2105 = vpop.f32.mrb[0].mxu0
    %v2106 = vadd.f32 0.0, %v2105
    %v2107 = vpop.f32.mrb[0].mxu0
    %v2108 = vpop.f32.mrb[0].mxu0
    %v2109 = vadd.f32 0.0, %v2108
    %v2110 = vpop.f32.mrb[0].mxu0
    %2111 = vmatprep.mubr.bf16.mxu0 0
    %2112 = vmatmul.mubr.bf16.gmra.mrb[0].mxu0 %v1736
    %v2113 = vpop.f32.mrb[0].mxu0
    %v2114 = vadd.f32 0.0, %v2113
    %v2115 = vpop.f32.mrb[0].mxu0
    %v2116 = vpop.f32.mrb[0].mxu0
    %v2117 = vadd.f32 0.0, %v2116
    %v2118 = vpop.f32.mrb[0].mxu0
    %2119 = vmatprep.mubr.bf16.mxu0 0
    %2120 = vmatmul.mubr.bf16.gmra.mrb[0].mxu0 %v1737
    %v2121 = vpop.f32.mrb[0].mxu0
    %v2122 = vadd.f32 0.0, %v2121
    %v2123 = vpop.f32.mrb[0].mxu0
    %v2124 = vpop.f32.mrb[0].mxu0
    %v2125 = vadd.f32 0.0, %v2124
    %v2126 = vpop.f32.mrb[0].mxu0
    %2127 = vmatprep.mubr.bf16.mxu0 0
    %2128 = vmatmul.mubr.bf16.gmra.mrb[0].mxu0 %v1738
    %v2129 = vpop.f32.mrb[0].mxu0
    %v2130 = vadd.f32 0.0, %v2129
    %v2131 = vpop.f32.mrb[0].mxu0
    %v2132 = vpop.f32.mrb[0].mxu0
    %v2133 = vadd.f32 0.0, %v2132
    %v2134 = vpop.f32.mrb[0].mxu0
    %2135 = vmatprep.mubr.bf16.mxu0 0
    %2136 = vmatmul.mubr.bf16.gmra.mrb[0].mxu0 %v1739
    %v2137 = vpop.f32.mrb[0].mxu0
    %v2138 = vadd.f32 0.0, %v2137
    %v2139 = vpop.f32.mrb[0].mxu0
    %v2140 = vpop.f32.mrb[0].mxu0
    %v2141 = vadd.f32 0.0, %v2140
    %v2142 = vpop.f32.mrb[0].mxu0
    %2143 = vmatprep.mubr.bf16.mxu0 0
    %2144 = vmatmul.mubr.bf16.gmra.mrb[0].mxu0 %v1740
    %v2145 = vpop.f32.mrb[0].mxu0
    %v2146 = vadd.f32 0.0, %v2145
    %v2147 = vpop.f32.mrb[0].mxu0
    %v2148 = vpop.f32.mrb[0].mxu0
    %v2149 = vadd.f32 0.0, %v2148
    %v2150 = vpop.f32.mrb[0].mxu0
    %2151 = vmatprep.mubr.bf16.mxu0 0
    %2152 = vmatmul.mubr.bf16.gmra.mrb[0].mxu0 %v1741
    %v2153 = vpop.f32.mrb[0].mxu0
    %v2154 = vadd.f32 0.0, %v2153
    %v2155 = vpop.f32.mrb[0].mxu0
    %v2156 = vpop.f32.mrb[0].mxu0
    %v2157 = vadd.f32 0.0, %v2156
    %v2158 = vpop.f32.mrb[0].mxu0
    %2159 = vmatprep.mubr.bf16.mxu0 0
    %2160 = vmatmul.mubr.bf16.gmra.mrb[0].mxu0 %v1742
    %v2161 = vpop.f32.mrb[0].mxu0
    %v2162 = vadd.f32 0.0, %v2161
    %v2163 = vpop.f32.mrb[0].mxu0
    %v2164 = vpop.f32.mrb[0].mxu0
    %v2165 = vadd.f32 0.0, %v2164
    %v2166 = vpop.f32.mrb[0].mxu0
    %2167 = vmatprep.mubr.bf16.mxu0 0
    %2168 = vmatmul.mubr.bf16.gmra.mrb[0].mxu0 %v1743
    %v2169 = vpop.f32.mrb[0].mxu0
    %v2170 = vadd.f32 0.0, %v2169
    %v2171 = vpop.f32.mrb[0].mxu0
    %v2172 = vpop.f32.mrb[0].mxu0
    %v2173 = vadd.f32 0.0, %v2172
    %v2174 = vpop.f32.mrb[0].mxu0
    %2175 = vmatprep.mubr.bf16.mxu0 0
    %2176 = vmatmul.mubr.bf16.gmra.mrb[0].mxu0 %v1744
    %v2177 = vpop.f32.mrb[0].mxu0
    %v2178 = vadd.f32 0.0, %v2177
    %v2179 = vpop.f32.mrb[0].mxu0
    %v2180 = vpop.f32.mrb[0].mxu0
    %v2181 = vadd.f32 0.0, %v2180
    %v2182 = vpop.f32.mrb[0].mxu0
    %2183 = vmatprep.mubr.bf16.mxu0 0
    %2184 = vmatmul.mubr.bf16.gmra.mrb[0].mxu0 %v1745
    %v2185 = vpop.f32.mrb[0].mxu0
    %v2186 = vadd.f32 0.0, %v2185
    %v2187 = vpop.f32.mrb[0].mxu0
    %v2188 = vpop.f32.mrb[0].mxu0
    %v2189 = vadd.f32 0.0, %v2188
    %v2190 = vpop.f32.mrb[0].mxu0
    %2191 = vmatprep.mubr.bf16.mxu0 0
    %2192 = vmatmul.mubr.bf16.gmra.mrb[0].mxu0 %v1746
    %v2193 = vpop.f32.mrb[0].mxu0
    %v2194 = vadd.f32 0.0, %v2193
    %v2195 = vpop.f32.mrb[0].mxu0
    %v2196 = vpop.f32.mrb[0].mxu0
    %v2197 = vadd.f32 0.0, %v2196
    %v2198 = vpop.f32.mrb[0].mxu0
    %2199 = vmatprep.mubr.bf16.mxu0 0
    %2200 = vmatmul.mubr.bf16.gmra.mrb[0].mxu0 %v1747
    %v2201 = vpop.f32.mrb[0].mxu0
    %v2202 = vadd.f32 0.0, %v2201
    %v2203 = vpop.f32.mrb[0].mxu0
    %v2204 = vpop.f32.mrb[0].mxu0
    %v2205 = vadd.f32 0.0, %v2204
    %v2206 = vpop.f32.mrb[0].mxu0
    %2207 = vmatprep.mubr.bf16.mxu0 0
    %2208 = vmatmul.mubr.bf16.gmra.mrb[0].mxu0 %v1748
    %v2209 = vpop.f32.mrb[0].mxu0
    %v2210 = vadd.f32 0.0, %v2209
    %v2211 = vpop.f32.mrb[0].mxu0
    %v2212 = vpop.f32.mrb[0].mxu0
    %v2213 = vadd.f32 0.0, %v2212
    %v2214 = vpop.f32.mrb[0].mxu0
    %2215 = vmatprep.mubr.bf16.mxu0 0
    %2216 = vmatmul.mubr.bf16.gmra.mrb[0].mxu0 %v1749
    %v2217 = vpop.f32.mrb[0].mxu0
    %v2218 = vadd.f32 0.0, %v2217
    %v2219 = vpop.f32.mrb[0].mxu0
    %v2220 = vpop.f32.mrb[0].mxu0
    %v2221 = vadd.f32 0.0, %v2220
    %v2222 = vpop.f32.mrb[0].mxu0
    %2223 = vmatprep.mubr.bf16.mxu0 0
    %2224 = vmatmul.mubr.bf16.gmra.mrb[0].mxu0 %v1750
    %v2225 = vpop.f32.mrb[0].mxu0
    %v2226 = vadd.f32 0.0, %v2225
    %v2227 = vpop.f32.mrb[0].mxu0
    %v2228 = vpop.f32.mrb[0].mxu0
    %v2229 = vadd.f32 0.0, %v2228
    %v2230 = vpop.f32.mrb[0].mxu0
    %2231 = vmatprep.mubr.bf16.mxu0 0
    %2232 = vmatmul.mubr.bf16.gmra.mrb[0].mxu0 %v1751
    %v2233 = vpop.f32.mrb[0].mxu0
    %v2234 = vadd.f32 0.0, %v2233
    %v2235 = vpop.f32.mrb[0].mxu0
    %v2236 = vpop.f32.mrb[0].mxu0
    %v2237 = vadd.f32 0.0, %v2236
    %v2238 = vpop.f32.mrb[0].mxu0
    %2239 = vmatprep.mubr.bf16.mxu0 0
    %2240 = vmatmul.mubr.bf16.gmra.mrb[0].mxu0 %v1752
    %v2241 = vpop.f32.mrb[0].mxu0
    %v2242 = vadd.f32 0.0, %v2241
    %v2243 = vpop.f32.mrb[0].mxu0
    %v2244 = vpop.f32.mrb[0].mxu0
    %v2245 = vadd.f32 0.0, %v2244
    %v2246 = vpop.f32.mrb[0].mxu0
    %2247 = vmatprep.mubr.bf16.mxu0 0
    %2248 = vmatmul.mubr.bf16.gmra.mrb[0].mxu0 %v1753
    %v2249 = vpop.f32.mrb[0].mxu0
    %v2250 = vadd.f32 0.0, %v2249
    %v2251 = vpop.f32.mrb[0].mxu0
    %v2252 = vpop.f32.mrb[0].mxu0
    %v2253 = vadd.f32 0.0, %v2252
    %v2254 = vpop.f32.mrb[0].mxu0
    %2255 = vmatprep.mubr.bf16.mxu0 0
    %2256 = vmatmul.mubr.bf16.gmra.mrb[0].mxu0 %v1754
    %v2257 = vpop.f32.mrb[0].mxu0
    %v2258 = vadd.f32 0.0, %v2257
    %v2259 = vpop.f32.mrb[0].mxu0
    %v2260 = vpop.f32.mrb[0].mxu0
    %v2261 = vadd.f32 0.0, %v2260
    %v2262 = vpop.f32.mrb[0].mxu0
    %2263 = vmatprep.mubr.bf16.mxu0 0
    %2264 = vmatmul.mubr.bf16.gmra.mrb[0].mxu0 %v1755
    %v2265 = vpop.f32.mrb[0].mxu0
    %v2266 = vadd.f32 0.0, %v2265
    %v2267 = vpop.f32.mrb[0].mxu0
    %v2268 = vpop.f32.mrb[0].mxu0
    %v2269 = vadd.f32 0.0, %v2268
    %v2270 = vpop.f32.mrb[0].mxu0
    %2271 = vmatprep.mubr.bf16.mxu0 0
    %2272 = vmatmul.mubr.bf16.gmra.mrb[0].mxu0 %v1756
    %v2273 = vpop.f32.mrb[0].mxu0
    %v2274 = vadd.f32 0.0, %v2273
    %v2275 = vpop.f32.mrb[0].mxu0
    %v2276 = vpop.f32.mrb[0].mxu0
    %v2277 = vadd.f32 0.0, %v2276
    %v2278 = vpop.f32.mrb[0].mxu0
    %2279 = vmatprep.mubr.bf16.mxu0 0
    %2280 = vmatmul.mubr.bf16.gmra.mrb[0].mxu0 %v1757
    %v2281 = vpop.f32.mrb[0].mxu0
    %v2282 = vadd.f32 0.0, %v2281
    %v2283 = vpop.f32.mrb[0].mxu0
    %v2284 = vpop.f32.mrb[0].mxu0
    %v2285 = vadd.f32 0.0, %v2284
    %v2286 = vpop.f32.mrb[0].mxu0
    %2287 = vmatprep.mubr.bf16.mxu0 0
    %2288 = vmatmul.mubr.bf16.gmra.mrb[0].mxu0 %v1758
    %v2289 = vpop.f32.mrb[0].mxu0
    %v2290 = vadd.f32 0.0, %v2289
    %v2291 = vpop.f32.mrb[0].mxu0
    %v2292 = vpop.f32.mrb[0].mxu0
    %v2293 = vadd.f32 0.0, %v2292
    %v2294 = vpop.f32.mrb[0].mxu0
    %2295 = vmatprep.mubr.bf16.mxu0 0
    %2296 = vmatmul.mubr.bf16.gmra.mrb[0].mxu0 %v1759
    %v2297 = vpop.f32.mrb[0].mxu0
    %v2298 = vadd.f32 0.0, %v2297
    %v2299 = vpop.f32.mrb[0].mxu0
    %v2300 = vpop.f32.mrb[0].mxu0
    %v2301 = vadd.f32 0.0, %v2300
    %v2302 = vpop.f32.mrb[0].mxu0
    %2303 = vmatprep.mubr.bf16.mxu0 0
    %2304 = vmatmul.mubr.bf16.gmra.mrb[0].mxu0 %v1760
    %v2305 = vpop.f32.mrb[0].mxu0
    %v2306 = vadd.f32 0.0, %v2305
    %v2307 = vpop.f32.mrb[0].mxu0
    %v2308 = vpop.f32.mrb[0].mxu0
    %v2309 = vadd.f32 0.0, %v2308
    %v2310 = vpop.f32.mrb[0].mxu0
    %2311 = vmatprep.mubr.bf16.mxu0 0
    %2312 = vmatmul.mubr.bf16.gmra.mrb[0].mxu0 %v1761
    %v2313 = vpop.f32.mrb[0].mxu0
    %v2314 = vadd.f32 0.0, %v2313
    %v2315 = vpop.f32.mrb[0].mxu0
    %v2316 = vpop.f32.mrb[0].mxu0
    %v2317 = vadd.f32 0.0, %v2316
    %v2318 = vpop.f32.mrb[0].mxu0
    %2319 = vmatprep.mubr.bf16.mxu0 0
    %2320 = vmatmul.mubr.bf16.gmra.mrb[0].mxu0 %v1762
    %v2321 = vpop.f32.mrb[0].mxu0
    %v2322 = vadd.f32 0.0, %v2321
    %v2323 = vpop.f32.mrb[0].mxu0
    %v2324 = vpop.f32.mrb[0].mxu0
    %v2325 = vadd.f32 0.0, %v2324
    %v2326 = vpop.f32.mrb[0].mxu0
    %2327 = vmatprep.mubr.bf16.mxu0 0
    %2328 = vmatmul.mubr.bf16.gmra.mrb[0].mxu0 %v1763
    %v2329 = vpop.f32.mrb[0].mxu0
    %v2330 = vadd.f32 0.0, %v2329
    %v2331 = vpop.f32.mrb[0].mxu0
    %v2332 = vpop.f32.mrb[0].mxu0
    %v2333 = vadd.f32 0.0, %v2332
    %v2334 = vpop.f32.mrb[0].mxu0
    %2335 = vmatprep.mubr.bf16.mxu0 0
    %2336 = vmatmul.mubr.bf16.gmra.mrb[0].mxu0 %v1764
    %v2337 = vpop.f32.mrb[0].mxu0
    %v2338 = vadd.f32 0.0, %v2337
    %v2339 = vpop.f32.mrb[0].mxu0
    %v2340 = vpop.f32.mrb[0].mxu0
    %v2341 = vadd.f32 0.0, %v2340
    %v2342 = vpop.f32.mrb[0].mxu0
    %2343 = vmatprep.mubr.bf16.mxu0 0
    %2344 = vmatmul.mubr.bf16.gmra.mrb[0].mxu0 %v1765
    %v2345 = vpop.f32.mrb[0].mxu0
    %v2346 = vadd.f32 0.0, %v2345
    %v2347 = vpop.f32.mrb[0].mxu0
    %v2348 = vpop.f32.mrb[0].mxu0
    %v2349 = vadd.f32 0.0, %v2348
    %v2350 = vpop.f32.mrb[0].mxu0
    %2351 = vmatprep.mubr.bf16.mxu0 0
    %2352 = vmatmul.mubr.bf16.gmra.mrb[0].mxu0 %v1766
    %v2353 = vpop.f32.mrb[0].mxu0
    %v2354 = vadd.f32 0.0, %v2353
    %v2355 = vpop.f32.mrb[0].mxu0
    %v2356 = vpop.f32.mrb[0].mxu0
    %v2357 = vadd.f32 0.0, %v2356
    %v2358 = vpop.f32.mrb[0].mxu0
    %2359 = vdwg.mxu0
    %v2360 = vadd.f32 %v1850, %v1853
    %v2361 = vadd.f32 %v2360, %v1858
    %v2362 = vadd.f32 %v2361, %v1861
    %v2363 = vadd.f32 %v2362, %v1866
    %v2364 = vadd.f32 %v2363, %v1869
    %v2365 = vadd.f32 %v2364, %v1874
    %v2366 = vadd.f32 %v2365, %v1877
    %v2367 = vadd.f32 %v2366, %v1882
    %v2368 = vadd.f32 %v2367, %v1885
    %v2369 = vadd.f32 %v2368, %v1890
    %v2370 = vadd.f32 %v2369, %v1893
    %v2371 = vadd.f32 %v2370, %v1898
    %v2372 = vadd.f32 %v2371, %v1901
    %v2373 = vadd.f32 %v2372, %v1906
    %v2374 = vadd.f32 %v2373, %v1909
    %v2375 = vadd.f32 %v2374, %v1914
    %v2376 = vadd.f32 %v2375, %v1917
    %v2377 = vadd.f32 %v2376, %v1922
    %v2378 = vadd.f32 %v2377, %v1925
    %v2379 = vadd.f32 %v2378, %v1930
    %v2380 = vadd.f32 %v2379, %v1933
    %v2381 = vadd.f32 %v2380, %v1938
    %v2382 = vadd.f32 %v2381, %v1941
    %v2383 = vadd.f32 %v2382, %v1946
    %v2384 = vadd.f32 %v2383, %v1949
    %v2385 = vadd.f32 %v2384, %v1954
    %v2386 = vadd.f32 %v2385, %v1957
    %v2387 = vadd.f32 %v2386, %v1962
    %v2388 = vadd.f32 %v2387, %v1965
    %v2389 = vadd.f32 %v2388, %v1970
    %v2390 = vadd.f32 %v2389, %v1973
    %v2391 = vadd.f32 %v2390, %v1978
    %v2392 = vadd.f32 %v2391, %v1981
    %v2393 = vadd.f32 %v2392, %v1986
    %v2394 = vadd.f32 %v2393, %v1989
    %v2395 = vadd.f32 %v2394, %v1994
    %v2396 = vadd.f32 %v2395, %v1997
    %v2397 = vadd.f32 %v2396, %v2002
    %v2398 = vadd.f32 %v2397, %v2005
    %v2399 = vadd.f32 %v2398, %v2010
    %v2400 = vadd.f32 %v2399, %v2013
    %v2401 = vadd.f32 %v2400, %v2018
    %v2402 = vadd.f32 %v2401, %v2021
    %v2403 = vadd.f32 %v2402, %v2026
    %v2404 = vadd.f32 %v2403, %v2029
    %v2405 = vadd.f32 %v2404, %v2034
    %v2406 = vadd.f32 %v2405, %v2037
    %v2407 = vadd.f32 %v2406, %v2042
    %v2408 = vadd.f32 %v2407, %v2045
    %v2409 = vadd.f32 %v2408, %v2050
    %v2410 = vadd.f32 %v2409, %v2053
    %v2411 = vadd.f32 %v2410, %v2058
    %v2412 = vadd.f32 %v2411, %v2061
    %v2413 = vadd.f32 %v2412, %v2066
    %v2414 = vadd.f32 %v2413, %v2069
    %v2415 = vadd.f32 %v2414, %v2074
    %v2416 = vadd.f32 %v2415, %v2077
    %v2417 = vadd.f32 %v2416, %v2082
    %v2418 = vadd.f32 %v2417, %v2085
    %v2419 = vadd.f32 %v2418, %v2090
    %v2420 = vadd.f32 %v2419, %v2093
    %v2421 = vadd.f32 %v2420, %v2098
    %v2422 = vadd.f32 %v2421, %v2101
    %v2423 = vadd.f32 %v2422, %v2106
    %v2424 = vadd.f32 %v2423, %v2109
    %v2425 = vadd.f32 %v2424, %v2114
    %v2426 = vadd.f32 %v2425, %v2117
    %v2427 = vadd.f32 %v2426, %v2122
    %v2428 = vadd.f32 %v2427, %v2125
    %v2429 = vadd.f32 %v2428, %v2130
    %v2430 = vadd.f32 %v2429, %v2133
    %v2431 = vadd.f32 %v2430, %v2138
    %v2432 = vadd.f32 %v2431, %v2141
    %v2433 = vadd.f32 %v2432, %v2146
    %v2434 = vadd.f32 %v2433, %v2149
    %v2435 = vadd.f32 %v2434, %v2154
    %v2436 = vadd.f32 %v2435, %v2157
    %v2437 = vadd.f32 %v2436, %v2162
    %v2438 = vadd.f32 %v2437, %v2165
    %v2439 = vadd.f32 %v2438, %v2170
    %v2440 = vadd.f32 %v2439, %v2173
    %v2441 = vadd.f32 %v2440, %v2178
    %v2442 = vadd.f32 %v2441, %v2181
    %v2443 = vadd.f32 %v2442, %v2186
    %v2444 = vadd.f32 %v2443, %v2189
    %v2445 = vadd.f32 %v2444, %v2194
    %v2446 = vadd.f32 %v2445, %v2197
    %v2447 = vadd.f32 %v2446, %v2202
    %v2448 = vadd.f32 %v2447, %v2205
    %v2449 = vadd.f32 %v2448, %v2210
    %v2450 = vadd.f32 %v2449, %v2213
    %v2451 = vadd.f32 %v2450, %v2218
    %v2452 = vadd.f32 %v2451, %v2221
    %v2453 = vadd.f32 %v2452, %v2226
    %v2454 = vadd.f32 %v2453, %v2229
    %v2455 = vadd.f32 %v2454, %v2234
    %v2456 = vadd.f32 %v2455, %v2237
    %v2457 = vadd.f32 %v2456, %v2242
    %v2458 = vadd.f32 %v2457, %v2245
    %v2459 = vadd.f32 %v2458, %v2250
    %v2460 = vadd.f32 %v2459, %v2253
    %v2461 = vadd.f32 %v2460, %v2258
    %v2462 = vadd.f32 %v2461, %v2261
    %v2463 = vadd.f32 %v2462, %v2266
    %v2464 = vadd.f32 %v2463, %v2269
    %v2465 = vadd.f32 %v2464, %v2274
    %v2466 = vadd.f32 %v2465, %v2277
    %v2467 = vadd.f32 %v2466, %v2282
    %v2468 = vadd.f32 %v2467, %v2285
    %v2469 = vadd.f32 %v2468, %v2290
    %v2470 = vadd.f32 %v2469, %v2293
    %v2471 = vadd.f32 %v2470, %v2298
    %v2472 = vadd.f32 %v2471, %v2301
    %v2473 = vadd.f32 %v2472, %v2306
    %v2474 = vadd.f32 %v2473, %v2309
    %v2475 = vadd.f32 %v2474, %v2314
    %v2476 = vadd.f32 %v2475, %v2317
    %v2477 = vadd.f32 %v2476, %v2322
    %v2478 = vadd.f32 %v2477, %v2325
    %v2479 = vadd.f32 %v2478, %v2330
    %v2480 = vadd.f32 %v2479, %v2333
    %v2481 = vadd.f32 %v2480, %v2338
    %v2482 = vadd.f32 %v2481, %v2341
    %v2483 = vadd.f32 %v2482, %v2346
    %v2484 = vadd.f32 %v2483, %v2349
    %v2485 = vadd.f32 %v2484, %v2354
    %v2486 = vadd.f32 %v2485, %v2357
    %v2487 = vrot.slane %v2486, 4
    %v2488 = vadd.f32 %v2486, %v2487
    %v2489 = vrot.slane %v2488, 2
    %v2490 = vadd.f32 %v2488, %v2489
    %v2491 = vrot.slane %v2490, 1
    %v2492 = vadd.f32 %v2490, %v2491
    %v2493 = vmul.f32 %v1850, %v1850
    %v2494 = vmul.f32 %v1853, %v1853
    %v2495 = vmul.f32 %v1858, %v1858
    %v2496 = vmul.f32 %v1861, %v1861
    %v2497 = vmul.f32 %v1866, %v1866
    %v2498 = vmul.f32 %v1869, %v1869
    %v2499 = vmul.f32 %v1874, %v1874
    %v2500 = vmul.f32 %v1877, %v1877
    %v2501 = vmul.f32 %v1882, %v1882
    %v2502 = vmul.f32 %v1885, %v1885
    %v2503 = vmul.f32 %v1890, %v1890
    %v2504 = vmul.f32 %v1893, %v1893
    %v2505 = vmul.f32 %v1898, %v1898
    %v2506 = vmul.f32 %v1901, %v1901
    %v2507 = vmul.f32 %v1906, %v1906
    %v2508 = vmul.f32 %v1909, %v1909
    %v2509 = vmul.f32 %v1914, %v1914
    %v2510 = vmul.f32 %v1917, %v1917
    %v2511 = vmul.f32 %v1922, %v1922
    %v2512 = vmul.f32 %v1925, %v1925
    %v2513 = vmul.f32 %v1930, %v1930
    %v2514 = vmul.f32 %v1933, %v1933
    %v2515 = vmul.f32 %v1938, %v1938
    %v2516 = vmul.f32 %v1941, %v1941
    %v2517 = vmul.f32 %v1946, %v1946
    %v2518 = vmul.f32 %v1949, %v1949
    %v2519 = vmul.f32 %v1954, %v1954
    %v2520 = vmul.f32 %v1957, %v1957
    %v2521 = vmul.f32 %v1962, %v1962
    %v2522 = vmul.f32 %v1965, %v1965
    %v2523 = vmul.f32 %v1970, %v1970
    %v2524 = vmul.f32 %v1973, %v1973
    %v2525 = vmul.f32 %v1978, %v1978
    %v2526 = vmul.f32 %v1981, %v1981
    %v2527 = vmul.f32 %v1986, %v1986
    %v2528 = vmul.f32 %v1989, %v1989
    %v2529 = vmul.f32 %v1994, %v1994
    %v2530 = vmul.f32 %v1997, %v1997
    %v2531 = vmul.f32 %v2002, %v2002
    %v2532 = vmul.f32 %v2005, %v2005
    %v2533 = vmul.f32 %v2010, %v2010
    %v2534 = vmul.f32 %v2013, %v2013
    %v2535 = vmul.f32 %v2018, %v2018
    %v2536 = vmul.f32 %v2021, %v2021
    %v2537 = vmul.f32 %v2026, %v2026
    %v2538 = vmul.f32 %v2029, %v2029
    %v2539 = vmul.f32 %v2034, %v2034
    %v2540 = vmul.f32 %v2037, %v2037
    %v2541 = vmul.f32 %v2042, %v2042
    %v2542 = vmul.f32 %v2045, %v2045
    %v2543 = vmul.f32 %v2050, %v2050
    %v2544 = vmul.f32 %v2053, %v2053
    %v2545 = vmul.f32 %v2058, %v2058
    %v2546 = vmul.f32 %v2061, %v2061
    %v2547 = vmul.f32 %v2066, %v2066
    %v2548 = vmul.f32 %v2069, %v2069
    %v2549 = vmul.f32 %v2074, %v2074
    %v2550 = vmul.f32 %v2077, %v2077
    %v2551 = vmul.f32 %v2082, %v2082
    %v2552 = vmul.f32 %v2085, %v2085
    %v2553 = vmul.f32 %v2090, %v2090
    %v2554 = vmul.f32 %v2093, %v2093
    %v2555 = vmul.f32 %v2098, %v2098
    %v2556 = vmul.f32 %v2101, %v2101
    %v2557 = vmul.f32 %v2106, %v2106
    %v2558 = vmul.f32 %v2109, %v2109
    %v2559 = vmul.f32 %v2114, %v2114
    %v2560 = vmul.f32 %v2117, %v2117
    %v2561 = vmul.f32 %v2122, %v2122
    %v2562 = vmul.f32 %v2125, %v2125
    %v2563 = vmul.f32 %v2130, %v2130
    %v2564 = vmul.f32 %v2133, %v2133
    %v2565 = vmul.f32 %v2138, %v2138
    %v2566 = vmul.f32 %v2141, %v2141
    %v2567 = vmul.f32 %v2146, %v2146
    %v2568 = vmul.f32 %v2149, %v2149
    %v2569 = vmul.f32 %v2154, %v2154
    %v2570 = vmul.f32 %v2157, %v2157
    %v2571 = vmul.f32 %v2162, %v2162
    %v2572 = vmul.f32 %v2165, %v2165
    %v2573 = vmul.f32 %v2170, %v2170
    %v2574 = vmul.f32 %v2173, %v2173
    %v2575 = vmul.f32 %v2178, %v2178
    %v2576 = vmul.f32 %v2181, %v2181
    %v2577 = vmul.f32 %v2186, %v2186
    %v2578 = vmul.f32 %v2189, %v2189
    %v2579 = vmul.f32 %v2194, %v2194
    %v2580 = vmul.f32 %v2197, %v2197
    %v2581 = vmul.f32 %v2202, %v2202
    %v2582 = vmul.f32 %v2205, %v2205
    %v2583 = vmul.f32 %v2210, %v2210
    %v2584 = vmul.f32 %v2213, %v2213
    %v2585 = vmul.f32 %v2218, %v2218
    %v2586 = vmul.f32 %v2221, %v2221
    %v2587 = vmul.f32 %v2226, %v2226
    %v2588 = vmul.f32 %v2229, %v2229
    %v2589 = vmul.f32 %v2234, %v2234
    %v2590 = vmul.f32 %v2237, %v2237
    %v2591 = vmul.f32 %v2242, %v2242
    %v2592 = vmul.f32 %v2245, %v2245
    %v2593 = vmul.f32 %v2250, %v2250
    %v2594 = vmul.f32 %v2253, %v2253
    %v2595 = vmul.f32 %v2258, %v2258
    %v2596 = vmul.f32 %v2261, %v2261
    %v2597 = vmul.f32 %v2266, %v2266
    %v2598 = vmul.f32 %v2269, %v2269
    %v2599 = vmul.f32 %v2274, %v2274
    %v2600 = vmul.f32 %v2277, %v2277
    %v2601 = vmul.f32 %v2282, %v2282
    %v2602 = vmul.f32 %v2285, %v2285
    %v2603 = vmul.f32 %v2290, %v2290
    %v2604 = vmul.f32 %v2293, %v2293
    %v2605 = vmul.f32 %v2298, %v2298
    %v2606 = vmul.f32 %v2301, %v2301
    %v2607 = vmul.f32 %v2306, %v2306
    %v2608 = vmul.f32 %v2309, %v2309
    %v2609 = vmul.f32 %v2314, %v2314
    %v2610 = vmul.f32 %v2317, %v2317
    %v2611 = vmul.f32 %v2322, %v2322
    %v2612 = vmul.f32 %v2325, %v2325
    %v2613 = vmul.f32 %v2330, %v2330
    %v2614 = vmul.f32 %v2333, %v2333
    %v2615 = vmul.f32 %v2338, %v2338
    %v2616 = vmul.f32 %v2341, %v2341
    %v2617 = vmul.f32 %v2346, %v2346
    %v2618 = vmul.f32 %v2349, %v2349
    %v2619 = vmul.f32 %v2354, %v2354
    %v2620 = vmul.f32 %v2357, %v2357
    %v2621 = vadd.f32 %v2493, %v2494
    %v2622 = vadd.f32 %v2621, %v2495
    %v2623 = vadd.f32 %v2622, %v2496
    %v2624 = vadd.f32 %v2623, %v2497
    %v2625 = vadd.f32 %v2624, %v2498
    %v2626 = vadd.f32 %v2625, %v2499
    %v2627 = vadd.f32 %v2626, %v2500
    %v2628 = vadd.f32 %v2627, %v2501
    %v2629 = vadd.f32 %v2628, %v2502
    %v2630 = vadd.f32 %v2629, %v2503
    %v2631 = vadd.f32 %v2630, %v2504
    %v2632 = vadd.f32 %v2631, %v2505
    %v2633 = vadd.f32 %v2632, %v2506
    %v2634 = vadd.f32 %v2633, %v2507
    %v2635 = vadd.f32 %v2634, %v2508
    %v2636 = vadd.f32 %v2635, %v2509
    %v2637 = vadd.f32 %v2636, %v2510
    %v2638 = vadd.f32 %v2637, %v2511
    %v2639 = vadd.f32 %v2638, %v2512
    %v2640 = vadd.f32 %v2639, %v2513
    %v2641 = vadd.f32 %v2640, %v2514
    %v2642 = vadd.f32 %v2641, %v2515
    %v2643 = vadd.f32 %v2642, %v2516
    %v2644 = vadd.f32 %v2643, %v2517
    %v2645 = vadd.f32 %v2644, %v2518
    %v2646 = vadd.f32 %v2645, %v2519
    %v2647 = vadd.f32 %v2646, %v2520
    %v2648 = vadd.f32 %v2647, %v2521
    %v2649 = vadd.f32 %v2648, %v2522
    %v2650 = vadd.f32 %v2649, %v2523
    %v2651 = vadd.f32 %v2650, %v2524
    %v2652 = vadd.f32 %v2651, %v2525
    %v2653 = vadd.f32 %v2652, %v2526
    %v2654 = vadd.f32 %v2653, %v2527
    %v2655 = vadd.f32 %v2654, %v2528
    %v2656 = vadd.f32 %v2655, %v2529
    %v2657 = vadd.f32 %v2656, %v2530
    %v2658 = vadd.f32 %v2657, %v2531
    %v2659 = vadd.f32 %v2658, %v2532
    %v2660 = vadd.f32 %v2659, %v2533
    %v2661 = vadd.f32 %v2660, %v2534
    %v2662 = vadd.f32 %v2661, %v2535
    %v2663 = vadd.f32 %v2662, %v2536
    %v2664 = vadd.f32 %v2663, %v2537
    %v2665 = vadd.f32 %v2664, %v2538
    %v2666 = vadd.f32 %v2665, %v2539
    %v2667 = vadd.f32 %v2666, %v2540
    %v2668 = vadd.f32 %v2667, %v2541
    %v2669 = vadd.f32 %v2668, %v2542
    %v2670 = vadd.f32 %v2669, %v2543
    %v2671 = vadd.f32 %v2670, %v2544
    %v2672 = vadd.f32 %v2671, %v2545
    %v2673 = vadd.f32 %v2672, %v2546
    %v2674 = vadd.f32 %v2673, %v2547
    %v2675 = vadd.f32 %v2674, %v2548
    %v2676 = vadd.f32 %v2675, %v2549
    %v2677 = vadd.f32 %v2676, %v2550
    %v2678 = vadd.f32 %v2677, %v2551
    %v2679 = vadd.f32 %v2678, %v2552
    %v2680 = vadd.f32 %v2679, %v2553
    %v2681 = vadd.f32 %v2680, %v2554
    %v2682 = vadd.f32 %v2681, %v2555
    %v2683 = vadd.f32 %v2682, %v2556
    %v2684 = vadd.f32 %v2683, %v2557
    %v2685 = vadd.f32 %v2684, %v2558
    %v2686 = vadd.f32 %v2685, %v2559
    %v2687 = vadd.f32 %v2686, %v2560
    %v2688 = vadd.f32 %v2687, %v2561
    %v2689 = vadd.f32 %v2688, %v2562
    %v2690 = vadd.f32 %v2689, %v2563
    %v2691 = vadd.f32 %v2690, %v2564
    %v2692 = vadd.f32 %v2691, %v2565
    %v2693 = vadd.f32 %v2692, %v2566
    %v2694 = vadd.f32 %v2693, %v2567
    %v2695 = vadd.f32 %v2694, %v2568
    %v2696 = vadd.f32 %v2695, %v2569
    %v2697 = vadd.f32 %v2696, %v2570
    %v2698 = vadd.f32 %v2697, %v2571
    %v2699 = vadd.f32 %v2698, %v2572
    %v2700 = vadd.f32 %v2699, %v2573
    %v2701 = vadd.f32 %v2700, %v2574
    %v2702 = vadd.f32 %v2701, %v2575
    %v2703 = vadd.f32 %v2702, %v2576
    %v2704 = vadd.f32 %v2703, %v2577
    %v2705 = vadd.f32 %v2704, %v2578
    %v2706 = vadd.f32 %v2705, %v2579
    %v2707 = vadd.f32 %v2706, %v2580
    %v2708 = vadd.f32 %v2707, %v2581
    %v2709 = vadd.f32 %v2708, %v2582
    %v2710 = vadd.f32 %v2709, %v2583
    %v2711 = vadd.f32 %v2710, %v2584
    %v2712 = vadd.f32 %v2711, %v2585
    %v2713 = vadd.f32 %v2712, %v2586
    %v2714 = vadd.f32 %v2713, %v2587
    %v2715 = vadd.f32 %v2714, %v2588
    %v2716 = vadd.f32 %v2715, %v2589
    %v2717 = vadd.f32 %v2716, %v2590
    %v2718 = vadd.f32 %v2717, %v2591
    %v2719 = vadd.f32 %v2718, %v2592
    %v2720 = vadd.f32 %v2719, %v2593
    %v2721 = vadd.f32 %v2720, %v2594
    %v2722 = vadd.f32 %v2721, %v2595
    %v2723 = vadd.f32 %v2722, %v2596
    %v2724 = vadd.f32 %v2723, %v2597
    %v2725 = vadd.f32 %v2724, %v2598
    %v2726 = vadd.f32 %v2725, %v2599
    %v2727 = vadd.f32 %v2726, %v2600
    %v2728 = vadd.f32 %v2727, %v2601
    %v2729 = vadd.f32 %v2728, %v2602
    %v2730 = vadd.f32 %v2729, %v2603
    %v2731 = vadd.f32 %v2730, %v2604
    %v2732 = vadd.f32 %v2731, %v2605
    %v2733 = vadd.f32 %v2732, %v2606
    %v2734 = vadd.f32 %v2733, %v2607
    %v2735 = vadd.f32 %v2734, %v2608
    %v2736 = vadd.f32 %v2735, %v2609
    %v2737 = vadd.f32 %v2736, %v2610
    %v2738 = vadd.f32 %v2737, %v2611
    %v2739 = vadd.f32 %v2738, %v2612
    %v2740 = vadd.f32 %v2739, %v2613
    %v2741 = vadd.f32 %v2740, %v2614
    %v2742 = vadd.f32 %v2741, %v2615
    %v2743 = vadd.f32 %v2742, %v2616
    %v2744 = vadd.f32 %v2743, %v2617
    %v2745 = vadd.f32 %v2744, %v2618
    %v2746 = vadd.f32 %v2745, %v2619
    %v2747 = vadd.f32 %v2746, %v2620
    %v2748 = vrot.slane %v2747, 4
    %v2749 = vadd.f32 %v2747, %v2748
    %v2750 = vrot.slane %v2749, 2
    %v2751 = vadd.f32 %v2749, %v2750
    %v2752 = vrot.slane %v2751, 1
    %v2753 = vadd.f32 %v2751, %v2752
    %v2754 = vmul.f32 %v2492, 0.0009765625
    %v2755 = vmul.f32 %v2753, 0.0009765625
    %v2756 = vmul.f32 %v2754, %v2754
    %v2757 = vsub.f32 %v2755, %v2756
    %v2758 = vmax.f32 %v2757, 0.0
    %v2759 = vadd.f32 %v2758, 1e-05
    %v2760 = vrsqrt.pop %v2759
    %v2761 = vmul.f32 %v1701, %v2760
    %v2762 = vmul.f32 %v2754, %v2761
    %v2763 = vsub.f32 %v1702, %v2762
    %v2764 = vmul.f32 %v1850, %v2761
    %v2765 = vmul.f32 %v1853, %v2761
    %v2766 = vmul.f32 %v1858, %v2761
    %v2767 = vmul.f32 %v1861, %v2761
    %v2768 = vmul.f32 %v1866, %v2761
    %v2769 = vmul.f32 %v1869, %v2761
    %v2770 = vmul.f32 %v1874, %v2761
    %v2771 = vmul.f32 %v1877, %v2761
    %v2772 = vmul.f32 %v1882, %v2761
    %v2773 = vmul.f32 %v1885, %v2761
    %v2774 = vmul.f32 %v1890, %v2761
    %v2775 = vmul.f32 %v1893, %v2761
    %v2776 = vmul.f32 %v1898, %v2761
    %v2777 = vmul.f32 %v1901, %v2761
    %v2778 = vmul.f32 %v1906, %v2761
    %v2779 = vmul.f32 %v1909, %v2761
    %v2780 = vmul.f32 %v1914, %v2761
    %v2781 = vmul.f32 %v1917, %v2761
    %v2782 = vmul.f32 %v1922, %v2761
    %v2783 = vmul.f32 %v1925, %v2761
    %v2784 = vmul.f32 %v1930, %v2761
    %v2785 = vmul.f32 %v1933, %v2761
    %v2786 = vmul.f32 %v1938, %v2761
    %v2787 = vmul.f32 %v1941, %v2761
    %v2788 = vmul.f32 %v1946, %v2761
    %v2789 = vmul.f32 %v1949, %v2761
    %v2790 = vmul.f32 %v1954, %v2761
    %v2791 = vmul.f32 %v1957, %v2761
    %v2792 = vmul.f32 %v1962, %v2761
    %v2793 = vmul.f32 %v1965, %v2761
    %v2794 = vmul.f32 %v1970, %v2761
    %v2795 = vmul.f32 %v1973, %v2761
    %v2796 = vmul.f32 %v1978, %v2761
    %v2797 = vmul.f32 %v1981, %v2761
    %v2798 = vmul.f32 %v1986, %v2761
    %v2799 = vmul.f32 %v1989, %v2761
    %v2800 = vmul.f32 %v1994, %v2761
    %v2801 = vmul.f32 %v1997, %v2761
    %v2802 = vmul.f32 %v2002, %v2761
    %v2803 = vmul.f32 %v2005, %v2761
    %v2804 = vmul.f32 %v2010, %v2761
    %v2805 = vmul.f32 %v2013, %v2761
    %v2806 = vmul.f32 %v2018, %v2761
    %v2807 = vmul.f32 %v2021, %v2761
    %v2808 = vmul.f32 %v2026, %v2761
    %v2809 = vmul.f32 %v2029, %v2761
    %v2810 = vmul.f32 %v2034, %v2761
    %v2811 = vmul.f32 %v2037, %v2761
    %v2812 = vmul.f32 %v2042, %v2761
    %v2813 = vmul.f32 %v2045, %v2761
    %v2814 = vmul.f32 %v2050, %v2761
    %v2815 = vmul.f32 %v2053, %v2761
    %v2816 = vmul.f32 %v2058, %v2761
    %v2817 = vmul.f32 %v2061, %v2761
    %v2818 = vmul.f32 %v2066, %v2761
    %v2819 = vmul.f32 %v2069, %v2761
    %v2820 = vmul.f32 %v2074, %v2761
    %v2821 = vmul.f32 %v2077, %v2761
    %v2822 = vmul.f32 %v2082, %v2761
    %v2823 = vmul.f32 %v2085, %v2761
    %v2824 = vmul.f32 %v2090, %v2761
    %v2825 = vmul.f32 %v2093, %v2761
    %v2826 = vmul.f32 %v2098, %v2761
    %v2827 = vmul.f32 %v2101, %v2761
    %v2828 = vmul.f32 %v2106, %v2761
    %v2829 = vmul.f32 %v2109, %v2761
    %v2830 = vmul.f32 %v2114, %v2761
    %v2831 = vmul.f32 %v2117, %v2761
    %v2832 = vmul.f32 %v2122, %v2761
    %v2833 = vmul.f32 %v2125, %v2761
    %v2834 = vmul.f32 %v2130, %v2761
    %v2835 = vmul.f32 %v2133, %v2761
    %v2836 = vmul.f32 %v2138, %v2761
    %v2837 = vmul.f32 %v2141, %v2761
    %v2838 = vmul.f32 %v2146, %v2761
    %v2839 = vmul.f32 %v2149, %v2761
    %v2840 = vmul.f32 %v2154, %v2761
    %v2841 = vmul.f32 %v2157, %v2761
    %v2842 = vmul.f32 %v2162, %v2761
    %v2843 = vmul.f32 %v2165, %v2761
    %v2844 = vmul.f32 %v2170, %v2761
    %v2845 = vmul.f32 %v2173, %v2761
    %v2846 = vmul.f32 %v2178, %v2761
    %v2847 = vmul.f32 %v2181, %v2761
    %v2848 = vmul.f32 %v2186, %v2761
    %v2849 = vmul.f32 %v2189, %v2761
    %v2850 = vmul.f32 %v2194, %v2761
    %v2851 = vmul.f32 %v2197, %v2761
    %v2852 = vmul.f32 %v2202, %v2761
    %v2853 = vmul.f32 %v2205, %v2761
    %v2854 = vmul.f32 %v2210, %v2761
    %v2855 = vmul.f32 %v2213, %v2761
    %v2856 = vmul.f32 %v2218, %v2761
    %v2857 = vmul.f32 %v2221, %v2761
    %v2858 = vmul.f32 %v2226, %v2761
    %v2859 = vmul.f32 %v2229, %v2761
    %v2860 = vmul.f32 %v2234, %v2761
    %v2861 = vmul.f32 %v2237, %v2761
    %v2862 = vmul.f32 %v2242, %v2761
    %v2863 = vmul.f32 %v2245, %v2761
    %v2864 = vmul.f32 %v2250, %v2761
    %v2865 = vmul.f32 %v2253, %v2761
    %v2866 = vmul.f32 %v2258, %v2761
    %v2867 = vmul.f32 %v2261, %v2761
    %v2868 = vmul.f32 %v2266, %v2761
    %v2869 = vmul.f32 %v2269, %v2761
    %v2870 = vmul.f32 %v2274, %v2761
    %v2871 = vmul.f32 %v2277, %v2761
    %v2872 = vmul.f32 %v2282, %v2761
    %v2873 = vmul.f32 %v2285, %v2761
    %v2874 = vmul.f32 %v2290, %v2761
    %v2875 = vmul.f32 %v2293, %v2761
    %v2876 = vmul.f32 %v2298, %v2761
    %v2877 = vmul.f32 %v2301, %v2761
    %v2878 = vmul.f32 %v2306, %v2761
    %v2879 = vmul.f32 %v2309, %v2761
    %v2880 = vmul.f32 %v2314, %v2761
    %v2881 = vmul.f32 %v2317, %v2761
    %v2882 = vmul.f32 %v2322, %v2761
    %v2883 = vmul.f32 %v2325, %v2761
    %v2884 = vmul.f32 %v2330, %v2761
    %v2885 = vmul.f32 %v2333, %v2761
    %v2886 = vmul.f32 %v2338, %v2761
    %v2887 = vmul.f32 %v2341, %v2761
    %v2888 = vmul.f32 %v2346, %v2761
    %v2889 = vmul.f32 %v2349, %v2761
    %v2890 = vmul.f32 %v2354, %v2761
    %v2891 = vmul.f32 %v2357, %v2761
    %v2892 = vadd.f32 %v2764, %v2763
    %v2893 = vadd.f32 %v2765, %v2763
    %v2894 = vadd.f32 %v2766, %v2763
    %v2895 = vadd.f32 %v2767, %v2763
    %v2896 = vadd.f32 %v2768, %v2763
    %v2897 = vadd.f32 %v2769, %v2763
    %v2898 = vadd.f32 %v2770, %v2763
    %v2899 = vadd.f32 %v2771, %v2763
    %v2900 = vadd.f32 %v2772, %v2763
    %v2901 = vadd.f32 %v2773, %v2763
    %v2902 = vadd.f32 %v2774, %v2763
    %v2903 = vadd.f32 %v2775, %v2763
    %v2904 = vadd.f32 %v2776, %v2763
    %v2905 = vadd.f32 %v2777, %v2763
    %v2906 = vadd.f32 %v2778, %v2763
    %v2907 = vadd.f32 %v2779, %v2763
    %v2908 = vadd.f32 %v2780, %v2763
    %v2909 = vadd.f32 %v2781, %v2763
    %v2910 = vadd.f32 %v2782, %v2763
    %v2911 = vadd.f32 %v2783, %v2763
    %v2912 = vadd.f32 %v2784, %v2763
    %v2913 = vadd.f32 %v2785, %v2763
    %v2914 = vadd.f32 %v2786, %v2763
    %v2915 = vadd.f32 %v2787, %v2763
    %v2916 = vadd.f32 %v2788, %v2763
    %v2917 = vadd.f32 %v2789, %v2763
    %v2918 = vadd.f32 %v2790, %v2763
    %v2919 = vadd.f32 %v2791, %v2763
    %v2920 = vadd.f32 %v2792, %v2763
    %v2921 = vadd.f32 %v2793, %v2763
    %v2922 = vadd.f32 %v2794, %v2763
    %v2923 = vadd.f32 %v2795, %v2763
    %v2924 = vadd.f32 %v2796, %v2763
    %v2925 = vadd.f32 %v2797, %v2763
    %v2926 = vadd.f32 %v2798, %v2763
    %v2927 = vadd.f32 %v2799, %v2763
    %v2928 = vadd.f32 %v2800, %v2763
    %v2929 = vadd.f32 %v2801, %v2763
    %v2930 = vadd.f32 %v2802, %v2763
    %v2931 = vadd.f32 %v2803, %v2763
    %v2932 = vadd.f32 %v2804, %v2763
    %v2933 = vadd.f32 %v2805, %v2763
    %v2934 = vadd.f32 %v2806, %v2763
    %v2935 = vadd.f32 %v2807, %v2763
    %v2936 = vadd.f32 %v2808, %v2763
    %v2937 = vadd.f32 %v2809, %v2763
    %v2938 = vadd.f32 %v2810, %v2763
    %v2939 = vadd.f32 %v2811, %v2763
    %v2940 = vadd.f32 %v2812, %v2763
    %v2941 = vadd.f32 %v2813, %v2763
    %v2942 = vadd.f32 %v2814, %v2763
    %v2943 = vadd.f32 %v2815, %v2763
    %v2944 = vadd.f32 %v2816, %v2763
    %v2945 = vadd.f32 %v2817, %v2763
    %v2946 = vadd.f32 %v2818, %v2763
    %v2947 = vadd.f32 %v2819, %v2763
    %v2948 = vadd.f32 %v2820, %v2763
    %v2949 = vadd.f32 %v2821, %v2763
    %v2950 = vadd.f32 %v2822, %v2763
    %v2951 = vadd.f32 %v2823, %v2763
    %v2952 = vadd.f32 %v2824, %v2763
    %v2953 = vadd.f32 %v2825, %v2763
    %v2954 = vadd.f32 %v2826, %v2763
    %v2955 = vadd.f32 %v2827, %v2763
    %v2956 = vadd.f32 %v2828, %v2763
    %v2957 = vadd.f32 %v2829, %v2763
    %v2958 = vadd.f32 %v2830, %v2763
    %v2959 = vadd.f32 %v2831, %v2763
    %v2960 = vadd.f32 %v2832, %v2763
    %v2961 = vadd.f32 %v2833, %v2763
    %v2962 = vadd.f32 %v2834, %v2763
    %v2963 = vadd.f32 %v2835, %v2763
    %v2964 = vadd.f32 %v2836, %v2763
    %v2965 = vadd.f32 %v2837, %v2763
    %v2966 = vadd.f32 %v2838, %v2763
    %v2967 = vadd.f32 %v2839, %v2763
    %v2968 = vadd.f32 %v2840, %v2763
    %v2969 = vadd.f32 %v2841, %v2763
    %v2970 = vadd.f32 %v2842, %v2763
    %v2971 = vadd.f32 %v2843, %v2763
    %v2972 = vadd.f32 %v2844, %v2763
    %v2973 = vadd.f32 %v2845, %v2763
    %v2974 = vadd.f32 %v2846, %v2763
    %v2975 = vadd.f32 %v2847, %v2763
    %v2976 = vadd.f32 %v2848, %v2763
    %v2977 = vadd.f32 %v2849, %v2763
    %v2978 = vadd.f32 %v2850, %v2763
    %v2979 = vadd.f32 %v2851, %v2763
    %v2980 = vadd.f32 %v2852, %v2763
    %v2981 = vadd.f32 %v2853, %v2763
    %v2982 = vadd.f32 %v2854, %v2763
    %v2983 = vadd.f32 %v2855, %v2763
    %v2984 = vadd.f32 %v2856, %v2763
    %v2985 = vadd.f32 %v2857, %v2763
    %v2986 = vadd.f32 %v2858, %v2763
    %v2987 = vadd.f32 %v2859, %v2763
    %v2988 = vadd.f32 %v2860, %v2763
    %v2989 = vadd.f32 %v2861, %v2763
    %v2990 = vadd.f32 %v2862, %v2763
    %v2991 = vadd.f32 %v2863, %v2763
    %v2992 = vadd.f32 %v2864, %v2763
    %v2993 = vadd.f32 %v2865, %v2763
    %v2994 = vadd.f32 %v2866, %v2763
    %v2995 = vadd.f32 %v2867, %v2763
    %v2996 = vadd.f32 %v2868, %v2763
    %v2997 = vadd.f32 %v2869, %v2763
    %v2998 = vadd.f32 %v2870, %v2763
    %v2999 = vadd.f32 %v2871, %v2763
    %v3000 = vadd.f32 %v2872, %v2763
    %v3001 = vadd.f32 %v2873, %v2763
    %v3002 = vadd.f32 %v2874, %v2763
    %v3003 = vadd.f32 %v2875, %v2763
    %v3004 = vadd.f32 %v2876, %v2763
    %v3005 = vadd.f32 %v2877, %v2763
    %v3006 = vadd.f32 %v2878, %v2763
    %v3007 = vadd.f32 %v2879, %v2763
    %v3008 = vadd.f32 %v2880, %v2763
    %v3009 = vadd.f32 %v2881, %v2763
    %v3010 = vadd.f32 %v2882, %v2763
    %v3011 = vadd.f32 %v2883, %v2763
    %v3012 = vadd.f32 %v2884, %v2763
    %v3013 = vadd.f32 %v2885, %v2763
    %v3014 = vadd.f32 %v2886, %v2763
    %v3015 = vadd.f32 %v2887, %v2763
    %v3016 = vadd.f32 %v2888, %v2763
    %v3017 = vadd.f32 %v2889, %v2763
    %v3018 = vadd.f32 %v2890, %v2763
    %v3019 = vadd.f32 %v2891, %v2763
    %v3020 = vmax.f32 %v2892, 0.0
    %v3021 = vmax.f32 %v2893, 0.0
    %v3022 = vmax.f32 %v2894, 0.0
    %v3023 = vmax.f32 %v2895, 0.0
    %v3024 = vmax.f32 %v2896, 0.0
    %v3025 = vmax.f32 %v2897, 0.0
    %v3026 = vmax.f32 %v2898, 0.0
    %v3027 = vmax.f32 %v2899, 0.0
    %v3028 = vmax.f32 %v2900, 0.0
    %v3029 = vmax.f32 %v2901, 0.0
    %v3030 = vmax.f32 %v2902, 0.0
    %v3031 = vmax.f32 %v2903, 0.0
    %v3032 = vmax.f32 %v2904, 0.0
    %v3033 = vmax.f32 %v2905, 0.0
    %v3034 = vmax.f32 %v2906, 0.0
    %v3035 = vmax.f32 %v2907, 0.0
    %v3036 = vmax.f32 %v2908, 0.0
    %v3037 = vmax.f32 %v2909, 0.0
    %v3038 = vmax.f32 %v2910, 0.0
    %v3039 = vmax.f32 %v2911, 0.0
    %v3040 = vmax.f32 %v2912, 0.0
    %v3041 = vmax.f32 %v2913, 0.0
    %v3042 = vmax.f32 %v2914, 0.0
    %v3043 = vmax.f32 %v2915, 0.0
    %v3044 = vmax.f32 %v2916, 0.0
    %v3045 = vmax.f32 %v2917, 0.0
    %v3046 = vmax.f32 %v2918, 0.0
    %v3047 = vmax.f32 %v2919, 0.0
    %v3048 = vmax.f32 %v2920, 0.0
    %v3049 = vmax.f32 %v2921, 0.0
    %v3050 = vmax.f32 %v2922, 0.0
    %v3051 = vmax.f32 %v2923, 0.0
    %v3052 = vmax.f32 %v2924, 0.0
    %v3053 = vmax.f32 %v2925, 0.0
    %v3054 = vmax.f32 %v2926, 0.0
    %v3055 = vmax.f32 %v2927, 0.0
    %v3056 = vmax.f32 %v2928, 0.0
    %v3057 = vmax.f32 %v2929, 0.0
    %v3058 = vmax.f32 %v2930, 0.0
    %v3059 = vmax.f32 %v2931, 0.0
    %v3060 = vmax.f32 %v2932, 0.0
    %v3061 = vmax.f32 %v2933, 0.0
    %v3062 = vmax.f32 %v2934, 0.0
    %v3063 = vmax.f32 %v2935, 0.0
    %v3064 = vmax.f32 %v2936, 0.0
    %v3065 = vmax.f32 %v2937, 0.0
    %v3066 = vmax.f32 %v2938, 0.0
    %v3067 = vmax.f32 %v2939, 0.0
    %v3068 = vmax.f32 %v2940, 0.0
    %v3069 = vmax.f32 %v2941, 0.0
    %v3070 = vmax.f32 %v2942, 0.0
    %v3071 = vmax.f32 %v2943, 0.0
    %v3072 = vmax.f32 %v2944, 0.0
    %v3073 = vmax.f32 %v2945, 0.0
    %v3074 = vmax.f32 %v2946, 0.0
    %v3075 = vmax.f32 %v2947, 0.0
    %v3076 = vmax.f32 %v2948, 0.0
    %v3077 = vmax.f32 %v2949, 0.0
    %v3078 = vmax.f32 %v2950, 0.0
    %v3079 = vmax.f32 %v2951, 0.0
    %v3080 = vmax.f32 %v2952, 0.0
    %v3081 = vmax.f32 %v2953, 0.0
    %v3082 = vmax.f32 %v2954, 0.0
    %v3083 = vmax.f32 %v2955, 0.0
    %v3084 = vmax.f32 %v2956, 0.0
    %v3085 = vmax.f32 %v2957, 0.0
    %v3086 = vmax.f32 %v2958, 0.0
    %v3087 = vmax.f32 %v2959, 0.0
    %v3088 = vmax.f32 %v2960, 0.0
    %v3089 = vmax.f32 %v2961, 0.0
    %v3090 = vmax.f32 %v2962, 0.0
    %v3091 = vmax.f32 %v2963, 0.0
    %v3092 = vmax.f32 %v2964, 0.0
    %v3093 = vmax.f32 %v2965, 0.0
    %v3094 = vmax.f32 %v2966, 0.0
    %v3095 = vmax.f32 %v2967, 0.0
    %v3096 = vmax.f32 %v2968, 0.0
    %v3097 = vmax.f32 %v2969, 0.0
    %v3098 = vmax.f32 %v2970, 0.0
    %v3099 = vmax.f32 %v2971, 0.0
    %v3100 = vmax.f32 %v2972, 0.0
    %v3101 = vmax.f32 %v2973, 0.0
    %v3102 = vmax.f32 %v2974, 0.0
    %v3103 = vmax.f32 %v2975, 0.0
    %v3104 = vmax.f32 %v2976, 0.0
    %v3105 = vmax.f32 %v2977, 0.0
    %v3106 = vmax.f32 %v2978, 0.0
    %v3107 = vmax.f32 %v2979, 0.0
    %v3108 = vmax.f32 %v2980, 0.0
    %v3109 = vmax.f32 %v2981, 0.0
    %v3110 = vmax.f32 %v2982, 0.0
    %v3111 = vmax.f32 %v2983, 0.0
    %v3112 = vmax.f32 %v2984, 0.0
    %v3113 = vmax.f32 %v2985, 0.0
    %v3114 = vmax.f32 %v2986, 0.0
    %v3115 = vmax.f32 %v2987, 0.0
    %v3116 = vmax.f32 %v2988, 0.0
    %v3117 = vmax.f32 %v2989, 0.0
    %v3118 = vmax.f32 %v2990, 0.0
    %v3119 = vmax.f32 %v2991, 0.0
    %v3120 = vmax.f32 %v2992, 0.0
    %v3121 = vmax.f32 %v2993, 0.0
    %v3122 = vmax.f32 %v2994, 0.0
    %v3123 = vmax.f32 %v2995, 0.0
    %v3124 = vmax.f32 %v2996, 0.0
    %v3125 = vmax.f32 %v2997, 0.0
    %v3126 = vmax.f32 %v2998, 0.0
    %v3127 = vmax.f32 %v2999, 0.0
    %v3128 = vmax.f32 %v3000, 0.0
    %v3129 = vmax.f32 %v3001, 0.0
    %v3130 = vmax.f32 %v3002, 0.0
    %v3131 = vmax.f32 %v3003, 0.0
    %v3132 = vmax.f32 %v3004, 0.0
    %v3133 = vmax.f32 %v3005, 0.0
    %v3134 = vmax.f32 %v3006, 0.0
    %v3135 = vmax.f32 %v3007, 0.0
    %v3136 = vmax.f32 %v3008, 0.0
    %v3137 = vmax.f32 %v3009, 0.0
    %v3138 = vmax.f32 %v3010, 0.0
    %v3139 = vmax.f32 %v3011, 0.0
    %v3140 = vmax.f32 %v3012, 0.0
    %v3141 = vmax.f32 %v3013, 0.0
    %v3142 = vmax.f32 %v3014, 0.0
    %v3143 = vmax.f32 %v3015, 0.0
    %v3144 = vmax.f32 %v3016, 0.0
    %v3145 = vmax.f32 %v3017, 0.0
    %v3146 = vmax.f32 %v3018, 0.0
    %v3147 = vmax.f32 %v3019, 0.0
    %s3148 = scalar_lea.vmem [#allocation7], 128
    %v3149 = vld [vmem:[%s3148] sm:$0xf]
    %v3150 = vld [vmem:[%s3148 + $0x4] sm:$0xf]
    %v3151 = vld [vmem:[%s3148 + $0x8] sm:$0xf]
    %v3152 = vld [vmem:[%s3148 + $0xc] sm:$0xf]
    %v3153 = vld [vmem:[%s3148 + $0x10] sm:$0xf]
    %v3154 = vld [vmem:[%s3148 + $0x14] sm:$0xf]
    %v3155 = vld [vmem:[%s3148 + $0x18] sm:$0xf]
    %v3156 = vld [vmem:[%s3148 + $0x1c] sm:$0xf]
    %v3157 = vld [vmem:[%s3148 + $0x20] sm:$0xf]
    %v3158 = vld [vmem:[%s3148 + $0x24] sm:$0xf]
    %v3159 = vld [vmem:[%s3148 + $0x28] sm:$0xf]
    %v3160 = vld [vmem:[%s3148 + $0x2c] sm:$0xf]
    %v3161 = vld [vmem:[%s3148 + $0x30] sm:$0xf]
    %v3162 = vld [vmem:[%s3148 + $0x34] sm:$0xf]
    %v3163 = vld [vmem:[%s3148 + $0x38] sm:$0xf]
    %v3164 = vld [vmem:[%s3148 + $0x3c] sm:$0xf]
    %v3165 = vld [vmem:[#allocation10 + $0x4] ss:$0 sm:$0xff]
    %v3166 = vld [vmem:[#allocation10 + $0x5] ss:$0 sm:$0xff]
    %v3167 = vpack.c.bf16 %v3021, %v3020
    %v3168 = vpack.c.bf16 %v3023, %v3022
    %v3169 = vpack.c.bf16 %v3025, %v3024
    %v3170 = vpack.c.bf16 %v3027, %v3026
    %v3171 = vpack.c.bf16 %v3029, %v3028
    %v3172 = vpack.c.bf16 %v3031, %v3030
    %v3173 = vpack.c.bf16 %v3033, %v3032
    %v3174 = vpack.c.bf16 %v3035, %v3034
    %v3175 = vpack.c.bf16 %v3037, %v3036
    %v3176 = vpack.c.bf16 %v3039, %v3038
    %v3177 = vpack.c.bf16 %v3041, %v3040
    %v3178 = vpack.c.bf16 %v3043, %v3042
    %v3179 = vpack.c.bf16 %v3045, %v3044
    %v3180 = vpack.c.bf16 %v3047, %v3046
    %v3181 = vpack.c.bf16 %v3049, %v3048
    %v3182 = vpack.c.bf16 %v3051, %v3050
    %v3183 = vpack.c.bf16 %v3053, %v3052
    %v3184 = vpack.c.bf16 %v3055, %v3054
    %v3185 = vpack.c.bf16 %v3057, %v3056
    %v3186 = vpack.c.bf16 %v3059, %v3058
    %v3187 = vpack.c.bf16 %v3061, %v3060
    %v3188 = vpack.c.bf16 %v3063, %v3062
    %v3189 = vpack.c.bf16 %v3065, %v3064
    %v3190 = vpack.c.bf16 %v3067, %v3066
    %v3191 = vpack.c.bf16 %v3069, %v3068
    %v3192 = vpack.c.bf16 %v3071, %v3070
    %v3193 = vpack.c.bf16 %v3073, %v3072
    %v3194 = vpack.c.bf16 %v3075, %v3074
    %v3195 = vpack.c.bf16 %v3077, %v3076
    %v3196 = vpack.c.bf16 %v3079, %v3078
    %v3197 = vpack.c.bf16 %v3081, %v3080
    %v3198 = vpack.c.bf16 %v3083, %v3082
    %v3199 = vpack.c.bf16 %v3085, %v3084
    %v3200 = vpack.c.bf16 %v3087, %v3086
    %v3201 = vpack.c.bf16 %v3089, %v3088
    %v3202 = vpack.c.bf16 %v3091, %v3090
    %v3203 = vpack.c.bf16 %v3093, %v3092
    %v3204 = vpack.c.bf16 %v3095, %v3094
    %v3205 = vpack.c.bf16 %v3097, %v3096
    %v3206 = vpack.c.bf16 %v3099, %v3098
    %v3207 = vpack.c.bf16 %v3101, %v3100
    %v3208 = vpack.c.bf16 %v3103, %v3102
    %v3209 = vpack.c.bf16 %v3105, %v3104
    %v3210 = vpack.c.bf16 %v3107, %v3106
    %v3211 = vpack.c.bf16 %v3109, %v3108
    %v3212 = vpack.c.bf16 %v3111, %v3110
    %v3213 = vpack.c.bf16 %v3113, %v3112
    %v3214 = vpack.c.bf16 %v3115, %v3114
    %v3215 = vpack.c.bf16 %v3117, %v3116
    %v3216 = vpack.c.bf16 %v3119, %v3118
    %v3217 = vpack.c.bf16 %v3121, %v3120
    %v3218 = vpack.c.bf16 %v3123, %v3122
    %v3219 = vpack.c.bf16 %v3125, %v3124
    %v3220 = vpack.c.bf16 %v3127, %v3126
    %v3221 = vpack.c.bf16 %v3129, %v3128
    %v3222 = vpack.c.bf16 %v3131, %v3130
    %v3223 = vpack.c.bf16 %v3133, %v3132
    %v3224 = vpack.c.bf16 %v3135, %v3134
    %v3225 = vpack.c.bf16 %v3137, %v3136
    %v3226 = vpack.c.bf16 %v3139, %v3138
    %v3227 = vpack.c.bf16 %v3141, %v3140
    %v3228 = vpack.c.bf16 %v3143, %v3142
    %v3229 = vpack.c.bf16 %v3145, %v3144
    %v3230 = vpack.c.bf16 %v3147, %v3146
    %v3247 = vunpack.c.l.b16 %v3149
    %v3248 = vunpack.c.l.b16 %v3150
    %v3249 = vunpack.c.l.b16 %v3151
    %v3250 = vunpack.c.l.b16 %v3152
    %v3251 = vunpack.c.l.b16 %v3153
    %v3252 = vunpack.c.l.b16 %v3154
    %v3253 = vunpack.c.l.b16 %v3155
    %v3254 = vunpack.c.l.b16 %v3156
    %v3255 = vunpack.c.l.b16 %v3157
    %v3256 = vunpack.c.l.b16 %v3158
    %v3257 = vunpack.c.l.b16 %v3159
    %v3258 = vunpack.c.l.b16 %v3160
    %v3259 = vunpack.c.l.b16 %v3161
    %v3260 = vunpack.c.l.b16 %v3162
    %v3261 = vunpack.c.l.b16 %v3163
    %v3262 = vunpack.c.l.b16 %v3164
    %v3263 = vpack.c.b16 %v3248, %v3247
    %v3264 = vpack.c.b16 %v3250, %v3249
    %v3265 = vpack.c.b16 %v3252, %v3251
    %v3266 = vpack.c.b16 %v3254, %v3253
    %v3267 = vpack.c.b16 %v3256, %v3255
    %v3268 = vpack.c.b16 %v3258, %v3257
    %v3269 = vpack.c.b16 %v3260, %v3259
    %v3270 = vpack.c.b16 %v3262, %v3261
    %3279 = vmatprep.subr.bf16.mxu0 0
    %3280 = vmatpush1.bf16.msra.mxu0 %v3263
    %3281 = vmatprep.subr.bf16.mxu0 0
    %3282 = vmatpush1.bf16.msra.mxu0 %v3264
    %3283 = vmatprep.subr.bf16.mxu0 0
    %3284 = vmatpush1.bf16.msra.mxu0 %v3265
    %3285 = vmatprep.subr.bf16.mxu0 0
    %3286 = vmatpush1.bf16.msra.mxu0 %v3266
    %3287 = vmatprep.subr.bf16.mxu0 0
    %3288 = vmatpush1.bf16.msra.mxu0 %v3267
    %3289 = vmatprep.subr.bf16.mxu0 0
    %3290 = vmatpush1.bf16.msra.mxu0 %v3268
    %3291 = vmatprep.subr.bf16.mxu0 0
    %3292 = vmatpush1.bf16.msra.mxu0 %v3269
    %3293 = vmatprep.subr.bf16.mxu0 0
    %3294 = vmatpush1.bf16.msra.mxu0 %v3270
    %3295 = vmatprep.subr.bf16.mxu0 0
    %3296 = vmatpush1.bf16.msra.mxu0 0
    %3297 = vmatprep.subr.bf16.mxu0 0
    %3298 = vmatpush1.bf16.msra.mxu0 0
    %3299 = vmatprep.subr.bf16.mxu0 0
    %3300 = vmatpush1.bf16.msra.mxu0 0
    %3301 = vmatprep.subr.bf16.mxu0 0
    %3302 = vmatpush1.bf16.msra.mxu0 0
    %3303 = vmatprep.subr.bf16.mxu0 0
    %3304 = vmatpush1.bf16.msra.mxu0 0
    %3305 = vmatprep.subr.bf16.mxu0 0
    %3306 = vmatpush1.bf16.msra.mxu0 0
    %3307 = vmatprep.subr.bf16.mxu0 0
    %3308 = vmatpush1.bf16.msra.mxu0 0
    %3309 = vmatprep.subr.bf16.mxu0 0
    %3310 = vmatpush1.bf16.msra.mxu0 0
    %3311 = vmatprep.mubr.bf16.mxu0 0
    %3312 = vmatmul.mubr.bf16.gmra.mrb[0].mxu0 %v3167
    %v3313 = vpop.f32.mrb[0].mxu0
    %v3314 = vadd.f32 0.0, %v3313
    %v3315 = vpop.f32.mrb[0].mxu0
    %v3316 = vpop.f32.mrb[0].mxu0
    %v3317 = vadd.f32 0.0, %v3316
    %v3318 = vpop.f32.mrb[0].mxu0
    %3319 = vmatprep.mubr.bf16.mxu0 0
    %3320 = vmatmul.mubr.bf16.gmra.mrb[0].mxu0 %v3168
    %v3321 = vpop.f32.mrb[0].mxu0
    %v3322 = vadd.f32 0.0, %v3321
    %v3323 = vpop.f32.mrb[0].mxu0
    %v3324 = vpop.f32.mrb[0].mxu0
    %v3325 = vadd.f32 0.0, %v3324
    %v3326 = vpop.f32.mrb[0].mxu0
    %3327 = vmatprep.mubr.bf16.mxu0 0
    %3328 = vmatmul.mubr.bf16.gmra.mrb[0].mxu0 %v3169
    %v3329 = vpop.f32.mrb[0].mxu0
    %v3330 = vadd.f32 0.0, %v3329
    %v3331 = vpop.f32.mrb[0].mxu0
    %v3332 = vpop.f32.mrb[0].mxu0
    %v3333 = vadd.f32 0.0, %v3332
    %v3334 = vpop.f32.mrb[0].mxu0
    %3335 = vmatprep.mubr.bf16.mxu0 0
    %3336 = vmatmul.mubr.bf16.gmra.mrb[0].mxu0 %v3170
    %v3337 = vpop.f32.mrb[0].mxu0
    %v3338 = vadd.f32 0.0, %v3337
    %v3339 = vpop.f32.mrb[0].mxu0
    %v3340 = vpop.f32.mrb[0].mxu0
    %v3341 = vadd.f32 0.0, %v3340
    %v3342 = vpop.f32.mrb[0].mxu0
    %3343 = vmatprep.mubr.bf16.mxu0 0
    %3344 = vmatmul.mubr.bf16.gmra.mrb[0].mxu0 %v3171
    %v3345 = vpop.f32.mrb[0].mxu0
    %v3346 = vadd.f32 0.0, %v3345
    %v3347 = vpop.f32.mrb[0].mxu0
    %v3348 = vpop.f32.mrb[0].mxu0
    %v3349 = vadd.f32 0.0, %v3348
    %v3350 = vpop.f32.mrb[0].mxu0
    %3351 = vmatprep.mubr.bf16.mxu0 0
    %3352 = vmatmul.mubr.bf16.gmra.mrb[0].mxu0 %v3172
    %v3353 = vpop.f32.mrb[0].mxu0
    %v3354 = vadd.f32 0.0, %v3353
    %v3355 = vpop.f32.mrb[0].mxu0
    %v3356 = vpop.f32.mrb[0].mxu0
    %v3357 = vadd.f32 0.0, %v3356
    %v3358 = vpop.f32.mrb[0].mxu0
    %3359 = vmatprep.mubr.bf16.mxu0 0
    %3360 = vmatmul.mubr.bf16.gmra.mrb[0].mxu0 %v3173
    %v3361 = vpop.f32.mrb[0].mxu0
    %v3362 = vadd.f32 0.0, %v3361
    %v3363 = vpop.f32.mrb[0].mxu0
    %v3364 = vpop.f32.mrb[0].mxu0
    %v3365 = vadd.f32 0.0, %v3364
    %v3366 = vpop.f32.mrb[0].mxu0
    %3367 = vmatprep.mubr.bf16.mxu0 0
    %3368 = vmatmul.mubr.bf16.gmra.mrb[0].mxu0 %v3174
    %v3369 = vpop.f32.mrb[0].mxu0
    %v3370 = vadd.f32 0.0, %v3369
    %v3371 = vpop.f32.mrb[0].mxu0
    %v3372 = vpop.f32.mrb[0].mxu0
    %v3373 = vadd.f32 0.0, %v3372
    %v3374 = vpop.f32.mrb[0].mxu0
    %3375 = vmatprep.mubr.bf16.mxu0 0
    %3376 = vmatmul.mubr.bf16.gmra.mrb[0].mxu0 %v3175
    %v3377 = vpop.f32.mrb[0].mxu0
    %v3378 = vadd.f32 0.0, %v3377
    %v3379 = vpop.f32.mrb[0].mxu0
    %v3380 = vpop.f32.mrb[0].mxu0
    %v3381 = vadd.f32 0.0, %v3380
    %v3382 = vpop.f32.mrb[0].mxu0
    %3383 = vmatprep.mubr.bf16.mxu0 0
    %3384 = vmatmul.mubr.bf16.gmra.mrb[0].mxu0 %v3176
    %v3385 = vpop.f32.mrb[0].mxu0
    %v3386 = vadd.f32 0.0, %v3385
    %v3387 = vpop.f32.mrb[0].mxu0
    %v3388 = vpop.f32.mrb[0].mxu0
    %v3389 = vadd.f32 0.0, %v3388
    %v3390 = vpop.f32.mrb[0].mxu0
    %3391 = vmatprep.mubr.bf16.mxu0 0
    %3392 = vmatmul.mubr.bf16.gmra.mrb[0].mxu0 %v3177
    %v3393 = vpop.f32.mrb[0].mxu0
    %v3394 = vadd.f32 0.0, %v3393
    %v3395 = vpop.f32.mrb[0].mxu0
    %v3396 = vpop.f32.mrb[0].mxu0
    %v3397 = vadd.f32 0.0, %v3396
    %v3398 = vpop.f32.mrb[0].mxu0
    %3399 = vmatprep.mubr.bf16.mxu0 0
    %3400 = vmatmul.mubr.bf16.gmra.mrb[0].mxu0 %v3178
    %v3401 = vpop.f32.mrb[0].mxu0
    %v3402 = vadd.f32 0.0, %v3401
    %v3403 = vpop.f32.mrb[0].mxu0
    %v3404 = vpop.f32.mrb[0].mxu0
    %v3405 = vadd.f32 0.0, %v3404
    %v3406 = vpop.f32.mrb[0].mxu0
    %3407 = vmatprep.mubr.bf16.mxu0 0
    %3408 = vmatmul.mubr.bf16.gmra.mrb[0].mxu0 %v3179
    %v3409 = vpop.f32.mrb[0].mxu0
    %v3410 = vadd.f32 0.0, %v3409
    %v3411 = vpop.f32.mrb[0].mxu0
    %v3412 = vpop.f32.mrb[0].mxu0
    %v3413 = vadd.f32 0.0, %v3412
    %v3414 = vpop.f32.mrb[0].mxu0
    %3415 = vmatprep.mubr.bf16.mxu0 0
    %3416 = vmatmul.mubr.bf16.gmra.mrb[0].mxu0 %v3180
    %v3417 = vpop.f32.mrb[0].mxu0
    %v3418 = vadd.f32 0.0, %v3417
    %v3419 = vpop.f32.mrb[0].mxu0
    %v3420 = vpop.f32.mrb[0].mxu0
    %v3421 = vadd.f32 0.0, %v3420
    %v3422 = vpop.f32.mrb[0].mxu0
    %3423 = vmatprep.mubr.bf16.mxu0 0
    %3424 = vmatmul.mubr.bf16.gmra.mrb[0].mxu0 %v3181
    %v3425 = vpop.f32.mrb[0].mxu0
    %v3426 = vadd.f32 0.0, %v3425
    %v3427 = vpop.f32.mrb[0].mxu0
    %v3428 = vpop.f32.mrb[0].mxu0
    %v3429 = vadd.f32 0.0, %v3428
    %v3430 = vpop.f32.mrb[0].mxu0
    %3431 = vmatprep.mubr.bf16.mxu0 0
    %3432 = vmatmul.mubr.bf16.gmra.mrb[0].mxu0 %v3182
    %v3433 = vpop.f32.mrb[0].mxu0
    %v3434 = vadd.f32 0.0, %v3433
    %v3435 = vpop.f32.mrb[0].mxu0
    %v3436 = vpop.f32.mrb[0].mxu0
    %v3437 = vadd.f32 0.0, %v3436
    %v3438 = vpop.f32.mrb[0].mxu0
    %3439 = vmatprep.mubr.bf16.mxu0 0
    %3440 = vmatmul.mubr.bf16.gmra.mrb[0].mxu0 %v3183
    %v3441 = vpop.f32.mrb[0].mxu0
    %v3442 = vadd.f32 0.0, %v3441
    %v3443 = vpop.f32.mrb[0].mxu0
    %v3444 = vpop.f32.mrb[0].mxu0
    %v3445 = vadd.f32 0.0, %v3444
    %v3446 = vpop.f32.mrb[0].mxu0
    %3447 = vmatprep.mubr.bf16.mxu0 0
    %3448 = vmatmul.mubr.bf16.gmra.mrb[0].mxu0 %v3184
    %v3449 = vpop.f32.mrb[0].mxu0
    %v3450 = vadd.f32 0.0, %v3449
    %v3451 = vpop.f32.mrb[0].mxu0
    %v3452 = vpop.f32.mrb[0].mxu0
    %v3453 = vadd.f32 0.0, %v3452
    %v3454 = vpop.f32.mrb[0].mxu0
    %3455 = vmatprep.mubr.bf16.mxu0 0
    %3456 = vmatmul.mubr.bf16.gmra.mrb[0].mxu0 %v3185
    %v3457 = vpop.f32.mrb[0].mxu0
    %v3458 = vadd.f32 0.0, %v3457
    %v3459 = vpop.f32.mrb[0].mxu0
    %v3460 = vpop.f32.mrb[0].mxu0
    %v3461 = vadd.f32 0.0, %v3460
    %v3462 = vpop.f32.mrb[0].mxu0
    %3463 = vmatprep.mubr.bf16.mxu0 0
    %3464 = vmatmul.mubr.bf16.gmra.mrb[0].mxu0 %v3186
    %v3465 = vpop.f32.mrb[0].mxu0
    %v3466 = vadd.f32 0.0, %v3465
    %v3467 = vpop.f32.mrb[0].mxu0
    %v3468 = vpop.f32.mrb[0].mxu0
    %v3469 = vadd.f32 0.0, %v3468
    %v3470 = vpop.f32.mrb[0].mxu0
    %3471 = vmatprep.mubr.bf16.mxu0 0
    %3472 = vmatmul.mubr.bf16.gmra.mrb[0].mxu0 %v3187
    %v3473 = vpop.f32.mrb[0].mxu0
    %v3474 = vadd.f32 0.0, %v3473
    %v3475 = vpop.f32.mrb[0].mxu0
    %v3476 = vpop.f32.mrb[0].mxu0
    %v3477 = vadd.f32 0.0, %v3476
    %v3478 = vpop.f32.mrb[0].mxu0
    %3479 = vmatprep.mubr.bf16.mxu0 0
    %3480 = vmatmul.mubr.bf16.gmra.mrb[0].mxu0 %v3188
    %v3481 = vpop.f32.mrb[0].mxu0
    %v3482 = vadd.f32 0.0, %v3481
    %v3483 = vpop.f32.mrb[0].mxu0
    %v3484 = vpop.f32.mrb[0].mxu0
    %v3485 = vadd.f32 0.0, %v3484
    %v3486 = vpop.f32.mrb[0].mxu0
    %3487 = vmatprep.mubr.bf16.mxu0 0
    %3488 = vmatmul.mubr.bf16.gmra.mrb[0].mxu0 %v3189
    %v3489 = vpop.f32.mrb[0].mxu0
    %v3490 = vadd.f32 0.0, %v3489
    %v3491 = vpop.f32.mrb[0].mxu0
    %v3492 = vpop.f32.mrb[0].mxu0
    %v3493 = vadd.f32 0.0, %v3492
    %v3494 = vpop.f32.mrb[0].mxu0
    %3495 = vmatprep.mubr.bf16.mxu0 0
    %3496 = vmatmul.mubr.bf16.gmra.mrb[0].mxu0 %v3190
    %v3497 = vpop.f32.mrb[0].mxu0
    %v3498 = vadd.f32 0.0, %v3497
    %v3499 = vpop.f32.mrb[0].mxu0
    %v3500 = vpop.f32.mrb[0].mxu0
    %v3501 = vadd.f32 0.0, %v3500
    %v3502 = vpop.f32.mrb[0].mxu0
    %3503 = vmatprep.mubr.bf16.mxu0 0
    %3504 = vmatmul.mubr.bf16.gmra.mrb[0].mxu0 %v3191
    %v3505 = vpop.f32.mrb[0].mxu0
    %v3506 = vadd.f32 0.0, %v3505
    %v3507 = vpop.f32.mrb[0].mxu0
    %v3508 = vpop.f32.mrb[0].mxu0
    %v3509 = vadd.f32 0.0, %v3508
    %v3510 = vpop.f32.mrb[0].mxu0
    %3511 = vmatprep.mubr.bf16.mxu0 0
    %3512 = vmatmul.mubr.bf16.gmra.mrb[0].mxu0 %v3192
    %v3513 = vpop.f32.mrb[0].mxu0
    %v3514 = vadd.f32 0.0, %v3513
    %v3515 = vpop.f32.mrb[0].mxu0
    %v3516 = vpop.f32.mrb[0].mxu0
    %v3517 = vadd.f32 0.0, %v3516
    %v3518 = vpop.f32.mrb[0].mxu0
    %3519 = vmatprep.mubr.bf16.mxu0 0
    %3520 = vmatmul.mubr.bf16.gmra.mrb[0].mxu0 %v3193
    %v3521 = vpop.f32.mrb[0].mxu0
    %v3522 = vadd.f32 0.0, %v3521
    %v3523 = vpop.f32.mrb[0].mxu0
    %v3524 = vpop.f32.mrb[0].mxu0
    %v3525 = vadd.f32 0.0, %v3524
    %v3526 = vpop.f32.mrb[0].mxu0
    %3527 = vmatprep.mubr.bf16.mxu0 0
    %3528 = vmatmul.mubr.bf16.gmra.mrb[0].mxu0 %v3194
    %v3529 = vpop.f32.mrb[0].mxu0
    %v3530 = vadd.f32 0.0, %v3529
    %v3531 = vpop.f32.mrb[0].mxu0
    %v3532 = vpop.f32.mrb[0].mxu0
    %v3533 = vadd.f32 0.0, %v3532
    %v3534 = vpop.f32.mrb[0].mxu0
    %3535 = vmatprep.mubr.bf16.mxu0 0
    %3536 = vmatmul.mubr.bf16.gmra.mrb[0].mxu0 %v3195
    %v3537 = vpop.f32.mrb[0].mxu0
    %v3538 = vadd.f32 0.0, %v3537
    %v3539 = vpop.f32.mrb[0].mxu0
    %v3540 = vpop.f32.mrb[0].mxu0
    %v3541 = vadd.f32 0.0, %v3540
    %v3542 = vpop.f32.mrb[0].mxu0
    %3543 = vmatprep.mubr.bf16.mxu0 0
    %3544 = vmatmul.mubr.bf16.gmra.mrb[0].mxu0 %v3196
    %v3545 = vpop.f32.mrb[0].mxu0
    %v3546 = vadd.f32 0.0, %v3545
    %v3547 = vpop.f32.mrb[0].mxu0
    %v3548 = vpop.f32.mrb[0].mxu0
    %v3549 = vadd.f32 0.0, %v3548
    %v3550 = vpop.f32.mrb[0].mxu0
    %3551 = vmatprep.mubr.bf16.mxu0 0
    %3552 = vmatmul.mubr.bf16.gmra.mrb[0].mxu0 %v3197
    %v3553 = vpop.f32.mrb[0].mxu0
    %v3554 = vadd.f32 0.0, %v3553
    %v3555 = vpop.f32.mrb[0].mxu0
    %v3556 = vpop.f32.mrb[0].mxu0
    %v3557 = vadd.f32 0.0, %v3556
    %v3558 = vpop.f32.mrb[0].mxu0
    %3559 = vmatprep.mubr.bf16.mxu0 0
    %3560 = vmatmul.mubr.bf16.gmra.mrb[0].mxu0 %v3198
    %v3561 = vpop.f32.mrb[0].mxu0
    %v3562 = vadd.f32 0.0, %v3561
    %v3563 = vpop.f32.mrb[0].mxu0
    %v3564 = vpop.f32.mrb[0].mxu0
    %v3565 = vadd.f32 0.0, %v3564
    %v3566 = vpop.f32.mrb[0].mxu0
    %3567 = vmatprep.mubr.bf16.mxu0 0
    %3568 = vmatmul.mubr.bf16.gmra.mrb[0].mxu0 %v3199
    %v3569 = vpop.f32.mrb[0].mxu0
    %v3570 = vadd.f32 0.0, %v3569
    %v3571 = vpop.f32.mrb[0].mxu0
    %v3572 = vpop.f32.mrb[0].mxu0
    %v3573 = vadd.f32 0.0, %v3572
    %v3574 = vpop.f32.mrb[0].mxu0
    %3575 = vmatprep.mubr.bf16.mxu0 0
    %3576 = vmatmul.mubr.bf16.gmra.mrb[0].mxu0 %v3200
    %v3577 = vpop.f32.mrb[0].mxu0
    %v3578 = vadd.f32 0.0, %v3577
    %v3579 = vpop.f32.mrb[0].mxu0
    %v3580 = vpop.f32.mrb[0].mxu0
    %v3581 = vadd.f32 0.0, %v3580
    %v3582 = vpop.f32.mrb[0].mxu0
    %3583 = vmatprep.mubr.bf16.mxu0 0
    %3584 = vmatmul.mubr.bf16.gmra.mrb[0].mxu0 %v3201
    %v3585 = vpop.f32.mrb[0].mxu0
    %v3586 = vadd.f32 0.0, %v3585
    %v3587 = vpop.f32.mrb[0].mxu0
    %v3588 = vpop.f32.mrb[0].mxu0
    %v3589 = vadd.f32 0.0, %v3588
    %v3590 = vpop.f32.mrb[0].mxu0
    %3591 = vmatprep.mubr.bf16.mxu0 0
    %3592 = vmatmul.mubr.bf16.gmra.mrb[0].mxu0 %v3202
    %v3593 = vpop.f32.mrb[0].mxu0
    %v3594 = vadd.f32 0.0, %v3593
    %v3595 = vpop.f32.mrb[0].mxu0
    %v3596 = vpop.f32.mrb[0].mxu0
    %v3597 = vadd.f32 0.0, %v3596
    %v3598 = vpop.f32.mrb[0].mxu0
    %3599 = vmatprep.mubr.bf16.mxu0 0
    %3600 = vmatmul.mubr.bf16.gmra.mrb[0].mxu0 %v3203
    %v3601 = vpop.f32.mrb[0].mxu0
    %v3602 = vadd.f32 0.0, %v3601
    %v3603 = vpop.f32.mrb[0].mxu0
    %v3604 = vpop.f32.mrb[0].mxu0
    %v3605 = vadd.f32 0.0, %v3604
    %v3606 = vpop.f32.mrb[0].mxu0
    %3607 = vmatprep.mubr.bf16.mxu0 0
    %3608 = vmatmul.mubr.bf16.gmra.mrb[0].mxu0 %v3204
    %v3609 = vpop.f32.mrb[0].mxu0
    %v3610 = vadd.f32 0.0, %v3609
    %v3611 = vpop.f32.mrb[0].mxu0
    %v3612 = vpop.f32.mrb[0].mxu0
    %v3613 = vadd.f32 0.0, %v3612
    %v3614 = vpop.f32.mrb[0].mxu0
    %3615 = vmatprep.mubr.bf16.mxu0 0
    %3616 = vmatmul.mubr.bf16.gmra.mrb[0].mxu0 %v3205
    %v3617 = vpop.f32.mrb[0].mxu0
    %v3618 = vadd.f32 0.0, %v3617
    %v3619 = vpop.f32.mrb[0].mxu0
    %v3620 = vpop.f32.mrb[0].mxu0
    %v3621 = vadd.f32 0.0, %v3620
    %v3622 = vpop.f32.mrb[0].mxu0
    %3623 = vmatprep.mubr.bf16.mxu0 0
    %3624 = vmatmul.mubr.bf16.gmra.mrb[0].mxu0 %v3206
    %v3625 = vpop.f32.mrb[0].mxu0
    %v3626 = vadd.f32 0.0, %v3625
    %v3627 = vpop.f32.mrb[0].mxu0
    %v3628 = vpop.f32.mrb[0].mxu0
    %v3629 = vadd.f32 0.0, %v3628
    %v3630 = vpop.f32.mrb[0].mxu0
    %3631 = vmatprep.mubr.bf16.mxu0 0
    %3632 = vmatmul.mubr.bf16.gmra.mrb[0].mxu0 %v3207
    %v3633 = vpop.f32.mrb[0].mxu0
    %v3634 = vadd.f32 0.0, %v3633
    %v3635 = vpop.f32.mrb[0].mxu0
    %v3636 = vpop.f32.mrb[0].mxu0
    %v3637 = vadd.f32 0.0, %v3636
    %v3638 = vpop.f32.mrb[0].mxu0
    %3639 = vmatprep.mubr.bf16.mxu0 0
    %3640 = vmatmul.mubr.bf16.gmra.mrb[0].mxu0 %v3208
    %v3641 = vpop.f32.mrb[0].mxu0
    %v3642 = vadd.f32 0.0, %v3641
    %v3643 = vpop.f32.mrb[0].mxu0
    %v3644 = vpop.f32.mrb[0].mxu0
    %v3645 = vadd.f32 0.0, %v3644
    %v3646 = vpop.f32.mrb[0].mxu0
    %3647 = vmatprep.mubr.bf16.mxu0 0
    %3648 = vmatmul.mubr.bf16.gmra.mrb[0].mxu0 %v3209
    %v3649 = vpop.f32.mrb[0].mxu0
    %v3650 = vadd.f32 0.0, %v3649
    %v3651 = vpop.f32.mrb[0].mxu0
    %v3652 = vpop.f32.mrb[0].mxu0
    %v3653 = vadd.f32 0.0, %v3652
    %v3654 = vpop.f32.mrb[0].mxu0
    %3655 = vmatprep.mubr.bf16.mxu0 0
    %3656 = vmatmul.mubr.bf16.gmra.mrb[0].mxu0 %v3210
    %v3657 = vpop.f32.mrb[0].mxu0
    %v3658 = vadd.f32 0.0, %v3657
    %v3659 = vpop.f32.mrb[0].mxu0
    %v3660 = vpop.f32.mrb[0].mxu0
    %v3661 = vadd.f32 0.0, %v3660
    %v3662 = vpop.f32.mrb[0].mxu0
    %3663 = vmatprep.mubr.bf16.mxu0 0
    %3664 = vmatmul.mubr.bf16.gmra.mrb[0].mxu0 %v3211
    %v3665 = vpop.f32.mrb[0].mxu0
    %v3666 = vadd.f32 0.0, %v3665
    %v3667 = vpop.f32.mrb[0].mxu0
    %v3668 = vpop.f32.mrb[0].mxu0
    %v3669 = vadd.f32 0.0, %v3668
    %v3670 = vpop.f32.mrb[0].mxu0
    %3671 = vmatprep.mubr.bf16.mxu0 0
    %3672 = vmatmul.mubr.bf16.gmra.mrb[0].mxu0 %v3212
    %v3673 = vpop.f32.mrb[0].mxu0
    %v3674 = vadd.f32 0.0, %v3673
    %v3675 = vpop.f32.mrb[0].mxu0
    %v3676 = vpop.f32.mrb[0].mxu0
    %v3677 = vadd.f32 0.0, %v3676
    %v3678 = vpop.f32.mrb[0].mxu0
    %3679 = vmatprep.mubr.bf16.mxu0 0
    %3680 = vmatmul.mubr.bf16.gmra.mrb[0].mxu0 %v3213
    %v3681 = vpop.f32.mrb[0].mxu0
    %v3682 = vadd.f32 0.0, %v3681
    %v3683 = vpop.f32.mrb[0].mxu0
    %v3684 = vpop.f32.mrb[0].mxu0
    %v3685 = vadd.f32 0.0, %v3684
    %v3686 = vpop.f32.mrb[0].mxu0
    %3687 = vmatprep.mubr.bf16.mxu0 0
    %3688 = vmatmul.mubr.bf16.gmra.mrb[0].mxu0 %v3214
    %v3689 = vpop.f32.mrb[0].mxu0
    %v3690 = vadd.f32 0.0, %v3689
    %v3691 = vpop.f32.mrb[0].mxu0
    %v3692 = vpop.f32.mrb[0].mxu0
    %v3693 = vadd.f32 0.0, %v3692
    %v3694 = vpop.f32.mrb[0].mxu0
    %3695 = vmatprep.mubr.bf16.mxu0 0
    %3696 = vmatmul.mubr.bf16.gmra.mrb[0].mxu0 %v3215
    %v3697 = vpop.f32.mrb[0].mxu0
    %v3698 = vadd.f32 0.0, %v3697
    %v3699 = vpop.f32.mrb[0].mxu0
    %v3700 = vpop.f32.mrb[0].mxu0
    %v3701 = vadd.f32 0.0, %v3700
    %v3702 = vpop.f32.mrb[0].mxu0
    %3703 = vmatprep.mubr.bf16.mxu0 0
    %3704 = vmatmul.mubr.bf16.gmra.mrb[0].mxu0 %v3216
    %v3705 = vpop.f32.mrb[0].mxu0
    %v3706 = vadd.f32 0.0, %v3705
    %v3707 = vpop.f32.mrb[0].mxu0
    %v3708 = vpop.f32.mrb[0].mxu0
    %v3709 = vadd.f32 0.0, %v3708
    %v3710 = vpop.f32.mrb[0].mxu0
    %3711 = vmatprep.mubr.bf16.mxu0 0
    %3712 = vmatmul.mubr.bf16.gmra.mrb[0].mxu0 %v3217
    %v3713 = vpop.f32.mrb[0].mxu0
    %v3714 = vadd.f32 0.0, %v3713
    %v3715 = vpop.f32.mrb[0].mxu0
    %v3716 = vpop.f32.mrb[0].mxu0
    %v3717 = vadd.f32 0.0, %v3716
    %v3718 = vpop.f32.mrb[0].mxu0
    %3719 = vmatprep.mubr.bf16.mxu0 0
    %3720 = vmatmul.mubr.bf16.gmra.mrb[0].mxu0 %v3218
    %v3721 = vpop.f32.mrb[0].mxu0
    %v3722 = vadd.f32 0.0, %v3721
    %v3723 = vpop.f32.mrb[0].mxu0
    %v3724 = vpop.f32.mrb[0].mxu0
    %v3725 = vadd.f32 0.0, %v3724
    %v3726 = vpop.f32.mrb[0].mxu0
    %3727 = vmatprep.mubr.bf16.mxu0 0
    %3728 = vmatmul.mubr.bf16.gmra.mrb[0].mxu0 %v3219
    %v3729 = vpop.f32.mrb[0].mxu0
    %v3730 = vadd.f32 0.0, %v3729
    %v3731 = vpop.f32.mrb[0].mxu0
    %v3732 = vpop.f32.mrb[0].mxu0
    %v3733 = vadd.f32 0.0, %v3732
    %v3734 = vpop.f32.mrb[0].mxu0
    %3735 = vmatprep.mubr.bf16.mxu0 0
    %3736 = vmatmul.mubr.bf16.gmra.mrb[0].mxu0 %v3220
    %v3737 = vpop.f32.mrb[0].mxu0
    %v3738 = vadd.f32 0.0, %v3737
    %v3739 = vpop.f32.mrb[0].mxu0
    %v3740 = vpop.f32.mrb[0].mxu0
    %v3741 = vadd.f32 0.0, %v3740
    %v3742 = vpop.f32.mrb[0].mxu0
    %3743 = vmatprep.mubr.bf16.mxu0 0
    %3744 = vmatmul.mubr.bf16.gmra.mrb[0].mxu0 %v3221
    %v3745 = vpop.f32.mrb[0].mxu0
    %v3746 = vadd.f32 0.0, %v3745
    %v3747 = vpop.f32.mrb[0].mxu0
    %v3748 = vpop.f32.mrb[0].mxu0
    %v3749 = vadd.f32 0.0, %v3748
    %v3750 = vpop.f32.mrb[0].mxu0
    %3751 = vmatprep.mubr.bf16.mxu0 0
    %3752 = vmatmul.mubr.bf16.gmra.mrb[0].mxu0 %v3222
    %v3753 = vpop.f32.mrb[0].mxu0
    %v3754 = vadd.f32 0.0, %v3753
    %v3755 = vpop.f32.mrb[0].mxu0
    %v3756 = vpop.f32.mrb[0].mxu0
    %v3757 = vadd.f32 0.0, %v3756
    %v3758 = vpop.f32.mrb[0].mxu0
    %3759 = vmatprep.mubr.bf16.mxu0 0
    %3760 = vmatmul.mubr.bf16.gmra.mrb[0].mxu0 %v3223
    %v3761 = vpop.f32.mrb[0].mxu0
    %v3762 = vadd.f32 0.0, %v3761
    %v3763 = vpop.f32.mrb[0].mxu0
    %v3764 = vpop.f32.mrb[0].mxu0
    %v3765 = vadd.f32 0.0, %v3764
    %v3766 = vpop.f32.mrb[0].mxu0
    %3767 = vmatprep.mubr.bf16.mxu0 0
    %3768 = vmatmul.mubr.bf16.gmra.mrb[0].mxu0 %v3224
    %v3769 = vpop.f32.mrb[0].mxu0
    %v3770 = vadd.f32 0.0, %v3769
    %v3771 = vpop.f32.mrb[0].mxu0
    %v3772 = vpop.f32.mrb[0].mxu0
    %v3773 = vadd.f32 0.0, %v3772
    %v3774 = vpop.f32.mrb[0].mxu0
    %3775 = vmatprep.mubr.bf16.mxu0 0
    %3776 = vmatmul.mubr.bf16.gmra.mrb[0].mxu0 %v3225
    %v3777 = vpop.f32.mrb[0].mxu0
    %v3778 = vadd.f32 0.0, %v3777
    %v3779 = vpop.f32.mrb[0].mxu0
    %v3780 = vpop.f32.mrb[0].mxu0
    %v3781 = vadd.f32 0.0, %v3780
    %v3782 = vpop.f32.mrb[0].mxu0
    %3783 = vmatprep.mubr.bf16.mxu0 0
    %3784 = vmatmul.mubr.bf16.gmra.mrb[0].mxu0 %v3226
    %v3785 = vpop.f32.mrb[0].mxu0
    %v3786 = vadd.f32 0.0, %v3785
    %v3787 = vpop.f32.mrb[0].mxu0
    %v3788 = vpop.f32.mrb[0].mxu0
    %v3789 = vadd.f32 0.0, %v3788
    %v3790 = vpop.f32.mrb[0].mxu0
    %3791 = vmatprep.mubr.bf16.mxu0 0
    %3792 = vmatmul.mubr.bf16.gmra.mrb[0].mxu0 %v3227
    %v3793 = vpop.f32.mrb[0].mxu0
    %v3794 = vadd.f32 0.0, %v3793
    %v3795 = vpop.f32.mrb[0].mxu0
    %v3796 = vpop.f32.mrb[0].mxu0
    %v3797 = vadd.f32 0.0, %v3796
    %v3798 = vpop.f32.mrb[0].mxu0
    %3799 = vmatprep.mubr.bf16.mxu0 0
    %3800 = vmatmul.mubr.bf16.gmra.mrb[0].mxu0 %v3228
    %v3801 = vpop.f32.mrb[0].mxu0
    %v3802 = vadd.f32 0.0, %v3801
    %v3803 = vpop.f32.mrb[0].mxu0
    %v3804 = vpop.f32.mrb[0].mxu0
    %v3805 = vadd.f32 0.0, %v3804
    %v3806 = vpop.f32.mrb[0].mxu0
    %3807 = vmatprep.mubr.bf16.mxu0 0
    %3808 = vmatmul.mubr.bf16.gmra.mrb[0].mxu0 %v3229
    %v3809 = vpop.f32.mrb[0].mxu0
    %v3810 = vadd.f32 0.0, %v3809
    %v3811 = vpop.f32.mrb[0].mxu0
    %v3812 = vpop.f32.mrb[0].mxu0
    %v3813 = vadd.f32 0.0, %v3812
    %v3814 = vpop.f32.mrb[0].mxu0
    %3815 = vmatprep.mubr.bf16.mxu0 0
    %3816 = vmatmul.mubr.bf16.gmra.mrb[0].mxu0 %v3230
    %v3817 = vpop.f32.mrb[0].mxu0
    %v3818 = vadd.f32 0.0, %v3817
    %v3819 = vpop.f32.mrb[0].mxu0
    %v3820 = vpop.f32.mrb[0].mxu0
    %v3821 = vadd.f32 0.0, %v3820
    %v3822 = vpop.f32.mrb[0].mxu0
    %3823 = vdwg.mxu0
    %v3824 = vadd.f32 %v3314, %v3317
    %v3825 = vadd.f32 %v3824, %v3322
    %v3826 = vadd.f32 %v3825, %v3325
    %v3827 = vadd.f32 %v3826, %v3330
    %v3828 = vadd.f32 %v3827, %v3333
    %v3829 = vadd.f32 %v3828, %v3338
    %v3830 = vadd.f32 %v3829, %v3341
    %v3831 = vadd.f32 %v3830, %v3346
    %v3832 = vadd.f32 %v3831, %v3349
    %v3833 = vadd.f32 %v3832, %v3354
    %v3834 = vadd.f32 %v3833, %v3357
    %v3835 = vadd.f32 %v3834, %v3362
    %v3836 = vadd.f32 %v3835, %v3365
    %v3837 = vadd.f32 %v3836, %v3370
    %v3838 = vadd.f32 %v3837, %v3373
    %v3839 = vadd.f32 %v3838, %v3378
    %v3840 = vadd.f32 %v3839, %v3381
    %v3841 = vadd.f32 %v3840, %v3386
    %v3842 = vadd.f32 %v3841, %v3389
    %v3843 = vadd.f32 %v3842, %v3394
    %v3844 = vadd.f32 %v3843, %v3397
    %v3845 = vadd.f32 %v3844, %v3402
    %v3846 = vadd.f32 %v3845, %v3405
    %v3847 = vadd.f32 %v3846, %v3410
    %v3848 = vadd.f32 %v3847, %v3413
    %v3849 = vadd.f32 %v3848, %v3418
    %v3850 = vadd.f32 %v3849, %v3421
    %v3851 = vadd.f32 %v3850, %v3426
    %v3852 = vadd.f32 %v3851, %v3429
    %v3853 = vadd.f32 %v3852, %v3434
    %v3854 = vadd.f32 %v3853, %v3437
    %v3855 = vadd.f32 %v3854, %v3442
    %v3856 = vadd.f32 %v3855, %v3445
    %v3857 = vadd.f32 %v3856, %v3450
    %v3858 = vadd.f32 %v3857, %v3453
    %v3859 = vadd.f32 %v3858, %v3458
    %v3860 = vadd.f32 %v3859, %v3461
    %v3861 = vadd.f32 %v3860, %v3466
    %v3862 = vadd.f32 %v3861, %v3469
    %v3863 = vadd.f32 %v3862, %v3474
    %v3864 = vadd.f32 %v3863, %v3477
    %v3865 = vadd.f32 %v3864, %v3482
    %v3866 = vadd.f32 %v3865, %v3485
    %v3867 = vadd.f32 %v3866, %v3490
    %v3868 = vadd.f32 %v3867, %v3493
    %v3869 = vadd.f32 %v3868, %v3498
    %v3870 = vadd.f32 %v3869, %v3501
    %v3871 = vadd.f32 %v3870, %v3506
    %v3872 = vadd.f32 %v3871, %v3509
    %v3873 = vadd.f32 %v3872, %v3514
    %v3874 = vadd.f32 %v3873, %v3517
    %v3875 = vadd.f32 %v3874, %v3522
    %v3876 = vadd.f32 %v3875, %v3525
    %v3877 = vadd.f32 %v3876, %v3530
    %v3878 = vadd.f32 %v3877, %v3533
    %v3879 = vadd.f32 %v3878, %v3538
    %v3880 = vadd.f32 %v3879, %v3541
    %v3881 = vadd.f32 %v3880, %v3546
    %v3882 = vadd.f32 %v3881, %v3549
    %v3883 = vadd.f32 %v3882, %v3554
    %v3884 = vadd.f32 %v3883, %v3557
    %v3885 = vadd.f32 %v3884, %v3562
    %v3886 = vadd.f32 %v3885, %v3565
    %v3887 = vadd.f32 %v3886, %v3570
    %v3888 = vadd.f32 %v3887, %v3573
    %v3889 = vadd.f32 %v3888, %v3578
    %v3890 = vadd.f32 %v3889, %v3581
    %v3891 = vadd.f32 %v3890, %v3586
    %v3892 = vadd.f32 %v3891, %v3589
    %v3893 = vadd.f32 %v3892, %v3594
    %v3894 = vadd.f32 %v3893, %v3597
    %v3895 = vadd.f32 %v3894, %v3602
    %v3896 = vadd.f32 %v3895, %v3605
    %v3897 = vadd.f32 %v3896, %v3610
    %v3898 = vadd.f32 %v3897, %v3613
    %v3899 = vadd.f32 %v3898, %v3618
    %v3900 = vadd.f32 %v3899, %v3621
    %v3901 = vadd.f32 %v3900, %v3626
    %v3902 = vadd.f32 %v3901, %v3629
    %v3903 = vadd.f32 %v3902, %v3634
    %v3904 = vadd.f32 %v3903, %v3637
    %v3905 = vadd.f32 %v3904, %v3642
    %v3906 = vadd.f32 %v3905, %v3645
    %v3907 = vadd.f32 %v3906, %v3650
    %v3908 = vadd.f32 %v3907, %v3653
    %v3909 = vadd.f32 %v3908, %v3658
    %v3910 = vadd.f32 %v3909, %v3661
    %v3911 = vadd.f32 %v3910, %v3666
    %v3912 = vadd.f32 %v3911, %v3669
    %v3913 = vadd.f32 %v3912, %v3674
    %v3914 = vadd.f32 %v3913, %v3677
    %v3915 = vadd.f32 %v3914, %v3682
    %v3916 = vadd.f32 %v3915, %v3685
    %v3917 = vadd.f32 %v3916, %v3690
    %v3918 = vadd.f32 %v3917, %v3693
    %v3919 = vadd.f32 %v3918, %v3698
    %v3920 = vadd.f32 %v3919, %v3701
    %v3921 = vadd.f32 %v3920, %v3706
    %v3922 = vadd.f32 %v3921, %v3709
    %v3923 = vadd.f32 %v3922, %v3714
    %v3924 = vadd.f32 %v3923, %v3717
    %v3925 = vadd.f32 %v3924, %v3722
    %v3926 = vadd.f32 %v3925, %v3725
    %v3927 = vadd.f32 %v3926, %v3730
    %v3928 = vadd.f32 %v3927, %v3733
    %v3929 = vadd.f32 %v3928, %v3738
    %v3930 = vadd.f32 %v3929, %v3741
    %v3931 = vadd.f32 %v3930, %v3746
    %v3932 = vadd.f32 %v3931, %v3749
    %v3933 = vadd.f32 %v3932, %v3754
    %v3934 = vadd.f32 %v3933, %v3757
    %v3935 = vadd.f32 %v3934, %v3762
    %v3936 = vadd.f32 %v3935, %v3765
    %v3937 = vadd.f32 %v3936, %v3770
    %v3938 = vadd.f32 %v3937, %v3773
    %v3939 = vadd.f32 %v3938, %v3778
    %v3940 = vadd.f32 %v3939, %v3781
    %v3941 = vadd.f32 %v3940, %v3786
    %v3942 = vadd.f32 %v3941, %v3789
    %v3943 = vadd.f32 %v3942, %v3794
    %v3944 = vadd.f32 %v3943, %v3797
    %v3945 = vadd.f32 %v3944, %v3802
    %v3946 = vadd.f32 %v3945, %v3805
    %v3947 = vadd.f32 %v3946, %v3810
    %v3948 = vadd.f32 %v3947, %v3813
    %v3949 = vadd.f32 %v3948, %v3818
    %v3950 = vadd.f32 %v3949, %v3821
    %v3951 = vrot.slane %v3950, 4
    %v3952 = vadd.f32 %v3950, %v3951
    %v3953 = vrot.slane %v3952, 2
    %v3954 = vadd.f32 %v3952, %v3953
    %v3955 = vrot.slane %v3954, 1
    %v3956 = vadd.f32 %v3954, %v3955
    %v3957 = vmul.f32 %v3314, %v3314
    %v3958 = vmul.f32 %v3317, %v3317
    %v3959 = vmul.f32 %v3322, %v3322
    %v3960 = vmul.f32 %v3325, %v3325
    %v3961 = vmul.f32 %v3330, %v3330
    %v3962 = vmul.f32 %v3333, %v3333
    %v3963 = vmul.f32 %v3338, %v3338
    %v3964 = vmul.f32 %v3341, %v3341
    %v3965 = vmul.f32 %v3346, %v3346
    %v3966 = vmul.f32 %v3349, %v3349
    %v3967 = vmul.f32 %v3354, %v3354
    %v3968 = vmul.f32 %v3357, %v3357
    %v3969 = vmul.f32 %v3362, %v3362
    %v3970 = vmul.f32 %v3365, %v3365
    %v3971 = vmul.f32 %v3370, %v3370
    %v3972 = vmul.f32 %v3373, %v3373
    %v3973 = vmul.f32 %v3378, %v3378
    %v3974 = vmul.f32 %v3381, %v3381
    %v3975 = vmul.f32 %v3386, %v3386
    %v3976 = vmul.f32 %v3389, %v3389
    %v3977 = vmul.f32 %v3394, %v3394
    %v3978 = vmul.f32 %v3397, %v3397
    %v3979 = vmul.f32 %v3402, %v3402
    %v3980 = vmul.f32 %v3405, %v3405
    %v3981 = vmul.f32 %v3410, %v3410
    %v3982 = vmul.f32 %v3413, %v3413
    %v3983 = vmul.f32 %v3418, %v3418
    %v3984 = vmul.f32 %v3421, %v3421
    %v3985 = vmul.f32 %v3426, %v3426
    %v3986 = vmul.f32 %v3429, %v3429
    %v3987 = vmul.f32 %v3434, %v3434
    %v3988 = vmul.f32 %v3437, %v3437
    %v3989 = vmul.f32 %v3442, %v3442
    %v3990 = vmul.f32 %v3445, %v3445
    %v3991 = vmul.f32 %v3450, %v3450
    %v3992 = vmul.f32 %v3453, %v3453
    %v3993 = vmul.f32 %v3458, %v3458
    %v3994 = vmul.f32 %v3461, %v3461
    %v3995 = vmul.f32 %v3466, %v3466
    %v3996 = vmul.f32 %v3469, %v3469
    %v3997 = vmul.f32 %v3474, %v3474
    %v3998 = vmul.f32 %v3477, %v3477
    %v3999 = vmul.f32 %v3482, %v3482
    %v4000 = vmul.f32 %v3485, %v3485
    %v4001 = vmul.f32 %v3490, %v3490
    %v4002 = vmul.f32 %v3493, %v3493
    %v4003 = vmul.f32 %v3498, %v3498
    %v4004 = vmul.f32 %v3501, %v3501
    %v4005 = vmul.f32 %v3506, %v3506
    %v4006 = vmul.f32 %v3509, %v3509
    %v4007 = vmul.f32 %v3514, %v3514
    %v4008 = vmul.f32 %v3517, %v3517
    %v4009 = vmul.f32 %v3522, %v3522
    %v4010 = vmul.f32 %v3525, %v3525
    %v4011 = vmul.f32 %v3530, %v3530
    %v4012 = vmul.f32 %v3533, %v3533
    %v4013 = vmul.f32 %v3538, %v3538
    %v4014 = vmul.f32 %v3541, %v3541
    %v4015 = vmul.f32 %v3546, %v3546
    %v4016 = vmul.f32 %v3549, %v3549
    %v4017 = vmul.f32 %v3554, %v3554
    %v4018 = vmul.f32 %v3557, %v3557
    %v4019 = vmul.f32 %v3562, %v3562
    %v4020 = vmul.f32 %v3565, %v3565
    %v4021 = vmul.f32 %v3570, %v3570
    %v4022 = vmul.f32 %v3573, %v3573
    %v4023 = vmul.f32 %v3578, %v3578
    %v4024 = vmul.f32 %v3581, %v3581
    %v4025 = vmul.f32 %v3586, %v3586
    %v4026 = vmul.f32 %v3589, %v3589
    %v4027 = vmul.f32 %v3594, %v3594
    %v4028 = vmul.f32 %v3597, %v3597
    %v4029 = vmul.f32 %v3602, %v3602
    %v4030 = vmul.f32 %v3605, %v3605
    %v4031 = vmul.f32 %v3610, %v3610
    %v4032 = vmul.f32 %v3613, %v3613
    %v4033 = vmul.f32 %v3618, %v3618
    %v4034 = vmul.f32 %v3621, %v3621
    %v4035 = vmul.f32 %v3626, %v3626
    %v4036 = vmul.f32 %v3629, %v3629
    %v4037 = vmul.f32 %v3634, %v3634
    %v4038 = vmul.f32 %v3637, %v3637
    %v4039 = vmul.f32 %v3642, %v3642
    %v4040 = vmul.f32 %v3645, %v3645
    %v4041 = vmul.f32 %v3650, %v3650
    %v4042 = vmul.f32 %v3653, %v3653
    %v4043 = vmul.f32 %v3658, %v3658
    %v4044 = vmul.f32 %v3661, %v3661
    %v4045 = vmul.f32 %v3666, %v3666
    %v4046 = vmul.f32 %v3669, %v3669
    %v4047 = vmul.f32 %v3674, %v3674
    %v4048 = vmul.f32 %v3677, %v3677
    %v4049 = vmul.f32 %v3682, %v3682
    %v4050 = vmul.f32 %v3685, %v3685
    %v4051 = vmul.f32 %v3690, %v3690
    %v4052 = vmul.f32 %v3693, %v3693
    %v4053 = vmul.f32 %v3698, %v3698
    %v4054 = vmul.f32 %v3701, %v3701
    %v4055 = vmul.f32 %v3706, %v3706
    %v4056 = vmul.f32 %v3709, %v3709
    %v4057 = vmul.f32 %v3714, %v3714
    %v4058 = vmul.f32 %v3717, %v3717
    %v4059 = vmul.f32 %v3722, %v3722
    %v4060 = vmul.f32 %v3725, %v3725
    %v4061 = vmul.f32 %v3730, %v3730
    %v4062 = vmul.f32 %v3733, %v3733
    %v4063 = vmul.f32 %v3738, %v3738
    %v4064 = vmul.f32 %v3741, %v3741
    %v4065 = vmul.f32 %v3746, %v3746
    %v4066 = vmul.f32 %v3749, %v3749
    %v4067 = vmul.f32 %v3754, %v3754
    %v4068 = vmul.f32 %v3757, %v3757
    %v4069 = vmul.f32 %v3762, %v3762
    %v4070 = vmul.f32 %v3765, %v3765
    %v4071 = vmul.f32 %v3770, %v3770
    %v4072 = vmul.f32 %v3773, %v3773
    %v4073 = vmul.f32 %v3778, %v3778
    %v4074 = vmul.f32 %v3781, %v3781
    %v4075 = vmul.f32 %v3786, %v3786
    %v4076 = vmul.f32 %v3789, %v3789
    %v4077 = vmul.f32 %v3794, %v3794
    %v4078 = vmul.f32 %v3797, %v3797
    %v4079 = vmul.f32 %v3802, %v3802
    %v4080 = vmul.f32 %v3805, %v3805
    %v4081 = vmul.f32 %v3810, %v3810
    %v4082 = vmul.f32 %v3813, %v3813
    %v4083 = vmul.f32 %v3818, %v3818
    %v4084 = vmul.f32 %v3821, %v3821
    %v4085 = vadd.f32 %v3957, %v3958
    %v4086 = vadd.f32 %v4085, %v3959
    %v4087 = vadd.f32 %v4086, %v3960
    %v4088 = vadd.f32 %v4087, %v3961
    %v4089 = vadd.f32 %v4088, %v3962
    %v4090 = vadd.f32 %v4089, %v3963
    %v4091 = vadd.f32 %v4090, %v3964
    %v4092 = vadd.f32 %v4091, %v3965
    %v4093 = vadd.f32 %v4092, %v3966
    %v4094 = vadd.f32 %v4093, %v3967
    %v4095 = vadd.f32 %v4094, %v3968
    %v4096 = vadd.f32 %v4095, %v3969
    %v4097 = vadd.f32 %v4096, %v3970
    %v4098 = vadd.f32 %v4097, %v3971
    %v4099 = vadd.f32 %v4098, %v3972
    %v4100 = vadd.f32 %v4099, %v3973
    %v4101 = vadd.f32 %v4100, %v3974
    %v4102 = vadd.f32 %v4101, %v3975
    %v4103 = vadd.f32 %v4102, %v3976
    %v4104 = vadd.f32 %v4103, %v3977
    %v4105 = vadd.f32 %v4104, %v3978
    %v4106 = vadd.f32 %v4105, %v3979
    %v4107 = vadd.f32 %v4106, %v3980
    %v4108 = vadd.f32 %v4107, %v3981
    %v4109 = vadd.f32 %v4108, %v3982
    %v4110 = vadd.f32 %v4109, %v3983
    %v4111 = vadd.f32 %v4110, %v3984
    %v4112 = vadd.f32 %v4111, %v3985
    %v4113 = vadd.f32 %v4112, %v3986
    %v4114 = vadd.f32 %v4113, %v3987
    %v4115 = vadd.f32 %v4114, %v3988
    %v4116 = vadd.f32 %v4115, %v3989
    %v4117 = vadd.f32 %v4116, %v3990
    %v4118 = vadd.f32 %v4117, %v3991
    %v4119 = vadd.f32 %v4118, %v3992
    %v4120 = vadd.f32 %v4119, %v3993
    %v4121 = vadd.f32 %v4120, %v3994
    %v4122 = vadd.f32 %v4121, %v3995
    %v4123 = vadd.f32 %v4122, %v3996
    %v4124 = vadd.f32 %v4123, %v3997
    %v4125 = vadd.f32 %v4124, %v3998
    %v4126 = vadd.f32 %v4125, %v3999
    %v4127 = vadd.f32 %v4126, %v4000
    %v4128 = vadd.f32 %v4127, %v4001
    %v4129 = vadd.f32 %v4128, %v4002
    %v4130 = vadd.f32 %v4129, %v4003
    %v4131 = vadd.f32 %v4130, %v4004
    %v4132 = vadd.f32 %v4131, %v4005
    %v4133 = vadd.f32 %v4132, %v4006
    %v4134 = vadd.f32 %v4133, %v4007
    %v4135 = vadd.f32 %v4134, %v4008
    %v4136 = vadd.f32 %v4135, %v4009
    %v4137 = vadd.f32 %v4136, %v4010
    %v4138 = vadd.f32 %v4137, %v4011
    %v4139 = vadd.f32 %v4138, %v4012
    %v4140 = vadd.f32 %v4139, %v4013
    %v4141 = vadd.f32 %v4140, %v4014
    %v4142 = vadd.f32 %v4141, %v4015
    %v4143 = vadd.f32 %v4142, %v4016
    %v4144 = vadd.f32 %v4143, %v4017
    %v4145 = vadd.f32 %v4144, %v4018
    %v4146 = vadd.f32 %v4145, %v4019
    %v4147 = vadd.f32 %v4146, %v4020
    %v4148 = vadd.f32 %v4147, %v4021
    %v4149 = vadd.f32 %v4148, %v4022
    %v4150 = vadd.f32 %v4149, %v4023
    %v4151 = vadd.f32 %v4150, %v4024
    %v4152 = vadd.f32 %v4151, %v4025
    %v4153 = vadd.f32 %v4152, %v4026
    %v4154 = vadd.f32 %v4153, %v4027
    %v4155 = vadd.f32 %v4154, %v4028
    %v4156 = vadd.f32 %v4155, %v4029
    %v4157 = vadd.f32 %v4156, %v4030
    %v4158 = vadd.f32 %v4157, %v4031
    %v4159 = vadd.f32 %v4158, %v4032
    %v4160 = vadd.f32 %v4159, %v4033
    %v4161 = vadd.f32 %v4160, %v4034
    %v4162 = vadd.f32 %v4161, %v4035
    %v4163 = vadd.f32 %v4162, %v4036
    %v4164 = vadd.f32 %v4163, %v4037
    %v4165 = vadd.f32 %v4164, %v4038
    %v4166 = vadd.f32 %v4165, %v4039
    %v4167 = vadd.f32 %v4166, %v4040
    %v4168 = vadd.f32 %v4167, %v4041
    %v4169 = vadd.f32 %v4168, %v4042
    %v4170 = vadd.f32 %v4169, %v4043
    %v4171 = vadd.f32 %v4170, %v4044
    %v4172 = vadd.f32 %v4171, %v4045
    %v4173 = vadd.f32 %v4172, %v4046
    %v4174 = vadd.f32 %v4173, %v4047
    %v4175 = vadd.f32 %v4174, %v4048
    %v4176 = vadd.f32 %v4175, %v4049
    %v4177 = vadd.f32 %v4176, %v4050
    %v4178 = vadd.f32 %v4177, %v4051
    %v4179 = vadd.f32 %v4178, %v4052
    %v4180 = vadd.f32 %v4179, %v4053
    %v4181 = vadd.f32 %v4180, %v4054
    %v4182 = vadd.f32 %v4181, %v4055
    %v4183 = vadd.f32 %v4182, %v4056
    %v4184 = vadd.f32 %v4183, %v4057
    %v4185 = vadd.f32 %v4184, %v4058
    %v4186 = vadd.f32 %v4185, %v4059
    %v4187 = vadd.f32 %v4186, %v4060
    %v4188 = vadd.f32 %v4187, %v4061
    %v4189 = vadd.f32 %v4188, %v4062
    %v4190 = vadd.f32 %v4189, %v4063
    %v4191 = vadd.f32 %v4190, %v4064
    %v4192 = vadd.f32 %v4191, %v4065
    %v4193 = vadd.f32 %v4192, %v4066
    %v4194 = vadd.f32 %v4193, %v4067
    %v4195 = vadd.f32 %v4194, %v4068
    %v4196 = vadd.f32 %v4195, %v4069
    %v4197 = vadd.f32 %v4196, %v4070
    %v4198 = vadd.f32 %v4197, %v4071
    %v4199 = vadd.f32 %v4198, %v4072
    %v4200 = vadd.f32 %v4199, %v4073
    %v4201 = vadd.f32 %v4200, %v4074
    %v4202 = vadd.f32 %v4201, %v4075
    %v4203 = vadd.f32 %v4202, %v4076
    %v4204 = vadd.f32 %v4203, %v4077
    %v4205 = vadd.f32 %v4204, %v4078
    %v4206 = vadd.f32 %v4205, %v4079
    %v4207 = vadd.f32 %v4206, %v4080
    %v4208 = vadd.f32 %v4207, %v4081
    %v4209 = vadd.f32 %v4208, %v4082
    %v4210 = vadd.f32 %v4209, %v4083
    %v4211 = vadd.f32 %v4210, %v4084
    %v4212 = vrot.slane %v4211, 4
    %v4213 = vadd.f32 %v4211, %v4212
    %v4214 = vrot.slane %v4213, 2
    %v4215 = vadd.f32 %v4213, %v4214
    %v4216 = vrot.slane %v4215, 1
    %v4217 = vadd.f32 %v4215, %v4216
    %v4218 = vmul.f32 %v3956, 0.0009765625
    %v4219 = vmul.f32 %v4217, 0.0009765625
    %v4220 = vmul.f32 %v4218, %v4218
    %v4221 = vsub.f32 %v4219, %v4220
    %v4222 = vmax.f32 %v4221, 0.0
    %v4223 = vadd.f32 %v4222, 1e-05
    %v4224 = vrsqrt.pop %v4223
    %v4225 = vmul.f32 %v3165, %v4224
    %v4226 = vmul.f32 %v4218, %v4225
    %v4227 = vsub.f32 %v3166, %v4226
    %v4228 = vmul.f32 %v3314, %v4225
    %v4229 = vmul.f32 %v3317, %v4225
    %v4230 = vmul.f32 %v3322, %v4225
    %v4231 = vmul.f32 %v3325, %v4225
    %v4232 = vmul.f32 %v3330, %v4225
    %v4233 = vmul.f32 %v3333, %v4225
    %v4234 = vmul.f32 %v3338, %v4225
    %v4235 = vmul.f32 %v3341, %v4225
    %v4236 = vmul.f32 %v3346, %v4225
    %v4237 = vmul.f32 %v3349, %v4225
    %v4238 = vmul.f32 %v3354, %v4225
    %v4239 = vmul.f32 %v3357, %v4225
    %v4240 = vmul.f32 %v3362, %v4225
    %v4241 = vmul.f32 %v3365, %v4225
    %v4242 = vmul.f32 %v3370, %v4225
    %v4243 = vmul.f32 %v3373, %v4225
    %v4244 = vmul.f32 %v3378, %v4225
    %v4245 = vmul.f32 %v3381, %v4225
    %v4246 = vmul.f32 %v3386, %v4225
    %v4247 = vmul.f32 %v3389, %v4225
    %v4248 = vmul.f32 %v3394, %v4225
    %v4249 = vmul.f32 %v3397, %v4225
    %v4250 = vmul.f32 %v3402, %v4225
    %v4251 = vmul.f32 %v3405, %v4225
    %v4252 = vmul.f32 %v3410, %v4225
    %v4253 = vmul.f32 %v3413, %v4225
    %v4254 = vmul.f32 %v3418, %v4225
    %v4255 = vmul.f32 %v3421, %v4225
    %v4256 = vmul.f32 %v3426, %v4225
    %v4257 = vmul.f32 %v3429, %v4225
    %v4258 = vmul.f32 %v3434, %v4225
    %v4259 = vmul.f32 %v3437, %v4225
    %v4260 = vmul.f32 %v3442, %v4225
    %v4261 = vmul.f32 %v3445, %v4225
    %v4262 = vmul.f32 %v3450, %v4225
    %v4263 = vmul.f32 %v3453, %v4225
    %v4264 = vmul.f32 %v3458, %v4225
    %v4265 = vmul.f32 %v3461, %v4225
    %v4266 = vmul.f32 %v3466, %v4225
    %v4267 = vmul.f32 %v3469, %v4225
    %v4268 = vmul.f32 %v3474, %v4225
    %v4269 = vmul.f32 %v3477, %v4225
    %v4270 = vmul.f32 %v3482, %v4225
    %v4271 = vmul.f32 %v3485, %v4225
    %v4272 = vmul.f32 %v3490, %v4225
    %v4273 = vmul.f32 %v3493, %v4225
    %v4274 = vmul.f32 %v3498, %v4225
    %v4275 = vmul.f32 %v3501, %v4225
    %v4276 = vmul.f32 %v3506, %v4225
    %v4277 = vmul.f32 %v3509, %v4225
    %v4278 = vmul.f32 %v3514, %v4225
    %v4279 = vmul.f32 %v3517, %v4225
    %v4280 = vmul.f32 %v3522, %v4225
    %v4281 = vmul.f32 %v3525, %v4225
    %v4282 = vmul.f32 %v3530, %v4225
    %v4283 = vmul.f32 %v3533, %v4225
    %v4284 = vmul.f32 %v3538, %v4225
    %v4285 = vmul.f32 %v3541, %v4225
    %v4286 = vmul.f32 %v3546, %v4225
    %v4287 = vmul.f32 %v3549, %v4225
    %v4288 = vmul.f32 %v3554, %v4225
    %v4289 = vmul.f32 %v3557, %v4225
    %v4290 = vmul.f32 %v3562, %v4225
    %v4291 = vmul.f32 %v3565, %v4225
    %v4292 = vmul.f32 %v3570, %v4225
    %v4293 = vmul.f32 %v3573, %v4225
    %v4294 = vmul.f32 %v3578, %v4225
    %v4295 = vmul.f32 %v3581, %v4225
    %v4296 = vmul.f32 %v3586, %v4225
    %v4297 = vmul.f32 %v3589, %v4225
    %v4298 = vmul.f32 %v3594, %v4225
    %v4299 = vmul.f32 %v3597, %v4225
    %v4300 = vmul.f32 %v3602, %v4225
    %v4301 = vmul.f32 %v3605, %v4225
    %v4302 = vmul.f32 %v3610, %v4225
    %v4303 = vmul.f32 %v3613, %v4225
    %v4304 = vmul.f32 %v3618, %v4225
    %v4305 = vmul.f32 %v3621, %v4225
    %v4306 = vmul.f32 %v3626, %v4225
    %v4307 = vmul.f32 %v3629, %v4225
    %v4308 = vmul.f32 %v3634, %v4225
    %v4309 = vmul.f32 %v3637, %v4225
    %v4310 = vmul.f32 %v3642, %v4225
    %v4311 = vmul.f32 %v3645, %v4225
    %v4312 = vmul.f32 %v3650, %v4225
    %v4313 = vmul.f32 %v3653, %v4225
    %v4314 = vmul.f32 %v3658, %v4225
    %v4315 = vmul.f32 %v3661, %v4225
    %v4316 = vmul.f32 %v3666, %v4225
    %v4317 = vmul.f32 %v3669, %v4225
    %v4318 = vmul.f32 %v3674, %v4225
    %v4319 = vmul.f32 %v3677, %v4225
    %v4320 = vmul.f32 %v3682, %v4225
    %v4321 = vmul.f32 %v3685, %v4225
    %v4322 = vmul.f32 %v3690, %v4225
    %v4323 = vmul.f32 %v3693, %v4225
    %v4324 = vmul.f32 %v3698, %v4225
    %v4325 = vmul.f32 %v3701, %v4225
    %v4326 = vmul.f32 %v3706, %v4225
    %v4327 = vmul.f32 %v3709, %v4225
    %v4328 = vmul.f32 %v3714, %v4225
    %v4329 = vmul.f32 %v3717, %v4225
    %v4330 = vmul.f32 %v3722, %v4225
    %v4331 = vmul.f32 %v3725, %v4225
    %v4332 = vmul.f32 %v3730, %v4225
    %v4333 = vmul.f32 %v3733, %v4225
    %v4334 = vmul.f32 %v3738, %v4225
    %v4335 = vmul.f32 %v3741, %v4225
    %v4336 = vmul.f32 %v3746, %v4225
    %v4337 = vmul.f32 %v3749, %v4225
    %v4338 = vmul.f32 %v3754, %v4225
    %v4339 = vmul.f32 %v3757, %v4225
    %v4340 = vmul.f32 %v3762, %v4225
    %v4341 = vmul.f32 %v3765, %v4225
    %v4342 = vmul.f32 %v3770, %v4225
    %v4343 = vmul.f32 %v3773, %v4225
    %v4344 = vmul.f32 %v3778, %v4225
    %v4345 = vmul.f32 %v3781, %v4225
    %v4346 = vmul.f32 %v3786, %v4225
    %v4347 = vmul.f32 %v3789, %v4225
    %v4348 = vmul.f32 %v3794, %v4225
    %v4349 = vmul.f32 %v3797, %v4225
    %v4350 = vmul.f32 %v3802, %v4225
    %v4351 = vmul.f32 %v3805, %v4225
    %v4352 = vmul.f32 %v3810, %v4225
    %v4353 = vmul.f32 %v3813, %v4225
    %v4354 = vmul.f32 %v3818, %v4225
    %v4355 = vmul.f32 %v3821, %v4225
    %v4356 = vadd.f32 %v4228, %v4227
    %v4357 = vadd.f32 %v4229, %v4227
    %v4358 = vadd.f32 %v4230, %v4227
    %v4359 = vadd.f32 %v4231, %v4227
    %v4360 = vadd.f32 %v4232, %v4227
    %v4361 = vadd.f32 %v4233, %v4227
    %v4362 = vadd.f32 %v4234, %v4227
    %v4363 = vadd.f32 %v4235, %v4227
    %v4364 = vadd.f32 %v4236, %v4227
    %v4365 = vadd.f32 %v4237, %v4227
    %v4366 = vadd.f32 %v4238, %v4227
    %v4367 = vadd.f32 %v4239, %v4227
    %v4368 = vadd.f32 %v4240, %v4227
    %v4369 = vadd.f32 %v4241, %v4227
    %v4370 = vadd.f32 %v4242, %v4227
    %v4371 = vadd.f32 %v4243, %v4227
    %v4372 = vadd.f32 %v4244, %v4227
    %v4373 = vadd.f32 %v4245, %v4227
    %v4374 = vadd.f32 %v4246, %v4227
    %v4375 = vadd.f32 %v4247, %v4227
    %v4376 = vadd.f32 %v4248, %v4227
    %v4377 = vadd.f32 %v4249, %v4227
    %v4378 = vadd.f32 %v4250, %v4227
    %v4379 = vadd.f32 %v4251, %v4227
    %v4380 = vadd.f32 %v4252, %v4227
    %v4381 = vadd.f32 %v4253, %v4227
    %v4382 = vadd.f32 %v4254, %v4227
    %v4383 = vadd.f32 %v4255, %v4227
    %v4384 = vadd.f32 %v4256, %v4227
    %v4385 = vadd.f32 %v4257, %v4227
    %v4386 = vadd.f32 %v4258, %v4227
    %v4387 = vadd.f32 %v4259, %v4227
    %v4388 = vadd.f32 %v4260, %v4227
    %v4389 = vadd.f32 %v4261, %v4227
    %v4390 = vadd.f32 %v4262, %v4227
    %v4391 = vadd.f32 %v4263, %v4227
    %v4392 = vadd.f32 %v4264, %v4227
    %v4393 = vadd.f32 %v4265, %v4227
    %v4394 = vadd.f32 %v4266, %v4227
    %v4395 = vadd.f32 %v4267, %v4227
    %v4396 = vadd.f32 %v4268, %v4227
    %v4397 = vadd.f32 %v4269, %v4227
    %v4398 = vadd.f32 %v4270, %v4227
    %v4399 = vadd.f32 %v4271, %v4227
    %v4400 = vadd.f32 %v4272, %v4227
    %v4401 = vadd.f32 %v4273, %v4227
    %v4402 = vadd.f32 %v4274, %v4227
    %v4403 = vadd.f32 %v4275, %v4227
    %v4404 = vadd.f32 %v4276, %v4227
    %v4405 = vadd.f32 %v4277, %v4227
    %v4406 = vadd.f32 %v4278, %v4227
    %v4407 = vadd.f32 %v4279, %v4227
    %v4408 = vadd.f32 %v4280, %v4227
    %v4409 = vadd.f32 %v4281, %v4227
    %v4410 = vadd.f32 %v4282, %v4227
    %v4411 = vadd.f32 %v4283, %v4227
    %v4412 = vadd.f32 %v4284, %v4227
    %v4413 = vadd.f32 %v4285, %v4227
    %v4414 = vadd.f32 %v4286, %v4227
    %v4415 = vadd.f32 %v4287, %v4227
    %v4416 = vadd.f32 %v4288, %v4227
    %v4417 = vadd.f32 %v4289, %v4227
    %v4418 = vadd.f32 %v4290, %v4227
    %v4419 = vadd.f32 %v4291, %v4227
    %v4420 = vadd.f32 %v4292, %v4227
    %v4421 = vadd.f32 %v4293, %v4227
    %v4422 = vadd.f32 %v4294, %v4227
    %v4423 = vadd.f32 %v4295, %v4227
    %v4424 = vadd.f32 %v4296, %v4227
    %v4425 = vadd.f32 %v4297, %v4227
    %v4426 = vadd.f32 %v4298, %v4227
    %v4427 = vadd.f32 %v4299, %v4227
    %v4428 = vadd.f32 %v4300, %v4227
    %v4429 = vadd.f32 %v4301, %v4227
    %v4430 = vadd.f32 %v4302, %v4227
    %v4431 = vadd.f32 %v4303, %v4227
    %v4432 = vadd.f32 %v4304, %v4227
    %v4433 = vadd.f32 %v4305, %v4227
    %v4434 = vadd.f32 %v4306, %v4227
    %v4435 = vadd.f32 %v4307, %v4227
    %v4436 = vadd.f32 %v4308, %v4227
    %v4437 = vadd.f32 %v4309, %v4227
    %v4438 = vadd.f32 %v4310, %v4227
    %v4439 = vadd.f32 %v4311, %v4227
    %v4440 = vadd.f32 %v4312, %v4227
    %v4441 = vadd.f32 %v4313, %v4227
    %v4442 = vadd.f32 %v4314, %v4227
    %v4443 = vadd.f32 %v4315, %v4227
    %v4444 = vadd.f32 %v4316, %v4227
    %v4445 = vadd.f32 %v4317, %v4227
    %v4446 = vadd.f32 %v4318, %v4227
    %v4447 = vadd.f32 %v4319, %v4227
    %v4448 = vadd.f32 %v4320, %v4227
    %v4449 = vadd.f32 %v4321, %v4227
    %v4450 = vadd.f32 %v4322, %v4227
    %v4451 = vadd.f32 %v4323, %v4227
    %v4452 = vadd.f32 %v4324, %v4227
    %v4453 = vadd.f32 %v4325, %v4227
    %v4454 = vadd.f32 %v4326, %v4227
    %v4455 = vadd.f32 %v4327, %v4227
    %v4456 = vadd.f32 %v4328, %v4227
    %v4457 = vadd.f32 %v4329, %v4227
    %v4458 = vadd.f32 %v4330, %v4227
    %v4459 = vadd.f32 %v4331, %v4227
    %v4460 = vadd.f32 %v4332, %v4227
    %v4461 = vadd.f32 %v4333, %v4227
    %v4462 = vadd.f32 %v4334, %v4227
    %v4463 = vadd.f32 %v4335, %v4227
    %v4464 = vadd.f32 %v4336, %v4227
    %v4465 = vadd.f32 %v4337, %v4227
    %v4466 = vadd.f32 %v4338, %v4227
    %v4467 = vadd.f32 %v4339, %v4227
    %v4468 = vadd.f32 %v4340, %v4227
    %v4469 = vadd.f32 %v4341, %v4227
    %v4470 = vadd.f32 %v4342, %v4227
    %v4471 = vadd.f32 %v4343, %v4227
    %v4472 = vadd.f32 %v4344, %v4227
    %v4473 = vadd.f32 %v4345, %v4227
    %v4474 = vadd.f32 %v4346, %v4227
    %v4475 = vadd.f32 %v4347, %v4227
    %v4476 = vadd.f32 %v4348, %v4227
    %v4477 = vadd.f32 %v4349, %v4227
    %v4478 = vadd.f32 %v4350, %v4227
    %v4479 = vadd.f32 %v4351, %v4227
    %v4480 = vadd.f32 %v4352, %v4227
    %v4481 = vadd.f32 %v4353, %v4227
    %v4482 = vadd.f32 %v4354, %v4227
    %v4483 = vadd.f32 %v4355, %v4227
    %v4484 = vmax.f32 %v4356, 0.0
    %v4485 = vmax.f32 %v4357, 0.0
    %v4486 = vmax.f32 %v4358, 0.0
    %v4487 = vmax.f32 %v4359, 0.0
    %v4488 = vmax.f32 %v4360, 0.0
    %v4489 = vmax.f32 %v4361, 0.0
    %v4490 = vmax.f32 %v4362, 0.0
    %v4491 = vmax.f32 %v4363, 0.0
    %v4492 = vmax.f32 %v4364, 0.0
    %v4493 = vmax.f32 %v4365, 0.0
    %v4494 = vmax.f32 %v4366, 0.0
    %v4495 = vmax.f32 %v4367, 0.0
    %v4496 = vmax.f32 %v4368, 0.0
    %v4497 = vmax.f32 %v4369, 0.0
    %v4498 = vmax.f32 %v4370, 0.0
    %v4499 = vmax.f32 %v4371, 0.0
    %v4500 = vmax.f32 %v4372, 0.0
    %v4501 = vmax.f32 %v4373, 0.0
    %v4502 = vmax.f32 %v4374, 0.0
    %v4503 = vmax.f32 %v4375, 0.0
    %v4504 = vmax.f32 %v4376, 0.0
    %v4505 = vmax.f32 %v4377, 0.0
    %v4506 = vmax.f32 %v4378, 0.0
    %v4507 = vmax.f32 %v4379, 0.0
    %v4508 = vmax.f32 %v4380, 0.0
    %v4509 = vmax.f32 %v4381, 0.0
    %v4510 = vmax.f32 %v4382, 0.0
    %v4511 = vmax.f32 %v4383, 0.0
    %v4512 = vmax.f32 %v4384, 0.0
    %v4513 = vmax.f32 %v4385, 0.0
    %v4514 = vmax.f32 %v4386, 0.0
    %v4515 = vmax.f32 %v4387, 0.0
    %v4516 = vmax.f32 %v4388, 0.0
    %v4517 = vmax.f32 %v4389, 0.0
    %v4518 = vmax.f32 %v4390, 0.0
    %v4519 = vmax.f32 %v4391, 0.0
    %v4520 = vmax.f32 %v4392, 0.0
    %v4521 = vmax.f32 %v4393, 0.0
    %v4522 = vmax.f32 %v4394, 0.0
    %v4523 = vmax.f32 %v4395, 0.0
    %v4524 = vmax.f32 %v4396, 0.0
    %v4525 = vmax.f32 %v4397, 0.0
    %v4526 = vmax.f32 %v4398, 0.0
    %v4527 = vmax.f32 %v4399, 0.0
    %v4528 = vmax.f32 %v4400, 0.0
    %v4529 = vmax.f32 %v4401, 0.0
    %v4530 = vmax.f32 %v4402, 0.0
    %v4531 = vmax.f32 %v4403, 0.0
    %v4532 = vmax.f32 %v4404, 0.0
    %v4533 = vmax.f32 %v4405, 0.0
    %v4534 = vmax.f32 %v4406, 0.0
    %v4535 = vmax.f32 %v4407, 0.0
    %v4536 = vmax.f32 %v4408, 0.0
    %v4537 = vmax.f32 %v4409, 0.0
    %v4538 = vmax.f32 %v4410, 0.0
    %v4539 = vmax.f32 %v4411, 0.0
    %v4540 = vmax.f32 %v4412, 0.0
    %v4541 = vmax.f32 %v4413, 0.0
    %v4542 = vmax.f32 %v4414, 0.0
    %v4543 = vmax.f32 %v4415, 0.0
    %v4544 = vmax.f32 %v4416, 0.0
    %v4545 = vmax.f32 %v4417, 0.0
    %v4546 = vmax.f32 %v4418, 0.0
    %v4547 = vmax.f32 %v4419, 0.0
    %v4548 = vmax.f32 %v4420, 0.0
    %v4549 = vmax.f32 %v4421, 0.0
    %v4550 = vmax.f32 %v4422, 0.0
    %v4551 = vmax.f32 %v4423, 0.0
    %v4552 = vmax.f32 %v4424, 0.0
    %v4553 = vmax.f32 %v4425, 0.0
    %v4554 = vmax.f32 %v4426, 0.0
    %v4555 = vmax.f32 %v4427, 0.0
    %v4556 = vmax.f32 %v4428, 0.0
    %v4557 = vmax.f32 %v4429, 0.0
    %v4558 = vmax.f32 %v4430, 0.0
    %v4559 = vmax.f32 %v4431, 0.0
    %v4560 = vmax.f32 %v4432, 0.0
    %v4561 = vmax.f32 %v4433, 0.0
    %v4562 = vmax.f32 %v4434, 0.0
    %v4563 = vmax.f32 %v4435, 0.0
    %v4564 = vmax.f32 %v4436, 0.0
    %v4565 = vmax.f32 %v4437, 0.0
    %v4566 = vmax.f32 %v4438, 0.0
    %v4567 = vmax.f32 %v4439, 0.0
    %v4568 = vmax.f32 %v4440, 0.0
    %v4569 = vmax.f32 %v4441, 0.0
    %v4570 = vmax.f32 %v4442, 0.0
    %v4571 = vmax.f32 %v4443, 0.0
    %v4572 = vmax.f32 %v4444, 0.0
    %v4573 = vmax.f32 %v4445, 0.0
    %v4574 = vmax.f32 %v4446, 0.0
    %v4575 = vmax.f32 %v4447, 0.0
    %v4576 = vmax.f32 %v4448, 0.0
    %v4577 = vmax.f32 %v4449, 0.0
    %v4578 = vmax.f32 %v4450, 0.0
    %v4579 = vmax.f32 %v4451, 0.0
    %v4580 = vmax.f32 %v4452, 0.0
    %v4581 = vmax.f32 %v4453, 0.0
    %v4582 = vmax.f32 %v4454, 0.0
    %v4583 = vmax.f32 %v4455, 0.0
    %v4584 = vmax.f32 %v4456, 0.0
    %v4585 = vmax.f32 %v4457, 0.0
    %v4586 = vmax.f32 %v4458, 0.0
    %v4587 = vmax.f32 %v4459, 0.0
    %v4588 = vmax.f32 %v4460, 0.0
    %v4589 = vmax.f32 %v4461, 0.0
    %v4590 = vmax.f32 %v4462, 0.0
    %v4591 = vmax.f32 %v4463, 0.0
    %v4592 = vmax.f32 %v4464, 0.0
    %v4593 = vmax.f32 %v4465, 0.0
    %v4594 = vmax.f32 %v4466, 0.0
    %v4595 = vmax.f32 %v4467, 0.0
    %v4596 = vmax.f32 %v4468, 0.0
    %v4597 = vmax.f32 %v4469, 0.0
    %v4598 = vmax.f32 %v4470, 0.0
    %v4599 = vmax.f32 %v4471, 0.0
    %v4600 = vmax.f32 %v4472, 0.0
    %v4601 = vmax.f32 %v4473, 0.0
    %v4602 = vmax.f32 %v4474, 0.0
    %v4603 = vmax.f32 %v4475, 0.0
    %v4604 = vmax.f32 %v4476, 0.0
    %v4605 = vmax.f32 %v4477, 0.0
    %v4606 = vmax.f32 %v4478, 0.0
    %v4607 = vmax.f32 %v4479, 0.0
    %v4608 = vmax.f32 %v4480, 0.0
    %v4609 = vmax.f32 %v4481, 0.0
    %v4610 = vmax.f32 %v4482, 0.0
    %v4611 = vmax.f32 %v4483, 0.0
    %v4612 = vld [vmem:[#allocation8] sm:$0xff]
    %v4613 = vld [vmem:[#allocation8 + $0x8] sm:$0xff]
    %v4614 = vld [vmem:[#allocation8 + $0x10] sm:$0xff]
    %v4615 = vld [vmem:[#allocation8 + $0x18] sm:$0xff]
    %v4616 = vld [vmem:[#allocation8 + $0x20] sm:$0xff]
    %v4617 = vld [vmem:[#allocation8 + $0x28] sm:$0xff]
    %v4618 = vld [vmem:[#allocation8 + $0x30] sm:$0xff]
    %v4619 = vld [vmem:[#allocation8 + $0x38] sm:$0xff]
    %v4620 = vld [vmem:[#allocation8 + $0x40] sm:$0xff]
    %v4621 = vld [vmem:[#allocation8 + $0x48] sm:$0xff]
    %v4622 = vld [vmem:[#allocation8 + $0x50] sm:$0xff]
    %v4623 = vld [vmem:[#allocation8 + $0x58] sm:$0xff]
    %v4624 = vld [vmem:[#allocation8 + $0x60] sm:$0xff]
    %v4625 = vld [vmem:[#allocation8 + $0x68] sm:$0xff]
    %v4626 = vld [vmem:[#allocation8 + $0x70] sm:$0xff]
    %v4627 = vld [vmem:[#allocation8 + $0x78] sm:$0xff]
    %v4628 = vpack.c.bf16 %v4485, %v4484
    %v4629 = vpack.c.bf16 %v4487, %v4486
    %v4630 = vpack.c.bf16 %v4489, %v4488
    %v4631 = vpack.c.bf16 %v4491, %v4490
    %v4632 = vpack.c.bf16 %v4493, %v4492
    %v4633 = vpack.c.bf16 %v4495, %v4494
    %v4634 = vpack.c.bf16 %v4497, %v4496
    %v4635 = vpack.c.bf16 %v4499, %v4498
    %v4636 = vpack.c.bf16 %v4501, %v4500
    %v4637 = vpack.c.bf16 %v4503, %v4502
    %v4638 = vpack.c.bf16 %v4505, %v4504
    %v4639 = vpack.c.bf16 %v4507, %v4506
    %v4640 = vpack.c.bf16 %v4509, %v4508
    %v4641 = vpack.c.bf16 %v4511, %v4510
    %v4642 = vpack.c.bf16 %v4513, %v4512
    %v4643 = vpack.c.bf16 %v4515, %v4514
    %v4644 = vpack.c.bf16 %v4517, %v4516
    %v4645 = vpack.c.bf16 %v4519, %v4518
    %v4646 = vpack.c.bf16 %v4521, %v4520
    %v4647 = vpack.c.bf16 %v4523, %v4522
    %v4648 = vpack.c.bf16 %v4525, %v4524
    %v4649 = vpack.c.bf16 %v4527, %v4526
    %v4650 = vpack.c.bf16 %v4529, %v4528
    %v4651 = vpack.c.bf16 %v4531, %v4530
    %v4652 = vpack.c.bf16 %v4533, %v4532
    %v4653 = vpack.c.bf16 %v4535, %v4534
    %v4654 = vpack.c.bf16 %v4537, %v4536
    %v4655 = vpack.c.bf16 %v4539, %v4538
    %v4656 = vpack.c.bf16 %v4541, %v4540
    %v4657 = vpack.c.bf16 %v4543, %v4542
    %v4658 = vpack.c.bf16 %v4545, %v4544
    %v4659 = vpack.c.bf16 %v4547, %v4546
    %v4660 = vpack.c.bf16 %v4549, %v4548
    %v4661 = vpack.c.bf16 %v4551, %v4550
    %v4662 = vpack.c.bf16 %v4553, %v4552
    %v4663 = vpack.c.bf16 %v4555, %v4554
    %v4664 = vpack.c.bf16 %v4557, %v4556
    %v4665 = vpack.c.bf16 %v4559, %v4558
    %v4666 = vpack.c.bf16 %v4561, %v4560
    %v4667 = vpack.c.bf16 %v4563, %v4562
    %v4668 = vpack.c.bf16 %v4565, %v4564
    %v4669 = vpack.c.bf16 %v4567, %v4566
    %v4670 = vpack.c.bf16 %v4569, %v4568
    %v4671 = vpack.c.bf16 %v4571, %v4570
    %v4672 = vpack.c.bf16 %v4573, %v4572
    %v4673 = vpack.c.bf16 %v4575, %v4574
    %v4674 = vpack.c.bf16 %v4577, %v4576
    %v4675 = vpack.c.bf16 %v4579, %v4578
    %v4676 = vpack.c.bf16 %v4581, %v4580
    %v4677 = vpack.c.bf16 %v4583, %v4582
    %v4678 = vpack.c.bf16 %v4585, %v4584
    %v4679 = vpack.c.bf16 %v4587, %v4586
    %v4680 = vpack.c.bf16 %v4589, %v4588
    %v4681 = vpack.c.bf16 %v4591, %v4590
    %v4682 = vpack.c.bf16 %v4593, %v4592
    %v4683 = vpack.c.bf16 %v4595, %v4594
    %v4684 = vpack.c.bf16 %v4597, %v4596
    %v4685 = vpack.c.bf16 %v4599, %v4598
    %v4686 = vpack.c.bf16 %v4601, %v4600
    %v4687 = vpack.c.bf16 %v4603, %v4602
    %v4688 = vpack.c.bf16 %v4605, %v4604
    %v4689 = vpack.c.bf16 %v4607, %v4606
    %v4690 = vpack.c.bf16 %v4609, %v4608
    %v4691 = vpack.c.bf16 %v4611, %v4610
    %s4692 = scalar_lea.vmem [#allocation10], 6
    %v4693 = vld [vmem:[%s4692] ss:$8 sm:$0x3]
    %v4695 = vlaneseq
    %v4696 = vshrl.u32 %v4695, 7
    %v4697 = vsub.s32 0, %v4696
    %v4698 = vrot.slane %v4693, %v4697
    %v4699 = vlaneseq
    %v4700 = vshrl.u32 %v4699, 7
    %v4701 = vsub.s32 1, %v4700
    %v4702 = vrot.slane %v4693, %v4701
    %v4721 = vunpack.c.l.b16 %v4612
    %v4722 = vunpack.c.h.b16 %v4612
    %v4723 = vunpack.c.l.b16 %v4613
    %v4724 = vunpack.c.h.b16 %v4613
    %v4725 = vunpack.c.l.b16 %v4614
    %v4726 = vunpack.c.h.b16 %v4614
    %v4727 = vunpack.c.l.b16 %v4615
    %v4728 = vunpack.c.h.b16 %v4615
    %v4729 = vunpack.c.l.b16 %v4616
    %v4730 = vunpack.c.h.b16 %v4616
    %v4731 = vunpack.c.l.b16 %v4617
    %v4732 = vunpack.c.h.b16 %v4617
    %v4733 = vunpack.c.l.b16 %v4618
    %v4734 = vunpack.c.h.b16 %v4618
    %v4735 = vunpack.c.l.b16 %v4619
    %v4736 = vunpack.c.h.b16 %v4619
    %v4737 = vunpack.c.l.b16 %v4620
    %v4738 = vunpack.c.h.b16 %v4620
    %v4739 = vunpack.c.l.b16 %v4621
    %v4740 = vunpack.c.h.b16 %v4621
    %v4741 = vunpack.c.l.b16 %v4622
    %v4742 = vunpack.c.h.b16 %v4622
    %v4743 = vunpack.c.l.b16 %v4623
    %v4744 = vunpack.c.h.b16 %v4623
    %v4745 = vunpack.c.l.b16 %v4624
    %v4746 = vunpack.c.h.b16 %v4624
    %v4747 = vunpack.c.l.b16 %v4625
    %v4748 = vunpack.c.h.b16 %v4625
    %v4749 = vunpack.c.l.b16 %v4626
    %v4750 = vunpack.c.h.b16 %v4626
    %v4751 = vunpack.c.l.b16 %v4627
    %v4752 = vunpack.c.h.b16 %v4627
    %v4753 = vpack.c.b16 %v4723, %v4721
    %v4754 = vpack.c.b16 %v4724, %v4722
    %v4755 = vpack.c.b16 %v4727, %v4725
    %v4756 = vpack.c.b16 %v4728, %v4726
    %v4757 = vpack.c.b16 %v4731, %v4729
    %v4758 = vpack.c.b16 %v4732, %v4730
    %v4759 = vpack.c.b16 %v4735, %v4733
    %v4760 = vpack.c.b16 %v4736, %v4734
    %v4761 = vpack.c.b16 %v4739, %v4737
    %v4762 = vpack.c.b16 %v4740, %v4738
    %v4763 = vpack.c.b16 %v4743, %v4741
    %v4764 = vpack.c.b16 %v4744, %v4742
    %v4765 = vpack.c.b16 %v4747, %v4745
    %v4766 = vpack.c.b16 %v4748, %v4746
    %v4767 = vpack.c.b16 %v4751, %v4749
    %v4768 = vpack.c.b16 %v4752, %v4750
    %4785 = vmatprep.subr.bf16.mxu0 %v4754
    %4786 = vmatpush1.bf16.msra.mxu0 %v4753
    %4787 = vmatprep.subr.bf16.mxu0 %v4756
    %4788 = vmatpush1.bf16.msra.mxu0 %v4755
    %4789 = vmatprep.subr.bf16.mxu0 %v4758
    %4790 = vmatpush1.bf16.msra.mxu0 %v4757
    %4791 = vmatprep.subr.bf16.mxu0 %v4760
    %4792 = vmatpush1.bf16.msra.mxu0 %v4759
    %4793 = vmatprep.subr.bf16.mxu0 %v4762
    %4794 = vmatpush1.bf16.msra.mxu0 %v4761
    %4795 = vmatprep.subr.bf16.mxu0 %v4764
    %4796 = vmatpush1.bf16.msra.mxu0 %v4763
    %4797 = vmatprep.subr.bf16.mxu0 %v4766
    %4798 = vmatpush1.bf16.msra.mxu0 %v4765
    %4799 = vmatprep.subr.bf16.mxu0 %v4768
    %4800 = vmatpush1.bf16.msra.mxu0 %v4767
    %4801 = vmatprep.subr.bf16.mxu0 0
    %4802 = vmatpush1.bf16.msra.mxu0 0
    %4803 = vmatprep.subr.bf16.mxu0 0
    %4804 = vmatpush1.bf16.msra.mxu0 0
    %4805 = vmatprep.subr.bf16.mxu0 0
    %4806 = vmatpush1.bf16.msra.mxu0 0
    %4807 = vmatprep.subr.bf16.mxu0 0
    %4808 = vmatpush1.bf16.msra.mxu0 0
    %4809 = vmatprep.subr.bf16.mxu0 0
    %4810 = vmatpush1.bf16.msra.mxu0 0
    %4811 = vmatprep.subr.bf16.mxu0 0
    %4812 = vmatpush1.bf16.msra.mxu0 0
    %4813 = vmatprep.subr.bf16.mxu0 0
    %4814 = vmatpush1.bf16.msra.mxu0 0
    %4815 = vmatprep.subr.bf16.mxu0 0
    %4816 = vmatpush1.bf16.msra.mxu0 0
    %4817 = vmatprep.mubr.bf16.mxu0 0
    %4818 = vmatmul.mubr.bf16.gmra.mrb[0].mxu0 %v4628
    %v4819 = vpop.f32.mrb[0].mxu0
    %v4820 = vadd.f32 %v4698, %v4819
    %v4821 = vpop.f32.mrb[0].mxu0
    %v4822 = vadd.f32 %v4702, %v4821
    %v4823 = vpop.f32.mrb[0].mxu0
    %v4824 = vadd.f32 %v4698, %v4823
    %v4825 = vpop.f32.mrb[0].mxu0
    %v4826 = vadd.f32 %v4702, %v4825
    %4827 = vmatprep.mubr.bf16.mxu0 0
    %4828 = vmatmul.mubr.bf16.gmra.mrb[0].mxu0 %v4629
    %v4829 = vpop.f32.mrb[0].mxu0
    %v4830 = vadd.f32 %v4698, %v4829
    %v4831 = vpop.f32.mrb[0].mxu0
    %v4832 = vadd.f32 %v4702, %v4831
    %v4833 = vpop.f32.mrb[0].mxu0
    %v4834 = vadd.f32 %v4698, %v4833
    %v4835 = vpop.f32.mrb[0].mxu0
    %v4836 = vadd.f32 %v4702, %v4835
    %4837 = vmatprep.mubr.bf16.mxu0 0
    %4838 = vmatmul.mubr.bf16.gmra.mrb[0].mxu0 %v4630
    %v4839 = vpop.f32.mrb[0].mxu0
    %v4840 = vadd.f32 %v4698, %v4839
    %v4841 = vpop.f32.mrb[0].mxu0
    %v4842 = vadd.f32 %v4702, %v4841
    %v4843 = vpop.f32.mrb[0].mxu0
    %v4844 = vadd.f32 %v4698, %v4843
    %v4845 = vpop.f32.mrb[0].mxu0
    %v4846 = vadd.f32 %v4702, %v4845
    %4847 = vmatprep.mubr.bf16.mxu0 0
    %4848 = vmatmul.mubr.bf16.gmra.mrb[0].mxu0 %v4631
    %v4849 = vpop.f32.mrb[0].mxu0
    %v4850 = vadd.f32 %v4698, %v4849
    %v4851 = vpop.f32.mrb[0].mxu0
    %v4852 = vadd.f32 %v4702, %v4851
    %v4853 = vpop.f32.mrb[0].mxu0
    %v4854 = vadd.f32 %v4698, %v4853
    %v4855 = vpop.f32.mrb[0].mxu0
    %v4856 = vadd.f32 %v4702, %v4855
    %4857 = vmatprep.mubr.bf16.mxu0 0
    %4858 = vmatmul.mubr.bf16.gmra.mrb[0].mxu0 %v4632
    %v4859 = vpop.f32.mrb[0].mxu0
    %v4860 = vadd.f32 %v4698, %v4859
    %v4861 = vpop.f32.mrb[0].mxu0
    %v4862 = vadd.f32 %v4702, %v4861
    %v4863 = vpop.f32.mrb[0].mxu0
    %v4864 = vadd.f32 %v4698, %v4863
    %v4865 = vpop.f32.mrb[0].mxu0
    %v4866 = vadd.f32 %v4702, %v4865
    %4867 = vmatprep.mubr.bf16.mxu0 0
    %4868 = vmatmul.mubr.bf16.gmra.mrb[0].mxu0 %v4633
    %v4869 = vpop.f32.mrb[0].mxu0
    %v4870 = vadd.f32 %v4698, %v4869
    %v4871 = vpop.f32.mrb[0].mxu0
    %v4872 = vadd.f32 %v4702, %v4871
    %v4873 = vpop.f32.mrb[0].mxu0
    %v4874 = vadd.f32 %v4698, %v4873
    %v4875 = vpop.f32.mrb[0].mxu0
    %v4876 = vadd.f32 %v4702, %v4875
    %4877 = vmatprep.mubr.bf16.mxu0 0
    %4878 = vmatmul.mubr.bf16.gmra.mrb[0].mxu0 %v4634
    %v4879 = vpop.f32.mrb[0].mxu0
    %v4880 = vadd.f32 %v4698, %v4879
    %v4881 = vpop.f32.mrb[0].mxu0
    %v4882 = vadd.f32 %v4702, %v4881
    %v4883 = vpop.f32.mrb[0].mxu0
    %v4884 = vadd.f32 %v4698, %v4883
    %v4885 = vpop.f32.mrb[0].mxu0
    %v4886 = vadd.f32 %v4702, %v4885
    %4887 = vmatprep.mubr.bf16.mxu0 0
    %4888 = vmatmul.mubr.bf16.gmra.mrb[0].mxu0 %v4635
    %v4889 = vpop.f32.mrb[0].mxu0
    %v4890 = vadd.f32 %v4698, %v4889
    %v4891 = vpop.f32.mrb[0].mxu0
    %v4892 = vadd.f32 %v4702, %v4891
    %v4893 = vpop.f32.mrb[0].mxu0
    %v4894 = vadd.f32 %v4698, %v4893
    %v4895 = vpop.f32.mrb[0].mxu0
    %v4896 = vadd.f32 %v4702, %v4895
    %4897 = vmatprep.mubr.bf16.mxu0 0
    %4898 = vmatmul.mubr.bf16.gmra.mrb[0].mxu0 %v4636
    %v4899 = vpop.f32.mrb[0].mxu0
    %v4900 = vadd.f32 %v4698, %v4899
    %v4901 = vpop.f32.mrb[0].mxu0
    %v4902 = vadd.f32 %v4702, %v4901
    %v4903 = vpop.f32.mrb[0].mxu0
    %v4904 = vadd.f32 %v4698, %v4903
    %v4905 = vpop.f32.mrb[0].mxu0
    %v4906 = vadd.f32 %v4702, %v4905
    %4907 = vmatprep.mubr.bf16.mxu0 0
    %4908 = vmatmul.mubr.bf16.gmra.mrb[0].mxu0 %v4637
    %v4909 = vpop.f32.mrb[0].mxu0
    %v4910 = vadd.f32 %v4698, %v4909
    %v4911 = vpop.f32.mrb[0].mxu0
    %v4912 = vadd.f32 %v4702, %v4911
    %v4913 = vpop.f32.mrb[0].mxu0
    %v4914 = vadd.f32 %v4698, %v4913
    %v4915 = vpop.f32.mrb[0].mxu0
    %v4916 = vadd.f32 %v4702, %v4915
    %4917 = vmatprep.mubr.bf16.mxu0 0
    %4918 = vmatmul.mubr.bf16.gmra.mrb[0].mxu0 %v4638
    %v4919 = vpop.f32.mrb[0].mxu0
    %v4920 = vadd.f32 %v4698, %v4919
    %v4921 = vpop.f32.mrb[0].mxu0
    %v4922 = vadd.f32 %v4702, %v4921
    %v4923 = vpop.f32.mrb[0].mxu0
    %v4924 = vadd.f32 %v4698, %v4923
    %v4925 = vpop.f32.mrb[0].mxu0
    %v4926 = vadd.f32 %v4702, %v4925
    %4927 = vmatprep.mubr.bf16.mxu0 0
    %4928 = vmatmul.mubr.bf16.gmra.mrb[0].mxu0 %v4639
    %v4929 = vpop.f32.mrb[0].mxu0
    %v4930 = vadd.f32 %v4698, %v4929
    %v4931 = vpop.f32.mrb[0].mxu0
    %v4932 = vadd.f32 %v4702, %v4931
    %v4933 = vpop.f32.mrb[0].mxu0
    %v4934 = vadd.f32 %v4698, %v4933
    %v4935 = vpop.f32.mrb[0].mxu0
    %v4936 = vadd.f32 %v4702, %v4935
    %4937 = vmatprep.mubr.bf16.mxu0 0
    %4938 = vmatmul.mubr.bf16.gmra.mrb[0].mxu0 %v4640
    %v4939 = vpop.f32.mrb[0].mxu0
    %v4940 = vadd.f32 %v4698, %v4939
    %v4941 = vpop.f32.mrb[0].mxu0
    %v4942 = vadd.f32 %v4702, %v4941
    %v4943 = vpop.f32.mrb[0].mxu0
    %v4944 = vadd.f32 %v4698, %v4943
    %v4945 = vpop.f32.mrb[0].mxu0
    %v4946 = vadd.f32 %v4702, %v4945
    %4947 = vmatprep.mubr.bf16.mxu0 0
    %4948 = vmatmul.mubr.bf16.gmra.mrb[0].mxu0 %v4641
    %v4949 = vpop.f32.mrb[0].mxu0
    %v4950 = vadd.f32 %v4698, %v4949
    %v4951 = vpop.f32.mrb[0].mxu0
    %v4952 = vadd.f32 %v4702, %v4951
    %v4953 = vpop.f32.mrb[0].mxu0
    %v4954 = vadd.f32 %v4698, %v4953
    %v4955 = vpop.f32.mrb[0].mxu0
    %v4956 = vadd.f32 %v4702, %v4955
    %4957 = vmatprep.mubr.bf16.mxu0 0
    %4958 = vmatmul.mubr.bf16.gmra.mrb[0].mxu0 %v4642
    %v4959 = vpop.f32.mrb[0].mxu0
    %v4960 = vadd.f32 %v4698, %v4959
    %v4961 = vpop.f32.mrb[0].mxu0
    %v4962 = vadd.f32 %v4702, %v4961
    %v4963 = vpop.f32.mrb[0].mxu0
    %v4964 = vadd.f32 %v4698, %v4963
    %v4965 = vpop.f32.mrb[0].mxu0
    %v4966 = vadd.f32 %v4702, %v4965
    %4967 = vmatprep.mubr.bf16.mxu0 0
    %4968 = vmatmul.mubr.bf16.gmra.mrb[0].mxu0 %v4643
    %v4969 = vpop.f32.mrb[0].mxu0
    %v4970 = vadd.f32 %v4698, %v4969
    %v4971 = vpop.f32.mrb[0].mxu0
    %v4972 = vadd.f32 %v4702, %v4971
    %v4973 = vpop.f32.mrb[0].mxu0
    %v4974 = vadd.f32 %v4698, %v4973
    %v4975 = vpop.f32.mrb[0].mxu0
    %v4976 = vadd.f32 %v4702, %v4975
    %4977 = vmatprep.mubr.bf16.mxu0 0
    %4978 = vmatmul.mubr.bf16.gmra.mrb[0].mxu0 %v4644
    %v4979 = vpop.f32.mrb[0].mxu0
    %v4980 = vadd.f32 %v4698, %v4979
    %v4981 = vpop.f32.mrb[0].mxu0
    %v4982 = vadd.f32 %v4702, %v4981
    %v4983 = vpop.f32.mrb[0].mxu0
    %v4984 = vadd.f32 %v4698, %v4983
    %v4985 = vpop.f32.mrb[0].mxu0
    %v4986 = vadd.f32 %v4702, %v4985
    %4987 = vmatprep.mubr.bf16.mxu0 0
    %4988 = vmatmul.mubr.bf16.gmra.mrb[0].mxu0 %v4645
    %v4989 = vpop.f32.mrb[0].mxu0
    %v4990 = vadd.f32 %v4698, %v4989
    %v4991 = vpop.f32.mrb[0].mxu0
    %v4992 = vadd.f32 %v4702, %v4991
    %v4993 = vpop.f32.mrb[0].mxu0
    %v4994 = vadd.f32 %v4698, %v4993
    %v4995 = vpop.f32.mrb[0].mxu0
    %v4996 = vadd.f32 %v4702, %v4995
    %4997 = vmatprep.mubr.bf16.mxu0 0
    %4998 = vmatmul.mubr.bf16.gmra.mrb[0].mxu0 %v4646
    %v4999 = vpop.f32.mrb[0].mxu0
    %v5000 = vadd.f32 %v4698, %v4999
    %v5001 = vpop.f32.mrb[0].mxu0
    %v5002 = vadd.f32 %v4702, %v5001
    %v5003 = vpop.f32.mrb[0].mxu0
    %v5004 = vadd.f32 %v4698, %v5003
    %v5005 = vpop.f32.mrb[0].mxu0
    %v5006 = vadd.f32 %v4702, %v5005
    %5007 = vmatprep.mubr.bf16.mxu0 0
    %5008 = vmatmul.mubr.bf16.gmra.mrb[0].mxu0 %v4647
    %v5009 = vpop.f32.mrb[0].mxu0
    %v5010 = vadd.f32 %v4698, %v5009
    %v5011 = vpop.f32.mrb[0].mxu0
    %v5012 = vadd.f32 %v4702, %v5011
    %v5013 = vpop.f32.mrb[0].mxu0
    %v5014 = vadd.f32 %v4698, %v5013
    %v5015 = vpop.f32.mrb[0].mxu0
    %v5016 = vadd.f32 %v4702, %v5015
    %5017 = vmatprep.mubr.bf16.mxu0 0
    %5018 = vmatmul.mubr.bf16.gmra.mrb[0].mxu0 %v4648
    %v5019 = vpop.f32.mrb[0].mxu0
    %v5020 = vadd.f32 %v4698, %v5019
    %v5021 = vpop.f32.mrb[0].mxu0
    %v5022 = vadd.f32 %v4702, %v5021
    %v5023 = vpop.f32.mrb[0].mxu0
    %v5024 = vadd.f32 %v4698, %v5023
    %v5025 = vpop.f32.mrb[0].mxu0
    %v5026 = vadd.f32 %v4702, %v5025
    %5027 = vmatprep.mubr.bf16.mxu0 0
    %5028 = vmatmul.mubr.bf16.gmra.mrb[0].mxu0 %v4649
    %v5029 = vpop.f32.mrb[0].mxu0
    %v5030 = vadd.f32 %v4698, %v5029
    %v5031 = vpop.f32.mrb[0].mxu0
    %v5032 = vadd.f32 %v4702, %v5031
    %v5033 = vpop.f32.mrb[0].mxu0
    %v5034 = vadd.f32 %v4698, %v5033
    %v5035 = vpop.f32.mrb[0].mxu0
    %v5036 = vadd.f32 %v4702, %v5035
    %5037 = vmatprep.mubr.bf16.mxu0 0
    %5038 = vmatmul.mubr.bf16.gmra.mrb[0].mxu0 %v4650
    %v5039 = vpop.f32.mrb[0].mxu0
    %v5040 = vadd.f32 %v4698, %v5039
    %v5041 = vpop.f32.mrb[0].mxu0
    %v5042 = vadd.f32 %v4702, %v5041
    %v5043 = vpop.f32.mrb[0].mxu0
    %v5044 = vadd.f32 %v4698, %v5043
    %v5045 = vpop.f32.mrb[0].mxu0
    %v5046 = vadd.f32 %v4702, %v5045
    %5047 = vmatprep.mubr.bf16.mxu0 0
    %5048 = vmatmul.mubr.bf16.gmra.mrb[0].mxu0 %v4651
    %v5049 = vpop.f32.mrb[0].mxu0
    %v5050 = vadd.f32 %v4698, %v5049
    %v5051 = vpop.f32.mrb[0].mxu0
    %v5052 = vadd.f32 %v4702, %v5051
    %v5053 = vpop.f32.mrb[0].mxu0
    %v5054 = vadd.f32 %v4698, %v5053
    %v5055 = vpop.f32.mrb[0].mxu0
    %v5056 = vadd.f32 %v4702, %v5055
    %5057 = vmatprep.mubr.bf16.mxu0 0
    %5058 = vmatmul.mubr.bf16.gmra.mrb[0].mxu0 %v4652
    %v5059 = vpop.f32.mrb[0].mxu0
    %v5060 = vadd.f32 %v4698, %v5059
    %v5061 = vpop.f32.mrb[0].mxu0
    %v5062 = vadd.f32 %v4702, %v5061
    %v5063 = vpop.f32.mrb[0].mxu0
    %v5064 = vadd.f32 %v4698, %v5063
    %v5065 = vpop.f32.mrb[0].mxu0
    %v5066 = vadd.f32 %v4702, %v5065
    %5067 = vmatprep.mubr.bf16.mxu0 0
    %5068 = vmatmul.mubr.bf16.gmra.mrb[0].mxu0 %v4653
    %v5069 = vpop.f32.mrb[0].mxu0
    %v5070 = vadd.f32 %v4698, %v5069
    %v5071 = vpop.f32.mrb[0].mxu0
    %v5072 = vadd.f32 %v4702, %v5071
    %v5073 = vpop.f32.mrb[0].mxu0
    %v5074 = vadd.f32 %v4698, %v5073
    %v5075 = vpop.f32.mrb[0].mxu0
    %v5076 = vadd.f32 %v4702, %v5075
    %5077 = vmatprep.mubr.bf16.mxu0 0
    %5078 = vmatmul.mubr.bf16.gmra.mrb[0].mxu0 %v4654
    %v5079 = vpop.f32.mrb[0].mxu0
    %v5080 = vadd.f32 %v4698, %v5079
    %v5081 = vpop.f32.mrb[0].mxu0
    %v5082 = vadd.f32 %v4702, %v5081
    %v5083 = vpop.f32.mrb[0].mxu0
    %v5084 = vadd.f32 %v4698, %v5083
    %v5085 = vpop.f32.mrb[0].mxu0
    %v5086 = vadd.f32 %v4702, %v5085
    %5087 = vmatprep.mubr.bf16.mxu0 0
    %5088 = vmatmul.mubr.bf16.gmra.mrb[0].mxu0 %v4655
    %v5089 = vpop.f32.mrb[0].mxu0
    %v5090 = vadd.f32 %v4698, %v5089
    %v5091 = vpop.f32.mrb[0].mxu0
    %v5092 = vadd.f32 %v4702, %v5091
    %v5093 = vpop.f32.mrb[0].mxu0
    %v5094 = vadd.f32 %v4698, %v5093
    %v5095 = vpop.f32.mrb[0].mxu0
    %v5096 = vadd.f32 %v4702, %v5095
    %5097 = vmatprep.mubr.bf16.mxu0 0
    %5098 = vmatmul.mubr.bf16.gmra.mrb[0].mxu0 %v4656
    %v5099 = vpop.f32.mrb[0].mxu0
    %v5100 = vadd.f32 %v4698, %v5099
    %v5101 = vpop.f32.mrb[0].mxu0
    %v5102 = vadd.f32 %v4702, %v5101
    %v5103 = vpop.f32.mrb[0].mxu0
    %v5104 = vadd.f32 %v4698, %v5103
    %v5105 = vpop.f32.mrb[0].mxu0
    %v5106 = vadd.f32 %v4702, %v5105
    %5107 = vmatprep.mubr.bf16.mxu0 0
    %5108 = vmatmul.mubr.bf16.gmra.mrb[0].mxu0 %v4657
    %v5109 = vpop.f32.mrb[0].mxu0
    %v5110 = vadd.f32 %v4698, %v5109
    %v5111 = vpop.f32.mrb[0].mxu0
    %v5112 = vadd.f32 %v4702, %v5111
    %v5113 = vpop.f32.mrb[0].mxu0
    %v5114 = vadd.f32 %v4698, %v5113
    %v5115 = vpop.f32.mrb[0].mxu0
    %v5116 = vadd.f32 %v4702, %v5115
    %5117 = vmatprep.mubr.bf16.mxu0 0
    %5118 = vmatmul.mubr.bf16.gmra.mrb[0].mxu0 %v4658
    %v5119 = vpop.f32.mrb[0].mxu0
    %v5120 = vadd.f32 %v4698, %v5119
    %v5121 = vpop.f32.mrb[0].mxu0
    %v5122 = vadd.f32 %v4702, %v5121
    %v5123 = vpop.f32.mrb[0].mxu0
    %v5124 = vadd.f32 %v4698, %v5123
    %v5125 = vpop.f32.mrb[0].mxu0
    %v5126 = vadd.f32 %v4702, %v5125
    %5127 = vmatprep.mubr.bf16.mxu0 0
    %5128 = vmatmul.mubr.bf16.gmra.mrb[0].mxu0 %v4659
    %v5129 = vpop.f32.mrb[0].mxu0
    %v5130 = vadd.f32 %v4698, %v5129
    %v5131 = vpop.f32.mrb[0].mxu0
    %v5132 = vadd.f32 %v4702, %v5131
    %v5133 = vpop.f32.mrb[0].mxu0
    %v5134 = vadd.f32 %v4698, %v5133
    %v5135 = vpop.f32.mrb[0].mxu0
    %v5136 = vadd.f32 %v4702, %v5135
    %5137 = vmatprep.mubr.bf16.mxu0 0
    %5138 = vmatmul.mubr.bf16.gmra.mrb[0].mxu0 %v4660
    %v5139 = vpop.f32.mrb[0].mxu0
    %v5140 = vadd.f32 %v4698, %v5139
    %v5141 = vpop.f32.mrb[0].mxu0
    %v5142 = vadd.f32 %v4702, %v5141
    %v5143 = vpop.f32.mrb[0].mxu0
    %v5144 = vadd.f32 %v4698, %v5143
    %v5145 = vpop.f32.mrb[0].mxu0
    %v5146 = vadd.f32 %v4702, %v5145
    %5147 = vmatprep.mubr.bf16.mxu0 0
    %5148 = vmatmul.mubr.bf16.gmra.mrb[0].mxu0 %v4661
    %v5149 = vpop.f32.mrb[0].mxu0
    %v5150 = vadd.f32 %v4698, %v5149
    %v5151 = vpop.f32.mrb[0].mxu0
    %v5152 = vadd.f32 %v4702, %v5151
    %v5153 = vpop.f32.mrb[0].mxu0
    %v5154 = vadd.f32 %v4698, %v5153
    %v5155 = vpop.f32.mrb[0].mxu0
    %v5156 = vadd.f32 %v4702, %v5155
    %5157 = vmatprep.mubr.bf16.mxu0 0
    %5158 = vmatmul.mubr.bf16.gmra.mrb[0].mxu0 %v4662
    %v5159 = vpop.f32.mrb[0].mxu0
    %v5160 = vadd.f32 %v4698, %v5159
    %v5161 = vpop.f32.mrb[0].mxu0
    %v5162 = vadd.f32 %v4702, %v5161
    %v5163 = vpop.f32.mrb[0].mxu0
    %v5164 = vadd.f32 %v4698, %v5163
    %v5165 = vpop.f32.mrb[0].mxu0
    %v5166 = vadd.f32 %v4702, %v5165
    %5167 = vmatprep.mubr.bf16.mxu0 0
    %5168 = vmatmul.mubr.bf16.gmra.mrb[0].mxu0 %v4663
    %v5169 = vpop.f32.mrb[0].mxu0
    %v5170 = vadd.f32 %v4698, %v5169
    %v5171 = vpop.f32.mrb[0].mxu0
    %v5172 = vadd.f32 %v4702, %v5171
    %v5173 = vpop.f32.mrb[0].mxu0
    %v5174 = vadd.f32 %v4698, %v5173
    %v5175 = vpop.f32.mrb[0].mxu0
    %v5176 = vadd.f32 %v4702, %v5175
    %5177 = vmatprep.mubr.bf16.mxu0 0
    %5178 = vmatmul.mubr.bf16.gmra.mrb[0].mxu0 %v4664
    %v5179 = vpop.f32.mrb[0].mxu0
    %v5180 = vadd.f32 %v4698, %v5179
    %v5181 = vpop.f32.mrb[0].mxu0
    %v5182 = vadd.f32 %v4702, %v5181
    %v5183 = vpop.f32.mrb[0].mxu0
    %v5184 = vadd.f32 %v4698, %v5183
    %v5185 = vpop.f32.mrb[0].mxu0
    %v5186 = vadd.f32 %v4702, %v5185
    %5187 = vmatprep.mubr.bf16.mxu0 0
    %5188 = vmatmul.mubr.bf16.gmra.mrb[0].mxu0 %v4665
    %v5189 = vpop.f32.mrb[0].mxu0
    %v5190 = vadd.f32 %v4698, %v5189
    %v5191 = vpop.f32.mrb[0].mxu0
    %v5192 = vadd.f32 %v4702, %v5191
    %v5193 = vpop.f32.mrb[0].mxu0
    %v5194 = vadd.f32 %v4698, %v5193
    %v5195 = vpop.f32.mrb[0].mxu0
    %v5196 = vadd.f32 %v4702, %v5195
    %5197 = vmatprep.mubr.bf16.mxu0 0
    %5198 = vmatmul.mubr.bf16.gmra.mrb[0].mxu0 %v4666
    %v5199 = vpop.f32.mrb[0].mxu0
    %v5200 = vadd.f32 %v4698, %v5199
    %v5201 = vpop.f32.mrb[0].mxu0
    %v5202 = vadd.f32 %v4702, %v5201
    %v5203 = vpop.f32.mrb[0].mxu0
    %v5204 = vadd.f32 %v4698, %v5203
    %v5205 = vpop.f32.mrb[0].mxu0
    %v5206 = vadd.f32 %v4702, %v5205
    %5207 = vmatprep.mubr.bf16.mxu0 0
    %5208 = vmatmul.mubr.bf16.gmra.mrb[0].mxu0 %v4667
    %v5209 = vpop.f32.mrb[0].mxu0
    %v5210 = vadd.f32 %v4698, %v5209
    %v5211 = vpop.f32.mrb[0].mxu0
    %v5212 = vadd.f32 %v4702, %v5211
    %v5213 = vpop.f32.mrb[0].mxu0
    %v5214 = vadd.f32 %v4698, %v5213
    %v5215 = vpop.f32.mrb[0].mxu0
    %v5216 = vadd.f32 %v4702, %v5215
    %5217 = vmatprep.mubr.bf16.mxu0 0
    %5218 = vmatmul.mubr.bf16.gmra.mrb[0].mxu0 %v4668
    %v5219 = vpop.f32.mrb[0].mxu0
    %v5220 = vadd.f32 %v4698, %v5219
    %v5221 = vpop.f32.mrb[0].mxu0
    %v5222 = vadd.f32 %v4702, %v5221
    %v5223 = vpop.f32.mrb[0].mxu0
    %v5224 = vadd.f32 %v4698, %v5223
    %v5225 = vpop.f32.mrb[0].mxu0
    %v5226 = vadd.f32 %v4702, %v5225
    %5227 = vmatprep.mubr.bf16.mxu0 0
    %5228 = vmatmul.mubr.bf16.gmra.mrb[0].mxu0 %v4669
    %v5229 = vpop.f32.mrb[0].mxu0
    %v5230 = vadd.f32 %v4698, %v5229
    %v5231 = vpop.f32.mrb[0].mxu0
    %v5232 = vadd.f32 %v4702, %v5231
    %v5233 = vpop.f32.mrb[0].mxu0
    %v5234 = vadd.f32 %v4698, %v5233
    %v5235 = vpop.f32.mrb[0].mxu0
    %v5236 = vadd.f32 %v4702, %v5235
    %5237 = vmatprep.mubr.bf16.mxu0 0
    %5238 = vmatmul.mubr.bf16.gmra.mrb[0].mxu0 %v4670
    %v5239 = vpop.f32.mrb[0].mxu0
    %v5240 = vadd.f32 %v4698, %v5239
    %v5241 = vpop.f32.mrb[0].mxu0
    %v5242 = vadd.f32 %v4702, %v5241
    %v5243 = vpop.f32.mrb[0].mxu0
    %v5244 = vadd.f32 %v4698, %v5243
    %v5245 = vpop.f32.mrb[0].mxu0
    %v5246 = vadd.f32 %v4702, %v5245
    %5247 = vmatprep.mubr.bf16.mxu0 0
    %5248 = vmatmul.mubr.bf16.gmra.mrb[0].mxu0 %v4671
    %v5249 = vpop.f32.mrb[0].mxu0
    %v5250 = vadd.f32 %v4698, %v5249
    %v5251 = vpop.f32.mrb[0].mxu0
    %v5252 = vadd.f32 %v4702, %v5251
    %v5253 = vpop.f32.mrb[0].mxu0
    %v5254 = vadd.f32 %v4698, %v5253
    %v5255 = vpop.f32.mrb[0].mxu0
    %v5256 = vadd.f32 %v4702, %v5255
    %5257 = vmatprep.mubr.bf16.mxu0 0
    %5258 = vmatmul.mubr.bf16.gmra.mrb[0].mxu0 %v4672
    %v5259 = vpop.f32.mrb[0].mxu0
    %v5260 = vadd.f32 %v4698, %v5259
    %v5261 = vpop.f32.mrb[0].mxu0
    %v5262 = vadd.f32 %v4702, %v5261
    %v5263 = vpop.f32.mrb[0].mxu0
    %v5264 = vadd.f32 %v4698, %v5263
    %v5265 = vpop.f32.mrb[0].mxu0
    %v5266 = vadd.f32 %v4702, %v5265
    %5267 = vmatprep.mubr.bf16.mxu0 0
    %5268 = vmatmul.mubr.bf16.gmra.mrb[0].mxu0 %v4673
    %v5269 = vpop.f32.mrb[0].mxu0
    %v5270 = vadd.f32 %v4698, %v5269
    %v5271 = vpop.f32.mrb[0].mxu0
    %v5272 = vadd.f32 %v4702, %v5271
    %v5273 = vpop.f32.mrb[0].mxu0
    %v5274 = vadd.f32 %v4698, %v5273
    %v5275 = vpop.f32.mrb[0].mxu0
    %v5276 = vadd.f32 %v4702, %v5275
    %5277 = vmatprep.mubr.bf16.mxu0 0
    %5278 = vmatmul.mubr.bf16.gmra.mrb[0].mxu0 %v4674
    %v5279 = vpop.f32.mrb[0].mxu0
    %v5280 = vadd.f32 %v4698, %v5279
    %v5281 = vpop.f32.mrb[0].mxu0
    %v5282 = vadd.f32 %v4702, %v5281
    %v5283 = vpop.f32.mrb[0].mxu0
    %v5284 = vadd.f32 %v4698, %v5283
    %v5285 = vpop.f32.mrb[0].mxu0
    %v5286 = vadd.f32 %v4702, %v5285
    %5287 = vmatprep.mubr.bf16.mxu0 0
    %5288 = vmatmul.mubr.bf16.gmra.mrb[0].mxu0 %v4675
    %v5289 = vpop.f32.mrb[0].mxu0
    %v5290 = vadd.f32 %v4698, %v5289
    %v5291 = vpop.f32.mrb[0].mxu0
    %v5292 = vadd.f32 %v4702, %v5291
    %v5293 = vpop.f32.mrb[0].mxu0
    %v5294 = vadd.f32 %v4698, %v5293
    %v5295 = vpop.f32.mrb[0].mxu0
    %v5296 = vadd.f32 %v4702, %v5295
    %5297 = vmatprep.mubr.bf16.mxu0 0
    %5298 = vmatmul.mubr.bf16.gmra.mrb[0].mxu0 %v4676
    %v5299 = vpop.f32.mrb[0].mxu0
    %v5300 = vadd.f32 %v4698, %v5299
    %v5301 = vpop.f32.mrb[0].mxu0
    %v5302 = vadd.f32 %v4702, %v5301
    %v5303 = vpop.f32.mrb[0].mxu0
    %v5304 = vadd.f32 %v4698, %v5303
    %v5305 = vpop.f32.mrb[0].mxu0
    %v5306 = vadd.f32 %v4702, %v5305
    %5307 = vmatprep.mubr.bf16.mxu0 0
    %5308 = vmatmul.mubr.bf16.gmra.mrb[0].mxu0 %v4677
    %v5309 = vpop.f32.mrb[0].mxu0
    %v5310 = vadd.f32 %v4698, %v5309
    %v5311 = vpop.f32.mrb[0].mxu0
    %v5312 = vadd.f32 %v4702, %v5311
    %v5313 = vpop.f32.mrb[0].mxu0
    %v5314 = vadd.f32 %v4698, %v5313
    %v5315 = vpop.f32.mrb[0].mxu0
    %v5316 = vadd.f32 %v4702, %v5315
    %5317 = vmatprep.mubr.bf16.mxu0 0
    %5318 = vmatmul.mubr.bf16.gmra.mrb[0].mxu0 %v4678
    %v5319 = vpop.f32.mrb[0].mxu0
    %v5320 = vadd.f32 %v4698, %v5319
    %v5321 = vpop.f32.mrb[0].mxu0
    %v5322 = vadd.f32 %v4702, %v5321
    %v5323 = vpop.f32.mrb[0].mxu0
    %v5324 = vadd.f32 %v4698, %v5323
    %v5325 = vpop.f32.mrb[0].mxu0
    %v5326 = vadd.f32 %v4702, %v5325
    %5327 = vmatprep.mubr.bf16.mxu0 0
    %5328 = vmatmul.mubr.bf16.gmra.mrb[0].mxu0 %v4679
    %v5329 = vpop.f32.mrb[0].mxu0
    %v5330 = vadd.f32 %v4698, %v5329
    %v5331 = vpop.f32.mrb[0].mxu0
    %v5332 = vadd.f32 %v4702, %v5331
    %v5333 = vpop.f32.mrb[0].mxu0
    %v5334 = vadd.f32 %v4698, %v5333
    %v5335 = vpop.f32.mrb[0].mxu0
    %v5336 = vadd.f32 %v4702, %v5335
    %5337 = vmatprep.mubr.bf16.mxu0 0
    %5338 = vmatmul.mubr.bf16.gmra.mrb[0].mxu0 %v4680
    %v5339 = vpop.f32.mrb[0].mxu0
    %v5340 = vadd.f32 %v4698, %v5339
    %v5341 = vpop.f32.mrb[0].mxu0
    %v5342 = vadd.f32 %v4702, %v5341
    %v5343 = vpop.f32.mrb[0].mxu0
    %v5344 = vadd.f32 %v4698, %v5343
    %v5345 = vpop.f32.mrb[0].mxu0
    %v5346 = vadd.f32 %v4702, %v5345
    %5347 = vmatprep.mubr.bf16.mxu0 0
    %5348 = vmatmul.mubr.bf16.gmra.mrb[0].mxu0 %v4681
    %v5349 = vpop.f32.mrb[0].mxu0
    %v5350 = vadd.f32 %v4698, %v5349
    %v5351 = vpop.f32.mrb[0].mxu0
    %v5352 = vadd.f32 %v4702, %v5351
    %v5353 = vpop.f32.mrb[0].mxu0
    %v5354 = vadd.f32 %v4698, %v5353
    %v5355 = vpop.f32.mrb[0].mxu0
    %v5356 = vadd.f32 %v4702, %v5355
    %5357 = vmatprep.mubr.bf16.mxu0 0
    %5358 = vmatmul.mubr.bf16.gmra.mrb[0].mxu0 %v4682
    %v5359 = vpop.f32.mrb[0].mxu0
    %v5360 = vadd.f32 %v4698, %v5359
    %v5361 = vpop.f32.mrb[0].mxu0
    %v5362 = vadd.f32 %v4702, %v5361
    %v5363 = vpop.f32.mrb[0].mxu0
    %v5364 = vadd.f32 %v4698, %v5363
    %v5365 = vpop.f32.mrb[0].mxu0
    %v5366 = vadd.f32 %v4702, %v5365
    %5367 = vmatprep.mubr.bf16.mxu0 0
    %5368 = vmatmul.mubr.bf16.gmra.mrb[0].mxu0 %v4683
    %v5369 = vpop.f32.mrb[0].mxu0
    %v5370 = vadd.f32 %v4698, %v5369
    %v5371 = vpop.f32.mrb[0].mxu0
    %v5372 = vadd.f32 %v4702, %v5371
    %v5373 = vpop.f32.mrb[0].mxu0
    %v5374 = vadd.f32 %v4698, %v5373
    %v5375 = vpop.f32.mrb[0].mxu0
    %v5376 = vadd.f32 %v4702, %v5375
    %5377 = vmatprep.mubr.bf16.mxu0 0
    %5378 = vmatmul.mubr.bf16.gmra.mrb[0].mxu0 %v4684
    %v5379 = vpop.f32.mrb[0].mxu0
    %v5380 = vadd.f32 %v4698, %v5379
    %v5381 = vpop.f32.mrb[0].mxu0
    %v5382 = vadd.f32 %v4702, %v5381
    %v5383 = vpop.f32.mrb[0].mxu0
    %v5384 = vadd.f32 %v4698, %v5383
    %v5385 = vpop.f32.mrb[0].mxu0
    %v5386 = vadd.f32 %v4702, %v5385
    %5387 = vmatprep.mubr.bf16.mxu0 0
    %5388 = vmatmul.mubr.bf16.gmra.mrb[0].mxu0 %v4685
    %v5389 = vpop.f32.mrb[0].mxu0
    %v5390 = vadd.f32 %v4698, %v5389
    %v5391 = vpop.f32.mrb[0].mxu0
    %v5392 = vadd.f32 %v4702, %v5391
    %v5393 = vpop.f32.mrb[0].mxu0
    %v5394 = vadd.f32 %v4698, %v5393
    %v5395 = vpop.f32.mrb[0].mxu0
    %v5396 = vadd.f32 %v4702, %v5395
    %5397 = vmatprep.mubr.bf16.mxu0 0
    %5398 = vmatmul.mubr.bf16.gmra.mrb[0].mxu0 %v4686
    %v5399 = vpop.f32.mrb[0].mxu0
    %v5400 = vadd.f32 %v4698, %v5399
    %v5401 = vpop.f32.mrb[0].mxu0
    %v5402 = vadd.f32 %v4702, %v5401
    %v5403 = vpop.f32.mrb[0].mxu0
    %v5404 = vadd.f32 %v4698, %v5403
    %v5405 = vpop.f32.mrb[0].mxu0
    %v5406 = vadd.f32 %v4702, %v5405
    %5407 = vmatprep.mubr.bf16.mxu0 0
    %5408 = vmatmul.mubr.bf16.gmra.mrb[0].mxu0 %v4687
    %v5409 = vpop.f32.mrb[0].mxu0
    %v5410 = vadd.f32 %v4698, %v5409
    %v5411 = vpop.f32.mrb[0].mxu0
    %v5412 = vadd.f32 %v4702, %v5411
    %v5413 = vpop.f32.mrb[0].mxu0
    %v5414 = vadd.f32 %v4698, %v5413
    %v5415 = vpop.f32.mrb[0].mxu0
    %v5416 = vadd.f32 %v4702, %v5415
    %5417 = vmatprep.mubr.bf16.mxu0 0
    %5418 = vmatmul.mubr.bf16.gmra.mrb[0].mxu0 %v4688
    %v5419 = vpop.f32.mrb[0].mxu0
    %v5420 = vadd.f32 %v4698, %v5419
    %v5421 = vpop.f32.mrb[0].mxu0
    %v5422 = vadd.f32 %v4702, %v5421
    %v5423 = vpop.f32.mrb[0].mxu0
    %v5424 = vadd.f32 %v4698, %v5423
    %v5425 = vpop.f32.mrb[0].mxu0
    %v5426 = vadd.f32 %v4702, %v5425
    %5427 = vmatprep.mubr.bf16.mxu0 0
    %5428 = vmatmul.mubr.bf16.gmra.mrb[0].mxu0 %v4689
    %v5429 = vpop.f32.mrb[0].mxu0
    %v5430 = vadd.f32 %v4698, %v5429
    %v5431 = vpop.f32.mrb[0].mxu0
    %v5432 = vadd.f32 %v4702, %v5431
    %v5433 = vpop.f32.mrb[0].mxu0
    %v5434 = vadd.f32 %v4698, %v5433
    %v5435 = vpop.f32.mrb[0].mxu0
    %v5436 = vadd.f32 %v4702, %v5435
    %5437 = vmatprep.mubr.bf16.mxu0 0
    %5438 = vmatmul.mubr.bf16.gmra.mrb[0].mxu0 %v4690
    %v5439 = vpop.f32.mrb[0].mxu0
    %v5440 = vadd.f32 %v4698, %v5439
    %v5441 = vpop.f32.mrb[0].mxu0
    %v5442 = vadd.f32 %v4702, %v5441
    %v5443 = vpop.f32.mrb[0].mxu0
    %v5444 = vadd.f32 %v4698, %v5443
    %v5445 = vpop.f32.mrb[0].mxu0
    %v5446 = vadd.f32 %v4702, %v5445
    %5447 = vmatprep.mubr.bf16.mxu0 0
    %5448 = vmatmul.mubr.bf16.gmra.mrb[0].mxu0 %v4691
    %v5449 = vpop.f32.mrb[0].mxu0
    %v5450 = vadd.f32 %v4698, %v5449
    %v5451 = vpop.f32.mrb[0].mxu0
    %v5452 = vadd.f32 %v4702, %v5451
    %v5453 = vpop.f32.mrb[0].mxu0
    %v5454 = vadd.f32 %v4698, %v5453
    %v5455 = vpop.f32.mrb[0].mxu0
    %v5456 = vadd.f32 %v4702, %v5455
    %5457 = vdwg.mxu0
    %5458 = vst [vmem:[#allocation12] sm:$0xff] %v4820
    %5459 = vst [vmem:[#allocation12 + $0x8] sm:$0xff] %v4822
    %5460 = vst [vmem:[#allocation12 + $0x10] sm:$0xff] %v4824
    %5461 = vst [vmem:[#allocation12 + $0x18] sm:$0xff] %v4826
    %5462 = vst [vmem:[#allocation12 + $0x20] sm:$0xff] %v4830
    %5463 = vst [vmem:[#allocation12 + $0x28] sm:$0xff] %v4832
    %5464 = vst [vmem:[#allocation12 + $0x30] sm:$0xff] %v4834
    %5465 = vst [vmem:[#allocation12 + $0x38] sm:$0xff] %v4836
    %5466 = vst [vmem:[#allocation12 + $0x40] sm:$0xff] %v4840
    %5467 = vst [vmem:[#allocation12 + $0x48] sm:$0xff] %v4842
    %5468 = vst [vmem:[#allocation12 + $0x50] sm:$0xff] %v4844
    %5469 = vst [vmem:[#allocation12 + $0x58] sm:$0xff] %v4846
    %5470 = vst [vmem:[#allocation12 + $0x60] sm:$0xff] %v4850
    %5471 = vst [vmem:[#allocation12 + $0x68] sm:$0xff] %v4852
    %5472 = vst [vmem:[#allocation12 + $0x70] sm:$0xff] %v4854
    %5473 = vst [vmem:[#allocation12 + $0x78] sm:$0xff] %v4856
    %5474 = vst [vmem:[#allocation12 + $0x80] sm:$0xff] %v4860
    %5475 = vst [vmem:[#allocation12 + $0x88] sm:$0xff] %v4862
    %5476 = vst [vmem:[#allocation12 + $0x90] sm:$0xff] %v4864
    %5477 = vst [vmem:[#allocation12 + $0x98] sm:$0xff] %v4866
    %5478 = vst [vmem:[#allocation12 + $0xa0] sm:$0xff] %v4870
    %5479 = vst [vmem:[#allocation12 + $0xa8] sm:$0xff] %v4872
    %5480 = vst [vmem:[#allocation12 + $0xb0] sm:$0xff] %v4874
    %5481 = vst [vmem:[#allocation12 + $0xb8] sm:$0xff] %v4876
    %5482 = vst [vmem:[#allocation12 + $0xc0] sm:$0xff] %v4880
    %5483 = vst [vmem:[#allocation12 + $0xc8] sm:$0xff] %v4882
    %5484 = vst [vmem:[#allocation12 + $0xd0] sm:$0xff] %v4884
    %5485 = vst [vmem:[#allocation12 + $0xd8] sm:$0xff] %v4886
    %5486 = vst [vmem:[#allocation12 + $0xe0] sm:$0xff] %v4890
    %5487 = vst [vmem:[#allocation12 + $0xe8] sm:$0xff] %v4892
    %5488 = vst [vmem:[#allocation12 + $0xf0] sm:$0xff] %v4894
    %5489 = vst [vmem:[#allocation12 + $0xf8] sm:$0xff] %v4896
    %5490 = vst [vmem:[#allocation12 + $0x100] sm:$0xff] %v4900
    %5491 = vst [vmem:[#allocation12 + $0x108] sm:$0xff] %v4902
    %5492 = vst [vmem:[#allocation12 + $0x110] sm:$0xff] %v4904
    %5493 = vst [vmem:[#allocation12 + $0x118] sm:$0xff] %v4906
    %5494 = vst [vmem:[#allocation12 + $0x120] sm:$0xff] %v4910
    %5495 = vst [vmem:[#allocation12 + $0x128] sm:$0xff] %v4912
    %5496 = vst [vmem:[#allocation12 + $0x130] sm:$0xff] %v4914
    %5497 = vst [vmem:[#allocation12 + $0x138] sm:$0xff] %v4916
    %5498 = vst [vmem:[#allocation12 + $0x140] sm:$0xff] %v4920
    %5499 = vst [vmem:[#allocation12 + $0x148] sm:$0xff] %v4922
    %5500 = vst [vmem:[#allocation12 + $0x150] sm:$0xff] %v4924
    %5501 = vst [vmem:[#allocation12 + $0x158] sm:$0xff] %v4926
    %5502 = vst [vmem:[#allocation12 + $0x160] sm:$0xff] %v4930
    %5503 = vst [vmem:[#allocation12 + $0x168] sm:$0xff] %v4932
    %5504 = vst [vmem:[#allocation12 + $0x170] sm:$0xff] %v4934
    %5505 = vst [vmem:[#allocation12 + $0x178] sm:$0xff] %v4936
    %5506 = vst [vmem:[#allocation12 + $0x180] sm:$0xff] %v4940
    %5507 = vst [vmem:[#allocation12 + $0x188] sm:$0xff] %v4942
    %5508 = vst [vmem:[#allocation12 + $0x190] sm:$0xff] %v4944
    %5509 = vst [vmem:[#allocation12 + $0x198] sm:$0xff] %v4946
    %5510 = vst [vmem:[#allocation12 + $0x1a0] sm:$0xff] %v4950
    %5511 = vst [vmem:[#allocation12 + $0x1a8] sm:$0xff] %v4952
    %5512 = vst [vmem:[#allocation12 + $0x1b0] sm:$0xff] %v4954
    %5513 = vst [vmem:[#allocation12 + $0x1b8] sm:$0xff] %v4956
    %5514 = vst [vmem:[#allocation12 + $0x1c0] sm:$0xff] %v4960
    %5515 = vst [vmem:[#allocation12 + $0x1c8] sm:$0xff] %v4962
    %5516 = vst [vmem:[#allocation12 + $0x1d0] sm:$0xff] %v4964
    %5517 = vst [vmem:[#allocation12 + $0x1d8] sm:$0xff] %v4966
    %5518 = vst [vmem:[#allocation12 + $0x1e0] sm:$0xff] %v4970
    %5519 = vst [vmem:[#allocation12 + $0x1e8] sm:$0xff] %v4972
    %5520 = vst [vmem:[#allocation12 + $0x1f0] sm:$0xff] %v4974
    %5521 = vst [vmem:[#allocation12 + $0x1f8] sm:$0xff] %v4976
    %5522 = vst [vmem:[#allocation12 + $0x200] sm:$0xff] %v4980
    %5523 = vst [vmem:[#allocation12 + $0x208] sm:$0xff] %v4982
    %5524 = vst [vmem:[#allocation12 + $0x210] sm:$0xff] %v4984
    %5525 = vst [vmem:[#allocation12 + $0x218] sm:$0xff] %v4986
    %5526 = vst [vmem:[#allocation12 + $0x220] sm:$0xff] %v4990
    %5527 = vst [vmem:[#allocation12 + $0x228] sm:$0xff] %v4992
    %5528 = vst [vmem:[#allocation12 + $0x230] sm:$0xff] %v4994
    %5529 = vst [vmem:[#allocation12 + $0x238] sm:$0xff] %v4996
    %5530 = vst [vmem:[#allocation12 + $0x240] sm:$0xff] %v5000
    %5531 = vst [vmem:[#allocation12 + $0x248] sm:$0xff] %v5002
    %5532 = vst [vmem:[#allocation12 + $0x250] sm:$0xff] %v5004
    %5533 = vst [vmem:[#allocation12 + $0x258] sm:$0xff] %v5006
    %5534 = vst [vmem:[#allocation12 + $0x260] sm:$0xff] %v5010
    %5535 = vst [vmem:[#allocation12 + $0x268] sm:$0xff] %v5012
    %5536 = vst [vmem:[#allocation12 + $0x270] sm:$0xff] %v5014
    %5537 = vst [vmem:[#allocation12 + $0x278] sm:$0xff] %v5016
    %5538 = vst [vmem:[#allocation12 + $0x280] sm:$0xff] %v5020
    %5539 = vst [vmem:[#allocation12 + $0x288] sm:$0xff] %v5022
    %5540 = vst [vmem:[#allocation12 + $0x290] sm:$0xff] %v5024
    %5541 = vst [vmem:[#allocation12 + $0x298] sm:$0xff] %v5026
    %5542 = vst [vmem:[#allocation12 + $0x2a0] sm:$0xff] %v5030
    %5543 = vst [vmem:[#allocation12 + $0x2a8] sm:$0xff] %v5032
    %5544 = vst [vmem:[#allocation12 + $0x2b0] sm:$0xff] %v5034
    %5545 = vst [vmem:[#allocation12 + $0x2b8] sm:$0xff] %v5036
    %5546 = vst [vmem:[#allocation12 + $0x2c0] sm:$0xff] %v5040
    %5547 = vst [vmem:[#allocation12 + $0x2c8] sm:$0xff] %v5042
    %5548 = vst [vmem:[#allocation12 + $0x2d0] sm:$0xff] %v5044
    %5549 = vst [vmem:[#allocation12 + $0x2d8] sm:$0xff] %v5046
    %5550 = vst [vmem:[#allocation12 + $0x2e0] sm:$0xff] %v5050
    %5551 = vst [vmem:[#allocation12 + $0x2e8] sm:$0xff] %v5052
    %5552 = vst [vmem:[#allocation12 + $0x2f0] sm:$0xff] %v5054
    %5553 = vst [vmem:[#allocation12 + $0x2f8] sm:$0xff] %v5056
    %5554 = vst [vmem:[#allocation12 + $0x300] sm:$0xff] %v5060
    %5555 = vst [vmem:[#allocation12 + $0x308] sm:$0xff] %v5062
    %5556 = vst [vmem:[#allocation12 + $0x310] sm:$0xff] %v5064
    %5557 = vst [vmem:[#allocation12 + $0x318] sm:$0xff] %v5066
    %5558 = vst [vmem:[#allocation12 + $0x320] sm:$0xff] %v5070
    %5559 = vst [vmem:[#allocation12 + $0x328] sm:$0xff] %v5072
    %5560 = vst [vmem:[#allocation12 + $0x330] sm:$0xff] %v5074
    %5561 = vst [vmem:[#allocation12 + $0x338] sm:$0xff] %v5076
    %5562 = vst [vmem:[#allocation12 + $0x340] sm:$0xff] %v5080
    %5563 = vst [vmem:[#allocation12 + $0x348] sm:$0xff] %v5082
    %5564 = vst [vmem:[#allocation12 + $0x350] sm:$0xff] %v5084
    %5565 = vst [vmem:[#allocation12 + $0x358] sm:$0xff] %v5086
    %5566 = vst [vmem:[#allocation12 + $0x360] sm:$0xff] %v5090
    %5567 = vst [vmem:[#allocation12 + $0x368] sm:$0xff] %v5092
    %5568 = vst [vmem:[#allocation12 + $0x370] sm:$0xff] %v5094
    %5569 = vst [vmem:[#allocation12 + $0x378] sm:$0xff] %v5096
    %5570 = vst [vmem:[#allocation12 + $0x380] sm:$0xff] %v5100
    %5571 = vst [vmem:[#allocation12 + $0x388] sm:$0xff] %v5102
    %5572 = vst [vmem:[#allocation12 + $0x390] sm:$0xff] %v5104
    %5573 = vst [vmem:[#allocation12 + $0x398] sm:$0xff] %v5106
    %5574 = vst [vmem:[#allocation12 + $0x3a0] sm:$0xff] %v5110
    %5575 = vst [vmem:[#allocation12 + $0x3a8] sm:$0xff] %v5112
    %5576 = vst [vmem:[#allocation12 + $0x3b0] sm:$0xff] %v5114
    %5577 = vst [vmem:[#allocation12 + $0x3b8] sm:$0xff] %v5116
    %5578 = vst [vmem:[#allocation12 + $0x3c0] sm:$0xff] %v5120
    %5579 = vst [vmem:[#allocation12 + $0x3c8] sm:$0xff] %v5122
    %5580 = vst [vmem:[#allocation12 + $0x3d0] sm:$0xff] %v5124
    %5581 = vst [vmem:[#allocation12 + $0x3d8] sm:$0xff] %v5126
    %5582 = vst [vmem:[#allocation12 + $0x3e0] sm:$0xff] %v5130
    %5583 = vst [vmem:[#allocation12 + $0x3e8] sm:$0xff] %v5132
    %5584 = vst [vmem:[#allocation12 + $0x3f0] sm:$0xff] %v5134
    %5585 = vst [vmem:[#allocation12 + $0x3f8] sm:$0xff] %v5136
    %5586 = vst [vmem:[#allocation12 + $0x400] sm:$0xff] %v5140
    %5587 = vst [vmem:[#allocation12 + $0x408] sm:$0xff] %v5142
    %5588 = vst [vmem:[#allocation12 + $0x410] sm:$0xff] %v5144
    %5589 = vst [vmem:[#allocation12 + $0x418] sm:$0xff] %v5146
    %5590 = vst [vmem:[#allocation12 + $0x420] sm:$0xff] %v5150
    %5591 = vst [vmem:[#allocation12 + $0x428] sm:$0xff] %v5152
    %5592 = vst [vmem:[#allocation12 + $0x430] sm:$0xff] %v5154
    %5593 = vst [vmem:[#allocation12 + $0x438] sm:$0xff] %v5156
    %5594 = vst [vmem:[#allocation12 + $0x440] sm:$0xff] %v5160
    %5595 = vst [vmem:[#allocation12 + $0x448] sm:$0xff] %v5162
    %5596 = vst [vmem:[#allocation12 + $0x450] sm:$0xff] %v5164
    %5597 = vst [vmem:[#allocation12 + $0x458] sm:$0xff] %v5166
    %5598 = vst [vmem:[#allocation12 + $0x460] sm:$0xff] %v5170
    %5599 = vst [vmem:[#allocation12 + $0x468] sm:$0xff] %v5172
    %5600 = vst [vmem:[#allocation12 + $0x470] sm:$0xff] %v5174
    %5601 = vst [vmem:[#allocation12 + $0x478] sm:$0xff] %v5176
    %5602 = vst [vmem:[#allocation12 + $0x480] sm:$0xff] %v5180
    %5603 = vst [vmem:[#allocation12 + $0x488] sm:$0xff] %v5182
    %5604 = vst [vmem:[#allocation12 + $0x490] sm:$0xff] %v5184
    %5605 = vst [vmem:[#allocation12 + $0x498] sm:$0xff] %v5186
    %5606 = vst [vmem:[#allocation12 + $0x4a0] sm:$0xff] %v5190
    %5607 = vst [vmem:[#allocation12 + $0x4a8] sm:$0xff] %v5192
    %5608 = vst [vmem:[#allocation12 + $0x4b0] sm:$0xff] %v5194
    %5609 = vst [vmem:[#allocation12 + $0x4b8] sm:$0xff] %v5196
    %5610 = vst [vmem:[#allocation12 + $0x4c0] sm:$0xff] %v5200
    %5611 = vst [vmem:[#allocation12 + $0x4c8] sm:$0xff] %v5202
    %5612 = vst [vmem:[#allocation12 + $0x4d0] sm:$0xff] %v5204
    %5613 = vst [vmem:[#allocation12 + $0x4d8] sm:$0xff] %v5206
    %5614 = vst [vmem:[#allocation12 + $0x4e0] sm:$0xff] %v5210
    %5615 = vst [vmem:[#allocation12 + $0x4e8] sm:$0xff] %v5212
    %5616 = vst [vmem:[#allocation12 + $0x4f0] sm:$0xff] %v5214
    %5617 = vst [vmem:[#allocation12 + $0x4f8] sm:$0xff] %v5216
    %5618 = vst [vmem:[#allocation12 + $0x500] sm:$0xff] %v5220
    %5619 = vst [vmem:[#allocation12 + $0x508] sm:$0xff] %v5222
    %5620 = vst [vmem:[#allocation12 + $0x510] sm:$0xff] %v5224
    %5621 = vst [vmem:[#allocation12 + $0x518] sm:$0xff] %v5226
    %5622 = vst [vmem:[#allocation12 + $0x520] sm:$0xff] %v5230
    %5623 = vst [vmem:[#allocation12 + $0x528] sm:$0xff] %v5232
    %5624 = vst [vmem:[#allocation12 + $0x530] sm:$0xff] %v5234
    %5625 = vst [vmem:[#allocation12 + $0x538] sm:$0xff] %v5236
    %5626 = vst [vmem:[#allocation12 + $0x540] sm:$0xff] %v5240
    %5627 = vst [vmem:[#allocation12 + $0x548] sm:$0xff] %v5242
    %5628 = vst [vmem:[#allocation12 + $0x550] sm:$0xff] %v5244
    %5629 = vst [vmem:[#allocation12 + $0x558] sm:$0xff] %v5246
    %5630 = vst [vmem:[#allocation12 + $0x560] sm:$0xff] %v5250
    %5631 = vst [vmem:[#allocation12 + $0x568] sm:$0xff] %v5252
    %5632 = vst [vmem:[#allocation12 + $0x570] sm:$0xff] %v5254
    %5633 = vst [vmem:[#allocation12 + $0x578] sm:$0xff] %v5256
    %5634 = vst [vmem:[#allocation12 + $0x580] sm:$0xff] %v5260
    %5635 = vst [vmem:[#allocation12 + $0x588] sm:$0xff] %v5262
    %5636 = vst [vmem:[#allocation12 + $0x590] sm:$0xff] %v5264
    %5637 = vst [vmem:[#allocation12 + $0x598] sm:$0xff] %v5266
    %5638 = vst [vmem:[#allocation12 + $0x5a0] sm:$0xff] %v5270
    %5639 = vst [vmem:[#allocation12 + $0x5a8] sm:$0xff] %v5272
    %5640 = vst [vmem:[#allocation12 + $0x5b0] sm:$0xff] %v5274
    %5641 = vst [vmem:[#allocation12 + $0x5b8] sm:$0xff] %v5276
    %5642 = vst [vmem:[#allocation12 + $0x5c0] sm:$0xff] %v5280
    %5643 = vst [vmem:[#allocation12 + $0x5c8] sm:$0xff] %v5282
    %5644 = vst [vmem:[#allocation12 + $0x5d0] sm:$0xff] %v5284
    %5645 = vst [vmem:[#allocation12 + $0x5d8] sm:$0xff] %v5286
    %5646 = vst [vmem:[#allocation12 + $0x5e0] sm:$0xff] %v5290
    %5647 = vst [vmem:[#allocation12 + $0x5e8] sm:$0xff] %v5292
    %5648 = vst [vmem:[#allocation12 + $0x5f0] sm:$0xff] %v5294
    %5649 = vst [vmem:[#allocation12 + $0x5f8] sm:$0xff] %v5296
    %5650 = vst [vmem:[#allocation12 + $0x600] sm:$0xff] %v5300
    %5651 = vst [vmem:[#allocation12 + $0x608] sm:$0xff] %v5302
    %5652 = vst [vmem:[#allocation12 + $0x610] sm:$0xff] %v5304
    %5653 = vst [vmem:[#allocation12 + $0x618] sm:$0xff] %v5306
    %5654 = vst [vmem:[#allocation12 + $0x620] sm:$0xff] %v5310
    %5655 = vst [vmem:[#allocation12 + $0x628] sm:$0xff] %v5312
    %5656 = vst [vmem:[#allocation12 + $0x630] sm:$0xff] %v5314
    %5657 = vst [vmem:[#allocation12 + $0x638] sm:$0xff] %v5316
    %5658 = vst [vmem:[#allocation12 + $0x640] sm:$0xff] %v5320
    %5659 = vst [vmem:[#allocation12 + $0x648] sm:$0xff] %v5322
    %5660 = vst [vmem:[#allocation12 + $0x650] sm:$0xff] %v5324
    %5661 = vst [vmem:[#allocation12 + $0x658] sm:$0xff] %v5326
    %5662 = vst [vmem:[#allocation12 + $0x660] sm:$0xff] %v5330
    %5663 = vst [vmem:[#allocation12 + $0x668] sm:$0xff] %v5332
    %5664 = vst [vmem:[#allocation12 + $0x670] sm:$0xff] %v5334
    %5665 = vst [vmem:[#allocation12 + $0x678] sm:$0xff] %v5336
    %5666 = vst [vmem:[#allocation12 + $0x680] sm:$0xff] %v5340
    %5667 = vst [vmem:[#allocation12 + $0x688] sm:$0xff] %v5342
    %5668 = vst [vmem:[#allocation12 + $0x690] sm:$0xff] %v5344
    %5669 = vst [vmem:[#allocation12 + $0x698] sm:$0xff] %v5346
    %5670 = vst [vmem:[#allocation12 + $0x6a0] sm:$0xff] %v5350
    %5671 = vst [vmem:[#allocation12 + $0x6a8] sm:$0xff] %v5352
    %5672 = vst [vmem:[#allocation12 + $0x6b0] sm:$0xff] %v5354
    %5673 = vst [vmem:[#allocation12 + $0x6b8] sm:$0xff] %v5356
    %5674 = vst [vmem:[#allocation12 + $0x6c0] sm:$0xff] %v5360
    %5675 = vst [vmem:[#allocation12 + $0x6c8] sm:$0xff] %v5362
    %5676 = vst [vmem:[#allocation12 + $0x6d0] sm:$0xff] %v5364
    %5677 = vst [vmem:[#allocation12 + $0x6d8] sm:$0xff] %v5366
    %5678 = vst [vmem:[#allocation12 + $0x6e0] sm:$0xff] %v5370
    %5679 = vst [vmem:[#allocation12 + $0x6e8] sm:$0xff] %v5372
    %5680 = vst [vmem:[#allocation12 + $0x6f0] sm:$0xff] %v5374
    %5681 = vst [vmem:[#allocation12 + $0x6f8] sm:$0xff] %v5376
    %5682 = vst [vmem:[#allocation12 + $0x700] sm:$0xff] %v5380
    %5683 = vst [vmem:[#allocation12 + $0x708] sm:$0xff] %v5382
    %5684 = vst [vmem:[#allocation12 + $0x710] sm:$0xff] %v5384
    %5685 = vst [vmem:[#allocation12 + $0x718] sm:$0xff] %v5386
    %5686 = vst [vmem:[#allocation12 + $0x720] sm:$0xff] %v5390
    %5687 = vst [vmem:[#allocation12 + $0x728] sm:$0xff] %v5392
    %5688 = vst [vmem:[#allocation12 + $0x730] sm:$0xff] %v5394
    %5689 = vst [vmem:[#allocation12 + $0x738] sm:$0xff] %v5396
    %5690 = vst [vmem:[#allocation12 + $0x740] sm:$0xff] %v5400
    %5691 = vst [vmem:[#allocation12 + $0x748] sm:$0xff] %v5402
    %5692 = vst [vmem:[#allocation12 + $0x750] sm:$0xff] %v5404
    %5693 = vst [vmem:[#allocation12 + $0x758] sm:$0xff] %v5406
    %5694 = vst [vmem:[#allocation12 + $0x760] sm:$0xff] %v5410
    %5695 = vst [vmem:[#allocation12 + $0x768] sm:$0xff] %v5412
    %5696 = vst [vmem:[#allocation12 + $0x770] sm:$0xff] %v5414
    %5697 = vst [vmem:[#allocation12 + $0x778] sm:$0xff] %v5416
    %5698 = vst [vmem:[#allocation12 + $0x780] sm:$0xff] %v5420
    %5699 = vst [vmem:[#allocation12 + $0x788] sm:$0xff] %v5422
    %5700 = vst [vmem:[#allocation12 + $0x790] sm:$0xff] %v5424
    %5701 = vst [vmem:[#allocation12 + $0x798] sm:$0xff] %v5426
    %5702 = vst [vmem:[#allocation12 + $0x7a0] sm:$0xff] %v5430
    %5703 = vst [vmem:[#allocation12 + $0x7a8] sm:$0xff] %v5432
    %5704 = vst [vmem:[#allocation12 + $0x7b0] sm:$0xff] %v5434
    %5705 = vst [vmem:[#allocation12 + $0x7b8] sm:$0xff] %v5436
    %5706 = vst [vmem:[#allocation12 + $0x7c0] sm:$0xff] %v5440
    %5707 = vst [vmem:[#allocation12 + $0x7c8] sm:$0xff] %v5442
    %5708 = vst [vmem:[#allocation12 + $0x7d0] sm:$0xff] %v5444
    %5709 = vst [vmem:[#allocation12 + $0x7d8] sm:$0xff] %v5446
    %5710 = vst [vmem:[#allocation12 + $0x7e0] sm:$0xff] %v5450
    %5711 = vst [vmem:[#allocation12 + $0x7e8] sm:$0xff] %v5452
    %5712 = vst [vmem:[#allocation12 + $0x7f0] sm:$0xff] %v5454
    %5713 = vst [vmem:[#allocation12 + $0x7f8] sm:$0xff] %v5456
    %v5714 = vld [vmem:[#allocation5] sm:$0xff]
    %v5715 = vld [vmem:[#allocation5 + $0x8] sm:$0xff]
    %v5716 = vld [vmem:[#allocation5 + $0x10] sm:$0xff]
    %v5717 = vld [vmem:[#allocation5 + $0x18] sm:$0xff]
    %v5718 = vld [vmem:[#allocation5 + $0x20] sm:$0xff]
    %v5719 = vld [vmem:[#allocation5 + $0x28] sm:$0xff]
    %v5720 = vld [vmem:[#allocation5 + $0x30] sm:$0xff]
    %v5721 = vld [vmem:[#allocation5 + $0x38] sm:$0xff]
    %v5722 = vld [vmem:[#allocation5 + $0x40] sm:$0xff]
    %v5723 = vld [vmem:[#allocation5 + $0x48] sm:$0xff]
    %v5724 = vld [vmem:[#allocation5 + $0x50] sm:$0xff]
    %v5725 = vld [vmem:[#allocation5 + $0x58] sm:$0xff]
    %v5726 = vld [vmem:[#allocation5 + $0x60] sm:$0xff]
    %v5727 = vld [vmem:[#allocation5 + $0x68] sm:$0xff]
    %v5728 = vld [vmem:[#allocation5 + $0x70] sm:$0xff]
    %v5729 = vld [vmem:[#allocation5 + $0x78] sm:$0xff]
    %v5730 = vld [vmem:[#allocation5 + $0x80] sm:$0xff]
    %v5731 = vld [vmem:[#allocation5 + $0x88] sm:$0xff]
    %v5732 = vld [vmem:[#allocation5 + $0x90] sm:$0xff]
    %v5733 = vld [vmem:[#allocation5 + $0x98] sm:$0xff]
    %v5734 = vld [vmem:[#allocation5 + $0xa0] sm:$0xff]
    %v5735 = vld [vmem:[#allocation5 + $0xa8] sm:$0xff]
    %v5736 = vld [vmem:[#allocation5 + $0xb0] sm:$0xff]
    %v5737 = vld [vmem:[#allocation5 + $0xb8] sm:$0xff]
    %v5738 = vld [vmem:[#allocation5 + $0xc0] sm:$0xff]
    %v5739 = vld [vmem:[#allocation5 + $0xc8] sm:$0xff]
    %v5740 = vld [vmem:[#allocation5 + $0xd0] sm:$0xff]
    %v5741 = vld [vmem:[#allocation5 + $0xd8] sm:$0xff]
    %v5742 = vld [vmem:[#allocation5 + $0xe0] sm:$0xff]
    %v5743 = vld [vmem:[#allocation5 + $0xe8] sm:$0xff]
    %v5744 = vld [vmem:[#allocation5 + $0xf0] sm:$0xff]
    %v5745 = vld [vmem:[#allocation5 + $0xf8] sm:$0xff]
    %v5746 = vld [vmem:[#allocation5 + $0x100] sm:$0xff]
    %v5747 = vld [vmem:[#allocation5 + $0x108] sm:$0xff]
    %v5748 = vld [vmem:[#allocation5 + $0x110] sm:$0xff]
    %v5749 = vld [vmem:[#allocation5 + $0x118] sm:$0xff]
    %v5750 = vld [vmem:[#allocation5 + $0x120] sm:$0xff]
    %v5751 = vld [vmem:[#allocation5 + $0x128] sm:$0xff]
    %v5752 = vld [vmem:[#allocation5 + $0x130] sm:$0xff]
    %v5753 = vld [vmem:[#allocation5 + $0x138] sm:$0xff]
    %v5754 = vld [vmem:[#allocation5 + $0x140] sm:$0xff]
    %v5755 = vld [vmem:[#allocation5 + $0x148] sm:$0xff]
    %v5756 = vld [vmem:[#allocation5 + $0x150] sm:$0xff]
    %v5757 = vld [vmem:[#allocation5 + $0x158] sm:$0xff]
    %v5758 = vld [vmem:[#allocation5 + $0x160] sm:$0xff]
    %v5759 = vld [vmem:[#allocation5 + $0x168] sm:$0xff]
    %v5760 = vld [vmem:[#allocation5 + $0x170] sm:$0xff]
    %v5761 = vld [vmem:[#allocation5 + $0x178] sm:$0xff]
    %v5762 = vld [vmem:[#allocation5 + $0x180] sm:$0xff]
    %v5763 = vld [vmem:[#allocation5 + $0x188] sm:$0xff]
    %v5764 = vld [vmem:[#allocation5 + $0x190] sm:$0xff]
    %v5765 = vld [vmem:[#allocation5 + $0x198] sm:$0xff]
    %v5766 = vld [vmem:[#allocation5 + $0x1a0] sm:$0xff]
    %v5767 = vld [vmem:[#allocation5 + $0x1a8] sm:$0xff]
    %v5768 = vld [vmem:[#allocation5 + $0x1b0] sm:$0xff]
    %v5769 = vld [vmem:[#allocation5 + $0x1b8] sm:$0xff]
    %v5770 = vld [vmem:[#allocation5 + $0x1c0] sm:$0xff]
    %v5771 = vld [vmem:[#allocation5 + $0x1c8] sm:$0xff]
    %v5772 = vld [vmem:[#allocation5 + $0x1d0] sm:$0xff]
    %v5773 = vld [vmem:[#allocation5 + $0x1d8] sm:$0xff]
    %v5774 = vld [vmem:[#allocation5 + $0x1e0] sm:$0xff]
    %v5775 = vld [vmem:[#allocation5 + $0x1e8] sm:$0xff]
    %v5776 = vld [vmem:[#allocation5 + $0x1f0] sm:$0xff]
    %v5777 = vld [vmem:[#allocation5 + $0x1f8] sm:$0xff]
    %v5778 = vld [vmem:[#allocation5 + $0x200] sm:$0xff]
    %v5779 = vld [vmem:[#allocation5 + $0x208] sm:$0xff]
    %v5780 = vld [vmem:[#allocation5 + $0x210] sm:$0xff]
    %v5781 = vld [vmem:[#allocation5 + $0x218] sm:$0xff]
    %v5782 = vld [vmem:[#allocation5 + $0x220] sm:$0xff]
    %v5783 = vld [vmem:[#allocation5 + $0x228] sm:$0xff]
    %v5784 = vld [vmem:[#allocation5 + $0x230] sm:$0xff]
    %v5785 = vld [vmem:[#allocation5 + $0x238] sm:$0xff]
    %v5786 = vld [vmem:[#allocation5 + $0x240] sm:$0xff]
    %v5787 = vld [vmem:[#allocation5 + $0x248] sm:$0xff]
    %v5788 = vld [vmem:[#allocation5 + $0x250] sm:$0xff]
    %v5789 = vld [vmem:[#allocation5 + $0x258] sm:$0xff]
    %v5790 = vld [vmem:[#allocation5 + $0x260] sm:$0xff]
    %v5791 = vld [vmem:[#allocation5 + $0x268] sm:$0xff]
    %v5792 = vld [vmem:[#allocation5 + $0x270] sm:$0xff]
    %v5793 = vld [vmem:[#allocation5 + $0x278] sm:$0xff]
    %v5794 = vld [vmem:[#allocation5 + $0x280] sm:$0xff]
    %v5795 = vld [vmem:[#allocation5 + $0x288] sm:$0xff]
    %v5796 = vld [vmem:[#allocation5 + $0x290] sm:$0xff]
    %v5797 = vld [vmem:[#allocation5 + $0x298] sm:$0xff]
    %v5798 = vld [vmem:[#allocation5 + $0x2a0] sm:$0xff]
    %v5799 = vld [vmem:[#allocation5 + $0x2a8] sm:$0xff]
    %v5800 = vld [vmem:[#allocation5 + $0x2b0] sm:$0xff]
    %v5801 = vld [vmem:[#allocation5 + $0x2b8] sm:$0xff]
    %v5802 = vld [vmem:[#allocation5 + $0x2c0] sm:$0xff]
    %v5803 = vld [vmem:[#allocation5 + $0x2c8] sm:$0xff]
    %v5804 = vld [vmem:[#allocation5 + $0x2d0] sm:$0xff]
    %v5805 = vld [vmem:[#allocation5 + $0x2d8] sm:$0xff]
    %v5806 = vld [vmem:[#allocation5 + $0x2e0] sm:$0xff]
    %v5807 = vld [vmem:[#allocation5 + $0x2e8] sm:$0xff]
    %v5808 = vld [vmem:[#allocation5 + $0x2f0] sm:$0xff]
    %v5809 = vld [vmem:[#allocation5 + $0x2f8] sm:$0xff]
    %v5810 = vld [vmem:[#allocation5 + $0x300] sm:$0xff]
    %v5811 = vld [vmem:[#allocation5 + $0x308] sm:$0xff]
    %v5812 = vld [vmem:[#allocation5 + $0x310] sm:$0xff]
    %v5813 = vld [vmem:[#allocation5 + $0x318] sm:$0xff]
    %v5814 = vld [vmem:[#allocation5 + $0x320] sm:$0xff]
    %v5815 = vld [vmem:[#allocation5 + $0x328] sm:$0xff]
    %v5816 = vld [vmem:[#allocation5 + $0x330] sm:$0xff]
    %v5817 = vld [vmem:[#allocation5 + $0x338] sm:$0xff]
    %v5818 = vld [vmem:[#allocation5 + $0x340] sm:$0xff]
    %v5819 = vld [vmem:[#allocation5 + $0x348] sm:$0xff]
    %v5820 = vld [vmem:[#allocation5 + $0x350] sm:$0xff]
    %v5821 = vld [vmem:[#allocation5 + $0x358] sm:$0xff]
    %v5822 = vld [vmem:[#allocation5 + $0x360] sm:$0xff]
    %v5823 = vld [vmem:[#allocation5 + $0x368] sm:$0xff]
    %v5824 = vld [vmem:[#allocation5 + $0x370] sm:$0xff]
    %v5825 = vld [vmem:[#allocation5 + $0x378] sm:$0xff]
    %v5826 = vld [vmem:[#allocation5 + $0x380] sm:$0xff]
    %v5827 = vld [vmem:[#allocation5 + $0x388] sm:$0xff]
    %v5828 = vld [vmem:[#allocation5 + $0x390] sm:$0xff]
    %v5829 = vld [vmem:[#allocation5 + $0x398] sm:$0xff]
    %v5830 = vld [vmem:[#allocation5 + $0x3a0] sm:$0xff]
    %v5831 = vld [vmem:[#allocation5 + $0x3a8] sm:$0xff]
    %v5832 = vld [vmem:[#allocation5 + $0x3b0] sm:$0xff]
    %v5833 = vld [vmem:[#allocation5 + $0x3b8] sm:$0xff]
    %v5834 = vld [vmem:[#allocation5 + $0x3c0] sm:$0xff]
    %v5835 = vld [vmem:[#allocation5 + $0x3c8] sm:$0xff]
    %v5836 = vld [vmem:[#allocation5 + $0x3d0] sm:$0xff]
    %v5837 = vld [vmem:[#allocation5 + $0x3d8] sm:$0xff]
    %v5838 = vld [vmem:[#allocation5 + $0x3e0] sm:$0xff]
    %v5839 = vld [vmem:[#allocation5 + $0x3e8] sm:$0xff]
    %v5840 = vld [vmem:[#allocation5 + $0x3f0] sm:$0xff]
    %v5841 = vld [vmem:[#allocation5 + $0x3f8] sm:$0xff]
    %v5842 = vmul.f32 %v4822, 0.5
    %v5843 = vmul.f32 %v4826, 0.5
    %v5844 = vmul.f32 %v4832, 0.5
    %v5845 = vmul.f32 %v4836, 0.5
    %v5846 = vmul.f32 %v4842, 0.5
    %v5847 = vmul.f32 %v4846, 0.5
    %v5848 = vmul.f32 %v4852, 0.5
    %v5849 = vmul.f32 %v4856, 0.5
    %v5850 = vmul.f32 %v4862, 0.5
    %v5851 = vmul.f32 %v4866, 0.5
    %v5852 = vmul.f32 %v4872, 0.5
    %v5853 = vmul.f32 %v4876, 0.5
    %v5854 = vmul.f32 %v4882, 0.5
    %v5855 = vmul.f32 %v4886, 0.5
    %v5856 = vmul.f32 %v4892, 0.5
    %v5857 = vmul.f32 %v4896, 0.5
    %v5858 = vmul.f32 %v4902, 0.5
    %v5859 = vmul.f32 %v4906, 0.5
    %v5860 = vmul.f32 %v4912, 0.5
    %v5861 = vmul.f32 %v4916, 0.5
    %v5862 = vmul.f32 %v4922, 0.5
    %v5863 = vmul.f32 %v4926, 0.5
    %v5864 = vmul.f32 %v4932, 0.5
    %v5865 = vmul.f32 %v4936, 0.5
    %v5866 = vmul.f32 %v4942, 0.5
    %v5867 = vmul.f32 %v4946, 0.5
    %v5868 = vmul.f32 %v4952, 0.5
    %v5869 = vmul.f32 %v4956, 0.5
    %v5870 = vmul.f32 %v4962, 0.5
    %v5871 = vmul.f32 %v4966, 0.5
    %v5872 = vmul.f32 %v4972, 0.5
    %v5873 = vmul.f32 %v4976, 0.5
    %v5874 = vmul.f32 %v4982, 0.5
    %v5875 = vmul.f32 %v4986, 0.5
    %v5876 = vmul.f32 %v4992, 0.5
    %v5877 = vmul.f32 %v4996, 0.5
    %v5878 = vmul.f32 %v5002, 0.5
    %v5879 = vmul.f32 %v5006, 0.5
    %v5880 = vmul.f32 %v5012, 0.5
    %v5881 = vmul.f32 %v5016, 0.5
    %v5882 = vmul.f32 %v5022, 0.5
    %v5883 = vmul.f32 %v5026, 0.5
    %v5884 = vmul.f32 %v5032, 0.5
    %v5885 = vmul.f32 %v5036, 0.5
    %v5886 = vmul.f32 %v5042, 0.5
    %v5887 = vmul.f32 %v5046, 0.5
    %v5888 = vmul.f32 %v5052, 0.5
    %v5889 = vmul.f32 %v5056, 0.5
    %v5890 = vmul.f32 %v5062, 0.5
    %v5891 = vmul.f32 %v5066, 0.5
    %v5892 = vmul.f32 %v5072, 0.5
    %v5893 = vmul.f32 %v5076, 0.5
    %v5894 = vmul.f32 %v5082, 0.5
    %v5895 = vmul.f32 %v5086, 0.5
    %v5896 = vmul.f32 %v5092, 0.5
    %v5897 = vmul.f32 %v5096, 0.5
    %v5898 = vmul.f32 %v5102, 0.5
    %v5899 = vmul.f32 %v5106, 0.5
    %v5900 = vmul.f32 %v5112, 0.5
    %v5901 = vmul.f32 %v5116, 0.5
    %v5902 = vmul.f32 %v5122, 0.5
    %v5903 = vmul.f32 %v5126, 0.5
    %v5904 = vmul.f32 %v5132, 0.5
    %v5905 = vmul.f32 %v5136, 0.5
    %v5906 = vmul.f32 %v5142, 0.5
    %v5907 = vmul.f32 %v5146, 0.5
    %v5908 = vmul.f32 %v5152, 0.5
    %v5909 = vmul.f32 %v5156, 0.5
    %v5910 = vmul.f32 %v5162, 0.5
    %v5911 = vmul.f32 %v5166, 0.5
    %v5912 = vmul.f32 %v5172, 0.5
    %v5913 = vmul.f32 %v5176, 0.5
    %v5914 = vmul.f32 %v5182, 0.5
    %v5915 = vmul.f32 %v5186, 0.5
    %v5916 = vmul.f32 %v5192, 0.5
    %v5917 = vmul.f32 %v5196, 0.5
    %v5918 = vmul.f32 %v5202, 0.5
    %v5919 = vmul.f32 %v5206, 0.5
    %v5920 = vmul.f32 %v5212, 0.5
    %v5921 = vmul.f32 %v5216, 0.5
    %v5922 = vmul.f32 %v5222, 0.5
    %v5923 = vmul.f32 %v5226, 0.5
    %v5924 = vmul.f32 %v5232, 0.5
    %v5925 = vmul.f32 %v5236, 0.5
    %v5926 = vmul.f32 %v5242, 0.5
    %v5927 = vmul.f32 %v5246, 0.5
    %v5928 = vmul.f32 %v5252, 0.5
    %v5929 = vmul.f32 %v5256, 0.5
    %v5930 = vmul.f32 %v5262, 0.5
    %v5931 = vmul.f32 %v5266, 0.5
    %v5932 = vmul.f32 %v5272, 0.5
    %v5933 = vmul.f32 %v5276, 0.5
    %v5934 = vmul.f32 %v5282, 0.5
    %v5935 = vmul.f32 %v5286, 0.5
    %v5936 = vmul.f32 %v5292, 0.5
    %v5937 = vmul.f32 %v5296, 0.5
    %v5938 = vmul.f32 %v5302, 0.5
    %v5939 = vmul.f32 %v5306, 0.5
    %v5940 = vmul.f32 %v5312, 0.5
    %v5941 = vmul.f32 %v5316, 0.5
    %v5942 = vmul.f32 %v5322, 0.5
    %v5943 = vmul.f32 %v5326, 0.5
    %v5944 = vmul.f32 %v5332, 0.5
    %v5945 = vmul.f32 %v5336, 0.5
    %v5946 = vmul.f32 %v5342, 0.5
    %v5947 = vmul.f32 %v5346, 0.5
    %v5948 = vmul.f32 %v5352, 0.5
    %v5949 = vmul.f32 %v5356, 0.5
    %v5950 = vmul.f32 %v5362, 0.5
    %v5951 = vmul.f32 %v5366, 0.5
    %v5952 = vmul.f32 %v5372, 0.5
    %v5953 = vmul.f32 %v5376, 0.5
    %v5954 = vmul.f32 %v5382, 0.5
    %v5955 = vmul.f32 %v5386, 0.5
    %v5956 = vmul.f32 %v5392, 0.5
    %v5957 = vmul.f32 %v5396, 0.5
    %v5958 = vmul.f32 %v5402, 0.5
    %v5959 = vmul.f32 %v5406, 0.5
    %v5960 = vmul.f32 %v5412, 0.5
    %v5961 = vmul.f32 %v5416, 0.5
    %v5962 = vmul.f32 %v5422, 0.5
    %v5963 = vmul.f32 %v5426, 0.5
    %v5964 = vmul.f32 %v5432, 0.5
    %v5965 = vmul.f32 %v5436, 0.5
    %v5966 = vmul.f32 %v5442, 0.5
    %v5967 = vmul.f32 %v5446, 0.5
    %v5968 = vmul.f32 %v5452, 0.5
    %v5969 = vmul.f32 %v5456, 0.5
    %v5970 = vmul.f32 %v5842, 1.442695
    %v5971 = vpow.pop %v5970
    %v5972 = vmul.f32 %v5843, 1.442695
    %v5973 = vpow.pop %v5972
    %v5974 = vmul.f32 %v5844, 1.442695
    %v5975 = vpow.pop %v5974
    %v5976 = vmul.f32 %v5845, 1.442695
    %v5977 = vpow.pop %v5976
    %v5978 = vmul.f32 %v5846, 1.442695
    %v5979 = vpow.pop %v5978
    %v5980 = vmul.f32 %v5847, 1.442695
    %v5981 = vpow.pop %v5980
    %v5982 = vmul.f32 %v5848, 1.442695
    %v5983 = vpow.pop %v5982
    %v5984 = vmul.f32 %v5849, 1.442695
    %v5985 = vpow.pop %v5984
    %v5986 = vmul.f32 %v5850, 1.442695
    %v5987 = vpow.pop %v5986
    %v5988 = vmul.f32 %v5851, 1.442695
    %v5989 = vpow.pop %v5988
    %v5990 = vmul.f32 %v5852, 1.442695
    %v5991 = vpow.pop %v5990
    %v5992 = vmul.f32 %v5853, 1.442695
    %v5993 = vpow.pop %v5992
    %v5994 = vmul.f32 %v5854, 1.442695
    %v5995 = vpow.pop %v5994
    %v5996 = vmul.f32 %v5855, 1.442695
    %v5997 = vpow.pop %v5996
    %v5998 = vmul.f32 %v5856, 1.442695
    %v5999 = vpow.pop %v5998
    %v6000 = vmul.f32 %v5857, 1.442695
    %v6001 = vpow.pop %v6000
    %v6002 = vmul.f32 %v5858, 1.442695
    %v6003 = vpow.pop %v6002
    %v6004 = vmul.f32 %v5859, 1.442695
    %v6005 = vpow.pop %v6004
    %v6006 = vmul.f32 %v5860, 1.442695
    %v6007 = vpow.pop %v6006
    %v6008 = vmul.f32 %v5861, 1.442695
    %v6009 = vpow.pop %v6008
    %v6010 = vmul.f32 %v5862, 1.442695
    %v6011 = vpow.pop %v6010
    %v6012 = vmul.f32 %v5863, 1.442695
    %v6013 = vpow.pop %v6012
    %v6014 = vmul.f32 %v5864, 1.442695
    %v6015 = vpow.pop %v6014
    %v6016 = vmul.f32 %v5865, 1.442695
    %v6017 = vpow.pop %v6016
    %v6018 = vmul.f32 %v5866, 1.442695
    %v6019 = vpow.pop %v6018
    %v6020 = vmul.f32 %v5867, 1.442695
    %v6021 = vpow.pop %v6020
    %v6022 = vmul.f32 %v5868, 1.442695
    %v6023 = vpow.pop %v6022
    %v6024 = vmul.f32 %v5869, 1.442695
    %v6025 = vpow.pop %v6024
    %v6026 = vmul.f32 %v5870, 1.442695
    %v6027 = vpow.pop %v6026
    %v6028 = vmul.f32 %v5871, 1.442695
    %v6029 = vpow.pop %v6028
    %v6030 = vmul.f32 %v5872, 1.442695
    %v6031 = vpow.pop %v6030
    %v6032 = vmul.f32 %v5873, 1.442695
    %v6033 = vpow.pop %v6032
    %v6034 = vmul.f32 %v5874, 1.442695
    %v6035 = vpow.pop %v6034
    %v6036 = vmul.f32 %v5875, 1.442695
    %v6037 = vpow.pop %v6036
    %v6038 = vmul.f32 %v5876, 1.442695
    %v6039 = vpow.pop %v6038
    %v6040 = vmul.f32 %v5877, 1.442695
    %v6041 = vpow.pop %v6040
    %v6042 = vmul.f32 %v5878, 1.442695
    %v6043 = vpow.pop %v6042
    %v6044 = vmul.f32 %v5879, 1.442695
    %v6045 = vpow.pop %v6044
    %v6046 = vmul.f32 %v5880, 1.442695
    %v6047 = vpow.pop %v6046
    %v6048 = vmul.f32 %v5881, 1.442695
    %v6049 = vpow.pop %v6048
    %v6050 = vmul.f32 %v5882, 1.442695
    %v6051 = vpow.pop %v6050
    %v6052 = vmul.f32 %v5883, 1.442695
    %v6053 = vpow.pop %v6052
    %v6054 = vmul.f32 %v5884, 1.442695
    %v6055 = vpow.pop %v6054
    %v6056 = vmul.f32 %v5885, 1.442695
    %v6057 = vpow.pop %v6056
    %v6058 = vmul.f32 %v5886, 1.442695
    %v6059 = vpow.pop %v6058
    %v6060 = vmul.f32 %v5887, 1.442695
    %v6061 = vpow.pop %v6060
    %v6062 = vmul.f32 %v5888, 1.442695
    %v6063 = vpow.pop %v6062
    %v6064 = vmul.f32 %v5889, 1.442695
    %v6065 = vpow.pop %v6064
    %v6066 = vmul.f32 %v5890, 1.442695
    %v6067 = vpow.pop %v6066
    %v6068 = vmul.f32 %v5891, 1.442695
    %v6069 = vpow.pop %v6068
    %v6070 = vmul.f32 %v5892, 1.442695
    %v6071 = vpow.pop %v6070
    %v6072 = vmul.f32 %v5893, 1.442695
    %v6073 = vpow.pop %v6072
    %v6074 = vmul.f32 %v5894, 1.442695
    %v6075 = vpow.pop %v6074
    %v6076 = vmul.f32 %v5895, 1.442695
    %v6077 = vpow.pop %v6076
    %v6078 = vmul.f32 %v5896, 1.442695
    %v6079 = vpow.pop %v6078
    %v6080 = vmul.f32 %v5897, 1.442695
    %v6081 = vpow.pop %v6080
    %v6082 = vmul.f32 %v5898, 1.442695
    %v6083 = vpow.pop %v6082
    %v6084 = vmul.f32 %v5899, 1.442695
    %v6085 = vpow.pop %v6084
    %v6086 = vmul.f32 %v5900, 1.442695
    %v6087 = vpow.pop %v6086
    %v6088 = vmul.f32 %v5901, 1.442695
    %v6089 = vpow.pop %v6088
    %v6090 = vmul.f32 %v5902, 1.442695
    %v6091 = vpow.pop %v6090
    %v6092 = vmul.f32 %v5903, 1.442695
    %v6093 = vpow.pop %v6092
    %v6094 = vmul.f32 %v5904, 1.442695
    %v6095 = vpow.pop %v6094
    %v6096 = vmul.f32 %v5905, 1.442695
    %v6097 = vpow.pop %v6096
    %v6098 = vmul.f32 %v5906, 1.442695
    %v6099 = vpow.pop %v6098
    %v6100 = vmul.f32 %v5907, 1.442695
    %v6101 = vpow.pop %v6100
    %v6102 = vmul.f32 %v5908, 1.442695
    %v6103 = vpow.pop %v6102
    %v6104 = vmul.f32 %v5909, 1.442695
    %v6105 = vpow.pop %v6104
    %v6106 = vmul.f32 %v5910, 1.442695
    %v6107 = vpow.pop %v6106
    %v6108 = vmul.f32 %v5911, 1.442695
    %v6109 = vpow.pop %v6108
    %v6110 = vmul.f32 %v5912, 1.442695
    %v6111 = vpow.pop %v6110
    %v6112 = vmul.f32 %v5913, 1.442695
    %v6113 = vpow.pop %v6112
    %v6114 = vmul.f32 %v5914, 1.442695
    %v6115 = vpow.pop %v6114
    %v6116 = vmul.f32 %v5915, 1.442695
    %v6117 = vpow.pop %v6116
    %v6118 = vmul.f32 %v5916, 1.442695
    %v6119 = vpow.pop %v6118
    %v6120 = vmul.f32 %v5917, 1.442695
    %v6121 = vpow.pop %v6120
    %v6122 = vmul.f32 %v5918, 1.442695
    %v6123 = vpow.pop %v6122
    %v6124 = vmul.f32 %v5919, 1.442695
    %v6125 = vpow.pop %v6124
    %v6126 = vmul.f32 %v5920, 1.442695
    %v6127 = vpow.pop %v6126
    %v6128 = vmul.f32 %v5921, 1.442695
    %v6129 = vpow.pop %v6128
    %v6130 = vmul.f32 %v5922, 1.442695
    %v6131 = vpow.pop %v6130
    %v6132 = vmul.f32 %v5923, 1.442695
    %v6133 = vpow.pop %v6132
    %v6134 = vmul.f32 %v5924, 1.442695
    %v6135 = vpow.pop %v6134
    %v6136 = vmul.f32 %v5925, 1.442695
    %v6137 = vpow.pop %v6136
    %v6138 = vmul.f32 %v5926, 1.442695
    %v6139 = vpow.pop %v6138
    %v6140 = vmul.f32 %v5927, 1.442695
    %v6141 = vpow.pop %v6140
    %v6142 = vmul.f32 %v5928, 1.442695
    %v6143 = vpow.pop %v6142
    %v6144 = vmul.f32 %v5929, 1.442695
    %v6145 = vpow.pop %v6144
    %v6146 = vmul.f32 %v5930, 1.442695
    %v6147 = vpow.pop %v6146
    %v6148 = vmul.f32 %v5931, 1.442695
    %v6149 = vpow.pop %v6148
    %v6150 = vmul.f32 %v5932, 1.442695
    %v6151 = vpow.pop %v6150
    %v6152 = vmul.f32 %v5933, 1.442695
    %v6153 = vpow.pop %v6152
    %v6154 = vmul.f32 %v5934, 1.442695
    %v6155 = vpow.pop %v6154
    %v6156 = vmul.f32 %v5935, 1.442695
    %v6157 = vpow.pop %v6156
    %v6158 = vmul.f32 %v5936, 1.442695
    %v6159 = vpow.pop %v6158
    %v6160 = vmul.f32 %v5937, 1.442695
    %v6161 = vpow.pop %v6160
    %v6162 = vmul.f32 %v5938, 1.442695
    %v6163 = vpow.pop %v6162
    %v6164 = vmul.f32 %v5939, 1.442695
    %v6165 = vpow.pop %v6164
    %v6166 = vmul.f32 %v5940, 1.442695
    %v6167 = vpow.pop %v6166
    %v6168 = vmul.f32 %v5941, 1.442695
    %v6169 = vpow.pop %v6168
    %v6170 = vmul.f32 %v5942, 1.442695
    %v6171 = vpow.pop %v6170
    %v6172 = vmul.f32 %v5943, 1.442695
    %v6173 = vpow.pop %v6172
    %v6174 = vmul.f32 %v5944, 1.442695
    %v6175 = vpow.pop %v6174
    %v6176 = vmul.f32 %v5945, 1.442695
    %v6177 = vpow.pop %v6176
    %v6178 = vmul.f32 %v5946, 1.442695
    %v6179 = vpow.pop %v6178
    %v6180 = vmul.f32 %v5947, 1.442695
    %v6181 = vpow.pop %v6180
    %v6182 = vmul.f32 %v5948, 1.442695
    %v6183 = vpow.pop %v6182
    %v6184 = vmul.f32 %v5949, 1.442695
    %v6185 = vpow.pop %v6184
    %v6186 = vmul.f32 %v5950, 1.442695
    %v6187 = vpow.pop %v6186
    %v6188 = vmul.f32 %v5951, 1.442695
    %v6189 = vpow.pop %v6188
    %v6190 = vmul.f32 %v5952, 1.442695
    %v6191 = vpow.pop %v6190
    %v6192 = vmul.f32 %v5953, 1.442695
    %v6193 = vpow.pop %v6192
    %v6194 = vmul.f32 %v5954, 1.442695
    %v6195 = vpow.pop %v6194
    %v6196 = vmul.f32 %v5955, 1.442695
    %v6197 = vpow.pop %v6196
    %v6198 = vmul.f32 %v5956, 1.442695
    %v6199 = vpow.pop %v6198
    %v6200 = vmul.f32 %v5957, 1.442695
    %v6201 = vpow.pop %v6200
    %v6202 = vmul.f32 %v5958, 1.442695
    %v6203 = vpow.pop %v6202
    %v6204 = vmul.f32 %v5959, 1.442695
    %v6205 = vpow.pop %v6204
    %v6206 = vmul.f32 %v5960, 1.442695
    %v6207 = vpow.pop %v6206
    %v6208 = vmul.f32 %v5961, 1.442695
    %v6209 = vpow.pop %v6208
    %v6210 = vmul.f32 %v5962, 1.442695
    %v6211 = vpow.pop %v6210
    %v6212 = vmul.f32 %v5963, 1.442695
    %v6213 = vpow.pop %v6212
    %v6214 = vmul.f32 %v5964, 1.442695
    %v6215 = vpow.pop %v6214
    %v6216 = vmul.f32 %v5965, 1.442695
    %v6217 = vpow.pop %v6216
    %v6218 = vmul.f32 %v5966, 1.442695
    %v6219 = vpow.pop %v6218
    %v6220 = vmul.f32 %v5967, 1.442695
    %v6221 = vpow.pop %v6220
    %v6222 = vmul.f32 %v5968, 1.442695
    %v6223 = vpow.pop %v6222
    %v6224 = vmul.f32 %v5969, 1.442695
    %v6225 = vpow.pop %v6224
    %v6226 = vmul.f32 %v5714, %v5971
    %v6227 = vmul.f32 %v5715, %v5973
    %v6228 = vmul.f32 %v5716, %v5975
    %v6229 = vmul.f32 %v5717, %v5977
    %v6230 = vmul.f32 %v5718, %v5979
    %v6231 = vmul.f32 %v5719, %v5981
    %v6232 = vmul.f32 %v5720, %v5983
    %v6233 = vmul.f32 %v5721, %v5985
    %v6234 = vmul.f32 %v5722, %v5987
    %v6235 = vmul.f32 %v5723, %v5989
    %v6236 = vmul.f32 %v5724, %v5991
    %v6237 = vmul.f32 %v5725, %v5993
    %v6238 = vmul.f32 %v5726, %v5995
    %v6239 = vmul.f32 %v5727, %v5997
    %v6240 = vmul.f32 %v5728, %v5999
    %v6241 = vmul.f32 %v5729, %v6001
    %v6242 = vmul.f32 %v5730, %v6003
    %v6243 = vmul.f32 %v5731, %v6005
    %v6244 = vmul.f32 %v5732, %v6007
    %v6245 = vmul.f32 %v5733, %v6009
    %v6246 = vmul.f32 %v5734, %v6011
    %v6247 = vmul.f32 %v5735, %v6013
    %v6248 = vmul.f32 %v5736, %v6015
    %v6249 = vmul.f32 %v5737, %v6017
    %v6250 = vmul.f32 %v5738, %v6019
    %v6251 = vmul.f32 %v5739, %v6021
    %v6252 = vmul.f32 %v5740, %v6023
    %v6253 = vmul.f32 %v5741, %v6025
    %v6254 = vmul.f32 %v5742, %v6027
    %v6255 = vmul.f32 %v5743, %v6029
    %v6256 = vmul.f32 %v5744, %v6031
    %v6257 = vmul.f32 %v5745, %v6033
    %v6258 = vmul.f32 %v5746, %v6035
    %v6259 = vmul.f32 %v5747, %v6037
    %v6260 = vmul.f32 %v5748, %v6039
    %v6261 = vmul.f32 %v5749, %v6041
    %v6262 = vmul.f32 %v5750, %v6043
    %v6263 = vmul.f32 %v5751, %v6045
    %v6264 = vmul.f32 %v5752, %v6047
    %v6265 = vmul.f32 %v5753, %v6049
    %v6266 = vmul.f32 %v5754, %v6051
    %v6267 = vmul.f32 %v5755, %v6053
    %v6268 = vmul.f32 %v5756, %v6055
    %v6269 = vmul.f32 %v5757, %v6057
    %v6270 = vmul.f32 %v5758, %v6059
    %v6271 = vmul.f32 %v5759, %v6061
    %v6272 = vmul.f32 %v5760, %v6063
    %v6273 = vmul.f32 %v5761, %v6065
    %v6274 = vmul.f32 %v5762, %v6067
    %v6275 = vmul.f32 %v5763, %v6069
    %v6276 = vmul.f32 %v5764, %v6071
    %v6277 = vmul.f32 %v5765, %v6073
    %v6278 = vmul.f32 %v5766, %v6075
    %v6279 = vmul.f32 %v5767, %v6077
    %v6280 = vmul.f32 %v5768, %v6079
    %v6281 = vmul.f32 %v5769, %v6081
    %v6282 = vmul.f32 %v5770, %v6083
    %v6283 = vmul.f32 %v5771, %v6085
    %v6284 = vmul.f32 %v5772, %v6087
    %v6285 = vmul.f32 %v5773, %v6089
    %v6286 = vmul.f32 %v5774, %v6091
    %v6287 = vmul.f32 %v5775, %v6093
    %v6288 = vmul.f32 %v5776, %v6095
    %v6289 = vmul.f32 %v5777, %v6097
    %v6290 = vmul.f32 %v5778, %v6099
    %v6291 = vmul.f32 %v5779, %v6101
    %v6292 = vmul.f32 %v5780, %v6103
    %v6293 = vmul.f32 %v5781, %v6105
    %v6294 = vmul.f32 %v5782, %v6107
    %v6295 = vmul.f32 %v5783, %v6109
    %v6296 = vmul.f32 %v5784, %v6111
    %v6297 = vmul.f32 %v5785, %v6113
    %v6298 = vmul.f32 %v5786, %v6115
    %v6299 = vmul.f32 %v5787, %v6117
    %v6300 = vmul.f32 %v5788, %v6119
    %v6301 = vmul.f32 %v5789, %v6121
    %v6302 = vmul.f32 %v5790, %v6123
    %v6303 = vmul.f32 %v5791, %v6125
    %v6304 = vmul.f32 %v5792, %v6127
    %v6305 = vmul.f32 %v5793, %v6129
    %v6306 = vmul.f32 %v5794, %v6131
    %v6307 = vmul.f32 %v5795, %v6133
    %v6308 = vmul.f32 %v5796, %v6135
    %v6309 = vmul.f32 %v5797, %v6137
    %v6310 = vmul.f32 %v5798, %v6139
    %v6311 = vmul.f32 %v5799, %v6141
    %v6312 = vmul.f32 %v5800, %v6143
    %v6313 = vmul.f32 %v5801, %v6145
    %v6314 = vmul.f32 %v5802, %v6147
    %v6315 = vmul.f32 %v5803, %v6149
    %v6316 = vmul.f32 %v5804, %v6151
    %v6317 = vmul.f32 %v5805, %v6153
    %v6318 = vmul.f32 %v5806, %v6155
    %v6319 = vmul.f32 %v5807, %v6157
    %v6320 = vmul.f32 %v5808, %v6159
    %v6321 = vmul.f32 %v5809, %v6161
    %v6322 = vmul.f32 %v5810, %v6163
    %v6323 = vmul.f32 %v5811, %v6165
    %v6324 = vmul.f32 %v5812, %v6167
    %v6325 = vmul.f32 %v5813, %v6169
    %v6326 = vmul.f32 %v5814, %v6171
    %v6327 = vmul.f32 %v5815, %v6173
    %v6328 = vmul.f32 %v5816, %v6175
    %v6329 = vmul.f32 %v5817, %v6177
    %v6330 = vmul.f32 %v5818, %v6179
    %v6331 = vmul.f32 %v5819, %v6181
    %v6332 = vmul.f32 %v5820, %v6183
    %v6333 = vmul.f32 %v5821, %v6185
    %v6334 = vmul.f32 %v5822, %v6187
    %v6335 = vmul.f32 %v5823, %v6189
    %v6336 = vmul.f32 %v5824, %v6191
    %v6337 = vmul.f32 %v5825, %v6193
    %v6338 = vmul.f32 %v5826, %v6195
    %v6339 = vmul.f32 %v5827, %v6197
    %v6340 = vmul.f32 %v5828, %v6199
    %v6341 = vmul.f32 %v5829, %v6201
    %v6342 = vmul.f32 %v5830, %v6203
    %v6343 = vmul.f32 %v5831, %v6205
    %v6344 = vmul.f32 %v5832, %v6207
    %v6345 = vmul.f32 %v5833, %v6209
    %v6346 = vmul.f32 %v5834, %v6211
    %v6347 = vmul.f32 %v5835, %v6213
    %v6348 = vmul.f32 %v5836, %v6215
    %v6349 = vmul.f32 %v5837, %v6217
    %v6350 = vmul.f32 %v5838, %v6219
    %v6351 = vmul.f32 %v5839, %v6221
    %v6352 = vmul.f32 %v5840, %v6223
    %v6353 = vmul.f32 %v5841, %v6225
    %v6354 = vadd.f32 %v6226, %v4820
    %v6355 = vadd.f32 %v6227, %v4824
    %v6356 = vadd.f32 %v6228, %v4830
    %v6357 = vadd.f32 %v6229, %v4834
    %v6358 = vadd.f32 %v6230, %v4840
    %v6359 = vadd.f32 %v6231, %v4844
    %v6360 = vadd.f32 %v6232, %v4850
    %v6361 = vadd.f32 %v6233, %v4854
    %v6362 = vadd.f32 %v6234, %v4860
    %v6363 = vadd.f32 %v6235, %v4864
    %v6364 = vadd.f32 %v6236, %v4870
    %v6365 = vadd.f32 %v6237, %v4874
    %v6366 = vadd.f32 %v6238, %v4880
    %v6367 = vadd.f32 %v6239, %v4884
    %v6368 = vadd.f32 %v6240, %v4890
    %v6369 = vadd.f32 %v6241, %v4894
    %v6370 = vadd.f32 %v6242, %v4900
    %v6371 = vadd.f32 %v6243, %v4904
    %v6372 = vadd.f32 %v6244, %v4910
    %v6373 = vadd.f32 %v6245, %v4914
    %v6374 = vadd.f32 %v6246, %v4920
    %v6375 = vadd.f32 %v6247, %v4924
    %v6376 = vadd.f32 %v6248, %v4930
    %v6377 = vadd.f32 %v6249, %v4934
    %v6378 = vadd.f32 %v6250, %v4940
    %v6379 = vadd.f32 %v6251, %v4944
    %v6380 = vadd.f32 %v6252, %v4950
    %v6381 = vadd.f32 %v6253, %v4954
    %v6382 = vadd.f32 %v6254, %v4960
    %v6383 = vadd.f32 %v6255, %v4964
    %v6384 = vadd.f32 %v6256, %v4970
    %v6385 = vadd.f32 %v6257, %v4974
    %v6386 = vadd.f32 %v6258, %v4980
    %v6387 = vadd.f32 %v6259, %v4984
    %v6388 = vadd.f32 %v6260, %v4990
    %v6389 = vadd.f32 %v6261, %v4994
    %v6390 = vadd.f32 %v6262, %v5000
    %v6391 = vadd.f32 %v6263, %v5004
    %v6392 = vadd.f32 %v6264, %v5010
    %v6393 = vadd.f32 %v6265, %v5014
    %v6394 = vadd.f32 %v6266, %v5020
    %v6395 = vadd.f32 %v6267, %v5024
    %v6396 = vadd.f32 %v6268, %v5030
    %v6397 = vadd.f32 %v6269, %v5034
    %v6398 = vadd.f32 %v6270, %v5040
    %v6399 = vadd.f32 %v6271, %v5044
    %v6400 = vadd.f32 %v6272, %v5050
    %v6401 = vadd.f32 %v6273, %v5054
    %v6402 = vadd.f32 %v6274, %v5060
    %v6403 = vadd.f32 %v6275, %v5064
    %v6404 = vadd.f32 %v6276, %v5070
    %v6405 = vadd.f32 %v6277, %v5074
    %v6406 = vadd.f32 %v6278, %v5080
    %v6407 = vadd.f32 %v6279, %v5084
    %v6408 = vadd.f32 %v6280, %v5090
    %v6409 = vadd.f32 %v6281, %v5094
    %v6410 = vadd.f32 %v6282, %v5100
    %v6411 = vadd.f32 %v6283, %v5104
    %v6412 = vadd.f32 %v6284, %v5110
    %v6413 = vadd.f32 %v6285, %v5114
    %v6414 = vadd.f32 %v6286, %v5120
    %v6415 = vadd.f32 %v6287, %v5124
    %v6416 = vadd.f32 %v6288, %v5130
    %v6417 = vadd.f32 %v6289, %v5134
    %v6418 = vadd.f32 %v6290, %v5140
    %v6419 = vadd.f32 %v6291, %v5144
    %v6420 = vadd.f32 %v6292, %v5150
    %v6421 = vadd.f32 %v6293, %v5154
    %v6422 = vadd.f32 %v6294, %v5160
    %v6423 = vadd.f32 %v6295, %v5164
    %v6424 = vadd.f32 %v6296, %v5170
    %v6425 = vadd.f32 %v6297, %v5174
    %v6426 = vadd.f32 %v6298, %v5180
    %v6427 = vadd.f32 %v6299, %v5184
    %v6428 = vadd.f32 %v6300, %v5190
    %v6429 = vadd.f32 %v6301, %v5194
    %v6430 = vadd.f32 %v6302, %v5200
    %v6431 = vadd.f32 %v6303, %v5204
    %v6432 = vadd.f32 %v6304, %v5210
    %v6433 = vadd.f32 %v6305, %v5214
    %v6434 = vadd.f32 %v6306, %v5220
    %v6435 = vadd.f32 %v6307, %v5224
    %v6436 = vadd.f32 %v6308, %v5230
    %v6437 = vadd.f32 %v6309, %v5234
    %v6438 = vadd.f32 %v6310, %v5240
    %v6439 = vadd.f32 %v6311, %v5244
    %v6440 = vadd.f32 %v6312, %v5250
    %v6441 = vadd.f32 %v6313, %v5254
    %v6442 = vadd.f32 %v6314, %v5260
    %v6443 = vadd.f32 %v6315, %v5264
    %v6444 = vadd.f32 %v6316, %v5270
    %v6445 = vadd.f32 %v6317, %v5274
    %v6446 = vadd.f32 %v6318, %v5280
    %v6447 = vadd.f32 %v6319, %v5284
    %v6448 = vadd.f32 %v6320, %v5290
    %v6449 = vadd.f32 %v6321, %v5294
    %v6450 = vadd.f32 %v6322, %v5300
    %v6451 = vadd.f32 %v6323, %v5304
    %v6452 = vadd.f32 %v6324, %v5310
    %v6453 = vadd.f32 %v6325, %v5314
    %v6454 = vadd.f32 %v6326, %v5320
    %v6455 = vadd.f32 %v6327, %v5324
    %v6456 = vadd.f32 %v6328, %v5330
    %v6457 = vadd.f32 %v6329, %v5334
    %v6458 = vadd.f32 %v6330, %v5340
    %v6459 = vadd.f32 %v6331, %v5344
    %v6460 = vadd.f32 %v6332, %v5350
    %v6461 = vadd.f32 %v6333, %v5354
    %v6462 = vadd.f32 %v6334, %v5360
    %v6463 = vadd.f32 %v6335, %v5364
    %v6464 = vadd.f32 %v6336, %v5370
    %v6465 = vadd.f32 %v6337, %v5374
    %v6466 = vadd.f32 %v6338, %v5380
    %v6467 = vadd.f32 %v6339, %v5384
    %v6468 = vadd.f32 %v6340, %v5390
    %v6469 = vadd.f32 %v6341, %v5394
    %v6470 = vadd.f32 %v6342, %v5400
    %v6471 = vadd.f32 %v6343, %v5404
    %v6472 = vadd.f32 %v6344, %v5410
    %v6473 = vadd.f32 %v6345, %v5414
    %v6474 = vadd.f32 %v6346, %v5420
    %v6475 = vadd.f32 %v6347, %v5424
    %v6476 = vadd.f32 %v6348, %v5430
    %v6477 = vadd.f32 %v6349, %v5434
    %v6478 = vadd.f32 %v6350, %v5440
    %v6479 = vadd.f32 %v6351, %v5444
    %v6480 = vadd.f32 %v6352, %v5450
    %v6481 = vadd.f32 %v6353, %v5454
    %s6482 = scalar_lea.vmem [#allocation7], 192
    %v6483 = vld [vmem:[%s6482] sm:$0xf]
    %v6484 = vld [vmem:[%s6482 + $0x4] sm:$0xf]
    %v6485 = vld [vmem:[%s6482 + $0x8] sm:$0xf]
    %v6486 = vld [vmem:[%s6482 + $0xc] sm:$0xf]
    %v6487 = vld [vmem:[%s6482 + $0x10] sm:$0xf]
    %v6488 = vld [vmem:[%s6482 + $0x14] sm:$0xf]
    %v6489 = vld [vmem:[%s6482 + $0x18] sm:$0xf]
    %v6490 = vld [vmem:[%s6482 + $0x1c] sm:$0xf]
    %v6491 = vld [vmem:[%s6482 + $0x20] sm:$0xf]
    %v6492 = vld [vmem:[%s6482 + $0x24] sm:$0xf]
    %v6493 = vld [vmem:[%s6482 + $0x28] sm:$0xf]
    %v6494 = vld [vmem:[%s6482 + $0x2c] sm:$0xf]
    %v6495 = vld [vmem:[%s6482 + $0x30] sm:$0xf]
    %v6496 = vld [vmem:[%s6482 + $0x34] sm:$0xf]
    %v6497 = vld [vmem:[%s6482 + $0x38] sm:$0xf]
    %v6498 = vld [vmem:[%s6482 + $0x3c] sm:$0xf]
    %v6499 = vld [vmem:[#allocation10 + $0x7] ss:$0 sm:$0xff]
    %v6500 = vld [vmem:[#allocation10 + $0x10] ss:$0 sm:$0xff]
    %v6501 = vpack.c.bf16 %v6355, %v6354
    %v6502 = vpack.c.bf16 %v6357, %v6356
    %v6503 = vpack.c.bf16 %v6359, %v6358
    %v6504 = vpack.c.bf16 %v6361, %v6360
    %v6505 = vpack.c.bf16 %v6363, %v6362
    %v6506 = vpack.c.bf16 %v6365, %v6364
    %v6507 = vpack.c.bf16 %v6367, %v6366
    %v6508 = vpack.c.bf16 %v6369, %v6368
    %v6509 = vpack.c.bf16 %v6371, %v6370
    %v6510 = vpack.c.bf16 %v6373, %v6372
    %v6511 = vpack.c.bf16 %v6375, %v6374
    %v6512 = vpack.c.bf16 %v6377, %v6376
    %v6513 = vpack.c.bf16 %v6379, %v6378
    %v6514 = vpack.c.bf16 %v6381, %v6380
    %v6515 = vpack.c.bf16 %v6383, %v6382
    %v6516 = vpack.c.bf16 %v6385, %v6384
    %v6517 = vpack.c.bf16 %v6387, %v6386
    %v6518 = vpack.c.bf16 %v6389, %v6388
    %v6519 = vpack.c.bf16 %v6391, %v6390
    %v6520 = vpack.c.bf16 %v6393, %v6392
    %v6521 = vpack.c.bf16 %v6395, %v6394
    %v6522 = vpack.c.bf16 %v6397, %v6396
    %v6523 = vpack.c.bf16 %v6399, %v6398
    %v6524 = vpack.c.bf16 %v6401, %v6400
    %v6525 = vpack.c.bf16 %v6403, %v6402
    %v6526 = vpack.c.bf16 %v6405, %v6404
    %v6527 = vpack.c.bf16 %v6407, %v6406
    %v6528 = vpack.c.bf16 %v6409, %v6408
    %v6529 = vpack.c.bf16 %v6411, %v6410
    %v6530 = vpack.c.bf16 %v6413, %v6412
    %v6531 = vpack.c.bf16 %v6415, %v6414
    %v6532 = vpack.c.bf16 %v6417, %v6416
    %v6533 = vpack.c.bf16 %v6419, %v6418
    %v6534 = vpack.c.bf16 %v6421, %v6420
    %v6535 = vpack.c.bf16 %v6423, %v6422
    %v6536 = vpack.c.bf16 %v6425, %v6424
    %v6537 = vpack.c.bf16 %v6427, %v6426
    %v6538 = vpack.c.bf16 %v6429, %v6428
    %v6539 = vpack.c.bf16 %v6431, %v6430
    %v6540 = vpack.c.bf16 %v6433, %v6432
    %v6541 = vpack.c.bf16 %v6435, %v6434
    %v6542 = vpack.c.bf16 %v6437, %v6436
    %v6543 = vpack.c.bf16 %v6439, %v6438
    %v6544 = vpack.c.bf16 %v6441, %v6440
    %v6545 = vpack.c.bf16 %v6443, %v6442
    %v6546 = vpack.c.bf16 %v6445, %v6444
    %v6547 = vpack.c.bf16 %v6447, %v6446
    %v6548 = vpack.c.bf16 %v6449, %v6448
    %v6549 = vpack.c.bf16 %v6451, %v6450
    %v6550 = vpack.c.bf16 %v6453, %v6452
    %v6551 = vpack.c.bf16 %v6455, %v6454
    %v6552 = vpack.c.bf16 %v6457, %v6456
    %v6553 = vpack.c.bf16 %v6459, %v6458
    %v6554 = vpack.c.bf16 %v6461, %v6460
    %v6555 = vpack.c.bf16 %v6463, %v6462
    %v6556 = vpack.c.bf16 %v6465, %v6464
    %v6557 = vpack.c.bf16 %v6467, %v6466
    %v6558 = vpack.c.bf16 %v6469, %v6468
    %v6559 = vpack.c.bf16 %v6471, %v6470
    %v6560 = vpack.c.bf16 %v6473, %v6472
    %v6561 = vpack.c.bf16 %v6475, %v6474
    %v6562 = vpack.c.bf16 %v6477, %v6476
    %v6563 = vpack.c.bf16 %v6479, %v6478
    %v6564 = vpack.c.bf16 %v6481, %v6480
    %v6581 = vunpack.c.l.b16 %v6483
    %v6582 = vunpack.c.l.b16 %v6484
    %v6583 = vunpack.c.l.b16 %v6485
    %v6584 = vunpack.c.l.b16 %v6486
    %v6585 = vunpack.c.l.b16 %v6487
    %v6586 = vunpack.c.l.b16 %v6488
    %v6587 = vunpack.c.l.b16 %v6489
    %v6588 = vunpack.c.l.b16 %v6490
    %v6589 = vunpack.c.l.b16 %v6491
    %v6590 = vunpack.c.l.b16 %v6492
    %v6591 = vunpack.c.l.b16 %v6493
    %v6592 = vunpack.c.l.b16 %v6494
    %v6593 = vunpack.c.l.b16 %v6495
    %v6594 = vunpack.c.l.b16 %v6496
    %v6595 = vunpack.c.l.b16 %v6497
    %v6596 = vunpack.c.l.b16 %v6498
    %v6597 = vpack.c.b16 %v6582, %v6581
    %v6598 = vpack.c.b16 %v6584, %v6583
    %v6599 = vpack.c.b16 %v6586, %v6585
    %v6600 = vpack.c.b16 %v6588, %v6587
    %v6601 = vpack.c.b16 %v6590, %v6589
    %v6602 = vpack.c.b16 %v6592, %v6591
    %v6603 = vpack.c.b16 %v6594, %v6593
    %v6604 = vpack.c.b16 %v6596, %v6595
    %6613 = vmatprep.subr.bf16.mxu0 0
    %6614 = vmatpush1.bf16.msra.mxu0 %v6597
    %6615 = vmatprep.subr.bf16.mxu0 0
    %6616 = vmatpush1.bf16.msra.mxu0 %v6598
    %6617 = vmatprep.subr.bf16.mxu0 0
    %6618 = vmatpush1.bf16.msra.mxu0 %v6599
    %6619 = vmatprep.subr.bf16.mxu0 0
    %6620 = vmatpush1.bf16.msra.mxu0 %v6600
    %6621 = vmatprep.subr.bf16.mxu0 0
    %6622 = vmatpush1.bf16.msra.mxu0 %v6601
    %6623 = vmatprep.subr.bf16.mxu0 0
    %6624 = vmatpush1.bf16.msra.mxu0 %v6602
    %6625 = vmatprep.subr.bf16.mxu0 0
    %6626 = vmatpush1.bf16.msra.mxu0 %v6603
    %6627 = vmatprep.subr.bf16.mxu0 0
    %6628 = vmatpush1.bf16.msra.mxu0 %v6604
    %6629 = vmatprep.subr.bf16.mxu0 0
    %6630 = vmatpush1.bf16.msra.mxu0 0
    %6631 = vmatprep.subr.bf16.mxu0 0
    %6632 = vmatpush1.bf16.msra.mxu0 0
    %6633 = vmatprep.subr.bf16.mxu0 0
    %6634 = vmatpush1.bf16.msra.mxu0 0
    %6635 = vmatprep.subr.bf16.mxu0 0
    %6636 = vmatpush1.bf16.msra.mxu0 0
    %6637 = vmatprep.subr.bf16.mxu0 0
    %6638 = vmatpush1.bf16.msra.mxu0 0
    %6639 = vmatprep.subr.bf16.mxu0 0
    %6640 = vmatpush1.bf16.msra.mxu0 0
    %6641 = vmatprep.subr.bf16.mxu0 0
    %6642 = vmatpush1.bf16.msra.mxu0 0
    %6643 = vmatprep.subr.bf16.mxu0 0
    %6644 = vmatpush1.bf16.msra.mxu0 0
    %6645 = vmatprep.mubr.bf16.mxu0 0
    %6646 = vmatmul.mubr.bf16.gmra.mrb[0].mxu0 %v6501
    %v6647 = vpop.f32.mrb[0].mxu0
    %v6648 = vadd.f32 0.0, %v6647
    %v6649 = vpop.f32.mrb[0].mxu0
    %v6650 = vpop.f32.mrb[0].mxu0
    %v6651 = vadd.f32 0.0, %v6650
    %v6652 = vpop.f32.mrb[0].mxu0
    %6653 = vmatprep.mubr.bf16.mxu0 0
    %6654 = vmatmul.mubr.bf16.gmra.mrb[0].mxu0 %v6502
    %v6655 = vpop.f32.mrb[0].mxu0
    %v6656 = vadd.f32 0.0, %v6655
    %v6657 = vpop.f32.mrb[0].mxu0
    %v6658 = vpop.f32.mrb[0].mxu0
    %v6659 = vadd.f32 0.0, %v6658
    %v6660 = vpop.f32.mrb[0].mxu0
    %6661 = vmatprep.mubr.bf16.mxu0 0
    %6662 = vmatmul.mubr.bf16.gmra.mrb[0].mxu0 %v6503
    %v6663 = vpop.f32.mrb[0].mxu0
    %v6664 = vadd.f32 0.0, %v6663
    %v6665 = vpop.f32.mrb[0].mxu0
    %v6666 = vpop.f32.mrb[0].mxu0
    %v6667 = vadd.f32 0.0, %v6666
    %v6668 = vpop.f32.mrb[0].mxu0
    %6669 = vmatprep.mubr.bf16.mxu0 0
    %6670 = vmatmul.mubr.bf16.gmra.mrb[0].mxu0 %v6504
    %v6671 = vpop.f32.mrb[0].mxu0
    %v6672 = vadd.f32 0.0, %v6671
    %v6673 = vpop.f32.mrb[0].mxu0
    %v6674 = vpop.f32.mrb[0].mxu0
    %v6675 = vadd.f32 0.0, %v6674
    %v6676 = vpop.f32.mrb[0].mxu0
    %6677 = vmatprep.mubr.bf16.mxu0 0
    %6678 = vmatmul.mubr.bf16.gmra.mrb[0].mxu0 %v6505
    %v6679 = vpop.f32.mrb[0].mxu0
    %v6680 = vadd.f32 0.0, %v6679
    %v6681 = vpop.f32.mrb[0].mxu0
    %v6682 = vpop.f32.mrb[0].mxu0
    %v6683 = vadd.f32 0.0, %v6682
    %v6684 = vpop.f32.mrb[0].mxu0
    %6685 = vmatprep.mubr.bf16.mxu0 0
    %6686 = vmatmul.mubr.bf16.gmra.mrb[0].mxu0 %v6506
    %v6687 = vpop.f32.mrb[0].mxu0
    %v6688 = vadd.f32 0.0, %v6687
    %v6689 = vpop.f32.mrb[0].mxu0
    %v6690 = vpop.f32.mrb[0].mxu0
    %v6691 = vadd.f32 0.0, %v6690
    %v6692 = vpop.f32.mrb[0].mxu0
    %6693 = vmatprep.mubr.bf16.mxu0 0
    %6694 = vmatmul.mubr.bf16.gmra.mrb[0].mxu0 %v6507
    %v6695 = vpop.f32.mrb[0].mxu0
    %v6696 = vadd.f32 0.0, %v6695
    %v6697 = vpop.f32.mrb[0].mxu0
    %v6698 = vpop.f32.mrb[0].mxu0
    %v6699 = vadd.f32 0.0, %v6698
    %v6700 = vpop.f32.mrb[0].mxu0
    %6701 = vmatprep.mubr.bf16.mxu0 0
    %6702 = vmatmul.mubr.bf16.gmra.mrb[0].mxu0 %v6508
    %v6703 = vpop.f32.mrb[0].mxu0
    %v6704 = vadd.f32 0.0, %v6703
    %v6705 = vpop.f32.mrb[0].mxu0
    %v6706 = vpop.f32.mrb[0].mxu0
    %v6707 = vadd.f32 0.0, %v6706
    %v6708 = vpop.f32.mrb[0].mxu0
    %6709 = vmatprep.mubr.bf16.mxu0 0
    %6710 = vmatmul.mubr.bf16.gmra.mrb[0].mxu0 %v6509
    %v6711 = vpop.f32.mrb[0].mxu0
    %v6712 = vadd.f32 0.0, %v6711
    %v6713 = vpop.f32.mrb[0].mxu0
    %v6714 = vpop.f32.mrb[0].mxu0
    %v6715 = vadd.f32 0.0, %v6714
    %v6716 = vpop.f32.mrb[0].mxu0
    %6717 = vmatprep.mubr.bf16.mxu0 0
    %6718 = vmatmul.mubr.bf16.gmra.mrb[0].mxu0 %v6510
    %v6719 = vpop.f32.mrb[0].mxu0
    %v6720 = vadd.f32 0.0, %v6719
    %v6721 = vpop.f32.mrb[0].mxu0
    %v6722 = vpop.f32.mrb[0].mxu0
    %v6723 = vadd.f32 0.0, %v6722
    %v6724 = vpop.f32.mrb[0].mxu0
    %6725 = vmatprep.mubr.bf16.mxu0 0
    %6726 = vmatmul.mubr.bf16.gmra.mrb[0].mxu0 %v6511
    %v6727 = vpop.f32.mrb[0].mxu0
    %v6728 = vadd.f32 0.0, %v6727
    %v6729 = vpop.f32.mrb[0].mxu0
    %v6730 = vpop.f32.mrb[0].mxu0
    %v6731 = vadd.f32 0.0, %v6730
    %v6732 = vpop.f32.mrb[0].mxu0
    %6733 = vmatprep.mubr.bf16.mxu0 0
    %6734 = vmatmul.mubr.bf16.gmra.mrb[0].mxu0 %v6512
    %v6735 = vpop.f32.mrb[0].mxu0
    %v6736 = vadd.f32 0.0, %v6735
    %v6737 = vpop.f32.mrb[0].mxu0
    %v6738 = vpop.f32.mrb[0].mxu0
    %v6739 = vadd.f32 0.0, %v6738
    %v6740 = vpop.f32.mrb[0].mxu0
    %6741 = vmatprep.mubr.bf16.mxu0 0
    %6742 = vmatmul.mubr.bf16.gmra.mrb[0].mxu0 %v6513
    %v6743 = vpop.f32.mrb[0].mxu0
    %v6744 = vadd.f32 0.0, %v6743
    %v6745 = vpop.f32.mrb[0].mxu0
    %v6746 = vpop.f32.mrb[0].mxu0
    %v6747 = vadd.f32 0.0, %v6746
    %v6748 = vpop.f32.mrb[0].mxu0
    %6749 = vmatprep.mubr.bf16.mxu0 0
    %6750 = vmatmul.mubr.bf16.gmra.mrb[0].mxu0 %v6514
    %v6751 = vpop.f32.mrb[0].mxu0
    %v6752 = vadd.f32 0.0, %v6751
    %v6753 = vpop.f32.mrb[0].mxu0
    %v6754 = vpop.f32.mrb[0].mxu0
    %v6755 = vadd.f32 0.0, %v6754
    %v6756 = vpop.f32.mrb[0].mxu0
    %6757 = vmatprep.mubr.bf16.mxu0 0
    %6758 = vmatmul.mubr.bf16.gmra.mrb[0].mxu0 %v6515
    %v6759 = vpop.f32.mrb[0].mxu0
    %v6760 = vadd.f32 0.0, %v6759
    %v6761 = vpop.f32.mrb[0].mxu0
    %v6762 = vpop.f32.mrb[0].mxu0
    %v6763 = vadd.f32 0.0, %v6762
    %v6764 = vpop.f32.mrb[0].mxu0
    %6765 = vmatprep.mubr.bf16.mxu0 0
    %6766 = vmatmul.mubr.bf16.gmra.mrb[0].mxu0 %v6516
    %v6767 = vpop.f32.mrb[0].mxu0
    %v6768 = vadd.f32 0.0, %v6767
    %v6769 = vpop.f32.mrb[0].mxu0
    %v6770 = vpop.f32.mrb[0].mxu0
    %v6771 = vadd.f32 0.0, %v6770
    %v6772 = vpop.f32.mrb[0].mxu0
    %6773 = vmatprep.mubr.bf16.mxu0 0
    %6774 = vmatmul.mubr.bf16.gmra.mrb[0].mxu0 %v6517
    %v6775 = vpop.f32.mrb[0].mxu0
    %v6776 = vadd.f32 0.0, %v6775
    %v6777 = vpop.f32.mrb[0].mxu0
    %v6778 = vpop.f32.mrb[0].mxu0
    %v6779 = vadd.f32 0.0, %v6778
    %v6780 = vpop.f32.mrb[0].mxu0
    %6781 = vmatprep.mubr.bf16.mxu0 0
    %6782 = vmatmul.mubr.bf16.gmra.mrb[0].mxu0 %v6518
    %v6783 = vpop.f32.mrb[0].mxu0
    %v6784 = vadd.f32 0.0, %v6783
    %v6785 = vpop.f32.mrb[0].mxu0
    %v6786 = vpop.f32.mrb[0].mxu0
    %v6787 = vadd.f32 0.0, %v6786
    %v6788 = vpop.f32.mrb[0].mxu0
    %6789 = vmatprep.mubr.bf16.mxu0 0
    %6790 = vmatmul.mubr.bf16.gmra.mrb[0].mxu0 %v6519
    %v6791 = vpop.f32.mrb[0].mxu0
    %v6792 = vadd.f32 0.0, %v6791
    %v6793 = vpop.f32.mrb[0].mxu0
    %v6794 = vpop.f32.mrb[0].mxu0
    %v6795 = vadd.f32 0.0, %v6794
    %v6796 = vpop.f32.mrb[0].mxu0
    %6797 = vmatprep.mubr.bf16.mxu0 0
    %6798 = vmatmul.mubr.bf16.gmra.mrb[0].mxu0 %v6520
    %v6799 = vpop.f32.mrb[0].mxu0
    %v6800 = vadd.f32 0.0, %v6799
    %v6801 = vpop.f32.mrb[0].mxu0
    %v6802 = vpop.f32.mrb[0].mxu0
    %v6803 = vadd.f32 0.0, %v6802
    %v6804 = vpop.f32.mrb[0].mxu0
    %6805 = vmatprep.mubr.bf16.mxu0 0
    %6806 = vmatmul.mubr.bf16.gmra.mrb[0].mxu0 %v6521
    %v6807 = vpop.f32.mrb[0].mxu0
    %v6808 = vadd.f32 0.0, %v6807
    %v6809 = vpop.f32.mrb[0].mxu0
    %v6810 = vpop.f32.mrb[0].mxu0
    %v6811 = vadd.f32 0.0, %v6810
    %v6812 = vpop.f32.mrb[0].mxu0
    %6813 = vmatprep.mubr.bf16.mxu0 0
    %6814 = vmatmul.mubr.bf16.gmra.mrb[0].mxu0 %v6522
    %v6815 = vpop.f32.mrb[0].mxu0
    %v6816 = vadd.f32 0.0, %v6815
    %v6817 = vpop.f32.mrb[0].mxu0
    %v6818 = vpop.f32.mrb[0].mxu0
    %v6819 = vadd.f32 0.0, %v6818
    %v6820 = vpop.f32.mrb[0].mxu0
    %6821 = vmatprep.mubr.bf16.mxu0 0
    %6822 = vmatmul.mubr.bf16.gmra.mrb[0].mxu0 %v6523
    %v6823 = vpop.f32.mrb[0].mxu0
    %v6824 = vadd.f32 0.0, %v6823
    %v6825 = vpop.f32.mrb[0].mxu0
    %v6826 = vpop.f32.mrb[0].mxu0
    %v6827 = vadd.f32 0.0, %v6826
    %v6828 = vpop.f32.mrb[0].mxu0
    %6829 = vmatprep.mubr.bf16.mxu0 0
    %6830 = vmatmul.mubr.bf16.gmra.mrb[0].mxu0 %v6524
    %v6831 = vpop.f32.mrb[0].mxu0
    %v6832 = vadd.f32 0.0, %v6831
    %v6833 = vpop.f32.mrb[0].mxu0
    %v6834 = vpop.f32.mrb[0].mxu0
    %v6835 = vadd.f32 0.0, %v6834
    %v6836 = vpop.f32.mrb[0].mxu0
    %6837 = vmatprep.mubr.bf16.mxu0 0
    %6838 = vmatmul.mubr.bf16.gmra.mrb[0].mxu0 %v6525
    %v6839 = vpop.f32.mrb[0].mxu0
    %v6840 = vadd.f32 0.0, %v6839
    %v6841 = vpop.f32.mrb[0].mxu0
    %v6842 = vpop.f32.mrb[0].mxu0
    %v6843 = vadd.f32 0.0, %v6842
    %v6844 = vpop.f32.mrb[0].mxu0
    %6845 = vmatprep.mubr.bf16.mxu0 0
    %6846 = vmatmul.mubr.bf16.gmra.mrb[0].mxu0 %v6526
    %v6847 = vpop.f32.mrb[0].mxu0
    %v6848 = vadd.f32 0.0, %v6847
    %v6849 = vpop.f32.mrb[0].mxu0
    %v6850 = vpop.f32.mrb[0].mxu0
    %v6851 = vadd.f32 0.0, %v6850
    %v6852 = vpop.f32.mrb[0].mxu0
    %6853 = vmatprep.mubr.bf16.mxu0 0
    %6854 = vmatmul.mubr.bf16.gmra.mrb[0].mxu0 %v6527
    %v6855 = vpop.f32.mrb[0].mxu0
    %v6856 = vadd.f32 0.0, %v6855
    %v6857 = vpop.f32.mrb[0].mxu0
    %v6858 = vpop.f32.mrb[0].mxu0
    %v6859 = vadd.f32 0.0, %v6858
    %v6860 = vpop.f32.mrb[0].mxu0
    %6861 = vmatprep.mubr.bf16.mxu0 0
    %6862 = vmatmul.mubr.bf16.gmra.mrb[0].mxu0 %v6528
    %v6863 = vpop.f32.mrb[0].mxu0
    %v6864 = vadd.f32 0.0, %v6863
    %v6865 = vpop.f32.mrb[0].mxu0
    %v6866 = vpop.f32.mrb[0].mxu0
    %v6867 = vadd.f32 0.0, %v6866
    %v6868 = vpop.f32.mrb[0].mxu0
    %6869 = vmatprep.mubr.bf16.mxu0 0
    %6870 = vmatmul.mubr.bf16.gmra.mrb[0].mxu0 %v6529
    %v6871 = vpop.f32.mrb[0].mxu0
    %v6872 = vadd.f32 0.0, %v6871
    %v6873 = vpop.f32.mrb[0].mxu0
    %v6874 = vpop.f32.mrb[0].mxu0
    %v6875 = vadd.f32 0.0, %v6874
    %v6876 = vpop.f32.mrb[0].mxu0
    %6877 = vmatprep.mubr.bf16.mxu0 0
    %6878 = vmatmul.mubr.bf16.gmra.mrb[0].mxu0 %v6530
    %v6879 = vpop.f32.mrb[0].mxu0
    %v6880 = vadd.f32 0.0, %v6879
    %v6881 = vpop.f32.mrb[0].mxu0
    %v6882 = vpop.f32.mrb[0].mxu0
    %v6883 = vadd.f32 0.0, %v6882
    %v6884 = vpop.f32.mrb[0].mxu0
    %6885 = vmatprep.mubr.bf16.mxu0 0
    %6886 = vmatmul.mubr.bf16.gmra.mrb[0].mxu0 %v6531
    %v6887 = vpop.f32.mrb[0].mxu0
    %v6888 = vadd.f32 0.0, %v6887
    %v6889 = vpop.f32.mrb[0].mxu0
    %v6890 = vpop.f32.mrb[0].mxu0
    %v6891 = vadd.f32 0.0, %v6890
    %v6892 = vpop.f32.mrb[0].mxu0
    %6893 = vmatprep.mubr.bf16.mxu0 0
    %6894 = vmatmul.mubr.bf16.gmra.mrb[0].mxu0 %v6532
    %v6895 = vpop.f32.mrb[0].mxu0
    %v6896 = vadd.f32 0.0, %v6895
    %v6897 = vpop.f32.mrb[0].mxu0
    %v6898 = vpop.f32.mrb[0].mxu0
    %v6899 = vadd.f32 0.0, %v6898
    %v6900 = vpop.f32.mrb[0].mxu0
    %6901 = vmatprep.mubr.bf16.mxu0 0
    %6902 = vmatmul.mubr.bf16.gmra.mrb[0].mxu0 %v6533
    %v6903 = vpop.f32.mrb[0].mxu0
    %v6904 = vadd.f32 0.0, %v6903
    %v6905 = vpop.f32.mrb[0].mxu0
    %v6906 = vpop.f32.mrb[0].mxu0
    %v6907 = vadd.f32 0.0, %v6906
    %v6908 = vpop.f32.mrb[0].mxu0
    %6909 = vmatprep.mubr.bf16.mxu0 0
    %6910 = vmatmul.mubr.bf16.gmra.mrb[0].mxu0 %v6534
    %v6911 = vpop.f32.mrb[0].mxu0
    %v6912 = vadd.f32 0.0, %v6911
    %v6913 = vpop.f32.mrb[0].mxu0
    %v6914 = vpop.f32.mrb[0].mxu0
    %v6915 = vadd.f32 0.0, %v6914
    %v6916 = vpop.f32.mrb[0].mxu0
    %6917 = vmatprep.mubr.bf16.mxu0 0
    %6918 = vmatmul.mubr.bf16.gmra.mrb[0].mxu0 %v6535
    %v6919 = vpop.f32.mrb[0].mxu0
    %v6920 = vadd.f32 0.0, %v6919
    %v6921 = vpop.f32.mrb[0].mxu0
    %v6922 = vpop.f32.mrb[0].mxu0
    %v6923 = vadd.f32 0.0, %v6922
    %v6924 = vpop.f32.mrb[0].mxu0
    %6925 = vmatprep.mubr.bf16.mxu0 0
    %6926 = vmatmul.mubr.bf16.gmra.mrb[0].mxu0 %v6536
    %v6927 = vpop.f32.mrb[0].mxu0
    %v6928 = vadd.f32 0.0, %v6927
    %v6929 = vpop.f32.mrb[0].mxu0
    %v6930 = vpop.f32.mrb[0].mxu0
    %v6931 = vadd.f32 0.0, %v6930
    %v6932 = vpop.f32.mrb[0].mxu0
    %6933 = vmatprep.mubr.bf16.mxu0 0
    %6934 = vmatmul.mubr.bf16.gmra.mrb[0].mxu0 %v6537
    %v6935 = vpop.f32.mrb[0].mxu0
    %v6936 = vadd.f32 0.0, %v6935
    %v6937 = vpop.f32.mrb[0].mxu0
    %v6938 = vpop.f32.mrb[0].mxu0
    %v6939 = vadd.f32 0.0, %v6938
    %v6940 = vpop.f32.mrb[0].mxu0
    %6941 = vmatprep.mubr.bf16.mxu0 0
    %6942 = vmatmul.mubr.bf16.gmra.mrb[0].mxu0 %v6538
    %v6943 = vpop.f32.mrb[0].mxu0
    %v6944 = vadd.f32 0.0, %v6943
    %v6945 = vpop.f32.mrb[0].mxu0
    %v6946 = vpop.f32.mrb[0].mxu0
    %v6947 = vadd.f32 0.0, %v6946
    %v6948 = vpop.f32.mrb[0].mxu0
    %6949 = vmatprep.mubr.bf16.mxu0 0
    %6950 = vmatmul.mubr.bf16.gmra.mrb[0].mxu0 %v6539
    %v6951 = vpop.f32.mrb[0].mxu0
    %v6952 = vadd.f32 0.0, %v6951
    %v6953 = vpop.f32.mrb[0].mxu0
    %v6954 = vpop.f32.mrb[0].mxu0
    %v6955 = vadd.f32 0.0, %v6954
    %v6956 = vpop.f32.mrb[0].mxu0
    %6957 = vmatprep.mubr.bf16.mxu0 0
    %6958 = vmatmul.mubr.bf16.gmra.mrb[0].mxu0 %v6540
    %v6959 = vpop.f32.mrb[0].mxu0
    %v6960 = vadd.f32 0.0, %v6959
    %v6961 = vpop.f32.mrb[0].mxu0
    %v6962 = vpop.f32.mrb[0].mxu0
    %v6963 = vadd.f32 0.0, %v6962
    %v6964 = vpop.f32.mrb[0].mxu0
    %6965 = vmatprep.mubr.bf16.mxu0 0
    %6966 = vmatmul.mubr.bf16.gmra.mrb[0].mxu0 %v6541
    %v6967 = vpop.f32.mrb[0].mxu0
    %v6968 = vadd.f32 0.0, %v6967
    %v6969 = vpop.f32.mrb[0].mxu0
    %v6970 = vpop.f32.mrb[0].mxu0
    %v6971 = vadd.f32 0.0, %v6970
    %v6972 = vpop.f32.mrb[0].mxu0
    %6973 = vmatprep.mubr.bf16.mxu0 0
    %6974 = vmatmul.mubr.bf16.gmra.mrb[0].mxu0 %v6542
    %v6975 = vpop.f32.mrb[0].mxu0
    %v6976 = vadd.f32 0.0, %v6975
    %v6977 = vpop.f32.mrb[0].mxu0
    %v6978 = vpop.f32.mrb[0].mxu0
    %v6979 = vadd.f32 0.0, %v6978
    %v6980 = vpop.f32.mrb[0].mxu0
    %6981 = vmatprep.mubr.bf16.mxu0 0
    %6982 = vmatmul.mubr.bf16.gmra.mrb[0].mxu0 %v6543
    %v6983 = vpop.f32.mrb[0].mxu0
    %v6984 = vadd.f32 0.0, %v6983
    %v6985 = vpop.f32.mrb[0].mxu0
    %v6986 = vpop.f32.mrb[0].mxu0
    %v6987 = vadd.f32 0.0, %v6986
    %v6988 = vpop.f32.mrb[0].mxu0
    %6989 = vmatprep.mubr.bf16.mxu0 0
    %6990 = vmatmul.mubr.bf16.gmra.mrb[0].mxu0 %v6544
    %v6991 = vpop.f32.mrb[0].mxu0
    %v6992 = vadd.f32 0.0, %v6991
    %v6993 = vpop.f32.mrb[0].mxu0
    %v6994 = vpop.f32.mrb[0].mxu0
    %v6995 = vadd.f32 0.0, %v6994
    %v6996 = vpop.f32.mrb[0].mxu0
    %6997 = vmatprep.mubr.bf16.mxu0 0
    %6998 = vmatmul.mubr.bf16.gmra.mrb[0].mxu0 %v6545
    %v6999 = vpop.f32.mrb[0].mxu0
    %v7000 = vadd.f32 0.0, %v6999
    %v7001 = vpop.f32.mrb[0].mxu0
    %v7002 = vpop.f32.mrb[0].mxu0
    %v7003 = vadd.f32 0.0, %v7002
    %v7004 = vpop.f32.mrb[0].mxu0
    %7005 = vmatprep.mubr.bf16.mxu0 0
    %7006 = vmatmul.mubr.bf16.gmra.mrb[0].mxu0 %v6546
    %v7007 = vpop.f32.mrb[0].mxu0
    %v7008 = vadd.f32 0.0, %v7007
    %v7009 = vpop.f32.mrb[0].mxu0
    %v7010 = vpop.f32.mrb[0].mxu0
    %v7011 = vadd.f32 0.0, %v7010
    %v7012 = vpop.f32.mrb[0].mxu0
    %7013 = vmatprep.mubr.bf16.mxu0 0
    %7014 = vmatmul.mubr.bf16.gmra.mrb[0].mxu0 %v6547
    %v7015 = vpop.f32.mrb[0].mxu0
    %v7016 = vadd.f32 0.0, %v7015
    %v7017 = vpop.f32.mrb[0].mxu0
    %v7018 = vpop.f32.mrb[0].mxu0
    %v7019 = vadd.f32 0.0, %v7018
    %v7020 = vpop.f32.mrb[0].mxu0
    %7021 = vmatprep.mubr.bf16.mxu0 0
    %7022 = vmatmul.mubr.bf16.gmra.mrb[0].mxu0 %v6548
    %v7023 = vpop.f32.mrb[0].mxu0
    %v7024 = vadd.f32 0.0, %v7023
    %v7025 = vpop.f32.mrb[0].mxu0
    %v7026 = vpop.f32.mrb[0].mxu0
    %v7027 = vadd.f32 0.0, %v7026
    %v7028 = vpop.f32.mrb[0].mxu0
    %7029 = vmatprep.mubr.bf16.mxu0 0
    %7030 = vmatmul.mubr.bf16.gmra.mrb[0].mxu0 %v6549
    %v7031 = vpop.f32.mrb[0].mxu0
    %v7032 = vadd.f32 0.0, %v7031
    %v7033 = vpop.f32.mrb[0].mxu0
    %v7034 = vpop.f32.mrb[0].mxu0
    %v7035 = vadd.f32 0.0, %v7034
    %v7036 = vpop.f32.mrb[0].mxu0
    %7037 = vmatprep.mubr.bf16.mxu0 0
    %7038 = vmatmul.mubr.bf16.gmra.mrb[0].mxu0 %v6550
    %v7039 = vpop.f32.mrb[0].mxu0
    %v7040 = vadd.f32 0.0, %v7039
    %v7041 = vpop.f32.mrb[0].mxu0
    %v7042 = vpop.f32.mrb[0].mxu0
    %v7043 = vadd.f32 0.0, %v7042
    %v7044 = vpop.f32.mrb[0].mxu0
    %7045 = vmatprep.mubr.bf16.mxu0 0
    %7046 = vmatmul.mubr.bf16.gmra.mrb[0].mxu0 %v6551
    %v7047 = vpop.f32.mrb[0].mxu0
    %v7048 = vadd.f32 0.0, %v7047
    %v7049 = vpop.f32.mrb[0].mxu0
    %v7050 = vpop.f32.mrb[0].mxu0
    %v7051 = vadd.f32 0.0, %v7050
    %v7052 = vpop.f32.mrb[0].mxu0
    %7053 = vmatprep.mubr.bf16.mxu0 0
    %7054 = vmatmul.mubr.bf16.gmra.mrb[0].mxu0 %v6552
    %v7055 = vpop.f32.mrb[0].mxu0
    %v7056 = vadd.f32 0.0, %v7055
    %v7057 = vpop.f32.mrb[0].mxu0
    %v7058 = vpop.f32.mrb[0].mxu0
    %v7059 = vadd.f32 0.0, %v7058
    %v7060 = vpop.f32.mrb[0].mxu0
    %7061 = vmatprep.mubr.bf16.mxu0 0
    %7062 = vmatmul.mubr.bf16.gmra.mrb[0].mxu0 %v6553
    %v7063 = vpop.f32.mrb[0].mxu0
    %v7064 = vadd.f32 0.0, %v7063
    %v7065 = vpop.f32.mrb[0].mxu0
    %v7066 = vpop.f32.mrb[0].mxu0
    %v7067 = vadd.f32 0.0, %v7066
    %v7068 = vpop.f32.mrb[0].mxu0
    %7069 = vmatprep.mubr.bf16.mxu0 0
    %7070 = vmatmul.mubr.bf16.gmra.mrb[0].mxu0 %v6554
    %v7071 = vpop.f32.mrb[0].mxu0
    %v7072 = vadd.f32 0.0, %v7071
    %v7073 = vpop.f32.mrb[0].mxu0
    %v7074 = vpop.f32.mrb[0].mxu0
    %v7075 = vadd.f32 0.0, %v7074
    %v7076 = vpop.f32.mrb[0].mxu0
    %7077 = vmatprep.mubr.bf16.mxu0 0
    %7078 = vmatmul.mubr.bf16.gmra.mrb[0].mxu0 %v6555
    %v7079 = vpop.f32.mrb[0].mxu0
    %v7080 = vadd.f32 0.0, %v7079
    %v7081 = vpop.f32.mrb[0].mxu0
    %v7082 = vpop.f32.mrb[0].mxu0
    %v7083 = vadd.f32 0.0, %v7082
    %v7084 = vpop.f32.mrb[0].mxu0
    %7085 = vmatprep.mubr.bf16.mxu0 0
    %7086 = vmatmul.mubr.bf16.gmra.mrb[0].mxu0 %v6556
    %v7087 = vpop.f32.mrb[0].mxu0
    %v7088 = vadd.f32 0.0, %v7087
    %v7089 = vpop.f32.mrb[0].mxu0
    %v7090 = vpop.f32.mrb[0].mxu0
    %v7091 = vadd.f32 0.0, %v7090
    %v7092 = vpop.f32.mrb[0].mxu0
    %7093 = vmatprep.mubr.bf16.mxu0 0
    %7094 = vmatmul.mubr.bf16.gmra.mrb[0].mxu0 %v6557
    %v7095 = vpop.f32.mrb[0].mxu0
    %v7096 = vadd.f32 0.0, %v7095
    %v7097 = vpop.f32.mrb[0].mxu0
    %v7098 = vpop.f32.mrb[0].mxu0
    %v7099 = vadd.f32 0.0, %v7098
    %v7100 = vpop.f32.mrb[0].mxu0
    %7101 = vmatprep.mubr.bf16.mxu0 0
    %7102 = vmatmul.mubr.bf16.gmra.mrb[0].mxu0 %v6558
    %v7103 = vpop.f32.mrb[0].mxu0
    %v7104 = vadd.f32 0.0, %v7103
    %v7105 = vpop.f32.mrb[0].mxu0
    %v7106 = vpop.f32.mrb[0].mxu0
    %v7107 = vadd.f32 0.0, %v7106
    %v7108 = vpop.f32.mrb[0].mxu0
    %7109 = vmatprep.mubr.bf16.mxu0 0
    %7110 = vmatmul.mubr.bf16.gmra.mrb[0].mxu0 %v6559
    %v7111 = vpop.f32.mrb[0].mxu0
    %v7112 = vadd.f32 0.0, %v7111
    %v7113 = vpop.f32.mrb[0].mxu0
    %v7114 = vpop.f32.mrb[0].mxu0
    %v7115 = vadd.f32 0.0, %v7114
    %v7116 = vpop.f32.mrb[0].mxu0
    %7117 = vmatprep.mubr.bf16.mxu0 0
    %7118 = vmatmul.mubr.bf16.gmra.mrb[0].mxu0 %v6560
    %v7119 = vpop.f32.mrb[0].mxu0
    %v7120 = vadd.f32 0.0, %v7119
    %v7121 = vpop.f32.mrb[0].mxu0
    %v7122 = vpop.f32.mrb[0].mxu0
    %v7123 = vadd.f32 0.0, %v7122
    %v7124 = vpop.f32.mrb[0].mxu0
    %7125 = vmatprep.mubr.bf16.mxu0 0
    %7126 = vmatmul.mubr.bf16.gmra.mrb[0].mxu0 %v6561
    %v7127 = vpop.f32.mrb[0].mxu0
    %v7128 = vadd.f32 0.0, %v7127
    %v7129 = vpop.f32.mrb[0].mxu0
    %v7130 = vpop.f32.mrb[0].mxu0
    %v7131 = vadd.f32 0.0, %v7130
    %v7132 = vpop.f32.mrb[0].mxu0
    %7133 = vmatprep.mubr.bf16.mxu0 0
    %7134 = vmatmul.mubr.bf16.gmra.mrb[0].mxu0 %v6562
    %v7135 = vpop.f32.mrb[0].mxu0
    %v7136 = vadd.f32 0.0, %v7135
    %v7137 = vpop.f32.mrb[0].mxu0
    %v7138 = vpop.f32.mrb[0].mxu0
    %v7139 = vadd.f32 0.0, %v7138
    %v7140 = vpop.f32.mrb[0].mxu0
    %7141 = vmatprep.mubr.bf16.mxu0 0
    %7142 = vmatmul.mubr.bf16.gmra.mrb[0].mxu0 %v6563
    %v7143 = vpop.f32.mrb[0].mxu0
    %v7144 = vadd.f32 0.0, %v7143
    %v7145 = vpop.f32.mrb[0].mxu0
    %v7146 = vpop.f32.mrb[0].mxu0
    %v7147 = vadd.f32 0.0, %v7146
    %v7148 = vpop.f32.mrb[0].mxu0
    %7149 = vmatprep.mubr.bf16.mxu0 0
    %7150 = vmatmul.mubr.bf16.gmra.mrb[0].mxu0 %v6564
    %v7151 = vpop.f32.mrb[0].mxu0
    %v7152 = vadd.f32 0.0, %v7151
    %v7153 = vpop.f32.mrb[0].mxu0
    %v7154 = vpop.f32.mrb[0].mxu0
    %v7155 = vadd.f32 0.0, %v7154
    %v7156 = vpop.f32.mrb[0].mxu0
    %7157 = vdwg.mxu0
    %v7158 = vadd.f32 %v6648, %v6651
    %v7159 = vadd.f32 %v7158, %v6656
    %v7160 = vadd.f32 %v7159, %v6659
    %v7161 = vadd.f32 %v7160, %v6664
    %v7162 = vadd.f32 %v7161, %v6667
    %v7163 = vadd.f32 %v7162, %v6672
    %v7164 = vadd.f32 %v7163, %v6675
    %v7165 = vadd.f32 %v7164, %v6680
    %v7166 = vadd.f32 %v7165, %v6683
    %v7167 = vadd.f32 %v7166, %v6688
    %v7168 = vadd.f32 %v7167, %v6691
    %v7169 = vadd.f32 %v7168, %v6696
    %v7170 = vadd.f32 %v7169, %v6699
    %v7171 = vadd.f32 %v7170, %v6704
    %v7172 = vadd.f32 %v7171, %v6707
    %v7173 = vadd.f32 %v7172, %v6712
    %v7174 = vadd.f32 %v7173, %v6715
    %v7175 = vadd.f32 %v7174, %v6720
    %v7176 = vadd.f32 %v7175, %v6723
    %v7177 = vadd.f32 %v7176, %v6728
    %v7178 = vadd.f32 %v7177, %v6731
    %v7179 = vadd.f32 %v7178, %v6736
    %v7180 = vadd.f32 %v7179, %v6739
    %v7181 = vadd.f32 %v7180, %v6744
    %v7182 = vadd.f32 %v7181, %v6747
    %v7183 = vadd.f32 %v7182, %v6752
    %v7184 = vadd.f32 %v7183, %v6755
    %v7185 = vadd.f32 %v7184, %v6760
    %v7186 = vadd.f32 %v7185, %v6763
    %v7187 = vadd.f32 %v7186, %v6768
    %v7188 = vadd.f32 %v7187, %v6771
    %v7189 = vadd.f32 %v7188, %v6776
    %v7190 = vadd.f32 %v7189, %v6779
    %v7191 = vadd.f32 %v7190, %v6784
    %v7192 = vadd.f32 %v7191, %v6787
    %v7193 = vadd.f32 %v7192, %v6792
    %v7194 = vadd.f32 %v7193, %v6795
    %v7195 = vadd.f32 %v7194, %v6800
    %v7196 = vadd.f32 %v7195, %v6803
    %v7197 = vadd.f32 %v7196, %v6808
    %v7198 = vadd.f32 %v7197, %v6811
    %v7199 = vadd.f32 %v7198, %v6816
    %v7200 = vadd.f32 %v7199, %v6819
    %v7201 = vadd.f32 %v7200, %v6824
    %v7202 = vadd.f32 %v7201, %v6827
    %v7203 = vadd.f32 %v7202, %v6832
    %v7204 = vadd.f32 %v7203, %v6835
    %v7205 = vadd.f32 %v7204, %v6840
    %v7206 = vadd.f32 %v7205, %v6843
    %v7207 = vadd.f32 %v7206, %v6848
    %v7208 = vadd.f32 %v7207, %v6851
    %v7209 = vadd.f32 %v7208, %v6856
    %v7210 = vadd.f32 %v7209, %v6859
    %v7211 = vadd.f32 %v7210, %v6864
    %v7212 = vadd.f32 %v7211, %v6867
    %v7213 = vadd.f32 %v7212, %v6872
    %v7214 = vadd.f32 %v7213, %v6875
    %v7215 = vadd.f32 %v7214, %v6880
    %v7216 = vadd.f32 %v7215, %v6883
    %v7217 = vadd.f32 %v7216, %v6888
    %v7218 = vadd.f32 %v7217, %v6891
    %v7219 = vadd.f32 %v7218, %v6896
    %v7220 = vadd.f32 %v7219, %v6899
    %v7221 = vadd.f32 %v7220, %v6904
    %v7222 = vadd.f32 %v7221, %v6907
    %v7223 = vadd.f32 %v7222, %v6912
    %v7224 = vadd.f32 %v7223, %v6915
    %v7225 = vadd.f32 %v7224, %v6920
    %v7226 = vadd.f32 %v7225, %v6923
    %v7227 = vadd.f32 %v7226, %v6928
    %v7228 = vadd.f32 %v7227, %v6931
    %v7229 = vadd.f32 %v7228, %v6936
    %v7230 = vadd.f32 %v7229, %v6939
    %v7231 = vadd.f32 %v7230, %v6944
    %v7232 = vadd.f32 %v7231, %v6947
    %v7233 = vadd.f32 %v7232, %v6952
    %v7234 = vadd.f32 %v7233, %v6955
    %v7235 = vadd.f32 %v7234, %v6960
    %v7236 = vadd.f32 %v7235, %v6963
    %v7237 = vadd.f32 %v7236, %v6968
    %v7238 = vadd.f32 %v7237, %v6971
    %v7239 = vadd.f32 %v7238, %v6976
    %v7240 = vadd.f32 %v7239, %v6979
    %v7241 = vadd.f32 %v7240, %v6984
    %v7242 = vadd.f32 %v7241, %v6987
    %v7243 = vadd.f32 %v7242, %v6992
    %v7244 = vadd.f32 %v7243, %v6995
    %v7245 = vadd.f32 %v7244, %v7000
    %v7246 = vadd.f32 %v7245, %v7003
    %v7247 = vadd.f32 %v7246, %v7008
    %v7248 = vadd.f32 %v7247, %v7011
    %v7249 = vadd.f32 %v7248, %v7016
    %v7250 = vadd.f32 %v7249, %v7019
    %v7251 = vadd.f32 %v7250, %v7024
    %v7252 = vadd.f32 %v7251, %v7027
    %v7253 = vadd.f32 %v7252, %v7032
    %v7254 = vadd.f32 %v7253, %v7035
    %v7255 = vadd.f32 %v7254, %v7040
    %v7256 = vadd.f32 %v7255, %v7043
    %v7257 = vadd.f32 %v7256, %v7048
    %v7258 = vadd.f32 %v7257, %v7051
    %v7259 = vadd.f32 %v7258, %v7056
    %v7260 = vadd.f32 %v7259, %v7059
    %v7261 = vadd.f32 %v7260, %v7064
    %v7262 = vadd.f32 %v7261, %v7067
    %v7263 = vadd.f32 %v7262, %v7072
    %v7264 = vadd.f32 %v7263, %v7075
    %v7265 = vadd.f32 %v7264, %v7080
    %v7266 = vadd.f32 %v7265, %v7083
    %v7267 = vadd.f32 %v7266, %v7088
    %v7268 = vadd.f32 %v7267, %v7091
    %v7269 = vadd.f32 %v7268, %v7096
    %v7270 = vadd.f32 %v7269, %v7099
    %v7271 = vadd.f32 %v7270, %v7104
    %v7272 = vadd.f32 %v7271, %v7107
    %v7273 = vadd.f32 %v7272, %v7112
    %v7274 = vadd.f32 %v7273, %v7115
    %v7275 = vadd.f32 %v7274, %v7120
    %v7276 = vadd.f32 %v7275, %v7123
    %v7277 = vadd.f32 %v7276, %v7128
    %v7278 = vadd.f32 %v7277, %v7131
    %v7279 = vadd.f32 %v7278, %v7136
    %v7280 = vadd.f32 %v7279, %v7139
    %v7281 = vadd.f32 %v7280, %v7144
    %v7282 = vadd.f32 %v7281, %v7147
    %v7283 = vadd.f32 %v7282, %v7152
    %v7284 = vadd.f32 %v7283, %v7155
    %v7285 = vrot.slane %v7284, 4
    %v7286 = vadd.f32 %v7284, %v7285
    %v7287 = vrot.slane %v7286, 2
    %v7288 = vadd.f32 %v7286, %v7287
    %v7289 = vrot.slane %v7288, 1
    %v7290 = vadd.f32 %v7288, %v7289
    %v7291 = vmul.f32 %v6648, %v6648
    %v7292 = vmul.f32 %v6651, %v6651
    %v7293 = vmul.f32 %v6656, %v6656
    %v7294 = vmul.f32 %v6659, %v6659
    %v7295 = vmul.f32 %v6664, %v6664
    %v7296 = vmul.f32 %v6667, %v6667
    %v7297 = vmul.f32 %v6672, %v6672
    %v7298 = vmul.f32 %v6675, %v6675
    %v7299 = vmul.f32 %v6680, %v6680
    %v7300 = vmul.f32 %v6683, %v6683
    %v7301 = vmul.f32 %v6688, %v6688
    %v7302 = vmul.f32 %v6691, %v6691
    %v7303 = vmul.f32 %v6696, %v6696
    %v7304 = vmul.f32 %v6699, %v6699
    %v7305 = vmul.f32 %v6704, %v6704
    %v7306 = vmul.f32 %v6707, %v6707
    %v7307 = vmul.f32 %v6712, %v6712
    %v7308 = vmul.f32 %v6715, %v6715
    %v7309 = vmul.f32 %v6720, %v6720
    %v7310 = vmul.f32 %v6723, %v6723
    %v7311 = vmul.f32 %v6728, %v6728
    %v7312 = vmul.f32 %v6731, %v6731
    %v7313 = vmul.f32 %v6736, %v6736
    %v7314 = vmul.f32 %v6739, %v6739
    %v7315 = vmul.f32 %v6744, %v6744
    %v7316 = vmul.f32 %v6747, %v6747
    %v7317 = vmul.f32 %v6752, %v6752
    %v7318 = vmul.f32 %v6755, %v6755
    %v7319 = vmul.f32 %v6760, %v6760
    %v7320 = vmul.f32 %v6763, %v6763
    %v7321 = vmul.f32 %v6768, %v6768
    %v7322 = vmul.f32 %v6771, %v6771
    %v7323 = vmul.f32 %v6776, %v6776
    %v7324 = vmul.f32 %v6779, %v6779
    %v7325 = vmul.f32 %v6784, %v6784
    %v7326 = vmul.f32 %v6787, %v6787
    %v7327 = vmul.f32 %v6792, %v6792
    %v7328 = vmul.f32 %v6795, %v6795
    %v7329 = vmul.f32 %v6800, %v6800
    %v7330 = vmul.f32 %v6803, %v6803
    %v7331 = vmul.f32 %v6808, %v6808
    %v7332 = vmul.f32 %v6811, %v6811
    %v7333 = vmul.f32 %v6816, %v6816
    %v7334 = vmul.f32 %v6819, %v6819
    %v7335 = vmul.f32 %v6824, %v6824
    %v7336 = vmul.f32 %v6827, %v6827
    %v7337 = vmul.f32 %v6832, %v6832
    %v7338 = vmul.f32 %v6835, %v6835
    %v7339 = vmul.f32 %v6840, %v6840
    %v7340 = vmul.f32 %v6843, %v6843
    %v7341 = vmul.f32 %v6848, %v6848
    %v7342 = vmul.f32 %v6851, %v6851
    %v7343 = vmul.f32 %v6856, %v6856
    %v7344 = vmul.f32 %v6859, %v6859
    %v7345 = vmul.f32 %v6864, %v6864
    %v7346 = vmul.f32 %v6867, %v6867
    %v7347 = vmul.f32 %v6872, %v6872
    %v7348 = vmul.f32 %v6875, %v6875
    %v7349 = vmul.f32 %v6880, %v6880
    %v7350 = vmul.f32 %v6883, %v6883
    %v7351 = vmul.f32 %v6888, %v6888
    %v7352 = vmul.f32 %v6891, %v6891
    %v7353 = vmul.f32 %v6896, %v6896
    %v7354 = vmul.f32 %v6899, %v6899
    %v7355 = vmul.f32 %v6904, %v6904
    %v7356 = vmul.f32 %v6907, %v6907
    %v7357 = vmul.f32 %v6912, %v6912
    %v7358 = vmul.f32 %v6915, %v6915
    %v7359 = vmul.f32 %v6920, %v6920
    %v7360 = vmul.f32 %v6923, %v6923
    %v7361 = vmul.f32 %v6928, %v6928
    %v7362 = vmul.f32 %v6931, %v6931
    %v7363 = vmul.f32 %v6936, %v6936
    %v7364 = vmul.f32 %v6939, %v6939
    %v7365 = vmul.f32 %v6944, %v6944
    %v7366 = vmul.f32 %v6947, %v6947
    %v7367 = vmul.f32 %v6952, %v6952
    %v7368 = vmul.f32 %v6955, %v6955
    %v7369 = vmul.f32 %v6960, %v6960
    %v7370 = vmul.f32 %v6963, %v6963
    %v7371 = vmul.f32 %v6968, %v6968
    %v7372 = vmul.f32 %v6971, %v6971
    %v7373 = vmul.f32 %v6976, %v6976
    %v7374 = vmul.f32 %v6979, %v6979
    %v7375 = vmul.f32 %v6984, %v6984
    %v7376 = vmul.f32 %v6987, %v6987
    %v7377 = vmul.f32 %v6992, %v6992
    %v7378 = vmul.f32 %v6995, %v6995
    %v7379 = vmul.f32 %v7000, %v7000
    %v7380 = vmul.f32 %v7003, %v7003
    %v7381 = vmul.f32 %v7008, %v7008
    %v7382 = vmul.f32 %v7011, %v7011
    %v7383 = vmul.f32 %v7016, %v7016
    %v7384 = vmul.f32 %v7019, %v7019
    %v7385 = vmul.f32 %v7024, %v7024
    %v7386 = vmul.f32 %v7027, %v7027
    %v7387 = vmul.f32 %v7032, %v7032
    %v7388 = vmul.f32 %v7035, %v7035
    %v7389 = vmul.f32 %v7040, %v7040
    %v7390 = vmul.f32 %v7043, %v7043
    %v7391 = vmul.f32 %v7048, %v7048
    %v7392 = vmul.f32 %v7051, %v7051
    %v7393 = vmul.f32 %v7056, %v7056
    %v7394 = vmul.f32 %v7059, %v7059
    %v7395 = vmul.f32 %v7064, %v7064
    %v7396 = vmul.f32 %v7067, %v7067
    %v7397 = vmul.f32 %v7072, %v7072
    %v7398 = vmul.f32 %v7075, %v7075
    %v7399 = vmul.f32 %v7080, %v7080
    %v7400 = vmul.f32 %v7083, %v7083
    %v7401 = vmul.f32 %v7088, %v7088
    %v7402 = vmul.f32 %v7091, %v7091
    %v7403 = vmul.f32 %v7096, %v7096
    %v7404 = vmul.f32 %v7099, %v7099
    %v7405 = vmul.f32 %v7104, %v7104
    %v7406 = vmul.f32 %v7107, %v7107
    %v7407 = vmul.f32 %v7112, %v7112
    %v7408 = vmul.f32 %v7115, %v7115
    %v7409 = vmul.f32 %v7120, %v7120
    %v7410 = vmul.f32 %v7123, %v7123
    %v7411 = vmul.f32 %v7128, %v7128
    %v7412 = vmul.f32 %v7131, %v7131
    %v7413 = vmul.f32 %v7136, %v7136
    %v7414 = vmul.f32 %v7139, %v7139
    %v7415 = vmul.f32 %v7144, %v7144
    %v7416 = vmul.f32 %v7147, %v7147
    %v7417 = vmul.f32 %v7152, %v7152
    %v7418 = vmul.f32 %v7155, %v7155
    %v7419 = vadd.f32 %v7291, %v7292
    %v7420 = vadd.f32 %v7419, %v7293
    %v7421 = vadd.f32 %v7420, %v7294
    %v7422 = vadd.f32 %v7421, %v7295
    %v7423 = vadd.f32 %v7422, %v7296
    %v7424 = vadd.f32 %v7423, %v7297
    %v7425 = vadd.f32 %v7424, %v7298
    %v7426 = vadd.f32 %v7425, %v7299
    %v7427 = vadd.f32 %v7426, %v7300
    %v7428 = vadd.f32 %v7427, %v7301
    %v7429 = vadd.f32 %v7428, %v7302
    %v7430 = vadd.f32 %v7429, %v7303
    %v7431 = vadd.f32 %v7430, %v7304
    %v7432 = vadd.f32 %v7431, %v7305
    %v7433 = vadd.f32 %v7432, %v7306
    %v7434 = vadd.f32 %v7433, %v7307
    %v7435 = vadd.f32 %v7434, %v7308
    %v7436 = vadd.f32 %v7435, %v7309
    %v7437 = vadd.f32 %v7436, %v7310
    %v7438 = vadd.f32 %v7437, %v7311
    %v7439 = vadd.f32 %v7438, %v7312
    %v7440 = vadd.f32 %v7439, %v7313
    %v7441 = vadd.f32 %v7440, %v7314
    %v7442 = vadd.f32 %v7441, %v7315
    %v7443 = vadd.f32 %v7442, %v7316
    %v7444 = vadd.f32 %v7443, %v7317
    %v7445 = vadd.f32 %v7444, %v7318
    %v7446 = vadd.f32 %v7445, %v7319
    %v7447 = vadd.f32 %v7446, %v7320
    %v7448 = vadd.f32 %v7447, %v7321
    %v7449 = vadd.f32 %v7448, %v7322
    %v7450 = vadd.f32 %v7449, %v7323
    %v7451 = vadd.f32 %v7450, %v7324
    %v7452 = vadd.f32 %v7451, %v7325
    %v7453 = vadd.f32 %v7452, %v7326
    %v7454 = vadd.f32 %v7453, %v7327
    %v7455 = vadd.f32 %v7454, %v7328
    %v7456 = vadd.f32 %v7455, %v7329
    %v7457 = vadd.f32 %v7456, %v7330
    %v7458 = vadd.f32 %v7457, %v7331
    %v7459 = vadd.f32 %v7458, %v7332
    %v7460 = vadd.f32 %v7459, %v7333
    %v7461 = vadd.f32 %v7460, %v7334
    %v7462 = vadd.f32 %v7461, %v7335
    %v7463 = vadd.f32 %v7462, %v7336
    %v7464 = vadd.f32 %v7463, %v7337
    %v7465 = vadd.f32 %v7464, %v7338
    %v7466 = vadd.f32 %v7465, %v7339
    %v7467 = vadd.f32 %v7466, %v7340
    %v7468 = vadd.f32 %v7467, %v7341
    %v7469 = vadd.f32 %v7468, %v7342
    %v7470 = vadd.f32 %v7469, %v7343
    %v7471 = vadd.f32 %v7470, %v7344
    %v7472 = vadd.f32 %v7471, %v7345
    %v7473 = vadd.f32 %v7472, %v7346
    %v7474 = vadd.f32 %v7473, %v7347
    %v7475 = vadd.f32 %v7474, %v7348
    %v7476 = vadd.f32 %v7475, %v7349
    %v7477 = vadd.f32 %v7476, %v7350
    %v7478 = vadd.f32 %v7477, %v7351
    %v7479 = vadd.f32 %v7478, %v7352
    %v7480 = vadd.f32 %v7479, %v7353
    %v7481 = vadd.f32 %v7480, %v7354
    %v7482 = vadd.f32 %v7481, %v7355
    %v7483 = vadd.f32 %v7482, %v7356
    %v7484 = vadd.f32 %v7483, %v7357
    %v7485 = vadd.f32 %v7484, %v7358
    %v7486 = vadd.f32 %v7485, %v7359
    %v7487 = vadd.f32 %v7486, %v7360
    %v7488 = vadd.f32 %v7487, %v7361
    %v7489 = vadd.f32 %v7488, %v7362
    %v7490 = vadd.f32 %v7489, %v7363
    %v7491 = vadd.f32 %v7490, %v7364
    %v7492 = vadd.f32 %v7491, %v7365
    %v7493 = vadd.f32 %v7492, %v7366
    %v7494 = vadd.f32 %v7493, %v7367
    %v7495 = vadd.f32 %v7494, %v7368
    %v7496 = vadd.f32 %v7495, %v7369
    %v7497 = vadd.f32 %v7496, %v7370
    %v7498 = vadd.f32 %v7497, %v7371
    %v7499 = vadd.f32 %v7498, %v7372
    %v7500 = vadd.f32 %v7499, %v7373
    %v7501 = vadd.f32 %v7500, %v7374
    %v7502 = vadd.f32 %v7501, %v7375
    %v7503 = vadd.f32 %v7502, %v7376
    %v7504 = vadd.f32 %v7503, %v7377
    %v7505 = vadd.f32 %v7504, %v7378
    %v7506 = vadd.f32 %v7505, %v7379
    %v7507 = vadd.f32 %v7506, %v7380
    %v7508 = vadd.f32 %v7507, %v7381
    %v7509 = vadd.f32 %v7508, %v7382
    %v7510 = vadd.f32 %v7509, %v7383
    %v7511 = vadd.f32 %v7510, %v7384
    %v7512 = vadd.f32 %v7511, %v7385
    %v7513 = vadd.f32 %v7512, %v7386
    %v7514 = vadd.f32 %v7513, %v7387
    %v7515 = vadd.f32 %v7514, %v7388
    %v7516 = vadd.f32 %v7515, %v7389
    %v7517 = vadd.f32 %v7516, %v7390
    %v7518 = vadd.f32 %v7517, %v7391
    %v7519 = vadd.f32 %v7518, %v7392
    %v7520 = vadd.f32 %v7519, %v7393
    %v7521 = vadd.f32 %v7520, %v7394
    %v7522 = vadd.f32 %v7521, %v7395
    %v7523 = vadd.f32 %v7522, %v7396
    %v7524 = vadd.f32 %v7523, %v7397
    %v7525 = vadd.f32 %v7524, %v7398
    %v7526 = vadd.f32 %v7525, %v7399
    %v7527 = vadd.f32 %v7526, %v7400
    %v7528 = vadd.f32 %v7527, %v7401
    %v7529 = vadd.f32 %v7528, %v7402
    %v7530 = vadd.f32 %v7529, %v7403
    %v7531 = vadd.f32 %v7530, %v7404
    %v7532 = vadd.f32 %v7531, %v7405
    %v7533 = vadd.f32 %v7532, %v7406
    %v7534 = vadd.f32 %v7533, %v7407
    %v7535 = vadd.f32 %v7534, %v7408
    %v7536 = vadd.f32 %v7535, %v7409
    %v7537 = vadd.f32 %v7536, %v7410
    %v7538 = vadd.f32 %v7537, %v7411
    %v7539 = vadd.f32 %v7538, %v7412
    %v7540 = vadd.f32 %v7539, %v7413
    %v7541 = vadd.f32 %v7540, %v7414
    %v7542 = vadd.f32 %v7541, %v7415
    %v7543 = vadd.f32 %v7542, %v7416
    %v7544 = vadd.f32 %v7543, %v7417
    %v7545 = vadd.f32 %v7544, %v7418
    %v7546 = vrot.slane %v7545, 4
    %v7547 = vadd.f32 %v7545, %v7546
    %v7548 = vrot.slane %v7547, 2
    %v7549 = vadd.f32 %v7547, %v7548
    %v7550 = vrot.slane %v7549, 1
    %v7551 = vadd.f32 %v7549, %v7550
    %v7552 = vmul.f32 %v7290, 0.0009765625
    %v7553 = vmul.f32 %v7551, 0.0009765625
    %v7554 = vmul.f32 %v7552, %v7552
    %v7555 = vsub.f32 %v7553, %v7554
    %v7556 = vmax.f32 %v7555, 0.0
    %v7557 = vadd.f32 %v7556, 1e-05
    %v7558 = vrsqrt.pop %v7557
    %v7559 = vmul.f32 %v6499, %v7558
    %v7560 = vmul.f32 %v7552, %v7559
    %v7561 = vsub.f32 %v6500, %v7560
    %v7562 = vmul.f32 %v6648, %v7559
    %v7563 = vmul.f32 %v6651, %v7559
    %v7564 = vmul.f32 %v6656, %v7559
    %v7565 = vmul.f32 %v6659, %v7559
    %v7566 = vmul.f32 %v6664, %v7559
    %v7567 = vmul.f32 %v6667, %v7559
    %v7568 = vmul.f32 %v6672, %v7559
    %v7569 = vmul.f32 %v6675, %v7559
    %v7570 = vmul.f32 %v6680, %v7559
    %v7571 = vmul.f32 %v6683, %v7559
    %v7572 = vmul.f32 %v6688, %v7559
    %v7573 = vmul.f32 %v6691, %v7559
    %v7574 = vmul.f32 %v6696, %v7559
    %v7575 = vmul.f32 %v6699, %v7559
    %v7576 = vmul.f32 %v6704, %v7559
    %v7577 = vmul.f32 %v6707, %v7559
    %v7578 = vmul.f32 %v6712, %v7559
    %v7579 = vmul.f32 %v6715, %v7559
    %v7580 = vmul.f32 %v6720, %v7559
    %v7581 = vmul.f32 %v6723, %v7559
    %v7582 = vmul.f32 %v6728, %v7559
    %v7583 = vmul.f32 %v6731, %v7559
    %v7584 = vmul.f32 %v6736, %v7559
    %v7585 = vmul.f32 %v6739, %v7559
    %v7586 = vmul.f32 %v6744, %v7559
    %v7587 = vmul.f32 %v6747, %v7559
    %v7588 = vmul.f32 %v6752, %v7559
    %v7589 = vmul.f32 %v6755, %v7559
    %v7590 = vmul.f32 %v6760, %v7559
    %v7591 = vmul.f32 %v6763, %v7559
    %v7592 = vmul.f32 %v6768, %v7559
    %v7593 = vmul.f32 %v6771, %v7559
    %v7594 = vmul.f32 %v6776, %v7559
    %v7595 = vmul.f32 %v6779, %v7559
    %v7596 = vmul.f32 %v6784, %v7559
    %v7597 = vmul.f32 %v6787, %v7559
    %v7598 = vmul.f32 %v6792, %v7559
    %v7599 = vmul.f32 %v6795, %v7559
    %v7600 = vmul.f32 %v6800, %v7559
    %v7601 = vmul.f32 %v6803, %v7559
    %v7602 = vmul.f32 %v6808, %v7559
    %v7603 = vmul.f32 %v6811, %v7559
    %v7604 = vmul.f32 %v6816, %v7559
    %v7605 = vmul.f32 %v6819, %v7559
    %v7606 = vmul.f32 %v6824, %v7559
    %v7607 = vmul.f32 %v6827, %v7559
    %v7608 = vmul.f32 %v6832, %v7559
    %v7609 = vmul.f32 %v6835, %v7559
    %v7610 = vmul.f32 %v6840, %v7559
    %v7611 = vmul.f32 %v6843, %v7559
    %v7612 = vmul.f32 %v6848, %v7559
    %v7613 = vmul.f32 %v6851, %v7559
    %v7614 = vmul.f32 %v6856, %v7559
    %v7615 = vmul.f32 %v6859, %v7559
    %v7616 = vmul.f32 %v6864, %v7559
    %v7617 = vmul.f32 %v6867, %v7559
    %v7618 = vmul.f32 %v6872, %v7559
    %v7619 = vmul.f32 %v6875, %v7559
    %v7620 = vmul.f32 %v6880, %v7559
    %v7621 = vmul.f32 %v6883, %v7559
    %v7622 = vmul.f32 %v6888, %v7559
    %v7623 = vmul.f32 %v6891, %v7559
    %v7624 = vmul.f32 %v6896, %v7559
    %v7625 = vmul.f32 %v6899, %v7559
    %v7626 = vmul.f32 %v6904, %v7559
    %v7627 = vmul.f32 %v6907, %v7559
    %v7628 = vmul.f32 %v6912, %v7559
    %v7629 = vmul.f32 %v6915, %v7559
    %v7630 = vmul.f32 %v6920, %v7559
    %v7631 = vmul.f32 %v6923, %v7559
    %v7632 = vmul.f32 %v6928, %v7559
    %v7633 = vmul.f32 %v6931, %v7559
    %v7634 = vmul.f32 %v6936, %v7559
    %v7635 = vmul.f32 %v6939, %v7559
    %v7636 = vmul.f32 %v6944, %v7559
    %v7637 = vmul.f32 %v6947, %v7559
    %v7638 = vmul.f32 %v6952, %v7559
    %v7639 = vmul.f32 %v6955, %v7559
    %v7640 = vmul.f32 %v6960, %v7559
    %v7641 = vmul.f32 %v6963, %v7559
    %v7642 = vmul.f32 %v6968, %v7559
    %v7643 = vmul.f32 %v6971, %v7559
    %v7644 = vmul.f32 %v6976, %v7559
    %v7645 = vmul.f32 %v6979, %v7559
    %v7646 = vmul.f32 %v6984, %v7559
    %v7647 = vmul.f32 %v6987, %v7559
    %v7648 = vmul.f32 %v6992, %v7559
    %v7649 = vmul.f32 %v6995, %v7559
    %v7650 = vmul.f32 %v7000, %v7559
    %v7651 = vmul.f32 %v7003, %v7559
    %v7652 = vmul.f32 %v7008, %v7559
    %v7653 = vmul.f32 %v7011, %v7559
    %v7654 = vmul.f32 %v7016, %v7559
    %v7655 = vmul.f32 %v7019, %v7559
    %v7656 = vmul.f32 %v7024, %v7559
    %v7657 = vmul.f32 %v7027, %v7559
    %v7658 = vmul.f32 %v7032, %v7559
    %v7659 = vmul.f32 %v7035, %v7559
    %v7660 = vmul.f32 %v7040, %v7559
    %v7661 = vmul.f32 %v7043, %v7559
    %v7662 = vmul.f32 %v7048, %v7559
    %v7663 = vmul.f32 %v7051, %v7559
    %v7664 = vmul.f32 %v7056, %v7559
    %v7665 = vmul.f32 %v7059, %v7559
    %v7666 = vmul.f32 %v7064, %v7559
    %v7667 = vmul.f32 %v7067, %v7559
    %v7668 = vmul.f32 %v7072, %v7559
    %v7669 = vmul.f32 %v7075, %v7559
    %v7670 = vmul.f32 %v7080, %v7559
    %v7671 = vmul.f32 %v7083, %v7559
    %v7672 = vmul.f32 %v7088, %v7559
    %v7673 = vmul.f32 %v7091, %v7559
    %v7674 = vmul.f32 %v7096, %v7559
    %v7675 = vmul.f32 %v7099, %v7559
    %v7676 = vmul.f32 %v7104, %v7559
    %v7677 = vmul.f32 %v7107, %v7559
    %v7678 = vmul.f32 %v7112, %v7559
    %v7679 = vmul.f32 %v7115, %v7559
    %v7680 = vmul.f32 %v7120, %v7559
    %v7681 = vmul.f32 %v7123, %v7559
    %v7682 = vmul.f32 %v7128, %v7559
    %v7683 = vmul.f32 %v7131, %v7559
    %v7684 = vmul.f32 %v7136, %v7559
    %v7685 = vmul.f32 %v7139, %v7559
    %v7686 = vmul.f32 %v7144, %v7559
    %v7687 = vmul.f32 %v7147, %v7559
    %v7688 = vmul.f32 %v7152, %v7559
    %v7689 = vmul.f32 %v7155, %v7559
    %v7690 = vadd.f32 %v7562, %v7561
    %v7691 = vadd.f32 %v7563, %v7561
    %v7692 = vadd.f32 %v7564, %v7561
    %v7693 = vadd.f32 %v7565, %v7561
    %v7694 = vadd.f32 %v7566, %v7561
    %v7695 = vadd.f32 %v7567, %v7561
    %v7696 = vadd.f32 %v7568, %v7561
    %v7697 = vadd.f32 %v7569, %v7561
    %v7698 = vadd.f32 %v7570, %v7561
    %v7699 = vadd.f32 %v7571, %v7561
    %v7700 = vadd.f32 %v7572, %v7561
    %v7701 = vadd.f32 %v7573, %v7561
    %v7702 = vadd.f32 %v7574, %v7561
    %v7703 = vadd.f32 %v7575, %v7561
    %v7704 = vadd.f32 %v7576, %v7561
    %v7705 = vadd.f32 %v7577, %v7561
    %v7706 = vadd.f32 %v7578, %v7561
    %v7707 = vadd.f32 %v7579, %v7561
    %v7708 = vadd.f32 %v7580, %v7561
    %v7709 = vadd.f32 %v7581, %v7561
    %v7710 = vadd.f32 %v7582, %v7561
    %v7711 = vadd.f32 %v7583, %v7561
    %v7712 = vadd.f32 %v7584, %v7561
    %v7713 = vadd.f32 %v7585, %v7561
    %v7714 = vadd.f32 %v7586, %v7561
    %v7715 = vadd.f32 %v7587, %v7561
    %v7716 = vadd.f32 %v7588, %v7561
    %v7717 = vadd.f32 %v7589, %v7561
    %v7718 = vadd.f32 %v7590, %v7561
    %v7719 = vadd.f32 %v7591, %v7561
    %v7720 = vadd.f32 %v7592, %v7561
    %v7721 = vadd.f32 %v7593, %v7561
    %v7722 = vadd.f32 %v7594, %v7561
    %v7723 = vadd.f32 %v7595, %v7561
    %v7724 = vadd.f32 %v7596, %v7561
    %v7725 = vadd.f32 %v7597, %v7561
    %v7726 = vadd.f32 %v7598, %v7561
    %v7727 = vadd.f32 %v7599, %v7561
    %v7728 = vadd.f32 %v7600, %v7561
    %v7729 = vadd.f32 %v7601, %v7561
    %v7730 = vadd.f32 %v7602, %v7561
    %v7731 = vadd.f32 %v7603, %v7561
    %v7732 = vadd.f32 %v7604, %v7561
    %v7733 = vadd.f32 %v7605, %v7561
    %v7734 = vadd.f32 %v7606, %v7561
    %v7735 = vadd.f32 %v7607, %v7561
    %v7736 = vadd.f32 %v7608, %v7561
    %v7737 = vadd.f32 %v7609, %v7561
    %v7738 = vadd.f32 %v7610, %v7561
    %v7739 = vadd.f32 %v7611, %v7561
    %v7740 = vadd.f32 %v7612, %v7561
    %v7741 = vadd.f32 %v7613, %v7561
    %v7742 = vadd.f32 %v7614, %v7561
    %v7743 = vadd.f32 %v7615, %v7561
    %v7744 = vadd.f32 %v7616, %v7561
    %v7745 = vadd.f32 %v7617, %v7561
    %v7746 = vadd.f32 %v7618, %v7561
    %v7747 = vadd.f32 %v7619, %v7561
    %v7748 = vadd.f32 %v7620, %v7561
    %v7749 = vadd.f32 %v7621, %v7561
    %v7750 = vadd.f32 %v7622, %v7561
    %v7751 = vadd.f32 %v7623, %v7561
    %v7752 = vadd.f32 %v7624, %v7561
    %v7753 = vadd.f32 %v7625, %v7561
    %v7754 = vadd.f32 %v7626, %v7561
    %v7755 = vadd.f32 %v7627, %v7561
    %v7756 = vadd.f32 %v7628, %v7561
    %v7757 = vadd.f32 %v7629, %v7561
    %v7758 = vadd.f32 %v7630, %v7561
    %v7759 = vadd.f32 %v7631, %v7561
    %v7760 = vadd.f32 %v7632, %v7561
    %v7761 = vadd.f32 %v7633, %v7561
    %v7762 = vadd.f32 %v7634, %v7561
    %v7763 = vadd.f32 %v7635, %v7561
    %v7764 = vadd.f32 %v7636, %v7561
    %v7765 = vadd.f32 %v7637, %v7561
    %v7766 = vadd.f32 %v7638, %v7561
    %v7767 = vadd.f32 %v7639, %v7561
    %v7768 = vadd.f32 %v7640, %v7561
    %v7769 = vadd.f32 %v7641, %v7561
    %v7770 = vadd.f32 %v7642, %v7561
    %v7771 = vadd.f32 %v7643, %v7561
    %v7772 = vadd.f32 %v7644, %v7561
    %v7773 = vadd.f32 %v7645, %v7561
    %v7774 = vadd.f32 %v7646, %v7561
    %v7775 = vadd.f32 %v7647, %v7561
    %v7776 = vadd.f32 %v7648, %v7561
    %v7777 = vadd.f32 %v7649, %v7561
    %v7778 = vadd.f32 %v7650, %v7561
    %v7779 = vadd.f32 %v7651, %v7561
    %v7780 = vadd.f32 %v7652, %v7561
    %v7781 = vadd.f32 %v7653, %v7561
    %v7782 = vadd.f32 %v7654, %v7561
    %v7783 = vadd.f32 %v7655, %v7561
    %v7784 = vadd.f32 %v7656, %v7561
    %v7785 = vadd.f32 %v7657, %v7561
    %v7786 = vadd.f32 %v7658, %v7561
    %v7787 = vadd.f32 %v7659, %v7561
    %v7788 = vadd.f32 %v7660, %v7561
    %v7789 = vadd.f32 %v7661, %v7561
    %v7790 = vadd.f32 %v7662, %v7561
    %v7791 = vadd.f32 %v7663, %v7561
    %v7792 = vadd.f32 %v7664, %v7561
    %v7793 = vadd.f32 %v7665, %v7561
    %v7794 = vadd.f32 %v7666, %v7561
    %v7795 = vadd.f32 %v7667, %v7561
    %v7796 = vadd.f32 %v7668, %v7561
    %v7797 = vadd.f32 %v7669, %v7561
    %v7798 = vadd.f32 %v7670, %v7561
    %v7799 = vadd.f32 %v7671, %v7561
    %v7800 = vadd.f32 %v7672, %v7561
    %v7801 = vadd.f32 %v7673, %v7561
    %v7802 = vadd.f32 %v7674, %v7561
    %v7803 = vadd.f32 %v7675, %v7561
    %v7804 = vadd.f32 %v7676, %v7561
    %v7805 = vadd.f32 %v7677, %v7561
    %v7806 = vadd.f32 %v7678, %v7561
    %v7807 = vadd.f32 %v7679, %v7561
    %v7808 = vadd.f32 %v7680, %v7561
    %v7809 = vadd.f32 %v7681, %v7561
    %v7810 = vadd.f32 %v7682, %v7561
    %v7811 = vadd.f32 %v7683, %v7561
    %v7812 = vadd.f32 %v7684, %v7561
    %v7813 = vadd.f32 %v7685, %v7561
    %v7814 = vadd.f32 %v7686, %v7561
    %v7815 = vadd.f32 %v7687, %v7561
    %v7816 = vadd.f32 %v7688, %v7561
    %v7817 = vadd.f32 %v7689, %v7561
    %v7818 = vmax.f32 %v7690, 0.0
    %v7819 = vmax.f32 %v7691, 0.0
    %v7820 = vmax.f32 %v7692, 0.0
    %v7821 = vmax.f32 %v7693, 0.0
    %v7822 = vmax.f32 %v7694, 0.0
    %v7823 = vmax.f32 %v7695, 0.0
    %v7824 = vmax.f32 %v7696, 0.0
    %v7825 = vmax.f32 %v7697, 0.0
    %v7826 = vmax.f32 %v7698, 0.0
    %v7827 = vmax.f32 %v7699, 0.0
    %v7828 = vmax.f32 %v7700, 0.0
    %v7829 = vmax.f32 %v7701, 0.0
    %v7830 = vmax.f32 %v7702, 0.0
    %v7831 = vmax.f32 %v7703, 0.0
    %v7832 = vmax.f32 %v7704, 0.0
    %v7833 = vmax.f32 %v7705, 0.0
    %v7834 = vmax.f32 %v7706, 0.0
    %v7835 = vmax.f32 %v7707, 0.0
    %v7836 = vmax.f32 %v7708, 0.0
    %v7837 = vmax.f32 %v7709, 0.0
    %v7838 = vmax.f32 %v7710, 0.0
    %v7839 = vmax.f32 %v7711, 0.0
    %v7840 = vmax.f32 %v7712, 0.0
    %v7841 = vmax.f32 %v7713, 0.0
    %v7842 = vmax.f32 %v7714, 0.0
    %v7843 = vmax.f32 %v7715, 0.0
    %v7844 = vmax.f32 %v7716, 0.0
    %v7845 = vmax.f32 %v7717, 0.0
    %v7846 = vmax.f32 %v7718, 0.0
    %v7847 = vmax.f32 %v7719, 0.0
    %v7848 = vmax.f32 %v7720, 0.0
    %v7849 = vmax.f32 %v7721, 0.0
    %v7850 = vmax.f32 %v7722, 0.0
    %v7851 = vmax.f32 %v7723, 0.0
    %v7852 = vmax.f32 %v7724, 0.0
    %v7853 = vmax.f32 %v7725, 0.0
    %v7854 = vmax.f32 %v7726, 0.0
    %v7855 = vmax.f32 %v7727, 0.0
    %v7856 = vmax.f32 %v7728, 0.0
    %v7857 = vmax.f32 %v7729, 0.0
    %v7858 = vmax.f32 %v7730, 0.0
    %v7859 = vmax.f32 %v7731, 0.0
    %v7860 = vmax.f32 %v7732, 0.0
    %v7861 = vmax.f32 %v7733, 0.0
    %v7862 = vmax.f32 %v7734, 0.0
    %v7863 = vmax.f32 %v7735, 0.0
    %v7864 = vmax.f32 %v7736, 0.0
    %v7865 = vmax.f32 %v7737, 0.0
    %v7866 = vmax.f32 %v7738, 0.0
    %v7867 = vmax.f32 %v7739, 0.0
    %v7868 = vmax.f32 %v7740, 0.0
    %v7869 = vmax.f32 %v7741, 0.0
    %v7870 = vmax.f32 %v7742, 0.0
    %v7871 = vmax.f32 %v7743, 0.0
    %v7872 = vmax.f32 %v7744, 0.0
    %v7873 = vmax.f32 %v7745, 0.0
    %v7874 = vmax.f32 %v7746, 0.0
    %v7875 = vmax.f32 %v7747, 0.0
    %v7876 = vmax.f32 %v7748, 0.0
    %v7877 = vmax.f32 %v7749, 0.0
    %v7878 = vmax.f32 %v7750, 0.0
    %v7879 = vmax.f32 %v7751, 0.0
    %v7880 = vmax.f32 %v7752, 0.0
    %v7881 = vmax.f32 %v7753, 0.0
    %v7882 = vmax.f32 %v7754, 0.0
    %v7883 = vmax.f32 %v7755, 0.0
    %v7884 = vmax.f32 %v7756, 0.0
    %v7885 = vmax.f32 %v7757, 0.0
    %v7886 = vmax.f32 %v7758, 0.0
    %v7887 = vmax.f32 %v7759, 0.0
    %v7888 = vmax.f32 %v7760, 0.0
    %v7889 = vmax.f32 %v7761, 0.0
    %v7890 = vmax.f32 %v7762, 0.0
    %v7891 = vmax.f32 %v7763, 0.0
    %v7892 = vmax.f32 %v7764, 0.0
    %v7893 = vmax.f32 %v7765, 0.0
    %v7894 = vmax.f32 %v7766, 0.0
    %v7895 = vmax.f32 %v7767, 0.0
    %v7896 = vmax.f32 %v7768, 0.0
    %v7897 = vmax.f32 %v7769, 0.0
    %v7898 = vmax.f32 %v7770, 0.0
    %v7899 = vmax.f32 %v7771, 0.0
    %v7900 = vmax.f32 %v7772, 0.0
    %v7901 = vmax.f32 %v7773, 0.0
    %v7902 = vmax.f32 %v7774, 0.0
    %v7903 = vmax.f32 %v7775, 0.0
    %v7904 = vmax.f32 %v7776, 0.0
    %v7905 = vmax.f32 %v7777, 0.0
    %v7906 = vmax.f32 %v7778, 0.0
    %v7907 = vmax.f32 %v7779, 0.0
    %v7908 = vmax.f32 %v7780, 0.0
    %v7909 = vmax.f32 %v7781, 0.0
    %v7910 = vmax.f32 %v7782, 0.0
    %v7911 = vmax.f32 %v7783, 0.0
    %v7912 = vmax.f32 %v7784, 0.0
    %v7913 = vmax.f32 %v7785, 0.0
    %v7914 = vmax.f32 %v7786, 0.0
    %v7915 = vmax.f32 %v7787, 0.0
    %v7916 = vmax.f32 %v7788, 0.0
    %v7917 = vmax.f32 %v7789, 0.0
    %v7918 = vmax.f32 %v7790, 0.0
    %v7919 = vmax.f32 %v7791, 0.0
    %v7920 = vmax.f32 %v7792, 0.0
    %v7921 = vmax.f32 %v7793, 0.0
    %v7922 = vmax.f32 %v7794, 0.0
    %v7923 = vmax.f32 %v7795, 0.0
    %v7924 = vmax.f32 %v7796, 0.0
    %v7925 = vmax.f32 %v7797, 0.0
    %v7926 = vmax.f32 %v7798, 0.0
    %v7927 = vmax.f32 %v7799, 0.0
    %v7928 = vmax.f32 %v7800, 0.0
    %v7929 = vmax.f32 %v7801, 0.0
    %v7930 = vmax.f32 %v7802, 0.0
    %v7931 = vmax.f32 %v7803, 0.0
    %v7932 = vmax.f32 %v7804, 0.0
    %v7933 = vmax.f32 %v7805, 0.0
    %v7934 = vmax.f32 %v7806, 0.0
    %v7935 = vmax.f32 %v7807, 0.0
    %v7936 = vmax.f32 %v7808, 0.0
    %v7937 = vmax.f32 %v7809, 0.0
    %v7938 = vmax.f32 %v7810, 0.0
    %v7939 = vmax.f32 %v7811, 0.0
    %v7940 = vmax.f32 %v7812, 0.0
    %v7941 = vmax.f32 %v7813, 0.0
    %v7942 = vmax.f32 %v7814, 0.0
    %v7943 = vmax.f32 %v7815, 0.0
    %v7944 = vmax.f32 %v7816, 0.0
    %v7945 = vmax.f32 %v7817, 0.0
    %s7946 = scalar_lea.vmem [#allocation7], 256
    %v7947 = vld [vmem:[%s7946] sm:$0xf]
    %v7948 = vld [vmem:[%s7946 + $0x4] sm:$0xf]
    %v7949 = vld [vmem:[%s7946 + $0x8] sm:$0xf]
    %v7950 = vld [vmem:[%s7946 + $0xc] sm:$0xf]
    %v7951 = vld [vmem:[%s7946 + $0x10] sm:$0xf]
    %v7952 = vld [vmem:[%s7946 + $0x14] sm:$0xf]
    %v7953 = vld [vmem:[%s7946 + $0x18] sm:$0xf]
    %v7954 = vld [vmem:[%s7946 + $0x1c] sm:$0xf]
    %v7955 = vld [vmem:[%s7946 + $0x20] sm:$0xf]
    %v7956 = vld [vmem:[%s7946 + $0x24] sm:$0xf]
    %v7957 = vld [vmem:[%s7946 + $0x28] sm:$0xf]
    %v7958 = vld [vmem:[%s7946 + $0x2c] sm:$0xf]
    %v7959 = vld [vmem:[%s7946 + $0x30] sm:$0xf]
    %v7960 = vld [vmem:[%s7946 + $0x34] sm:$0xf]
    %v7961 = vld [vmem:[%s7946 + $0x38] sm:$0xf]
    %v7962 = vld [vmem:[%s7946 + $0x3c] sm:$0xf]
    %v7963 = vld [vmem:[#allocation10 + $0x11] ss:$0 sm:$0xff]
    %v7964 = vld [vmem:[#allocation10 + $0x12] ss:$0 sm:$0xff]
    %v7965 = vpack.c.bf16 %v7819, %v7818
    %v7966 = vpack.c.bf16 %v7821, %v7820
    %v7967 = vpack.c.bf16 %v7823, %v7822
    %v7968 = vpack.c.bf16 %v7825, %v7824
    %v7969 = vpack.c.bf16 %v7827, %v7826
    %v7970 = vpack.c.bf16 %v7829, %v7828
    %v7971 = vpack.c.bf16 %v7831, %v7830
    %v7972 = vpack.c.bf16 %v7833, %v7832
    %v7973 = vpack.c.bf16 %v7835, %v7834
    %v7974 = vpack.c.bf16 %v7837, %v7836
    %v7975 = vpack.c.bf16 %v7839, %v7838
    %v7976 = vpack.c.bf16 %v7841, %v7840
    %v7977 = vpack.c.bf16 %v7843, %v7842
    %v7978 = vpack.c.bf16 %v7845, %v7844
    %v7979 = vpack.c.bf16 %v7847, %v7846
    %v7980 = vpack.c.bf16 %v7849, %v7848
    %v7981 = vpack.c.bf16 %v7851, %v7850
    %v7982 = vpack.c.bf16 %v7853, %v7852
    %v7983 = vpack.c.bf16 %v7855, %v7854
    %v7984 = vpack.c.bf16 %v7857, %v7856
    %v7985 = vpack.c.bf16 %v7859, %v7858
    %v7986 = vpack.c.bf16 %v7861, %v7860
    %v7987 = vpack.c.bf16 %v7863, %v7862
    %v7988 = vpack.c.bf16 %v7865, %v7864
    %v7989 = vpack.c.bf16 %v7867, %v7866
    %v7990 = vpack.c.bf16 %v7869, %v7868
    %v7991 = vpack.c.bf16 %v7871, %v7870
    %v7992 = vpack.c.bf16 %v7873, %v7872
    %v7993 = vpack.c.bf16 %v7875, %v7874
    %v7994 = vpack.c.bf16 %v7877, %v7876
    %v7995 = vpack.c.bf16 %v7879, %v7878
    %v7996 = vpack.c.bf16 %v7881, %v7880
    %v7997 = vpack.c.bf16 %v7883, %v7882
    %v7998 = vpack.c.bf16 %v7885, %v7884
    %v7999 = vpack.c.bf16 %v7887, %v7886
    %v8000 = vpack.c.bf16 %v7889, %v7888
    %v8001 = vpack.c.bf16 %v7891, %v7890
    %v8002 = vpack.c.bf16 %v7893, %v7892
    %v8003 = vpack.c.bf16 %v7895, %v7894
    %v8004 = vpack.c.bf16 %v7897, %v7896
    %v8005 = vpack.c.bf16 %v7899, %v7898
    %v8006 = vpack.c.bf16 %v7901, %v7900
    %v8007 = vpack.c.bf16 %v7903, %v7902
    %v8008 = vpack.c.bf16 %v7905, %v7904
    %v8009 = vpack.c.bf16 %v7907, %v7906
    %v8010 = vpack.c.bf16 %v7909, %v7908
    %v8011 = vpack.c.bf16 %v7911, %v7910
    %v8012 = vpack.c.bf16 %v7913, %v7912
    %v8013 = vpack.c.bf16 %v7915, %v7914
    %v8014 = vpack.c.bf16 %v7917, %v7916
    %v8015 = vpack.c.bf16 %v7919, %v7918
    %v8016 = vpack.c.bf16 %v7921, %v7920
    %v8017 = vpack.c.bf16 %v7923, %v7922
    %v8018 = vpack.c.bf16 %v7925, %v7924
    %v8019 = vpack.c.bf16 %v7927, %v7926
    %v8020 = vpack.c.bf16 %v7929, %v7928
    %v8021 = vpack.c.bf16 %v7931, %v7930
    %v8022 = vpack.c.bf16 %v7933, %v7932
    %v8023 = vpack.c.bf16 %v7935, %v7934
    %v8024 = vpack.c.bf16 %v7937, %v7936
    %v8025 = vpack.c.bf16 %v7939, %v7938
    %v8026 = vpack.c.bf16 %v7941, %v7940
    %v8027 = vpack.c.bf16 %v7943, %v7942
    %v8028 = vpack.c.bf16 %v7945, %v7944
    %v8045 = vunpack.c.l.b16 %v7947
    %v8046 = vunpack.c.l.b16 %v7948
    %v8047 = vunpack.c.l.b16 %v7949
    %v8048 = vunpack.c.l.b16 %v7950
    %v8049 = vunpack.c.l.b16 %v7951
    %v8050 = vunpack.c.l.b16 %v7952
    %v8051 = vunpack.c.l.b16 %v7953
    %v8052 = vunpack.c.l.b16 %v7954
    %v8053 = vunpack.c.l.b16 %v7955
    %v8054 = vunpack.c.l.b16 %v7956
    %v8055 = vunpack.c.l.b16 %v7957
    %v8056 = vunpack.c.l.b16 %v7958
    %v8057 = vunpack.c.l.b16 %v7959
    %v8058 = vunpack.c.l.b16 %v7960
    %v8059 = vunpack.c.l.b16 %v7961
    %v8060 = vunpack.c.l.b16 %v7962
    %v8061 = vpack.c.b16 %v8046, %v8045
    %v8062 = vpack.c.b16 %v8048, %v8047
    %v8063 = vpack.c.b16 %v8050, %v8049
    %v8064 = vpack.c.b16 %v8052, %v8051
    %v8065 = vpack.c.b16 %v8054, %v8053
    %v8066 = vpack.c.b16 %v8056, %v8055
    %v8067 = vpack.c.b16 %v8058, %v8057
    %v8068 = vpack.c.b16 %v8060, %v8059
    %8077 = vmatprep.subr.bf16.mxu0 0
    %8078 = vmatpush1.bf16.msra.mxu0 %v8061
    %8079 = vmatprep.subr.bf16.mxu0 0
    %8080 = vmatpush1.bf16.msra.mxu0 %v8062
    %8081 = vmatprep.subr.bf16.mxu0 0
    %8082 = vmatpush1.bf16.msra.mxu0 %v8063
    %8083 = vmatprep.subr.bf16.mxu0 0
    %8084 = vmatpush1.bf16.msra.mxu0 %v8064
    %8085 = vmatprep.subr.bf16.mxu0 0
    %8086 = vmatpush1.bf16.msra.mxu0 %v8065
    %8087 = vmatprep.subr.bf16.mxu0 0
    %8088 = vmatpush1.bf16.msra.mxu0 %v8066
    %8089 = vmatprep.subr.bf16.mxu0 0
    %8090 = vmatpush1.bf16.msra.mxu0 %v8067
    %8091 = vmatprep.subr.bf16.mxu0 0
    %8092 = vmatpush1.bf16.msra.mxu0 %v8068
    %8093 = vmatprep.subr.bf16.mxu0 0
    %8094 = vmatpush1.bf16.msra.mxu0 0
    %8095 = vmatprep.subr.bf16.mxu0 0
    %8096 = vmatpush1.bf16.msra.mxu0 0
    %8097 = vmatprep.subr.bf16.mxu0 0
    %8098 = vmatpush1.bf16.msra.mxu0 0
    %8099 = vmatprep.subr.bf16.mxu0 0
    %8100 = vmatpush1.bf16.msra.mxu0 0
    %8101 = vmatprep.subr.bf16.mxu0 0
    %8102 = vmatpush1.bf16.msra.mxu0 0
    %8103 = vmatprep.subr.bf16.mxu0 0
    %8104 = vmatpush1.bf16.msra.mxu0 0
    %8105 = vmatprep.subr.bf16.mxu0 0
    %8106 = vmatpush1.bf16.msra.mxu0 0
    %8107 = vmatprep.subr.bf16.mxu0 0
    %8108 = vmatpush1.bf16.msra.mxu0 0
    %8109 = vmatprep.mubr.bf16.mxu0 0
    %8110 = vmatmul.mubr.bf16.gmra.mrb[0].mxu0 %v7965
    %v8111 = vpop.f32.mrb[0].mxu0
    %v8112 = vadd.f32 0.0, %v8111
    %v8113 = vpop.f32.mrb[0].mxu0
    %v8114 = vpop.f32.mrb[0].mxu0
    %v8115 = vadd.f32 0.0, %v8114
    %v8116 = vpop.f32.mrb[0].mxu0
    %8117 = vmatprep.mubr.bf16.mxu0 0
    %8118 = vmatmul.mubr.bf16.gmra.mrb[0].mxu0 %v7966
    %v8119 = vpop.f32.mrb[0].mxu0
    %v8120 = vadd.f32 0.0, %v8119
    %v8121 = vpop.f32.mrb[0].mxu0
    %v8122 = vpop.f32.mrb[0].mxu0
    %v8123 = vadd.f32 0.0, %v8122
    %v8124 = vpop.f32.mrb[0].mxu0
    %8125 = vmatprep.mubr.bf16.mxu0 0
    %8126 = vmatmul.mubr.bf16.gmra.mrb[0].mxu0 %v7967
    %v8127 = vpop.f32.mrb[0].mxu0
    %v8128 = vadd.f32 0.0, %v8127
    %v8129 = vpop.f32.mrb[0].mxu0
    %v8130 = vpop.f32.mrb[0].mxu0
    %v8131 = vadd.f32 0.0, %v8130
    %v8132 = vpop.f32.mrb[0].mxu0
    %8133 = vmatprep.mubr.bf16.mxu0 0
    %8134 = vmatmul.mubr.bf16.gmra.mrb[0].mxu0 %v7968
    %v8135 = vpop.f32.mrb[0].mxu0
    %v8136 = vadd.f32 0.0, %v8135
    %v8137 = vpop.f32.mrb[0].mxu0
    %v8138 = vpop.f32.mrb[0].mxu0
    %v8139 = vadd.f32 0.0, %v8138
    %v8140 = vpop.f32.mrb[0].mxu0
    %8141 = vmatprep.mubr.bf16.mxu0 0
    %8142 = vmatmul.mubr.bf16.gmra.mrb[0].mxu0 %v7969
    %v8143 = vpop.f32.mrb[0].mxu0
    %v8144 = vadd.f32 0.0, %v8143
    %v8145 = vpop.f32.mrb[0].mxu0
    %v8146 = vpop.f32.mrb[0].mxu0
    %v8147 = vadd.f32 0.0, %v8146
    %v8148 = vpop.f32.mrb[0].mxu0
    %8149 = vmatprep.mubr.bf16.mxu0 0
    %8150 = vmatmul.mubr.bf16.gmra.mrb[0].mxu0 %v7970
    %v8151 = vpop.f32.mrb[0].mxu0
    %v8152 = vadd.f32 0.0, %v8151
    %v8153 = vpop.f32.mrb[0].mxu0
    %v8154 = vpop.f32.mrb[0].mxu0
    %v8155 = vadd.f32 0.0, %v8154
    %v8156 = vpop.f32.mrb[0].mxu0
    %8157 = vmatprep.mubr.bf16.mxu0 0
    %8158 = vmatmul.mubr.bf16.gmra.mrb[0].mxu0 %v7971
    %v8159 = vpop.f32.mrb[0].mxu0
    %v8160 = vadd.f32 0.0, %v8159
    %v8161 = vpop.f32.mrb[0].mxu0
    %v8162 = vpop.f32.mrb[0].mxu0
    %v8163 = vadd.f32 0.0, %v8162
    %v8164 = vpop.f32.mrb[0].mxu0
    %8165 = vmatprep.mubr.bf16.mxu0 0
    %8166 = vmatmul.mubr.bf16.gmra.mrb[0].mxu0 %v7972
    %v8167 = vpop.f32.mrb[0].mxu0
    %v8168 = vadd.f32 0.0, %v8167
    %v8169 = vpop.f32.mrb[0].mxu0
    %v8170 = vpop.f32.mrb[0].mxu0
    %v8171 = vadd.f32 0.0, %v8170
    %v8172 = vpop.f32.mrb[0].mxu0
    %8173 = vmatprep.mubr.bf16.mxu0 0
    %8174 = vmatmul.mubr.bf16.gmra.mrb[0].mxu0 %v7973
    %v8175 = vpop.f32.mrb[0].mxu0
    %v8176 = vadd.f32 0.0, %v8175
    %v8177 = vpop.f32.mrb[0].mxu0
    %v8178 = vpop.f32.mrb[0].mxu0
    %v8179 = vadd.f32 0.0, %v8178
    %v8180 = vpop.f32.mrb[0].mxu0
    %8181 = vmatprep.mubr.bf16.mxu0 0
    %8182 = vmatmul.mubr.bf16.gmra.mrb[0].mxu0 %v7974
    %v8183 = vpop.f32.mrb[0].mxu0
    %v8184 = vadd.f32 0.0, %v8183
    %v8185 = vpop.f32.mrb[0].mxu0
    %v8186 = vpop.f32.mrb[0].mxu0
    %v8187 = vadd.f32 0.0, %v8186
    %v8188 = vpop.f32.mrb[0].mxu0
    %8189 = vmatprep.mubr.bf16.mxu0 0
    %8190 = vmatmul.mubr.bf16.gmra.mrb[0].mxu0 %v7975
    %v8191 = vpop.f32.mrb[0].mxu0
    %v8192 = vadd.f32 0.0, %v8191
    %v8193 = vpop.f32.mrb[0].mxu0
    %v8194 = vpop.f32.mrb[0].mxu0
    %v8195 = vadd.f32 0.0, %v8194
    %v8196 = vpop.f32.mrb[0].mxu0
    %8197 = vmatprep.mubr.bf16.mxu0 0
    %8198 = vmatmul.mubr.bf16.gmra.mrb[0].mxu0 %v7976
    %v8199 = vpop.f32.mrb[0].mxu0
    %v8200 = vadd.f32 0.0, %v8199
    %v8201 = vpop.f32.mrb[0].mxu0
    %v8202 = vpop.f32.mrb[0].mxu0
    %v8203 = vadd.f32 0.0, %v8202
    %v8204 = vpop.f32.mrb[0].mxu0
    %8205 = vmatprep.mubr.bf16.mxu0 0
    %8206 = vmatmul.mubr.bf16.gmra.mrb[0].mxu0 %v7977
    %v8207 = vpop.f32.mrb[0].mxu0
    %v8208 = vadd.f32 0.0, %v8207
    %v8209 = vpop.f32.mrb[0].mxu0
    %v8210 = vpop.f32.mrb[0].mxu0
    %v8211 = vadd.f32 0.0, %v8210
    %v8212 = vpop.f32.mrb[0].mxu0
    %8213 = vmatprep.mubr.bf16.mxu0 0
    %8214 = vmatmul.mubr.bf16.gmra.mrb[0].mxu0 %v7978
    %v8215 = vpop.f32.mrb[0].mxu0
    %v8216 = vadd.f32 0.0, %v8215
    %v8217 = vpop.f32.mrb[0].mxu0
    %v8218 = vpop.f32.mrb[0].mxu0
    %v8219 = vadd.f32 0.0, %v8218
    %v8220 = vpop.f32.mrb[0].mxu0
    %8221 = vmatprep.mubr.bf16.mxu0 0
    %8222 = vmatmul.mubr.bf16.gmra.mrb[0].mxu0 %v7979
    %v8223 = vpop.f32.mrb[0].mxu0
    %v8224 = vadd.f32 0.0, %v8223
    %v8225 = vpop.f32.mrb[0].mxu0
    %v8226 = vpop.f32.mrb[0].mxu0
    %v8227 = vadd.f32 0.0, %v8226
    %v8228 = vpop.f32.mrb[0].mxu0
    %8229 = vmatprep.mubr.bf16.mxu0 0
    %8230 = vmatmul.mubr.bf16.gmra.mrb[0].mxu0 %v7980
    %v8231 = vpop.f32.mrb[0].mxu0
    %v8232 = vadd.f32 0.0, %v8231
    %v8233 = vpop.f32.mrb[0].mxu0
    %v8234 = vpop.f32.mrb[0].mxu0
    %v8235 = vadd.f32 0.0, %v8234
    %v8236 = vpop.f32.mrb[0].mxu0
    %8237 = vmatprep.mubr.bf16.mxu0 0
    %8238 = vmatmul.mubr.bf16.gmra.mrb[0].mxu0 %v7981
    %v8239 = vpop.f32.mrb[0].mxu0
    %v8240 = vadd.f32 0.0, %v8239
    %v8241 = vpop.f32.mrb[0].mxu0
    %v8242 = vpop.f32.mrb[0].mxu0
    %v8243 = vadd.f32 0.0, %v8242
    %v8244 = vpop.f32.mrb[0].mxu0
    %8245 = vmatprep.mubr.bf16.mxu0 0
    %8246 = vmatmul.mubr.bf16.gmra.mrb[0].mxu0 %v7982
    %v8247 = vpop.f32.mrb[0].mxu0
    %v8248 = vadd.f32 0.0, %v8247
    %v8249 = vpop.f32.mrb[0].mxu0
    %v8250 = vpop.f32.mrb[0].mxu0
    %v8251 = vadd.f32 0.0, %v8250
    %v8252 = vpop.f32.mrb[0].mxu0
    %8253 = vmatprep.mubr.bf16.mxu0 0
    %8254 = vmatmul.mubr.bf16.gmra.mrb[0].mxu0 %v7983
    %v8255 = vpop.f32.mrb[0].mxu0
    %v8256 = vadd.f32 0.0, %v8255
    %v8257 = vpop.f32.mrb[0].mxu0
    %v8258 = vpop.f32.mrb[0].mxu0
    %v8259 = vadd.f32 0.0, %v8258
    %v8260 = vpop.f32.mrb[0].mxu0
    %8261 = vmatprep.mubr.bf16.mxu0 0
    %8262 = vmatmul.mubr.bf16.gmra.mrb[0].mxu0 %v7984
    %v8263 = vpop.f32.mrb[0].mxu0
    %v8264 = vadd.f32 0.0, %v8263
    %v8265 = vpop.f32.mrb[0].mxu0
    %v8266 = vpop.f32.mrb[0].mxu0
    %v8267 = vadd.f32 0.0, %v8266
    %v8268 = vpop.f32.mrb[0].mxu0
    %8269 = vmatprep.mubr.bf16.mxu0 0
    %8270 = vmatmul.mubr.bf16.gmra.mrb[0].mxu0 %v7985
    %v8271 = vpop.f32.mrb[0].mxu0
    %v8272 = vadd.f32 0.0, %v8271
    %v8273 = vpop.f32.mrb[0].mxu0
    %v8274 = vpop.f32.mrb[0].mxu0
    %v8275 = vadd.f32 0.0, %v8274
    %v8276 = vpop.f32.mrb[0].mxu0
    %8277 = vmatprep.mubr.bf16.mxu0 0
    %8278 = vmatmul.mubr.bf16.gmra.mrb[0].mxu0 %v7986
    %v8279 = vpop.f32.mrb[0].mxu0
    %v8280 = vadd.f32 0.0, %v8279
    %v8281 = vpop.f32.mrb[0].mxu0
    %v8282 = vpop.f32.mrb[0].mxu0
    %v8283 = vadd.f32 0.0, %v8282
    %v8284 = vpop.f32.mrb[0].mxu0
    %8285 = vmatprep.mubr.bf16.mxu0 0
    %8286 = vmatmul.mubr.bf16.gmra.mrb[0].mxu0 %v7987
    %v8287 = vpop.f32.mrb[0].mxu0
    %v8288 = vadd.f32 0.0, %v8287
    %v8289 = vpop.f32.mrb[0].mxu0
    %v8290 = vpop.f32.mrb[0].mxu0
    %v8291 = vadd.f32 0.0, %v8290
    %v8292 = vpop.f32.mrb[0].mxu0
    %8293 = vmatprep.mubr.bf16.mxu0 0
    %8294 = vmatmul.mubr.bf16.gmra.mrb[0].mxu0 %v7988
    %v8295 = vpop.f32.mrb[0].mxu0
    %v8296 = vadd.f32 0.0, %v8295
    %v8297 = vpop.f32.mrb[0].mxu0
    %v8298 = vpop.f32.mrb[0].mxu0
    %v8299 = vadd.f32 0.0, %v8298
    %v8300 = vpop.f32.mrb[0].mxu0
    %8301 = vmatprep.mubr.bf16.mxu0 0
    %8302 = vmatmul.mubr.bf16.gmra.mrb[0].mxu0 %v7989
    %v8303 = vpop.f32.mrb[0].mxu0
    %v8304 = vadd.f32 0.0, %v8303
    %v8305 = vpop.f32.mrb[0].mxu0
    %v8306 = vpop.f32.mrb[0].mxu0
    %v8307 = vadd.f32 0.0, %v8306
    %v8308 = vpop.f32.mrb[0].mxu0
    %8309 = vmatprep.mubr.bf16.mxu0 0
    %8310 = vmatmul.mubr.bf16.gmra.mrb[0].mxu0 %v7990
    %v8311 = vpop.f32.mrb[0].mxu0
    %v8312 = vadd.f32 0.0, %v8311
    %v8313 = vpop.f32.mrb[0].mxu0
    %v8314 = vpop.f32.mrb[0].mxu0
    %v8315 = vadd.f32 0.0, %v8314
    %v8316 = vpop.f32.mrb[0].mxu0
    %8317 = vmatprep.mubr.bf16.mxu0 0
    %8318 = vmatmul.mubr.bf16.gmra.mrb[0].mxu0 %v7991
    %v8319 = vpop.f32.mrb[0].mxu0
    %v8320 = vadd.f32 0.0, %v8319
    %v8321 = vpop.f32.mrb[0].mxu0
    %v8322 = vpop.f32.mrb[0].mxu0
    %v8323 = vadd.f32 0.0, %v8322
    %v8324 = vpop.f32.mrb[0].mxu0
    %8325 = vmatprep.mubr.bf16.mxu0 0
    %8326 = vmatmul.mubr.bf16.gmra.mrb[0].mxu0 %v7992
    %v8327 = vpop.f32.mrb[0].mxu0
    %v8328 = vadd.f32 0.0, %v8327
    %v8329 = vpop.f32.mrb[0].mxu0
    %v8330 = vpop.f32.mrb[0].mxu0
    %v8331 = vadd.f32 0.0, %v8330
    %v8332 = vpop.f32.mrb[0].mxu0
    %8333 = vmatprep.mubr.bf16.mxu0 0
    %8334 = vmatmul.mubr.bf16.gmra.mrb[0].mxu0 %v7993
    %v8335 = vpop.f32.mrb[0].mxu0
    %v8336 = vadd.f32 0.0, %v8335
    %v8337 = vpop.f32.mrb[0].mxu0
    %v8338 = vpop.f32.mrb[0].mxu0
    %v8339 = vadd.f32 0.0, %v8338
    %v8340 = vpop.f32.mrb[0].mxu0
    %8341 = vmatprep.mubr.bf16.mxu0 0
    %8342 = vmatmul.mubr.bf16.gmra.mrb[0].mxu0 %v7994
    %v8343 = vpop.f32.mrb[0].mxu0
    %v8344 = vadd.f32 0.0, %v8343
    %v8345 = vpop.f32.mrb[0].mxu0
    %v8346 = vpop.f32.mrb[0].mxu0
    %v8347 = vadd.f32 0.0, %v8346
    %v8348 = vpop.f32.mrb[0].mxu0
    %8349 = vmatprep.mubr.bf16.mxu0 0
    %8350 = vmatmul.mubr.bf16.gmra.mrb[0].mxu0 %v7995
    %v8351 = vpop.f32.mrb[0].mxu0
    %v8352 = vadd.f32 0.0, %v8351
    %v8353 = vpop.f32.mrb[0].mxu0
    %v8354 = vpop.f32.mrb[0].mxu0
    %v8355 = vadd.f32 0.0, %v8354
    %v8356 = vpop.f32.mrb[0].mxu0
    %8357 = vmatprep.mubr.bf16.mxu0 0
    %8358 = vmatmul.mubr.bf16.gmra.mrb[0].mxu0 %v7996
    %v8359 = vpop.f32.mrb[0].mxu0
    %v8360 = vadd.f32 0.0, %v8359
    %v8361 = vpop.f32.mrb[0].mxu0
    %v8362 = vpop.f32.mrb[0].mxu0
    %v8363 = vadd.f32 0.0, %v8362
    %v8364 = vpop.f32.mrb[0].mxu0
    %8365 = vmatprep.mubr.bf16.mxu0 0
    %8366 = vmatmul.mubr.bf16.gmra.mrb[0].mxu0 %v7997
    %v8367 = vpop.f32.mrb[0].mxu0
    %v8368 = vadd.f32 0.0, %v8367
    %v8369 = vpop.f32.mrb[0].mxu0
    %v8370 = vpop.f32.mrb[0].mxu0
    %v8371 = vadd.f32 0.0, %v8370
    %v8372 = vpop.f32.mrb[0].mxu0
    %8373 = vmatprep.mubr.bf16.mxu0 0
    %8374 = vmatmul.mubr.bf16.gmra.mrb[0].mxu0 %v7998
    %v8375 = vpop.f32.mrb[0].mxu0
    %v8376 = vadd.f32 0.0, %v8375
    %v8377 = vpop.f32.mrb[0].mxu0
    %v8378 = vpop.f32.mrb[0].mxu0
    %v8379 = vadd.f32 0.0, %v8378
    %v8380 = vpop.f32.mrb[0].mxu0
    %8381 = vmatprep.mubr.bf16.mxu0 0
    %8382 = vmatmul.mubr.bf16.gmra.mrb[0].mxu0 %v7999
    %v8383 = vpop.f32.mrb[0].mxu0
    %v8384 = vadd.f32 0.0, %v8383
    %v8385 = vpop.f32.mrb[0].mxu0
    %v8386 = vpop.f32.mrb[0].mxu0
    %v8387 = vadd.f32 0.0, %v8386
    %v8388 = vpop.f32.mrb[0].mxu0
    %8389 = vmatprep.mubr.bf16.mxu0 0
    %8390 = vmatmul.mubr.bf16.gmra.mrb[0].mxu0 %v8000
    %v8391 = vpop.f32.mrb[0].mxu0
    %v8392 = vadd.f32 0.0, %v8391
    %v8393 = vpop.f32.mrb[0].mxu0
    %v8394 = vpop.f32.mrb[0].mxu0
    %v8395 = vadd.f32 0.0, %v8394
    %v8396 = vpop.f32.mrb[0].mxu0
    %8397 = vmatprep.mubr.bf16.mxu0 0
    %8398 = vmatmul.mubr.bf16.gmra.mrb[0].mxu0 %v8001
    %v8399 = vpop.f32.mrb[0].mxu0
    %v8400 = vadd.f32 0.0, %v8399
    %v8401 = vpop.f32.mrb[0].mxu0
    %v8402 = vpop.f32.mrb[0].mxu0
    %v8403 = vadd.f32 0.0, %v8402
    %v8404 = vpop.f32.mrb[0].mxu0
    %8405 = vmatprep.mubr.bf16.mxu0 0
    %8406 = vmatmul.mubr.bf16.gmra.mrb[0].mxu0 %v8002
    %v8407 = vpop.f32.mrb[0].mxu0
    %v8408 = vadd.f32 0.0, %v8407
    %v8409 = vpop.f32.mrb[0].mxu0
    %v8410 = vpop.f32.mrb[0].mxu0
    %v8411 = vadd.f32 0.0, %v8410
    %v8412 = vpop.f32.mrb[0].mxu0
    %8413 = vmatprep.mubr.bf16.mxu0 0
    %8414 = vmatmul.mubr.bf16.gmra.mrb[0].mxu0 %v8003
    %v8415 = vpop.f32.mrb[0].mxu0
    %v8416 = vadd.f32 0.0, %v8415
    %v8417 = vpop.f32.mrb[0].mxu0
    %v8418 = vpop.f32.mrb[0].mxu0
    %v8419 = vadd.f32 0.0, %v8418
    %v8420 = vpop.f32.mrb[0].mxu0
    %8421 = vmatprep.mubr.bf16.mxu0 0
    %8422 = vmatmul.mubr.bf16.gmra.mrb[0].mxu0 %v8004
    %v8423 = vpop.f32.mrb[0].mxu0
    %v8424 = vadd.f32 0.0, %v8423
    %v8425 = vpop.f32.mrb[0].mxu0
    %v8426 = vpop.f32.mrb[0].mxu0
    %v8427 = vadd.f32 0.0, %v8426
    %v8428 = vpop.f32.mrb[0].mxu0
    %8429 = vmatprep.mubr.bf16.mxu0 0
    %8430 = vmatmul.mubr.bf16.gmra.mrb[0].mxu0 %v8005
    %v8431 = vpop.f32.mrb[0].mxu0
    %v8432 = vadd.f32 0.0, %v8431
    %v8433 = vpop.f32.mrb[0].mxu0
    %v8434 = vpop.f32.mrb[0].mxu0
    %v8435 = vadd.f32 0.0, %v8434
    %v8436 = vpop.f32.mrb[0].mxu0
    %8437 = vmatprep.mubr.bf16.mxu0 0
    %8438 = vmatmul.mubr.bf16.gmra.mrb[0].mxu0 %v8006
    %v8439 = vpop.f32.mrb[0].mxu0
    %v8440 = vadd.f32 0.0, %v8439
    %v8441 = vpop.f32.mrb[0].mxu0
    %v8442 = vpop.f32.mrb[0].mxu0
    %v8443 = vadd.f32 0.0, %v8442
    %v8444 = vpop.f32.mrb[0].mxu0
    %8445 = vmatprep.mubr.bf16.mxu0 0
    %8446 = vmatmul.mubr.bf16.gmra.mrb[0].mxu0 %v8007
    %v8447 = vpop.f32.mrb[0].mxu0
    %v8448 = vadd.f32 0.0, %v8447
    %v8449 = vpop.f32.mrb[0].mxu0
    %v8450 = vpop.f32.mrb[0].mxu0
    %v8451 = vadd.f32 0.0, %v8450
    %v8452 = vpop.f32.mrb[0].mxu0
    %8453 = vmatprep.mubr.bf16.mxu0 0
    %8454 = vmatmul.mubr.bf16.gmra.mrb[0].mxu0 %v8008
    %v8455 = vpop.f32.mrb[0].mxu0
    %v8456 = vadd.f32 0.0, %v8455
    %v8457 = vpop.f32.mrb[0].mxu0
    %v8458 = vpop.f32.mrb[0].mxu0
    %v8459 = vadd.f32 0.0, %v8458
    %v8460 = vpop.f32.mrb[0].mxu0
    %8461 = vmatprep.mubr.bf16.mxu0 0
    %8462 = vmatmul.mubr.bf16.gmra.mrb[0].mxu0 %v8009
    %v8463 = vpop.f32.mrb[0].mxu0
    %v8464 = vadd.f32 0.0, %v8463
    %v8465 = vpop.f32.mrb[0].mxu0
    %v8466 = vpop.f32.mrb[0].mxu0
    %v8467 = vadd.f32 0.0, %v8466
    %v8468 = vpop.f32.mrb[0].mxu0
    %8469 = vmatprep.mubr.bf16.mxu0 0
    %8470 = vmatmul.mubr.bf16.gmra.mrb[0].mxu0 %v8010
    %v8471 = vpop.f32.mrb[0].mxu0
    %v8472 = vadd.f32 0.0, %v8471
    %v8473 = vpop.f32.mrb[0].mxu0
    %v8474 = vpop.f32.mrb[0].mxu0
    %v8475 = vadd.f32 0.0, %v8474
    %v8476 = vpop.f32.mrb[0].mxu0
    %8477 = vmatprep.mubr.bf16.mxu0 0
    %8478 = vmatmul.mubr.bf16.gmra.mrb[0].mxu0 %v8011
    %v8479 = vpop.f32.mrb[0].mxu0
    %v8480 = vadd.f32 0.0, %v8479
    %v8481 = vpop.f32.mrb[0].mxu0
    %v8482 = vpop.f32.mrb[0].mxu0
    %v8483 = vadd.f32 0.0, %v8482
    %v8484 = vpop.f32.mrb[0].mxu0
    %8485 = vmatprep.mubr.bf16.mxu0 0
    %8486 = vmatmul.mubr.bf16.gmra.mrb[0].mxu0 %v8012
    %v8487 = vpop.f32.mrb[0].mxu0
    %v8488 = vadd.f32 0.0, %v8487
    %v8489 = vpop.f32.mrb[0].mxu0
    %v8490 = vpop.f32.mrb[0].mxu0
    %v8491 = vadd.f32 0.0, %v8490
    %v8492 = vpop.f32.mrb[0].mxu0
    %8493 = vmatprep.mubr.bf16.mxu0 0
    %8494 = vmatmul.mubr.bf16.gmra.mrb[0].mxu0 %v8013
    %v8495 = vpop.f32.mrb[0].mxu0
    %v8496 = vadd.f32 0.0, %v8495
    %v8497 = vpop.f32.mrb[0].mxu0
    %v8498 = vpop.f32.mrb[0].mxu0
    %v8499 = vadd.f32 0.0, %v8498
    %v8500 = vpop.f32.mrb[0].mxu0
    %8501 = vmatprep.mubr.bf16.mxu0 0
    %8502 = vmatmul.mubr.bf16.gmra.mrb[0].mxu0 %v8014
    %v8503 = vpop.f32.mrb[0].mxu0
    %v8504 = vadd.f32 0.0, %v8503
    %v8505 = vpop.f32.mrb[0].mxu0
    %v8506 = vpop.f32.mrb[0].mxu0
    %v8507 = vadd.f32 0.0, %v8506
    %v8508 = vpop.f32.mrb[0].mxu0
    %8509 = vmatprep.mubr.bf16.mxu0 0
    %8510 = vmatmul.mubr.bf16.gmra.mrb[0].mxu0 %v8015
    %v8511 = vpop.f32.mrb[0].mxu0
    %v8512 = vadd.f32 0.0, %v8511
    %v8513 = vpop.f32.mrb[0].mxu0
    %v8514 = vpop.f32.mrb[0].mxu0
    %v8515 = vadd.f32 0.0, %v8514
    %v8516 = vpop.f32.mrb[0].mxu0
    %8517 = vmatprep.mubr.bf16.mxu0 0
    %8518 = vmatmul.mubr.bf16.gmra.mrb[0].mxu0 %v8016
    %v8519 = vpop.f32.mrb[0].mxu0
    %v8520 = vadd.f32 0.0, %v8519
    %v8521 = vpop.f32.mrb[0].mxu0
    %v8522 = vpop.f32.mrb[0].mxu0
    %v8523 = vadd.f32 0.0, %v8522
    %v8524 = vpop.f32.mrb[0].mxu0
    %8525 = vmatprep.mubr.bf16.mxu0 0
    %8526 = vmatmul.mubr.bf16.gmra.mrb[0].mxu0 %v8017
    %v8527 = vpop.f32.mrb[0].mxu0
    %v8528 = vadd.f32 0.0, %v8527
    %v8529 = vpop.f32.mrb[0].mxu0
    %v8530 = vpop.f32.mrb[0].mxu0
    %v8531 = vadd.f32 0.0, %v8530
    %v8532 = vpop.f32.mrb[0].mxu0
    %8533 = vmatprep.mubr.bf16.mxu0 0
    %8534 = vmatmul.mubr.bf16.gmra.mrb[0].mxu0 %v8018
    %v8535 = vpop.f32.mrb[0].mxu0
    %v8536 = vadd.f32 0.0, %v8535
    %v8537 = vpop.f32.mrb[0].mxu0
    %v8538 = vpop.f32.mrb[0].mxu0
    %v8539 = vadd.f32 0.0, %v8538
    %v8540 = vpop.f32.mrb[0].mxu0
    %8541 = vmatprep.mubr.bf16.mxu0 0
    %8542 = vmatmul.mubr.bf16.gmra.mrb[0].mxu0 %v8019
    %v8543 = vpop.f32.mrb[0].mxu0
    %v8544 = vadd.f32 0.0, %v8543
    %v8545 = vpop.f32.mrb[0].mxu0
    %v8546 = vpop.f32.mrb[0].mxu0
    %v8547 = vadd.f32 0.0, %v8546
    %v8548 = vpop.f32.mrb[0].mxu0
    %8549 = vmatprep.mubr.bf16.mxu0 0
    %8550 = vmatmul.mubr.bf16.gmra.mrb[0].mxu0 %v8020
    %v8551 = vpop.f32.mrb[0].mxu0
    %v8552 = vadd.f32 0.0, %v8551
    %v8553 = vpop.f32.mrb[0].mxu0
    %v8554 = vpop.f32.mrb[0].mxu0
    %v8555 = vadd.f32 0.0, %v8554
    %v8556 = vpop.f32.mrb[0].mxu0
    %8557 = vmatprep.mubr.bf16.mxu0 0
    %8558 = vmatmul.mubr.bf16.gmra.mrb[0].mxu0 %v8021
    %v8559 = vpop.f32.mrb[0].mxu0
    %v8560 = vadd.f32 0.0, %v8559
    %v8561 = vpop.f32.mrb[0].mxu0
    %v8562 = vpop.f32.mrb[0].mxu0
    %v8563 = vadd.f32 0.0, %v8562
    %v8564 = vpop.f32.mrb[0].mxu0
    %8565 = vmatprep.mubr.bf16.mxu0 0
    %8566 = vmatmul.mubr.bf16.gmra.mrb[0].mxu0 %v8022
    %v8567 = vpop.f32.mrb[0].mxu0
    %v8568 = vadd.f32 0.0, %v8567
    %v8569 = vpop.f32.mrb[0].mxu0
    %v8570 = vpop.f32.mrb[0].mxu0
    %v8571 = vadd.f32 0.0, %v8570
    %v8572 = vpop.f32.mrb[0].mxu0
    %8573 = vmatprep.mubr.bf16.mxu0 0
    %8574 = vmatmul.mubr.bf16.gmra.mrb[0].mxu0 %v8023
    %v8575 = vpop.f32.mrb[0].mxu0
    %v8576 = vadd.f32 0.0, %v8575
    %v8577 = vpop.f32.mrb[0].mxu0
    %v8578 = vpop.f32.mrb[0].mxu0
    %v8579 = vadd.f32 0.0, %v8578
    %v8580 = vpop.f32.mrb[0].mxu0
    %8581 = vmatprep.mubr.bf16.mxu0 0
    %8582 = vmatmul.mubr.bf16.gmra.mrb[0].mxu0 %v8024
    %v8583 = vpop.f32.mrb[0].mxu0
    %v8584 = vadd.f32 0.0, %v8583
    %v8585 = vpop.f32.mrb[0].mxu0
    %v8586 = vpop.f32.mrb[0].mxu0
    %v8587 = vadd.f32 0.0, %v8586
    %v8588 = vpop.f32.mrb[0].mxu0
    %8589 = vmatprep.mubr.bf16.mxu0 0
    %8590 = vmatmul.mubr.bf16.gmra.mrb[0].mxu0 %v8025
    %v8591 = vpop.f32.mrb[0].mxu0
    %v8592 = vadd.f32 0.0, %v8591
    %v8593 = vpop.f32.mrb[0].mxu0
    %v8594 = vpop.f32.mrb[0].mxu0
    %v8595 = vadd.f32 0.0, %v8594
    %v8596 = vpop.f32.mrb[0].mxu0
    %8597 = vmatprep.mubr.bf16.mxu0 0
    %8598 = vmatmul.mubr.bf16.gmra.mrb[0].mxu0 %v8026
    %v8599 = vpop.f32.mrb[0].mxu0
    %v8600 = vadd.f32 0.0, %v8599
    %v8601 = vpop.f32.mrb[0].mxu0
    %v8602 = vpop.f32.mrb[0].mxu0
    %v8603 = vadd.f32 0.0, %v8602
    %v8604 = vpop.f32.mrb[0].mxu0
    %8605 = vmatprep.mubr.bf16.mxu0 0
    %8606 = vmatmul.mubr.bf16.gmra.mrb[0].mxu0 %v8027
    %v8607 = vpop.f32.mrb[0].mxu0
    %v8608 = vadd.f32 0.0, %v8607
    %v8609 = vpop.f32.mrb[0].mxu0
    %v8610 = vpop.f32.mrb[0].mxu0
    %v8611 = vadd.f32 0.0, %v8610
    %v8612 = vpop.f32.mrb[0].mxu0
    %8613 = vmatprep.mubr.bf16.mxu0 0
    %8614 = vmatmul.mubr.bf16.gmra.mrb[0].mxu0 %v8028
    %v8615 = vpop.f32.mrb[0].mxu0
    %v8616 = vadd.f32 0.0, %v8615
    %v8617 = vpop.f32.mrb[0].mxu0
    %v8618 = vpop.f32.mrb[0].mxu0
    %v8619 = vadd.f32 0.0, %v8618
    %v8620 = vpop.f32.mrb[0].mxu0
    %8621 = vdwg.mxu0
    %v8622 = vadd.f32 %v8112, %v8115
    %v8623 = vadd.f32 %v8622, %v8120
    %v8624 = vadd.f32 %v8623, %v8123
    %v8625 = vadd.f32 %v8624, %v8128
    %v8626 = vadd.f32 %v8625, %v8131
    %v8627 = vadd.f32 %v8626, %v8136
    %v8628 = vadd.f32 %v8627, %v8139
    %v8629 = vadd.f32 %v8628, %v8144
    %v8630 = vadd.f32 %v8629, %v8147
    %v8631 = vadd.f32 %v8630, %v8152
    %v8632 = vadd.f32 %v8631, %v8155
    %v8633 = vadd.f32 %v8632, %v8160
    %v8634 = vadd.f32 %v8633, %v8163
    %v8635 = vadd.f32 %v8634, %v8168
    %v8636 = vadd.f32 %v8635, %v8171
    %v8637 = vadd.f32 %v8636, %v8176
    %v8638 = vadd.f32 %v8637, %v8179
    %v8639 = vadd.f32 %v8638, %v8184
    %v8640 = vadd.f32 %v8639, %v8187
    %v8641 = vadd.f32 %v8640, %v8192
    %v8642 = vadd.f32 %v8641, %v8195
    %v8643 = vadd.f32 %v8642, %v8200
    %v8644 = vadd.f32 %v8643, %v8203
    %v8645 = vadd.f32 %v8644, %v8208
    %v8646 = vadd.f32 %v8645, %v8211
    %v8647 = vadd.f32 %v8646, %v8216
    %v8648 = vadd.f32 %v8647, %v8219
    %v8649 = vadd.f32 %v8648, %v8224
    %v8650 = vadd.f32 %v8649, %v8227
    %v8651 = vadd.f32 %v8650, %v8232
    %v8652 = vadd.f32 %v8651, %v8235
    %v8653 = vadd.f32 %v8652, %v8240
    %v8654 = vadd.f32 %v8653, %v8243
    %v8655 = vadd.f32 %v8654, %v8248
    %v8656 = vadd.f32 %v8655, %v8251
    %v8657 = vadd.f32 %v8656, %v8256
    %v8658 = vadd.f32 %v8657, %v8259
    %v8659 = vadd.f32 %v8658, %v8264
    %v8660 = vadd.f32 %v8659, %v8267
    %v8661 = vadd.f32 %v8660, %v8272
    %v8662 = vadd.f32 %v8661, %v8275
    %v8663 = vadd.f32 %v8662, %v8280
    %v8664 = vadd.f32 %v8663, %v8283
    %v8665 = vadd.f32 %v8664, %v8288
    %v8666 = vadd.f32 %v8665, %v8291
    %v8667 = vadd.f32 %v8666, %v8296
    %v8668 = vadd.f32 %v8667, %v8299
    %v8669 = vadd.f32 %v8668, %v8304
    %v8670 = vadd.f32 %v8669, %v8307
    %v8671 = vadd.f32 %v8670, %v8312
    %v8672 = vadd.f32 %v8671, %v8315
    %v8673 = vadd.f32 %v8672, %v8320
    %v8674 = vadd.f32 %v8673, %v8323
    %v8675 = vadd.f32 %v8674, %v8328
    %v8676 = vadd.f32 %v8675, %v8331
    %v8677 = vadd.f32 %v8676, %v8336
    %v8678 = vadd.f32 %v8677, %v8339
    %v8679 = vadd.f32 %v8678, %v8344
    %v8680 = vadd.f32 %v8679, %v8347
    %v8681 = vadd.f32 %v8680, %v8352
    %v8682 = vadd.f32 %v8681, %v8355
    %v8683 = vadd.f32 %v8682, %v8360
    %v8684 = vadd.f32 %v8683, %v8363
    %v8685 = vadd.f32 %v8684, %v8368
    %v8686 = vadd.f32 %v8685, %v8371
    %v8687 = vadd.f32 %v8686, %v8376
    %v8688 = vadd.f32 %v8687, %v8379
    %v8689 = vadd.f32 %v8688, %v8384
    %v8690 = vadd.f32 %v8689, %v8387
    %v8691 = vadd.f32 %v8690, %v8392
    %v8692 = vadd.f32 %v8691, %v8395
    %v8693 = vadd.f32 %v8692, %v8400
    %v8694 = vadd.f32 %v8693, %v8403
    %v8695 = vadd.f32 %v8694, %v8408
    %v8696 = vadd.f32 %v8695, %v8411
    %v8697 = vadd.f32 %v8696, %v8416
    %v8698 = vadd.f32 %v8697, %v8419
    %v8699 = vadd.f32 %v8698, %v8424
    %v8700 = vadd.f32 %v8699, %v8427
    %v8701 = vadd.f32 %v8700, %v8432
    %v8702 = vadd.f32 %v8701, %v8435
    %v8703 = vadd.f32 %v8702, %v8440
    %v8704 = vadd.f32 %v8703, %v8443
    %v8705 = vadd.f32 %v8704, %v8448
    %v8706 = vadd.f32 %v8705, %v8451
    %v8707 = vadd.f32 %v8706, %v8456
    %v8708 = vadd.f32 %v8707, %v8459
    %v8709 = vadd.f32 %v8708, %v8464
    %v8710 = vadd.f32 %v8709, %v8467
    %v8711 = vadd.f32 %v8710, %v8472
    %v8712 = vadd.f32 %v8711, %v8475
    %v8713 = vadd.f32 %v8712, %v8480
    %v8714 = vadd.f32 %v8713, %v8483
    %v8715 = vadd.f32 %v8714, %v8488
    %v8716 = vadd.f32 %v8715, %v8491
    %v8717 = vadd.f32 %v8716, %v8496
    %v8718 = vadd.f32 %v8717, %v8499
    %v8719 = vadd.f32 %v8718, %v8504
    %v8720 = vadd.f32 %v8719, %v8507
    %v8721 = vadd.f32 %v8720, %v8512
    %v8722 = vadd.f32 %v8721, %v8515
    %v8723 = vadd.f32 %v8722, %v8520
    %v8724 = vadd.f32 %v8723, %v8523
    %v8725 = vadd.f32 %v8724, %v8528
    %v8726 = vadd.f32 %v8725, %v8531
    %v8727 = vadd.f32 %v8726, %v8536
    %v8728 = vadd.f32 %v8727, %v8539
    %v8729 = vadd.f32 %v8728, %v8544
    %v8730 = vadd.f32 %v8729, %v8547
    %v8731 = vadd.f32 %v8730, %v8552
    %v8732 = vadd.f32 %v8731, %v8555
    %v8733 = vadd.f32 %v8732, %v8560
    %v8734 = vadd.f32 %v8733, %v8563
    %v8735 = vadd.f32 %v8734, %v8568
    %v8736 = vadd.f32 %v8735, %v8571
    %v8737 = vadd.f32 %v8736, %v8576
    %v8738 = vadd.f32 %v8737, %v8579
    %v8739 = vadd.f32 %v8738, %v8584
    %v8740 = vadd.f32 %v8739, %v8587
    %v8741 = vadd.f32 %v8740, %v8592
    %v8742 = vadd.f32 %v8741, %v8595
    %v8743 = vadd.f32 %v8742, %v8600
    %v8744 = vadd.f32 %v8743, %v8603
    %v8745 = vadd.f32 %v8744, %v8608
    %v8746 = vadd.f32 %v8745, %v8611
    %v8747 = vadd.f32 %v8746, %v8616
    %v8748 = vadd.f32 %v8747, %v8619
    %v8749 = vrot.slane %v8748, 4
    %v8750 = vadd.f32 %v8748, %v8749
    %v8751 = vrot.slane %v8750, 2
    %v8752 = vadd.f32 %v8750, %v8751
    %v8753 = vrot.slane %v8752, 1
    %v8754 = vadd.f32 %v8752, %v8753
    %v8755 = vmul.f32 %v8112, %v8112
    %v8756 = vmul.f32 %v8115, %v8115
    %v8757 = vmul.f32 %v8120, %v8120
    %v8758 = vmul.f32 %v8123, %v8123
    %v8759 = vmul.f32 %v8128, %v8128
    %v8760 = vmul.f32 %v8131, %v8131
    %v8761 = vmul.f32 %v8136, %v8136
    %v8762 = vmul.f32 %v8139, %v8139
    %v8763 = vmul.f32 %v8144, %v8144
    %v8764 = vmul.f32 %v8147, %v8147
    %v8765 = vmul.f32 %v8152, %v8152
    %v8766 = vmul.f32 %v8155, %v8155
    %v8767 = vmul.f32 %v8160, %v8160
    %v8768 = vmul.f32 %v8163, %v8163
    %v8769 = vmul.f32 %v8168, %v8168
    %v8770 = vmul.f32 %v8171, %v8171
    %v8771 = vmul.f32 %v8176, %v8176
    %v8772 = vmul.f32 %v8179, %v8179
    %v8773 = vmul.f32 %v8184, %v8184
    %v8774 = vmul.f32 %v8187, %v8187
    %v8775 = vmul.f32 %v8192, %v8192
    %v8776 = vmul.f32 %v8195, %v8195
    %v8777 = vmul.f32 %v8200, %v8200
    %v8778 = vmul.f32 %v8203, %v8203
    %v8779 = vmul.f32 %v8208, %v8208
    %v8780 = vmul.f32 %v8211, %v8211
    %v8781 = vmul.f32 %v8216, %v8216
    %v8782 = vmul.f32 %v8219, %v8219
    %v8783 = vmul.f32 %v8224, %v8224
    %v8784 = vmul.f32 %v8227, %v8227
    %v8785 = vmul.f32 %v8232, %v8232
    %v8786 = vmul.f32 %v8235, %v8235
    %v8787 = vmul.f32 %v8240, %v8240
    %v8788 = vmul.f32 %v8243, %v8243
    %v8789 = vmul.f32 %v8248, %v8248
    %v8790 = vmul.f32 %v8251, %v8251
    %v8791 = vmul.f32 %v8256, %v8256
    %v8792 = vmul.f32 %v8259, %v8259
    %v8793 = vmul.f32 %v8264, %v8264
    %v8794 = vmul.f32 %v8267, %v8267
    %v8795 = vmul.f32 %v8272, %v8272
    %v8796 = vmul.f32 %v8275, %v8275
    %v8797 = vmul.f32 %v8280, %v8280
    %v8798 = vmul.f32 %v8283, %v8283
    %v8799 = vmul.f32 %v8288, %v8288
    %v8800 = vmul.f32 %v8291, %v8291
    %v8801 = vmul.f32 %v8296, %v8296
    %v8802 = vmul.f32 %v8299, %v8299
    %v8803 = vmul.f32 %v8304, %v8304
    %v8804 = vmul.f32 %v8307, %v8307
    %v8805 = vmul.f32 %v8312, %v8312
    %v8806 = vmul.f32 %v8315, %v8315
    %v8807 = vmul.f32 %v8320, %v8320
    %v8808 = vmul.f32 %v8323, %v8323
    %v8809 = vmul.f32 %v8328, %v8328
    %v8810 = vmul.f32 %v8331, %v8331
    %v8811 = vmul.f32 %v8336, %v8336
    %v8812 = vmul.f32 %v8339, %v8339
    %v8813 = vmul.f32 %v8344, %v8344
    %v8814 = vmul.f32 %v8347, %v8347
    %v8815 = vmul.f32 %v8352, %v8352
    %v8816 = vmul.f32 %v8355, %v8355
    %v8817 = vmul.f32 %v8360, %v8360
    %v8818 = vmul.f32 %v8363, %v8363
    %v8819 = vmul.f32 %v8368, %v8368
    %v8820 = vmul.f32 %v8371, %v8371
    %v8821 = vmul.f32 %v8376, %v8376
    %v8822 = vmul.f32 %v8379, %v8379
    %v8823 = vmul.f32 %v8384, %v8384
    %v8824 = vmul.f32 %v8387, %v8387
    %v8825 = vmul.f32 %v8392, %v8392
    %v8826 = vmul.f32 %v8395, %v8395
    %v8827 = vmul.f32 %v8400, %v8400
    %v8828 = vmul.f32 %v8403, %v8403
    %v8829 = vmul.f32 %v8408, %v8408
    %v8830 = vmul.f32 %v8411, %v8411
    %v8831 = vmul.f32 %v8416, %v8416
    %v8832 = vmul.f32 %v8419, %v8419
    %v8833 = vmul.f32 %v8424, %v8424
    %v8834 = vmul.f32 %v8427, %v8427
    %v8835 = vmul.f32 %v8432, %v8432
    %v8836 = vmul.f32 %v8435, %v8435
    %v8837 = vmul.f32 %v8440, %v8440
    %v8838 = vmul.f32 %v8443, %v8443
    %v8839 = vmul.f32 %v8448, %v8448
    %v8840 = vmul.f32 %v8451, %v8451
    %v8841 = vmul.f32 %v8456, %v8456
    %v8842 = vmul.f32 %v8459, %v8459
    %v8843 = vmul.f32 %v8464, %v8464
    %v8844 = vmul.f32 %v8467, %v8467
    %v8845 = vmul.f32 %v8472, %v8472
    %v8846 = vmul.f32 %v8475, %v8475
    %v8847 = vmul.f32 %v8480, %v8480
    %v8848 = vmul.f32 %v8483, %v8483
    %v8849 = vmul.f32 %v8488, %v8488
    %v8850 = vmul.f32 %v8491, %v8491
    %v8851 = vmul.f32 %v8496, %v8496
    %v8852 = vmul.f32 %v8499, %v8499
    %v8853 = vmul.f32 %v8504, %v8504
    %v8854 = vmul.f32 %v8507, %v8507
    %v8855 = vmul.f32 %v8512, %v8512
    %v8856 = vmul.f32 %v8515, %v8515
    %v8857 = vmul.f32 %v8520, %v8520
    %v8858 = vmul.f32 %v8523, %v8523
    %v8859 = vmul.f32 %v8528, %v8528
    %v8860 = vmul.f32 %v8531, %v8531
    %v8861 = vmul.f32 %v8536, %v8536
    %v8862 = vmul.f32 %v8539, %v8539
    %v8863 = vmul.f32 %v8544, %v8544
    %v8864 = vmul.f32 %v8547, %v8547
    %v8865 = vmul.f32 %v8552, %v8552
    %v8866 = vmul.f32 %v8555, %v8555
    %v8867 = vmul.f32 %v8560, %v8560
    %v8868 = vmul.f32 %v8563, %v8563
    %v8869 = vmul.f32 %v8568, %v8568
    %v8870 = vmul.f32 %v8571, %v8571
    %v8871 = vmul.f32 %v8576, %v8576
    %v8872 = vmul.f32 %v8579, %v8579
    %v8873 = vmul.f32 %v8584, %v8584
    %v8874 = vmul.f32 %v8587, %v8587
    %v8875 = vmul.f32 %v8592, %v8592
    %v8876 = vmul.f32 %v8595, %v8595
    %v8877 = vmul.f32 %v8600, %v8600
    %v8878 = vmul.f32 %v8603, %v8603
    %v8879 = vmul.f32 %v8608, %v8608
    %v8880 = vmul.f32 %v8611, %v8611
    %v8881 = vmul.f32 %v8616, %v8616
    %v8882 = vmul.f32 %v8619, %v8619
    %v8883 = vadd.f32 %v8755, %v8756
    %v8884 = vadd.f32 %v8883, %v8757
    %v8885 = vadd.f32 %v8884, %v8758
    %v8886 = vadd.f32 %v8885, %v8759
    %v8887 = vadd.f32 %v8886, %v8760
    %v8888 = vadd.f32 %v8887, %v8761
    %v8889 = vadd.f32 %v8888, %v8762
    %v8890 = vadd.f32 %v8889, %v8763
    %v8891 = vadd.f32 %v8890, %v8764
    %v8892 = vadd.f32 %v8891, %v8765
    %v8893 = vadd.f32 %v8892, %v8766
    %v8894 = vadd.f32 %v8893, %v8767
    %v8895 = vadd.f32 %v8894, %v8768
    %v8896 = vadd.f32 %v8895, %v8769
    %v8897 = vadd.f32 %v8896, %v8770
    %v8898 = vadd.f32 %v8897, %v8771
    %v8899 = vadd.f32 %v8898, %v8772
    %v8900 = vadd.f32 %v8899, %v8773
    %v8901 = vadd.f32 %v8900, %v8774
    %v8902 = vadd.f32 %v8901, %v8775
    %v8903 = vadd.f32 %v8902, %v8776
    %v8904 = vadd.f32 %v8903, %v8777
    %v8905 = vadd.f32 %v8904, %v8778
    %v8906 = vadd.f32 %v8905, %v8779
    %v8907 = vadd.f32 %v8906, %v8780
    %v8908 = vadd.f32 %v8907, %v8781
    %v8909 = vadd.f32 %v8908, %v8782
    %v8910 = vadd.f32 %v8909, %v8783
    %v8911 = vadd.f32 %v8910, %v8784
    %v8912 = vadd.f32 %v8911, %v8785
    %v8913 = vadd.f32 %v8912, %v8786
    %v8914 = vadd.f32 %v8913, %v8787
    %v8915 = vadd.f32 %v8914, %v8788
    %v8916 = vadd.f32 %v8915, %v8789
    %v8917 = vadd.f32 %v8916, %v8790
    %v8918 = vadd.f32 %v8917, %v8791
    %v8919 = vadd.f32 %v8918, %v8792
    %v8920 = vadd.f32 %v8919, %v8793
    %v8921 = vadd.f32 %v8920, %v8794
    %v8922 = vadd.f32 %v8921, %v8795
    %v8923 = vadd.f32 %v8922, %v8796
    %v8924 = vadd.f32 %v8923, %v8797
    %v8925 = vadd.f32 %v8924, %v8798
    %v8926 = vadd.f32 %v8925, %v8799
    %v8927 = vadd.f32 %v8926, %v8800
    %v8928 = vadd.f32 %v8927, %v8801
    %v8929 = vadd.f32 %v8928, %v8802
    %v8930 = vadd.f32 %v8929, %v8803
    %v8931 = vadd.f32 %v8930, %v8804
    %v8932 = vadd.f32 %v8931, %v8805
    %v8933 = vadd.f32 %v8932, %v8806
    %v8934 = vadd.f32 %v8933, %v8807
    %v8935 = vadd.f32 %v8934, %v8808
    %v8936 = vadd.f32 %v8935, %v8809
    %v8937 = vadd.f32 %v8936, %v8810
    %v8938 = vadd.f32 %v8937, %v8811
    %v8939 = vadd.f32 %v8938, %v8812
    %v8940 = vadd.f32 %v8939, %v8813
    %v8941 = vadd.f32 %v8940, %v8814
    %v8942 = vadd.f32 %v8941, %v8815
    %v8943 = vadd.f32 %v8942, %v8816
    %v8944 = vadd.f32 %v8943, %v8817
    %v8945 = vadd.f32 %v8944, %v8818
    %v8946 = vadd.f32 %v8945, %v8819
    %v8947 = vadd.f32 %v8946, %v8820
    %v8948 = vadd.f32 %v8947, %v8821
    %v8949 = vadd.f32 %v8948, %v8822
    %v8950 = vadd.f32 %v8949, %v8823
    %v8951 = vadd.f32 %v8950, %v8824
    %v8952 = vadd.f32 %v8951, %v8825
    %v8953 = vadd.f32 %v8952, %v8826
    %v8954 = vadd.f32 %v8953, %v8827
    %v8955 = vadd.f32 %v8954, %v8828
    %v8956 = vadd.f32 %v8955, %v8829
    %v8957 = vadd.f32 %v8956, %v8830
    %v8958 = vadd.f32 %v8957, %v8831
    %v8959 = vadd.f32 %v8958, %v8832
    %v8960 = vadd.f32 %v8959, %v8833
    %v8961 = vadd.f32 %v8960, %v8834
    %v8962 = vadd.f32 %v8961, %v8835
    %v8963 = vadd.f32 %v8962, %v8836
    %v8964 = vadd.f32 %v8963, %v8837
    %v8965 = vadd.f32 %v8964, %v8838
    %v8966 = vadd.f32 %v8965, %v8839
    %v8967 = vadd.f32 %v8966, %v8840
    %v8968 = vadd.f32 %v8967, %v8841
    %v8969 = vadd.f32 %v8968, %v8842
    %v8970 = vadd.f32 %v8969, %v8843
    %v8971 = vadd.f32 %v8970, %v8844
    %v8972 = vadd.f32 %v8971, %v8845
    %v8973 = vadd.f32 %v8972, %v8846
    %v8974 = vadd.f32 %v8973, %v8847
    %v8975 = vadd.f32 %v8974, %v8848
    %v8976 = vadd.f32 %v8975, %v8849
    %v8977 = vadd.f32 %v8976, %v8850
    %v8978 = vadd.f32 %v8977, %v8851
    %v8979 = vadd.f32 %v8978, %v8852
    %v8980 = vadd.f32 %v8979, %v8853
    %v8981 = vadd.f32 %v8980, %v8854
    %v8982 = vadd.f32 %v8981, %v8855
    %v8983 = vadd.f32 %v8982, %v8856
    %v8984 = vadd.f32 %v8983, %v8857
    %v8985 = vadd.f32 %v8984, %v8858
    %v8986 = vadd.f32 %v8985, %v8859
    %v8987 = vadd.f32 %v8986, %v8860
    %v8988 = vadd.f32 %v8987, %v8861
    %v8989 = vadd.f32 %v8988, %v8862
    %v8990 = vadd.f32 %v8989, %v8863
    %v8991 = vadd.f32 %v8990, %v8864
    %v8992 = vadd.f32 %v8991, %v8865
    %v8993 = vadd.f32 %v8992, %v8866
    %v8994 = vadd.f32 %v8993, %v8867
    %v8995 = vadd.f32 %v8994, %v8868
    %v8996 = vadd.f32 %v8995, %v8869
    %v8997 = vadd.f32 %v8996, %v8870
    %v8998 = vadd.f32 %v8997, %v8871
    %v8999 = vadd.f32 %v8998, %v8872
    %v9000 = vadd.f32 %v8999, %v8873
    %v9001 = vadd.f32 %v9000, %v8874
    %v9002 = vadd.f32 %v9001, %v8875
    %v9003 = vadd.f32 %v9002, %v8876
    %v9004 = vadd.f32 %v9003, %v8877
    %v9005 = vadd.f32 %v9004, %v8878
    %v9006 = vadd.f32 %v9005, %v8879
    %v9007 = vadd.f32 %v9006, %v8880
    %v9008 = vadd.f32 %v9007, %v8881
    %v9009 = vadd.f32 %v9008, %v8882
    %v9010 = vrot.slane %v9009, 4
    %v9011 = vadd.f32 %v9009, %v9010
    %v9012 = vrot.slane %v9011, 2
    %v9013 = vadd.f32 %v9011, %v9012
    %v9014 = vrot.slane %v9013, 1
    %v9015 = vadd.f32 %v9013, %v9014
    %v9016 = vmul.f32 %v8754, 0.0009765625
    %v9017 = vmul.f32 %v9015, 0.0009765625
    %v9018 = vmul.f32 %v9016, %v9016
    %v9019 = vsub.f32 %v9017, %v9018
    %v9020 = vmax.f32 %v9019, 0.0
    %v9021 = vadd.f32 %v9020, 1e-05
    %v9022 = vrsqrt.pop %v9021
    %v9023 = vmul.f32 %v7963, %v9022
    %v9024 = vmul.f32 %v9016, %v9023
    %v9025 = vsub.f32 %v7964, %v9024
    %v9026 = vmul.f32 %v8112, %v9023
    %v9027 = vmul.f32 %v8115, %v9023
    %v9028 = vmul.f32 %v8120, %v9023
    %v9029 = vmul.f32 %v8123, %v9023
    %v9030 = vmul.f32 %v8128, %v9023
    %v9031 = vmul.f32 %v8131, %v9023
    %v9032 = vmul.f32 %v8136, %v9023
    %v9033 = vmul.f32 %v8139, %v9023
    %v9034 = vmul.f32 %v8144, %v9023
    %v9035 = vmul.f32 %v8147, %v9023
    %v9036 = vmul.f32 %v8152, %v9023
    %v9037 = vmul.f32 %v8155, %v9023
    %v9038 = vmul.f32 %v8160, %v9023
    %v9039 = vmul.f32 %v8163, %v9023
    %v9040 = vmul.f32 %v8168, %v9023
    %v9041 = vmul.f32 %v8171, %v9023
    %v9042 = vmul.f32 %v8176, %v9023
    %v9043 = vmul.f32 %v8179, %v9023
    %v9044 = vmul.f32 %v8184, %v9023
    %v9045 = vmul.f32 %v8187, %v9023
    %v9046 = vmul.f32 %v8192, %v9023
    %v9047 = vmul.f32 %v8195, %v9023
    %v9048 = vmul.f32 %v8200, %v9023
    %v9049 = vmul.f32 %v8203, %v9023
    %v9050 = vmul.f32 %v8208, %v9023
    %v9051 = vmul.f32 %v8211, %v9023
    %v9052 = vmul.f32 %v8216, %v9023
    %v9053 = vmul.f32 %v8219, %v9023
    %v9054 = vmul.f32 %v8224, %v9023
    %v9055 = vmul.f32 %v8227, %v9023
    %v9056 = vmul.f32 %v8232, %v9023
    %v9057 = vmul.f32 %v8235, %v9023
    %v9058 = vmul.f32 %v8240, %v9023
    %v9059 = vmul.f32 %v8243, %v9023
    %v9060 = vmul.f32 %v8248, %v9023
    %v9061 = vmul.f32 %v8251, %v9023
    %v9062 = vmul.f32 %v8256, %v9023
    %v9063 = vmul.f32 %v8259, %v9023
    %v9064 = vmul.f32 %v8264, %v9023
    %v9065 = vmul.f32 %v8267, %v9023
    %v9066 = vmul.f32 %v8272, %v9023
    %v9067 = vmul.f32 %v8275, %v9023
    %v9068 = vmul.f32 %v8280, %v9023
    %v9069 = vmul.f32 %v8283, %v9023
    %v9070 = vmul.f32 %v8288, %v9023
    %v9071 = vmul.f32 %v8291, %v9023
    %v9072 = vmul.f32 %v8296, %v9023
    %v9073 = vmul.f32 %v8299, %v9023
    %v9074 = vmul.f32 %v8304, %v9023
    %v9075 = vmul.f32 %v8307, %v9023
    %v9076 = vmul.f32 %v8312, %v9023
    %v9077 = vmul.f32 %v8315, %v9023
    %v9078 = vmul.f32 %v8320, %v9023
    %v9079 = vmul.f32 %v8323, %v9023
    %v9080 = vmul.f32 %v8328, %v9023
    %v9081 = vmul.f32 %v8331, %v9023
    %v9082 = vmul.f32 %v8336, %v9023
    %v9083 = vmul.f32 %v8339, %v9023
    %v9084 = vmul.f32 %v8344, %v9023
    %v9085 = vmul.f32 %v8347, %v9023
    %v9086 = vmul.f32 %v8352, %v9023
    %v9087 = vmul.f32 %v8355, %v9023
    %v9088 = vmul.f32 %v8360, %v9023
    %v9089 = vmul.f32 %v8363, %v9023
    %v9090 = vmul.f32 %v8368, %v9023
    %v9091 = vmul.f32 %v8371, %v9023
    %v9092 = vmul.f32 %v8376, %v9023
    %v9093 = vmul.f32 %v8379, %v9023
    %v9094 = vmul.f32 %v8384, %v9023
    %v9095 = vmul.f32 %v8387, %v9023
    %v9096 = vmul.f32 %v8392, %v9023
    %v9097 = vmul.f32 %v8395, %v9023
    %v9098 = vmul.f32 %v8400, %v9023
    %v9099 = vmul.f32 %v8403, %v9023
    %v9100 = vmul.f32 %v8408, %v9023
    %v9101 = vmul.f32 %v8411, %v9023
    %v9102 = vmul.f32 %v8416, %v9023
    %v9103 = vmul.f32 %v8419, %v9023
    %v9104 = vmul.f32 %v8424, %v9023
    %v9105 = vmul.f32 %v8427, %v9023
    %v9106 = vmul.f32 %v8432, %v9023
    %v9107 = vmul.f32 %v8435, %v9023
    %v9108 = vmul.f32 %v8440, %v9023
    %v9109 = vmul.f32 %v8443, %v9023
    %v9110 = vmul.f32 %v8448, %v9023
    %v9111 = vmul.f32 %v8451, %v9023
    %v9112 = vmul.f32 %v8456, %v9023
    %v9113 = vmul.f32 %v8459, %v9023
    %v9114 = vmul.f32 %v8464, %v9023
    %v9115 = vmul.f32 %v8467, %v9023
    %v9116 = vmul.f32 %v8472, %v9023
    %v9117 = vmul.f32 %v8475, %v9023
    %v9118 = vmul.f32 %v8480, %v9023
    %v9119 = vmul.f32 %v8483, %v9023
    %v9120 = vmul.f32 %v8488, %v9023
    %v9121 = vmul.f32 %v8491, %v9023
    %v9122 = vmul.f32 %v8496, %v9023
    %v9123 = vmul.f32 %v8499, %v9023
    %v9124 = vmul.f32 %v8504, %v9023
    %v9125 = vmul.f32 %v8507, %v9023
    %v9126 = vmul.f32 %v8512, %v9023
    %v9127 = vmul.f32 %v8515, %v9023
    %v9128 = vmul.f32 %v8520, %v9023
    %v9129 = vmul.f32 %v8523, %v9023
    %v9130 = vmul.f32 %v8528, %v9023
    %v9131 = vmul.f32 %v8531, %v9023
    %v9132 = vmul.f32 %v8536, %v9023
    %v9133 = vmul.f32 %v8539, %v9023
    %v9134 = vmul.f32 %v8544, %v9023
    %v9135 = vmul.f32 %v8547, %v9023
    %v9136 = vmul.f32 %v8552, %v9023
    %v9137 = vmul.f32 %v8555, %v9023
    %v9138 = vmul.f32 %v8560, %v9023
    %v9139 = vmul.f32 %v8563, %v9023
    %v9140 = vmul.f32 %v8568, %v9023
    %v9141 = vmul.f32 %v8571, %v9023
    %v9142 = vmul.f32 %v8576, %v9023
    %v9143 = vmul.f32 %v8579, %v9023
    %v9144 = vmul.f32 %v8584, %v9023
    %v9145 = vmul.f32 %v8587, %v9023
    %v9146 = vmul.f32 %v8592, %v9023
    %v9147 = vmul.f32 %v8595, %v9023
    %v9148 = vmul.f32 %v8600, %v9023
    %v9149 = vmul.f32 %v8603, %v9023
    %v9150 = vmul.f32 %v8608, %v9023
    %v9151 = vmul.f32 %v8611, %v9023
    %v9152 = vmul.f32 %v8616, %v9023
    %v9153 = vmul.f32 %v8619, %v9023
    %v9154 = vadd.f32 %v9026, %v9025
    %v9155 = vadd.f32 %v9027, %v9025
    %v9156 = vadd.f32 %v9028, %v9025
    %v9157 = vadd.f32 %v9029, %v9025
    %v9158 = vadd.f32 %v9030, %v9025
    %v9159 = vadd.f32 %v9031, %v9025
    %v9160 = vadd.f32 %v9032, %v9025
    %v9161 = vadd.f32 %v9033, %v9025
    %v9162 = vadd.f32 %v9034, %v9025
    %v9163 = vadd.f32 %v9035, %v9025
    %v9164 = vadd.f32 %v9036, %v9025
    %v9165 = vadd.f32 %v9037, %v9025
    %v9166 = vadd.f32 %v9038, %v9025
    %v9167 = vadd.f32 %v9039, %v9025
    %v9168 = vadd.f32 %v9040, %v9025
    %v9169 = vadd.f32 %v9041, %v9025
    %v9170 = vadd.f32 %v9042, %v9025
    %v9171 = vadd.f32 %v9043, %v9025
    %v9172 = vadd.f32 %v9044, %v9025
    %v9173 = vadd.f32 %v9045, %v9025
    %v9174 = vadd.f32 %v9046, %v9025
    %v9175 = vadd.f32 %v9047, %v9025
    %v9176 = vadd.f32 %v9048, %v9025
    %v9177 = vadd.f32 %v9049, %v9025
    %v9178 = vadd.f32 %v9050, %v9025
    %v9179 = vadd.f32 %v9051, %v9025
    %v9180 = vadd.f32 %v9052, %v9025
    %v9181 = vadd.f32 %v9053, %v9025
    %v9182 = vadd.f32 %v9054, %v9025
    %v9183 = vadd.f32 %v9055, %v9025
    %v9184 = vadd.f32 %v9056, %v9025
    %v9185 = vadd.f32 %v9057, %v9025
    %v9186 = vadd.f32 %v9058, %v9025
    %v9187 = vadd.f32 %v9059, %v9025
    %v9188 = vadd.f32 %v9060, %v9025
    %v9189 = vadd.f32 %v9061, %v9025
    %v9190 = vadd.f32 %v9062, %v9025
    %v9191 = vadd.f32 %v9063, %v9025
    %v9192 = vadd.f32 %v9064, %v9025
    %v9193 = vadd.f32 %v9065, %v9025
    %v9194 = vadd.f32 %v9066, %v9025
    %v9195 = vadd.f32 %v9067, %v9025
    %v9196 = vadd.f32 %v9068, %v9025
    %v9197 = vadd.f32 %v9069, %v9025
    %v9198 = vadd.f32 %v9070, %v9025
    %v9199 = vadd.f32 %v9071, %v9025
    %v9200 = vadd.f32 %v9072, %v9025
    %v9201 = vadd.f32 %v9073, %v9025
    %v9202 = vadd.f32 %v9074, %v9025
    %v9203 = vadd.f32 %v9075, %v9025
    %v9204 = vadd.f32 %v9076, %v9025
    %v9205 = vadd.f32 %v9077, %v9025
    %v9206 = vadd.f32 %v9078, %v9025
    %v9207 = vadd.f32 %v9079, %v9025
    %v9208 = vadd.f32 %v9080, %v9025
    %v9209 = vadd.f32 %v9081, %v9025
    %v9210 = vadd.f32 %v9082, %v9025
    %v9211 = vadd.f32 %v9083, %v9025
    %v9212 = vadd.f32 %v9084, %v9025
    %v9213 = vadd.f32 %v9085, %v9025
    %v9214 = vadd.f32 %v9086, %v9025
    %v9215 = vadd.f32 %v9087, %v9025
    %v9216 = vadd.f32 %v9088, %v9025
    %v9217 = vadd.f32 %v9089, %v9025
    %v9218 = vadd.f32 %v9090, %v9025
    %v9219 = vadd.f32 %v9091, %v9025
    %v9220 = vadd.f32 %v9092, %v9025
    %v9221 = vadd.f32 %v9093, %v9025
    %v9222 = vadd.f32 %v9094, %v9025
    %v9223 = vadd.f32 %v9095, %v9025
    %v9224 = vadd.f32 %v9096, %v9025
    %v9225 = vadd.f32 %v9097, %v9025
    %v9226 = vadd.f32 %v9098, %v9025
    %v9227 = vadd.f32 %v9099, %v9025
    %v9228 = vadd.f32 %v9100, %v9025
    %v9229 = vadd.f32 %v9101, %v9025
    %v9230 = vadd.f32 %v9102, %v9025
    %v9231 = vadd.f32 %v9103, %v9025
    %v9232 = vadd.f32 %v9104, %v9025
    %v9233 = vadd.f32 %v9105, %v9025
    %v9234 = vadd.f32 %v9106, %v9025
    %v9235 = vadd.f32 %v9107, %v9025
    %v9236 = vadd.f32 %v9108, %v9025
    %v9237 = vadd.f32 %v9109, %v9025
    %v9238 = vadd.f32 %v9110, %v9025
    %v9239 = vadd.f32 %v9111, %v9025
    %v9240 = vadd.f32 %v9112, %v9025
    %v9241 = vadd.f32 %v9113, %v9025
    %v9242 = vadd.f32 %v9114, %v9025
    %v9243 = vadd.f32 %v9115, %v9025
    %v9244 = vadd.f32 %v9116, %v9025
    %v9245 = vadd.f32 %v9117, %v9025
    %v9246 = vadd.f32 %v9118, %v9025
    %v9247 = vadd.f32 %v9119, %v9025
    %v9248 = vadd.f32 %v9120, %v9025
    %v9249 = vadd.f32 %v9121, %v9025
    %v9250 = vadd.f32 %v9122, %v9025
    %v9251 = vadd.f32 %v9123, %v9025
    %v9252 = vadd.f32 %v9124, %v9025
    %v9253 = vadd.f32 %v9125, %v9025
    %v9254 = vadd.f32 %v9126, %v9025
    %v9255 = vadd.f32 %v9127, %v9025
    %v9256 = vadd.f32 %v9128, %v9025
    %v9257 = vadd.f32 %v9129, %v9025
    %v9258 = vadd.f32 %v9130, %v9025
    %v9259 = vadd.f32 %v9131, %v9025
    %v9260 = vadd.f32 %v9132, %v9025
    %v9261 = vadd.f32 %v9133, %v9025
    %v9262 = vadd.f32 %v9134, %v9025
    %v9263 = vadd.f32 %v9135, %v9025
    %v9264 = vadd.f32 %v9136, %v9025
    %v9265 = vadd.f32 %v9137, %v9025
    %v9266 = vadd.f32 %v9138, %v9025
    %v9267 = vadd.f32 %v9139, %v9025
    %v9268 = vadd.f32 %v9140, %v9025
    %v9269 = vadd.f32 %v9141, %v9025
    %v9270 = vadd.f32 %v9142, %v9025
    %v9271 = vadd.f32 %v9143, %v9025
    %v9272 = vadd.f32 %v9144, %v9025
    %v9273 = vadd.f32 %v9145, %v9025
    %v9274 = vadd.f32 %v9146, %v9025
    %v9275 = vadd.f32 %v9147, %v9025
    %v9276 = vadd.f32 %v9148, %v9025
    %v9277 = vadd.f32 %v9149, %v9025
    %v9278 = vadd.f32 %v9150, %v9025
    %v9279 = vadd.f32 %v9151, %v9025
    %v9280 = vadd.f32 %v9152, %v9025
    %v9281 = vadd.f32 %v9153, %v9025
    %v9282 = vmax.f32 %v9154, 0.0
    %v9283 = vmax.f32 %v9155, 0.0
    %v9284 = vmax.f32 %v9156, 0.0
    %v9285 = vmax.f32 %v9157, 0.0
    %v9286 = vmax.f32 %v9158, 0.0
    %v9287 = vmax.f32 %v9159, 0.0
    %v9288 = vmax.f32 %v9160, 0.0
    %v9289 = vmax.f32 %v9161, 0.0
    %v9290 = vmax.f32 %v9162, 0.0
    %v9291 = vmax.f32 %v9163, 0.0
    %v9292 = vmax.f32 %v9164, 0.0
    %v9293 = vmax.f32 %v9165, 0.0
    %v9294 = vmax.f32 %v9166, 0.0
    %v9295 = vmax.f32 %v9167, 0.0
    %v9296 = vmax.f32 %v9168, 0.0
    %v9297 = vmax.f32 %v9169, 0.0
    %v9298 = vmax.f32 %v9170, 0.0
    %v9299 = vmax.f32 %v9171, 0.0
    %v9300 = vmax.f32 %v9172, 0.0
    %v9301 = vmax.f32 %v9173, 0.0
    %v9302 = vmax.f32 %v9174, 0.0
    %v9303 = vmax.f32 %v9175, 0.0
    %v9304 = vmax.f32 %v9176, 0.0
    %v9305 = vmax.f32 %v9177, 0.0
    %v9306 = vmax.f32 %v9178, 0.0
    %v9307 = vmax.f32 %v9179, 0.0
    %v9308 = vmax.f32 %v9180, 0.0
    %v9309 = vmax.f32 %v9181, 0.0
    %v9310 = vmax.f32 %v9182, 0.0
    %v9311 = vmax.f32 %v9183, 0.0
    %v9312 = vmax.f32 %v9184, 0.0
    %v9313 = vmax.f32 %v9185, 0.0
    %v9314 = vmax.f32 %v9186, 0.0
    %v9315 = vmax.f32 %v9187, 0.0
    %v9316 = vmax.f32 %v9188, 0.0
    %v9317 = vmax.f32 %v9189, 0.0
    %v9318 = vmax.f32 %v9190, 0.0
    %v9319 = vmax.f32 %v9191, 0.0
    %v9320 = vmax.f32 %v9192, 0.0
    %v9321 = vmax.f32 %v9193, 0.0
    %v9322 = vmax.f32 %v9194, 0.0
    %v9323 = vmax.f32 %v9195, 0.0
    %v9324 = vmax.f32 %v9196, 0.0
    %v9325 = vmax.f32 %v9197, 0.0
    %v9326 = vmax.f32 %v9198, 0.0
    %v9327 = vmax.f32 %v9199, 0.0
    %v9328 = vmax.f32 %v9200, 0.0
    %v9329 = vmax.f32 %v9201, 0.0
    %v9330 = vmax.f32 %v9202, 0.0
    %v9331 = vmax.f32 %v9203, 0.0
    %v9332 = vmax.f32 %v9204, 0.0
    %v9333 = vmax.f32 %v9205, 0.0
    %v9334 = vmax.f32 %v9206, 0.0
    %v9335 = vmax.f32 %v9207, 0.0
    %v9336 = vmax.f32 %v9208, 0.0
    %v9337 = vmax.f32 %v9209, 0.0
    %v9338 = vmax.f32 %v9210, 0.0
    %v9339 = vmax.f32 %v9211, 0.0
    %v9340 = vmax.f32 %v9212, 0.0
    %v9341 = vmax.f32 %v9213, 0.0
    %v9342 = vmax.f32 %v9214, 0.0
    %v9343 = vmax.f32 %v9215, 0.0
    %v9344 = vmax.f32 %v9216, 0.0
    %v9345 = vmax.f32 %v9217, 0.0
    %v9346 = vmax.f32 %v9218, 0.0
    %v9347 = vmax.f32 %v9219, 0.0
    %v9348 = vmax.f32 %v9220, 0.0
    %v9349 = vmax.f32 %v9221, 0.0
    %v9350 = vmax.f32 %v9222, 0.0
    %v9351 = vmax.f32 %v9223, 0.0
    %v9352 = vmax.f32 %v9224, 0.0
    %v9353 = vmax.f32 %v9225, 0.0
    %v9354 = vmax.f32 %v9226, 0.0
    %v9355 = vmax.f32 %v9227, 0.0
    %v9356 = vmax.f32 %v9228, 0.0
    %v9357 = vmax.f32 %v9229, 0.0
    %v9358 = vmax.f32 %v9230, 0.0
    %v9359 = vmax.f32 %v9231, 0.0
    %v9360 = vmax.f32 %v9232, 0.0
    %v9361 = vmax.f32 %v9233, 0.0
    %v9362 = vmax.f32 %v9234, 0.0
    %v9363 = vmax.f32 %v9235, 0.0
    %v9364 = vmax.f32 %v9236, 0.0
    %v9365 = vmax.f32 %v9237, 0.0
    %v9366 = vmax.f32 %v9238, 0.0
    %v9367 = vmax.f32 %v9239, 0.0
    %v9368 = vmax.f32 %v9240, 0.0
    %v9369 = vmax.f32 %v9241, 0.0
    %v9370 = vmax.f32 %v9242, 0.0
    %v9371 = vmax.f32 %v9243, 0.0
    %v9372 = vmax.f32 %v9244, 0.0
    %v9373 = vmax.f32 %v9245, 0.0
    %v9374 = vmax.f32 %v9246, 0.0
    %v9375 = vmax.f32 %v9247, 0.0
    %v9376 = vmax.f32 %v9248, 0.0
    %v9377 = vmax.f32 %v9249, 0.0
    %v9378 = vmax.f32 %v9250, 0.0
    %v9379 = vmax.f32 %v9251, 0.0
    %v9380 = vmax.f32 %v9252, 0.0
    %v9381 = vmax.f32 %v9253, 0.0
    %v9382 = vmax.f32 %v9254, 0.0
    %v9383 = vmax.f32 %v9255, 0.0
    %v9384 = vmax.f32 %v9256, 0.0
    %v9385 = vmax.f32 %v9257, 0.0
    %v9386 = vmax.f32 %v9258, 0.0
    %v9387 = vmax.f32 %v9259, 0.0
    %v9388 = vmax.f32 %v9260, 0.0
    %v9389 = vmax.f32 %v9261, 0.0
    %v9390 = vmax.f32 %v9262, 0.0
    %v9391 = vmax.f32 %v9263, 0.0
    %v9392 = vmax.f32 %v9264, 0.0
    %v9393 = vmax.f32 %v9265, 0.0
    %v9394 = vmax.f32 %v9266, 0.0
    %v9395 = vmax.f32 %v9267, 0.0
    %v9396 = vmax.f32 %v9268, 0.0
    %v9397 = vmax.f32 %v9269, 0.0
    %v9398 = vmax.f32 %v9270, 0.0
    %v9399 = vmax.f32 %v9271, 0.0
    %v9400 = vmax.f32 %v9272, 0.0
    %v9401 = vmax.f32 %v9273, 0.0
    %v9402 = vmax.f32 %v9274, 0.0
    %v9403 = vmax.f32 %v9275, 0.0
    %v9404 = vmax.f32 %v9276, 0.0
    %v9405 = vmax.f32 %v9277, 0.0
    %v9406 = vmax.f32 %v9278, 0.0
    %v9407 = vmax.f32 %v9279, 0.0
    %v9408 = vmax.f32 %v9280, 0.0
    %v9409 = vmax.f32 %v9281, 0.0
    %s9410 = scalar_lea.vmem [#allocation7], 320
    %v9411 = vld [vmem:[%s9410] sm:$0xf]
    %v9412 = vld [vmem:[%s9410 + $0x4] sm:$0xf]
    %v9413 = vld [vmem:[%s9410 + $0x8] sm:$0xf]
    %v9414 = vld [vmem:[%s9410 + $0xc] sm:$0xf]
    %v9415 = vld [vmem:[%s9410 + $0x10] sm:$0xf]
    %v9416 = vld [vmem:[%s9410 + $0x14] sm:$0xf]
    %v9417 = vld [vmem:[%s9410 + $0x18] sm:$0xf]
    %v9418 = vld [vmem:[%s9410 + $0x1c] sm:$0xf]
    %v9419 = vld [vmem:[%s9410 + $0x20] sm:$0xf]
    %v9420 = vld [vmem:[%s9410 + $0x24] sm:$0xf]
    %v9421 = vld [vmem:[%s9410 + $0x28] sm:$0xf]
    %v9422 = vld [vmem:[%s9410 + $0x2c] sm:$0xf]
    %v9423 = vld [vmem:[%s9410 + $0x30] sm:$0xf]
    %v9424 = vld [vmem:[%s9410 + $0x34] sm:$0xf]
    %v9425 = vld [vmem:[%s9410 + $0x38] sm:$0xf]
    %v9426 = vld [vmem:[%s9410 + $0x3c] sm:$0xf]
    %v9427 = vld [vmem:[#allocation10 + $0x13] ss:$0 sm:$0xff]
    %v9428 = vld [vmem:[#allocation10 + $0x14] ss:$0 sm:$0xff]
    %v9429 = vpack.c.bf16 %v9283, %v9282
    %v9430 = vpack.c.bf16 %v9285, %v9284
    %v9431 = vpack.c.bf16 %v9287, %v9286
    %v9432 = vpack.c.bf16 %v9289, %v9288
    %v9433 = vpack.c.bf16 %v9291, %v9290
    %v9434 = vpack.c.bf16 %v9293, %v9292
    %v9435 = vpack.c.bf16 %v9295, %v9294
    %v9436 = vpack.c.bf16 %v9297, %v9296
    %v9437 = vpack.c.bf16 %v9299, %v9298
    %v9438 = vpack.c.bf16 %v9301, %v9300
    %v9439 = vpack.c.bf16 %v9303, %v9302
    %v9440 = vpack.c.bf16 %v9305, %v9304
    %v9441 = vpack.c.bf16 %v9307, %v9306
    %v9442 = vpack.c.bf16 %v9309, %v9308
    %v9443 = vpack.c.bf16 %v9311, %v9310
    %v9444 = vpack.c.bf16 %v9313, %v9312
    %v9445 = vpack.c.bf16 %v9315, %v9314
    %v9446 = vpack.c.bf16 %v9317, %v9316
    %v9447 = vpack.c.bf16 %v9319, %v9318
    %v9448 = vpack.c.bf16 %v9321, %v9320
    %v9449 = vpack.c.bf16 %v9323, %v9322
    %v9450 = vpack.c.bf16 %v9325, %v9324
    %v9451 = vpack.c.bf16 %v9327, %v9326
    %v9452 = vpack.c.bf16 %v9329, %v9328
    %v9453 = vpack.c.bf16 %v9331, %v9330
    %v9454 = vpack.c.bf16 %v9333, %v9332
    %v9455 = vpack.c.bf16 %v9335, %v9334
    %v9456 = vpack.c.bf16 %v9337, %v9336
    %v9457 = vpack.c.bf16 %v9339, %v9338
    %v9458 = vpack.c.bf16 %v9341, %v9340
    %v9459 = vpack.c.bf16 %v9343, %v9342
    %v9460 = vpack.c.bf16 %v9345, %v9344
    %v9461 = vpack.c.bf16 %v9347, %v9346
    %v9462 = vpack.c.bf16 %v9349, %v9348
    %v9463 = vpack.c.bf16 %v9351, %v9350
    %v9464 = vpack.c.bf16 %v9353, %v9352
    %v9465 = vpack.c.bf16 %v9355, %v9354
    %v9466 = vpack.c.bf16 %v9357, %v9356
    %v9467 = vpack.c.bf16 %v9359, %v9358
    %v9468 = vpack.c.bf16 %v9361, %v9360
    %v9469 = vpack.c.bf16 %v9363, %v9362
    %v9470 = vpack.c.bf16 %v9365, %v9364
    %v9471 = vpack.c.bf16 %v9367, %v9366
    %v9472 = vpack.c.bf16 %v9369, %v9368
    %v9473 = vpack.c.bf16 %v9371, %v9370
    %v9474 = vpack.c.bf16 %v9373, %v9372
    %v9475 = vpack.c.bf16 %v9375, %v9374
    %v9476 = vpack.c.bf16 %v9377, %v9376
    %v9477 = vpack.c.bf16 %v9379, %v9378
    %v9478 = vpack.c.bf16 %v9381, %v9380
    %v9479 = vpack.c.bf16 %v9383, %v9382
    %v9480 = vpack.c.bf16 %v9385, %v9384
    %v9481 = vpack.c.bf16 %v9387, %v9386
    %v9482 = vpack.c.bf16 %v9389, %v9388
    %v9483 = vpack.c.bf16 %v9391, %v9390
    %v9484 = vpack.c.bf16 %v9393, %v9392
    %v9485 = vpack.c.bf16 %v9395, %v9394
    %v9486 = vpack.c.bf16 %v9397, %v9396
    %v9487 = vpack.c.bf16 %v9399, %v9398
    %v9488 = vpack.c.bf16 %v9401, %v9400
    %v9489 = vpack.c.bf16 %v9403, %v9402
    %v9490 = vpack.c.bf16 %v9405, %v9404
    %v9491 = vpack.c.bf16 %v9407, %v9406
    %v9492 = vpack.c.bf16 %v9409, %v9408
    %v9509 = vunpack.c.l.b16 %v9411
    %v9510 = vunpack.c.l.b16 %v9412
    %v9511 = vunpack.c.l.b16 %v9413
    %v9512 = vunpack.c.l.b16 %v9414
    %v9513 = vunpack.c.l.b16 %v9415
    %v9514 = vunpack.c.l.b16 %v9416
    %v9515 = vunpack.c.l.b16 %v9417
    %v9516 = vunpack.c.l.b16 %v9418
    %v9517 = vunpack.c.l.b16 %v9419
    %v9518 = vunpack.c.l.b16 %v9420
    %v9519 = vunpack.c.l.b16 %v9421
    %v9520 = vunpack.c.l.b16 %v9422
    %v9521 = vunpack.c.l.b16 %v9423
    %v9522 = vunpack.c.l.b16 %v9424
    %v9523 = vunpack.c.l.b16 %v9425
    %v9524 = vunpack.c.l.b16 %v9426
    %v9525 = vpack.c.b16 %v9510, %v9509
    %v9526 = vpack.c.b16 %v9512, %v9511
    %v9527 = vpack.c.b16 %v9514, %v9513
    %v9528 = vpack.c.b16 %v9516, %v9515
    %v9529 = vpack.c.b16 %v9518, %v9517
    %v9530 = vpack.c.b16 %v9520, %v9519
    %v9531 = vpack.c.b16 %v9522, %v9521
    %v9532 = vpack.c.b16 %v9524, %v9523
    %9541 = vmatprep.subr.bf16.mxu0 0
    %9542 = vmatpush1.bf16.msra.mxu0 %v9525
    %9543 = vmatprep.subr.bf16.mxu0 0
    %9544 = vmatpush1.bf16.msra.mxu0 %v9526
    %9545 = vmatprep.subr.bf16.mxu0 0
    %9546 = vmatpush1.bf16.msra.mxu0 %v9527
    %9547 = vmatprep.subr.bf16.mxu0 0
    %9548 = vmatpush1.bf16.msra.mxu0 %v9528
    %9549 = vmatprep.subr.bf16.mxu0 0
    %9550 = vmatpush1.bf16.msra.mxu0 %v9529
    %9551 = vmatprep.subr.bf16.mxu0 0
    %9552 = vmatpush1.bf16.msra.mxu0 %v9530
    %9553 = vmatprep.subr.bf16.mxu0 0
    %9554 = vmatpush1.bf16.msra.mxu0 %v9531
    %9555 = vmatprep.subr.bf16.mxu0 0
    %9556 = vmatpush1.bf16.msra.mxu0 %v9532
    %9557 = vmatprep.subr.bf16.mxu0 0
    %9558 = vmatpush1.bf16.msra.mxu0 0
    %9559 = vmatprep.subr.bf16.mxu0 0
    %9560 = vmatpush1.bf16.msra.mxu0 0
    %9561 = vmatprep.subr.bf16.mxu0 0
    %9562 = vmatpush1.bf16.msra.mxu0 0
    %9563 = vmatprep.subr.bf16.mxu0 0
    %9564 = vmatpush1.bf16.msra.mxu0 0
    %9565 = vmatprep.subr.bf16.mxu0 0
    %9566 = vmatpush1.bf16.msra.mxu0 0
    %9567 = vmatprep.subr.bf16.mxu0 0
    %9568 = vmatpush1.bf16.msra.mxu0 0
    %9569 = vmatprep.subr.bf16.mxu0 0
    %9570 = vmatpush1.bf16.msra.mxu0 0
    %9571 = vmatprep.subr.bf16.mxu0 0
    %9572 = vmatpush1.bf16.msra.mxu0 0
    %9573 = vmatprep.mubr.bf16.mxu0 0
    %9574 = vmatmul.mubr.bf16.gmra.mrb[0].mxu0 %v9429
    %v9575 = vpop.f32.mrb[0].mxu0
    %v9576 = vadd.f32 0.0, %v9575
    %v9577 = vpop.f32.mrb[0].mxu0
    %v9578 = vpop.f32.mrb[0].mxu0
    %v9579 = vadd.f32 0.0, %v9578
    %v9580 = vpop.f32.mrb[0].mxu0
    %9581 = vmatprep.mubr.bf16.mxu0 0
    %9582 = vmatmul.mubr.bf16.gmra.mrb[0].mxu0 %v9430
    %v9583 = vpop.f32.mrb[0].mxu0
    %v9584 = vadd.f32 0.0, %v9583
    %v9585 = vpop.f32.mrb[0].mxu0
    %v9586 = vpop.f32.mrb[0].mxu0
    %v9587 = vadd.f32 0.0, %v9586
    %v9588 = vpop.f32.mrb[0].mxu0
    %9589 = vmatprep.mubr.bf16.mxu0 0
    %9590 = vmatmul.mubr.bf16.gmra.mrb[0].mxu0 %v9431
    %v9591 = vpop.f32.mrb[0].mxu0
    %v9592 = vadd.f32 0.0, %v9591
    %v9593 = vpop.f32.mrb[0].mxu0
    %v9594 = vpop.f32.mrb[0].mxu0
    %v9595 = vadd.f32 0.0, %v9594
    %v9596 = vpop.f32.mrb[0].mxu0
    %9597 = vmatprep.mubr.bf16.mxu0 0
    %9598 = vmatmul.mubr.bf16.gmra.mrb[0].mxu0 %v9432
    %v9599 = vpop.f32.mrb[0].mxu0
    %v9600 = vadd.f32 0.0, %v9599
    %v9601 = vpop.f32.mrb[0].mxu0
    %v9602 = vpop.f32.mrb[0].mxu0
    %v9603 = vadd.f32 0.0, %v9602
    %v9604 = vpop.f32.mrb[0].mxu0
    %9605 = vmatprep.mubr.bf16.mxu0 0
    %9606 = vmatmul.mubr.bf16.gmra.mrb[0].mxu0 %v9433
    %v9607 = vpop.f32.mrb[0].mxu0
    %v9608 = vadd.f32 0.0, %v9607
    %v9609 = vpop.f32.mrb[0].mxu0
    %v9610 = vpop.f32.mrb[0].mxu0
    %v9611 = vadd.f32 0.0, %v9610
    %v9612 = vpop.f32.mrb[0].mxu0
    %9613 = vmatprep.mubr.bf16.mxu0 0
    %9614 = vmatmul.mubr.bf16.gmra.mrb[0].mxu0 %v9434
    %v9615 = vpop.f32.mrb[0].mxu0
    %v9616 = vadd.f32 0.0, %v9615
    %v9617 = vpop.f32.mrb[0].mxu0
    %v9618 = vpop.f32.mrb[0].mxu0
    %v9619 = vadd.f32 0.0, %v9618
    %v9620 = vpop.f32.mrb[0].mxu0
    %9621 = vmatprep.mubr.bf16.mxu0 0
    %9622 = vmatmul.mubr.bf16.gmra.mrb[0].mxu0 %v9435
    %v9623 = vpop.f32.mrb[0].mxu0
    %v9624 = vadd.f32 0.0, %v9623
    %v9625 = vpop.f32.mrb[0].mxu0
    %v9626 = vpop.f32.mrb[0].mxu0
    %v9627 = vadd.f32 0.0, %v9626
    %v9628 = vpop.f32.mrb[0].mxu0
    %9629 = vmatprep.mubr.bf16.mxu0 0
    %9630 = vmatmul.mubr.bf16.gmra.mrb[0].mxu0 %v9436
    %v9631 = vpop.f32.mrb[0].mxu0
    %v9632 = vadd.f32 0.0, %v9631
    %v9633 = vpop.f32.mrb[0].mxu0
    %v9634 = vpop.f32.mrb[0].mxu0
    %v9635 = vadd.f32 0.0, %v9634
    %v9636 = vpop.f32.mrb[0].mxu0
    %9637 = vmatprep.mubr.bf16.mxu0 0
    %9638 = vmatmul.mubr.bf16.gmra.mrb[0].mxu0 %v9437
    %v9639 = vpop.f32.mrb[0].mxu0
    %v9640 = vadd.f32 0.0, %v9639
    %v9641 = vpop.f32.mrb[0].mxu0
    %v9642 = vpop.f32.mrb[0].mxu0
    %v9643 = vadd.f32 0.0, %v9642
    %v9644 = vpop.f32.mrb[0].mxu0
    %9645 = vmatprep.mubr.bf16.mxu0 0
    %9646 = vmatmul.mubr.bf16.gmra.mrb[0].mxu0 %v9438
    %v9647 = vpop.f32.mrb[0].mxu0
    %v9648 = vadd.f32 0.0, %v9647
    %v9649 = vpop.f32.mrb[0].mxu0
    %v9650 = vpop.f32.mrb[0].mxu0
    %v9651 = vadd.f32 0.0, %v9650
    %v9652 = vpop.f32.mrb[0].mxu0
    %9653 = vmatprep.mubr.bf16.mxu0 0
    %9654 = vmatmul.mubr.bf16.gmra.mrb[0].mxu0 %v9439
    %v9655 = vpop.f32.mrb[0].mxu0
    %v9656 = vadd.f32 0.0, %v9655
    %v9657 = vpop.f32.mrb[0].mxu0
    %v9658 = vpop.f32.mrb[0].mxu0
    %v9659 = vadd.f32 0.0, %v9658
    %v9660 = vpop.f32.mrb[0].mxu0
    %9661 = vmatprep.mubr.bf16.mxu0 0
    %9662 = vmatmul.mubr.bf16.gmra.mrb[0].mxu0 %v9440
    %v9663 = vpop.f32.mrb[0].mxu0
    %v9664 = vadd.f32 0.0, %v9663
    %v9665 = vpop.f32.mrb[0].mxu0
    %v9666 = vpop.f32.mrb[0].mxu0
    %v9667 = vadd.f32 0.0, %v9666
    %v9668 = vpop.f32.mrb[0].mxu0
    %9669 = vmatprep.mubr.bf16.mxu0 0
    %9670 = vmatmul.mubr.bf16.gmra.mrb[0].mxu0 %v9441
    %v9671 = vpop.f32.mrb[0].mxu0
    %v9672 = vadd.f32 0.0, %v9671
    %v9673 = vpop.f32.mrb[0].mxu0
    %v9674 = vpop.f32.mrb[0].mxu0
    %v9675 = vadd.f32 0.0, %v9674
    %v9676 = vpop.f32.mrb[0].mxu0
    %9677 = vmatprep.mubr.bf16.mxu0 0
    %9678 = vmatmul.mubr.bf16.gmra.mrb[0].mxu0 %v9442
    %v9679 = vpop.f32.mrb[0].mxu0
    %v9680 = vadd.f32 0.0, %v9679
    %v9681 = vpop.f32.mrb[0].mxu0
    %v9682 = vpop.f32.mrb[0].mxu0
    %v9683 = vadd.f32 0.0, %v9682
    %v9684 = vpop.f32.mrb[0].mxu0
    %9685 = vmatprep.mubr.bf16.mxu0 0
    %9686 = vmatmul.mubr.bf16.gmra.mrb[0].mxu0 %v9443
    %v9687 = vpop.f32.mrb[0].mxu0
    %v9688 = vadd.f32 0.0, %v9687
    %v9689 = vpop.f32.mrb[0].mxu0
    %v9690 = vpop.f32.mrb[0].mxu0
    %v9691 = vadd.f32 0.0, %v9690
    %v9692 = vpop.f32.mrb[0].mxu0
    %9693 = vmatprep.mubr.bf16.mxu0 0
    %9694 = vmatmul.mubr.bf16.gmra.mrb[0].mxu0 %v9444
    %v9695 = vpop.f32.mrb[0].mxu0
    %v9696 = vadd.f32 0.0, %v9695
    %v9697 = vpop.f32.mrb[0].mxu0
    %v9698 = vpop.f32.mrb[0].mxu0
    %v9699 = vadd.f32 0.0, %v9698
    %v9700 = vpop.f32.mrb[0].mxu0
    %9701 = vmatprep.mubr.bf16.mxu0 0
    %9702 = vmatmul.mubr.bf16.gmra.mrb[0].mxu0 %v9445
    %v9703 = vpop.f32.mrb[0].mxu0
    %v9704 = vadd.f32 0.0, %v9703
    %v9705 = vpop.f32.mrb[0].mxu0
    %v9706 = vpop.f32.mrb[0].mxu0
    %v9707 = vadd.f32 0.0, %v9706
    %v9708 = vpop.f32.mrb[0].mxu0
    %9709 = vmatprep.mubr.bf16.mxu0 0
    %9710 = vmatmul.mubr.bf16.gmra.mrb[0].mxu0 %v9446
    %v9711 = vpop.f32.mrb[0].mxu0
    %v9712 = vadd.f32 0.0, %v9711
    %v9713 = vpop.f32.mrb[0].mxu0
    %v9714 = vpop.f32.mrb[0].mxu0
    %v9715 = vadd.f32 0.0, %v9714
    %v9716 = vpop.f32.mrb[0].mxu0
    %9717 = vmatprep.mubr.bf16.mxu0 0
    %9718 = vmatmul.mubr.bf16.gmra.mrb[0].mxu0 %v9447
    %v9719 = vpop.f32.mrb[0].mxu0
    %v9720 = vadd.f32 0.0, %v9719
    %v9721 = vpop.f32.mrb[0].mxu0
    %v9722 = vpop.f32.mrb[0].mxu0
    %v9723 = vadd.f32 0.0, %v9722
    %v9724 = vpop.f32.mrb[0].mxu0
    %9725 = vmatprep.mubr.bf16.mxu0 0
    %9726 = vmatmul.mubr.bf16.gmra.mrb[0].mxu0 %v9448
    %v9727 = vpop.f32.mrb[0].mxu0
    %v9728 = vadd.f32 0.0, %v9727
    %v9729 = vpop.f32.mrb[0].mxu0
    %v9730 = vpop.f32.mrb[0].mxu0
    %v9731 = vadd.f32 0.0, %v9730
    %v9732 = vpop.f32.mrb[0].mxu0
    %9733 = vmatprep.mubr.bf16.mxu0 0
    %9734 = vmatmul.mubr.bf16.gmra.mrb[0].mxu0 %v9449
    %v9735 = vpop.f32.mrb[0].mxu0
    %v9736 = vadd.f32 0.0, %v9735
    %v9737 = vpop.f32.mrb[0].mxu0
    %v9738 = vpop.f32.mrb[0].mxu0
    %v9739 = vadd.f32 0.0, %v9738
    %v9740 = vpop.f32.mrb[0].mxu0
    %9741 = vmatprep.mubr.bf16.mxu0 0
    %9742 = vmatmul.mubr.bf16.gmra.mrb[0].mxu0 %v9450
    %v9743 = vpop.f32.mrb[0].mxu0
    %v9744 = vadd.f32 0.0, %v9743
    %v9745 = vpop.f32.mrb[0].mxu0
    %v9746 = vpop.f32.mrb[0].mxu0
    %v9747 = vadd.f32 0.0, %v9746
    %v9748 = vpop.f32.mrb[0].mxu0
    %9749 = vmatprep.mubr.bf16.mxu0 0
    %9750 = vmatmul.mubr.bf16.gmra.mrb[0].mxu0 %v9451
    %v9751 = vpop.f32.mrb[0].mxu0
    %v9752 = vadd.f32 0.0, %v9751
    %v9753 = vpop.f32.mrb[0].mxu0
    %v9754 = vpop.f32.mrb[0].mxu0
    %v9755 = vadd.f32 0.0, %v9754
    %v9756 = vpop.f32.mrb[0].mxu0
    %9757 = vmatprep.mubr.bf16.mxu0 0
    %9758 = vmatmul.mubr.bf16.gmra.mrb[0].mxu0 %v9452
    %v9759 = vpop.f32.mrb[0].mxu0
    %v9760 = vadd.f32 0.0, %v9759
    %v9761 = vpop.f32.mrb[0].mxu0
    %v9762 = vpop.f32.mrb[0].mxu0
    %v9763 = vadd.f32 0.0, %v9762
    %v9764 = vpop.f32.mrb[0].mxu0
    %9765 = vmatprep.mubr.bf16.mxu0 0
    %9766 = vmatmul.mubr.bf16.gmra.mrb[0].mxu0 %v9453
    %v9767 = vpop.f32.mrb[0].mxu0
    %v9768 = vadd.f32 0.0, %v9767
    %v9769 = vpop.f32.mrb[0].mxu0
    %v9770 = vpop.f32.mrb[0].mxu0
    %v9771 = vadd.f32 0.0, %v9770
    %v9772 = vpop.f32.mrb[0].mxu0
    %9773 = vmatprep.mubr.bf16.mxu0 0
    %9774 = vmatmul.mubr.bf16.gmra.mrb[0].mxu0 %v9454
    %v9775 = vpop.f32.mrb[0].mxu0
    %v9776 = vadd.f32 0.0, %v9775
    %v9777 = vpop.f32.mrb[0].mxu0
    %v9778 = vpop.f32.mrb[0].mxu0
    %v9779 = vadd.f32 0.0, %v9778
    %v9780 = vpop.f32.mrb[0].mxu0
    %9781 = vmatprep.mubr.bf16.mxu0 0
    %9782 = vmatmul.mubr.bf16.gmra.mrb[0].mxu0 %v9455
    %v9783 = vpop.f32.mrb[0].mxu0
    %v9784 = vadd.f32 0.0, %v9783
    %v9785 = vpop.f32.mrb[0].mxu0
    %v9786 = vpop.f32.mrb[0].mxu0
    %v9787 = vadd.f32 0.0, %v9786
    %v9788 = vpop.f32.mrb[0].mxu0
    %9789 = vmatprep.mubr.bf16.mxu0 0
    %9790 = vmatmul.mubr.bf16.gmra.mrb[0].mxu0 %v9456
    %v9791 = vpop.f32.mrb[0].mxu0
    %v9792 = vadd.f32 0.0, %v9791
    %v9793 = vpop.f32.mrb[0].mxu0
    %v9794 = vpop.f32.mrb[0].mxu0
    %v9795 = vadd.f32 0.0, %v9794
    %v9796 = vpop.f32.mrb[0].mxu0
    %9797 = vmatprep.mubr.bf16.mxu0 0
    %9798 = vmatmul.mubr.bf16.gmra.mrb[0].mxu0 %v9457
    %v9799 = vpop.f32.mrb[0].mxu0
    %v9800 = vadd.f32 0.0, %v9799
    %v9801 = vpop.f32.mrb[0].mxu0
    %v9802 = vpop.f32.mrb[0].mxu0
    %v9803 = vadd.f32 0.0, %v9802
    %v9804 = vpop.f32.mrb[0].mxu0
    %9805 = vmatprep.mubr.bf16.mxu0 0
    %9806 = vmatmul.mubr.bf16.gmra.mrb[0].mxu0 %v9458
    %v9807 = vpop.f32.mrb[0].mxu0
    %v9808 = vadd.f32 0.0, %v9807
    %v9809 = vpop.f32.mrb[0].mxu0
    %v9810 = vpop.f32.mrb[0].mxu0
    %v9811 = vadd.f32 0.0, %v9810
    %v9812 = vpop.f32.mrb[0].mxu0
    %9813 = vmatprep.mubr.bf16.mxu0 0
    %9814 = vmatmul.mubr.bf16.gmra.mrb[0].mxu0 %v9459
    %v9815 = vpop.f32.mrb[0].mxu0
    %v9816 = vadd.f32 0.0, %v9815
    %v9817 = vpop.f32.mrb[0].mxu0
    %v9818 = vpop.f32.mrb[0].mxu0
    %v9819 = vadd.f32 0.0, %v9818
    %v9820 = vpop.f32.mrb[0].mxu0
    %9821 = vmatprep.mubr.bf16.mxu0 0
    %9822 = vmatmul.mubr.bf16.gmra.mrb[0].mxu0 %v9460
    %v9823 = vpop.f32.mrb[0].mxu0
    %v9824 = vadd.f32 0.0, %v9823
    %v9825 = vpop.f32.mrb[0].mxu0
    %v9826 = vpop.f32.mrb[0].mxu0
    %v9827 = vadd.f32 0.0, %v9826
    %v9828 = vpop.f32.mrb[0].mxu0
    %9829 = vmatprep.mubr.bf16.mxu0 0
    %9830 = vmatmul.mubr.bf16.gmra.mrb[0].mxu0 %v9461
    %v9831 = vpop.f32.mrb[0].mxu0
    %v9832 = vadd.f32 0.0, %v9831
    %v9833 = vpop.f32.mrb[0].mxu0
    %v9834 = vpop.f32.mrb[0].mxu0
    %v9835 = vadd.f32 0.0, %v9834
    %v9836 = vpop.f32.mrb[0].mxu0
    %9837 = vmatprep.mubr.bf16.mxu0 0
    %9838 = vmatmul.mubr.bf16.gmra.mrb[0].mxu0 %v9462
    %v9839 = vpop.f32.mrb[0].mxu0
    %v9840 = vadd.f32 0.0, %v9839
    %v9841 = vpop.f32.mrb[0].mxu0
    %v9842 = vpop.f32.mrb[0].mxu0
    %v9843 = vadd.f32 0.0, %v9842
    %v9844 = vpop.f32.mrb[0].mxu0
    %9845 = vmatprep.mubr.bf16.mxu0 0
    %9846 = vmatmul.mubr.bf16.gmra.mrb[0].mxu0 %v9463
    %v9847 = vpop.f32.mrb[0].mxu0
    %v9848 = vadd.f32 0.0, %v9847
    %v9849 = vpop.f32.mrb[0].mxu0
    %v9850 = vpop.f32.mrb[0].mxu0
    %v9851 = vadd.f32 0.0, %v9850
    %v9852 = vpop.f32.mrb[0].mxu0
    %9853 = vmatprep.mubr.bf16.mxu0 0
    %9854 = vmatmul.mubr.bf16.gmra.mrb[0].mxu0 %v9464
    %v9855 = vpop.f32.mrb[0].mxu0
    %v9856 = vadd.f32 0.0, %v9855
    %v9857 = vpop.f32.mrb[0].mxu0
    %v9858 = vpop.f32.mrb[0].mxu0
    %v9859 = vadd.f32 0.0, %v9858
    %v9860 = vpop.f32.mrb[0].mxu0
    %9861 = vmatprep.mubr.bf16.mxu0 0
    %9862 = vmatmul.mubr.bf16.gmra.mrb[0].mxu0 %v9465
    %v9863 = vpop.f32.mrb[0].mxu0
    %v9864 = vadd.f32 0.0, %v9863
    %v9865 = vpop.f32.mrb[0].mxu0
    %v9866 = vpop.f32.mrb[0].mxu0
    %v9867 = vadd.f32 0.0, %v9866
    %v9868 = vpop.f32.mrb[0].mxu0
    %9869 = vmatprep.mubr.bf16.mxu0 0
    %9870 = vmatmul.mubr.bf16.gmra.mrb[0].mxu0 %v9466
    %v9871 = vpop.f32.mrb[0].mxu0
    %v9872 = vadd.f32 0.0, %v9871
    %v9873 = vpop.f32.mrb[0].mxu0
    %v9874 = vpop.f32.mrb[0].mxu0
    %v9875 = vadd.f32 0.0, %v9874
    %v9876 = vpop.f32.mrb[0].mxu0
    %9877 = vmatprep.mubr.bf16.mxu0 0
    %9878 = vmatmul.mubr.bf16.gmra.mrb[0].mxu0 %v9467
    %v9879 = vpop.f32.mrb[0].mxu0
    %v9880 = vadd.f32 0.0, %v9879
    %v9881 = vpop.f32.mrb[0].mxu0
    %v9882 = vpop.f32.mrb[0].mxu0
    %v9883 = vadd.f32 0.0, %v9882
    %v9884 = vpop.f32.mrb[0].mxu0
    %9885 = vmatprep.mubr.bf16.mxu0 0
    %9886 = vmatmul.mubr.bf16.gmra.mrb[0].mxu0 %v9468
    %v9887 = vpop.f32.mrb[0].mxu0
    %v9888 = vadd.f32 0.0, %v9887
    %v9889 = vpop.f32.mrb[0].mxu0
    %v9890 = vpop.f32.mrb[0].mxu0
    %v9891 = vadd.f32 0.0, %v9890
    %v9892 = vpop.f32.mrb[0].mxu0
    %9893 = vmatprep.mubr.bf16.mxu0 0
    %9894 = vmatmul.mubr.bf16.gmra.mrb[0].mxu0 %v9469
    %v9895 = vpop.f32.mrb[0].mxu0
    %v9896 = vadd.f32 0.0, %v9895
    %v9897 = vpop.f32.mrb[0].mxu0
    %v9898 = vpop.f32.mrb[0].mxu0
    %v9899 = vadd.f32 0.0, %v9898
    %v9900 = vpop.f32.mrb[0].mxu0
    %9901 = vmatprep.mubr.bf16.mxu0 0
    %9902 = vmatmul.mubr.bf16.gmra.mrb[0].mxu0 %v9470
    %v9903 = vpop.f32.mrb[0].mxu0
    %v9904 = vadd.f32 0.0, %v9903
    %v9905 = vpop.f32.mrb[0].mxu0
    %v9906 = vpop.f32.mrb[0].mxu0
    %v9907 = vadd.f32 0.0, %v9906
    %v9908 = vpop.f32.mrb[0].mxu0
    %9909 = vmatprep.mubr.bf16.mxu0 0
    %9910 = vmatmul.mubr.bf16.gmra.mrb[0].mxu0 %v9471
    %v9911 = vpop.f32.mrb[0].mxu0
    %v9912 = vadd.f32 0.0, %v9911
    %v9913 = vpop.f32.mrb[0].mxu0
    %v9914 = vpop.f32.mrb[0].mxu0
    %v9915 = vadd.f32 0.0, %v9914
    %v9916 = vpop.f32.mrb[0].mxu0
    %9917 = vmatprep.mubr.bf16.mxu0 0
    %9918 = vmatmul.mubr.bf16.gmra.mrb[0].mxu0 %v9472
    %v9919 = vpop.f32.mrb[0].mxu0
    %v9920 = vadd.f32 0.0, %v9919
    %v9921 = vpop.f32.mrb[0].mxu0
    %v9922 = vpop.f32.mrb[0].mxu0
    %v9923 = vadd.f32 0.0, %v9922
    %v9924 = vpop.f32.mrb[0].mxu0
    %9925 = vmatprep.mubr.bf16.mxu0 0
    %9926 = vmatmul.mubr.bf16.gmra.mrb[0].mxu0 %v9473
    %v9927 = vpop.f32.mrb[0].mxu0
    %v9928 = vadd.f32 0.0, %v9927
    %v9929 = vpop.f32.mrb[0].mxu0
    %v9930 = vpop.f32.mrb[0].mxu0
    %v9931 = vadd.f32 0.0, %v9930
    %v9932 = vpop.f32.mrb[0].mxu0
    %9933 = vmatprep.mubr.bf16.mxu0 0
    %9934 = vmatmul.mubr.bf16.gmra.mrb[0].mxu0 %v9474
    %v9935 = vpop.f32.mrb[0].mxu0
    %v9936 = vadd.f32 0.0, %v9935
    %v9937 = vpop.f32.mrb[0].mxu0
    %v9938 = vpop.f32.mrb[0].mxu0
    %v9939 = vadd.f32 0.0, %v9938
    %v9940 = vpop.f32.mrb[0].mxu0
    %9941 = vmatprep.mubr.bf16.mxu0 0
    %9942 = vmatmul.mubr.bf16.gmra.mrb[0].mxu0 %v9475
    %v9943 = vpop.f32.mrb[0].mxu0
    %v9944 = vadd.f32 0.0, %v9943
    %v9945 = vpop.f32.mrb[0].mxu0
    %v9946 = vpop.f32.mrb[0].mxu0
    %v9947 = vadd.f32 0.0, %v9946
    %v9948 = vpop.f32.mrb[0].mxu0
    %9949 = vmatprep.mubr.bf16.mxu0 0
    %9950 = vmatmul.mubr.bf16.gmra.mrb[0].mxu0 %v9476
    %v9951 = vpop.f32.mrb[0].mxu0
    %v9952 = vadd.f32 0.0, %v9951
    %v9953 = vpop.f32.mrb[0].mxu0
    %v9954 = vpop.f32.mrb[0].mxu0
    %v9955 = vadd.f32 0.0, %v9954
    %v9956 = vpop.f32.mrb[0].mxu0
    %9957 = vmatprep.mubr.bf16.mxu0 0
    %9958 = vmatmul.mubr.bf16.gmra.mrb[0].mxu0 %v9477
    %v9959 = vpop.f32.mrb[0].mxu0
    %v9960 = vadd.f32 0.0, %v9959
    %v9961 = vpop.f32.mrb[0].mxu0
    %v9962 = vpop.f32.mrb[0].mxu0
    %v9963 = vadd.f32 0.0, %v9962
    %v9964 = vpop.f32.mrb[0].mxu0
    %9965 = vmatprep.mubr.bf16.mxu0 0
    %9966 = vmatmul.mubr.bf16.gmra.mrb[0].mxu0 %v9478
    %v9967 = vpop.f32.mrb[0].mxu0
    %v9968 = vadd.f32 0.0, %v9967
    %v9969 = vpop.f32.mrb[0].mxu0
    %v9970 = vpop.f32.mrb[0].mxu0
    %v9971 = vadd.f32 0.0, %v9970
    %v9972 = vpop.f32.mrb[0].mxu0
    %9973 = vmatprep.mubr.bf16.mxu0 0
    %9974 = vmatmul.mubr.bf16.gmra.mrb[0].mxu0 %v9479
    %v9975 = vpop.f32.mrb[0].mxu0
    %v9976 = vadd.f32 0.0, %v9975
    %v9977 = vpop.f32.mrb[0].mxu0
    %v9978 = vpop.f32.mrb[0].mxu0
    %v9979 = vadd.f32 0.0, %v9978
    %v9980 = vpop.f32.mrb[0].mxu0
    %9981 = vmatprep.mubr.bf16.mxu0 0
    %9982 = vmatmul.mubr.bf16.gmra.mrb[0].mxu0 %v9480
    %v9983 = vpop.f32.mrb[0].mxu0
    %v9984 = vadd.f32 0.0, %v9983
    %v9985 = vpop.f32.mrb[0].mxu0
    %v9986 = vpop.f32.mrb[0].mxu0
    %v9987 = vadd.f32 0.0, %v9986
    %v9988 = vpop.f32.mrb[0].mxu0
    %9989 = vmatprep.mubr.bf16.mxu0 0
    %9990 = vmatmul.mubr.bf16.gmra.mrb[0].mxu0 %v9481
    %v9991 = vpop.f32.mrb[0].mxu0
    %v9992 = vadd.f32 0.0, %v9991
    %v9993 = vpop.f32.mrb[0].mxu0
    %v9994 = vpop.f32.mrb[0].mxu0
    %v9995 = vadd.f32 0.0, %v9994
    %v9996 = vpop.f32.mrb[0].mxu0
    %9997 = vmatprep.mubr.bf16.mxu0 0
    %9998 = vmatmul.mubr.bf16.gmra.mrb[0].mxu0 %v9482
    %v9999 = vpop.f32.mrb[0].mxu0
    %v10000 = vadd.f32 0.0, %v9999
    %v10001 = vpop.f32.mrb[0].mxu0
    %v10002 = vpop.f32.mrb[0].mxu0
    %v10003 = vadd.f32 0.0, %v10002
    %v10004 = vpop.f32.mrb[0].mxu0
    %10005 = vmatprep.mubr.bf16.mxu0 0
    %10006 = vmatmul.mubr.bf16.gmra.mrb[0].mxu0 %v9483
    %v10007 = vpop.f32.mrb[0].mxu0
    %v10008 = vadd.f32 0.0, %v10007
    %v10009 = vpop.f32.mrb[0].mxu0
    %v10010 = vpop.f32.mrb[0].mxu0
    %v10011 = vadd.f32 0.0, %v10010
    %v10012 = vpop.f32.mrb[0].mxu0
    %10013 = vmatprep.mubr.bf16.mxu0 0
    %10014 = vmatmul.mubr.bf16.gmra.mrb[0].mxu0 %v9484
    %v10015 = vpop.f32.mrb[0].mxu0
    %v10016 = vadd.f32 0.0, %v10015
    %v10017 = vpop.f32.mrb[0].mxu0
    %v10018 = vpop.f32.mrb[0].mxu0
    %v10019 = vadd.f32 0.0, %v10018
    %v10020 = vpop.f32.mrb[0].mxu0
    %10021 = vmatprep.mubr.bf16.mxu0 0
    %10022 = vmatmul.mubr.bf16.gmra.mrb[0].mxu0 %v9485
    %v10023 = vpop.f32.mrb[0].mxu0
    %v10024 = vadd.f32 0.0, %v10023
    %v10025 = vpop.f32.mrb[0].mxu0
    %v10026 = vpop.f32.mrb[0].mxu0
    %v10027 = vadd.f32 0.0, %v10026
    %v10028 = vpop.f32.mrb[0].mxu0
    %10029 = vmatprep.mubr.bf16.mxu0 0
    %10030 = vmatmul.mubr.bf16.gmra.mrb[0].mxu0 %v9486
    %v10031 = vpop.f32.mrb[0].mxu0
    %v10032 = vadd.f32 0.0, %v10031
    %v10033 = vpop.f32.mrb[0].mxu0
    %v10034 = vpop.f32.mrb[0].mxu0
    %v10035 = vadd.f32 0.0, %v10034
    %v10036 = vpop.f32.mrb[0].mxu0
    %10037 = vmatprep.mubr.bf16.mxu0 0
    %10038 = vmatmul.mubr.bf16.gmra.mrb[0].mxu0 %v9487
    %v10039 = vpop.f32.mrb[0].mxu0
    %v10040 = vadd.f32 0.0, %v10039
    %v10041 = vpop.f32.mrb[0].mxu0
    %v10042 = vpop.f32.mrb[0].mxu0
    %v10043 = vadd.f32 0.0, %v10042
    %v10044 = vpop.f32.mrb[0].mxu0
    %10045 = vmatprep.mubr.bf16.mxu0 0
    %10046 = vmatmul.mubr.bf16.gmra.mrb[0].mxu0 %v9488
    %v10047 = vpop.f32.mrb[0].mxu0
    %v10048 = vadd.f32 0.0, %v10047
    %v10049 = vpop.f32.mrb[0].mxu0
    %v10050 = vpop.f32.mrb[0].mxu0
    %v10051 = vadd.f32 0.0, %v10050
    %v10052 = vpop.f32.mrb[0].mxu0
    %10053 = vmatprep.mubr.bf16.mxu0 0
    %10054 = vmatmul.mubr.bf16.gmra.mrb[0].mxu0 %v9489
    %v10055 = vpop.f32.mrb[0].mxu0
    %v10056 = vadd.f32 0.0, %v10055
    %v10057 = vpop.f32.mrb[0].mxu0
    %v10058 = vpop.f32.mrb[0].mxu0
    %v10059 = vadd.f32 0.0, %v10058
    %v10060 = vpop.f32.mrb[0].mxu0
    %10061 = vmatprep.mubr.bf16.mxu0 0
    %10062 = vmatmul.mubr.bf16.gmra.mrb[0].mxu0 %v9490
    %v10063 = vpop.f32.mrb[0].mxu0
    %v10064 = vadd.f32 0.0, %v10063
    %v10065 = vpop.f32.mrb[0].mxu0
    %v10066 = vpop.f32.mrb[0].mxu0
    %v10067 = vadd.f32 0.0, %v10066
    %v10068 = vpop.f32.mrb[0].mxu0
    %10069 = vmatprep.mubr.bf16.mxu0 0
    %10070 = vmatmul.mubr.bf16.gmra.mrb[0].mxu0 %v9491
    %v10071 = vpop.f32.mrb[0].mxu0
    %v10072 = vadd.f32 0.0, %v10071
    %v10073 = vpop.f32.mrb[0].mxu0
    %v10074 = vpop.f32.mrb[0].mxu0
    %v10075 = vadd.f32 0.0, %v10074
    %v10076 = vpop.f32.mrb[0].mxu0
    %10077 = vmatprep.mubr.bf16.mxu0 0
    %10078 = vmatmul.mubr.bf16.gmra.mrb[0].mxu0 %v9492
    %v10079 = vpop.f32.mrb[0].mxu0
    %v10080 = vadd.f32 0.0, %v10079
    %v10081 = vpop.f32.mrb[0].mxu0
    %v10082 = vpop.f32.mrb[0].mxu0
    %v10083 = vadd.f32 0.0, %v10082
    %v10084 = vpop.f32.mrb[0].mxu0
    %10085 = vdwg.mxu0
    %v10086 = vadd.f32 %v9576, %v9579
    %v10087 = vadd.f32 %v10086, %v9584
    %v10088 = vadd.f32 %v10087, %v9587
    %v10089 = vadd.f32 %v10088, %v9592
    %v10090 = vadd.f32 %v10089, %v9595
    %v10091 = vadd.f32 %v10090, %v9600
    %v10092 = vadd.f32 %v10091, %v9603
    %v10093 = vadd.f32 %v10092, %v9608
    %v10094 = vadd.f32 %v10093, %v9611
    %v10095 = vadd.f32 %v10094, %v9616
    %v10096 = vadd.f32 %v10095, %v9619
    %v10097 = vadd.f32 %v10096, %v9624
    %v10098 = vadd.f32 %v10097, %v9627
    %v10099 = vadd.f32 %v10098, %v9632
    %v10100 = vadd.f32 %v10099, %v9635
    %v10101 = vadd.f32 %v10100, %v9640
    %v10102 = vadd.f32 %v10101, %v9643
    %v10103 = vadd.f32 %v10102, %v9648
    %v10104 = vadd.f32 %v10103, %v9651
    %v10105 = vadd.f32 %v10104, %v9656
    %v10106 = vadd.f32 %v10105, %v9659
    %v10107 = vadd.f32 %v10106, %v9664
    %v10108 = vadd.f32 %v10107, %v9667
    %v10109 = vadd.f32 %v10108, %v9672
    %v10110 = vadd.f32 %v10109, %v9675
    %v10111 = vadd.f32 %v10110, %v9680
    %v10112 = vadd.f32 %v10111, %v9683
    %v10113 = vadd.f32 %v10112, %v9688
    %v10114 = vadd.f32 %v10113, %v9691
    %v10115 = vadd.f32 %v10114, %v9696
    %v10116 = vadd.f32 %v10115, %v9699
    %v10117 = vadd.f32 %v10116, %v9704
    %v10118 = vadd.f32 %v10117, %v9707
    %v10119 = vadd.f32 %v10118, %v9712
    %v10120 = vadd.f32 %v10119, %v9715
    %v10121 = vadd.f32 %v10120, %v9720
    %v10122 = vadd.f32 %v10121, %v9723
    %v10123 = vadd.f32 %v10122, %v9728
    %v10124 = vadd.f32 %v10123, %v9731
    %v10125 = vadd.f32 %v10124, %v9736
    %v10126 = vadd.f32 %v10125, %v9739
    %v10127 = vadd.f32 %v10126, %v9744
    %v10128 = vadd.f32 %v10127, %v9747
    %v10129 = vadd.f32 %v10128, %v9752
    %v10130 = vadd.f32 %v10129, %v9755
    %v10131 = vadd.f32 %v10130, %v9760
    %v10132 = vadd.f32 %v10131, %v9763
    %v10133 = vadd.f32 %v10132, %v9768
    %v10134 = vadd.f32 %v10133, %v9771
    %v10135 = vadd.f32 %v10134, %v9776
    %v10136 = vadd.f32 %v10135, %v9779
    %v10137 = vadd.f32 %v10136, %v9784
    %v10138 = vadd.f32 %v10137, %v9787
    %v10139 = vadd.f32 %v10138, %v9792
    %v10140 = vadd.f32 %v10139, %v9795
    %v10141 = vadd.f32 %v10140, %v9800
    %v10142 = vadd.f32 %v10141, %v9803
    %v10143 = vadd.f32 %v10142, %v9808
    %v10144 = vadd.f32 %v10143, %v9811
    %v10145 = vadd.f32 %v10144, %v9816
    %v10146 = vadd.f32 %v10145, %v9819
    %v10147 = vadd.f32 %v10146, %v9824
    %v10148 = vadd.f32 %v10147, %v9827
    %v10149 = vadd.f32 %v10148, %v9832
    %v10150 = vadd.f32 %v10149, %v9835
    %v10151 = vadd.f32 %v10150, %v9840
    %v10152 = vadd.f32 %v10151, %v9843
    %v10153 = vadd.f32 %v10152, %v9848
    %v10154 = vadd.f32 %v10153, %v9851
    %v10155 = vadd.f32 %v10154, %v9856
    %v10156 = vadd.f32 %v10155, %v9859
    %v10157 = vadd.f32 %v10156, %v9864
    %v10158 = vadd.f32 %v10157, %v9867
    %v10159 = vadd.f32 %v10158, %v9872
    %v10160 = vadd.f32 %v10159, %v9875
    %v10161 = vadd.f32 %v10160, %v9880
    %v10162 = vadd.f32 %v10161, %v9883
    %v10163 = vadd.f32 %v10162, %v9888
    %v10164 = vadd.f32 %v10163, %v9891
    %v10165 = vadd.f32 %v10164, %v9896
    %v10166 = vadd.f32 %v10165, %v9899
    %v10167 = vadd.f32 %v10166, %v9904
    %v10168 = vadd.f32 %v10167, %v9907
    %v10169 = vadd.f32 %v10168, %v9912
    %v10170 = vadd.f32 %v10169, %v9915
    %v10171 = vadd.f32 %v10170, %v9920
    %v10172 = vadd.f32 %v10171, %v9923
    %v10173 = vadd.f32 %v10172, %v9928
    %v10174 = vadd.f32 %v10173, %v9931
    %v10175 = vadd.f32 %v10174, %v9936
    %v10176 = vadd.f32 %v10175, %v9939
    %v10177 = vadd.f32 %v10176, %v9944
    %v10178 = vadd.f32 %v10177, %v9947
    %v10179 = vadd.f32 %v10178, %v9952
    %v10180 = vadd.f32 %v10179, %v9955
    %v10181 = vadd.f32 %v10180, %v9960
    %v10182 = vadd.f32 %v10181, %v9963
    %v10183 = vadd.f32 %v10182, %v9968
    %v10184 = vadd.f32 %v10183, %v9971
    %v10185 = vadd.f32 %v10184, %v9976
    %v10186 = vadd.f32 %v10185, %v9979
    %v10187 = vadd.f32 %v10186, %v9984
    %v10188 = vadd.f32 %v10187, %v9987
    %v10189 = vadd.f32 %v10188, %v9992
    %v10190 = vadd.f32 %v10189, %v9995
    %v10191 = vadd.f32 %v10190, %v10000
    %v10192 = vadd.f32 %v10191, %v10003
    %v10193 = vadd.f32 %v10192, %v10008
    %v10194 = vadd.f32 %v10193, %v10011
    %v10195 = vadd.f32 %v10194, %v10016
    %v10196 = vadd.f32 %v10195, %v10019
    %v10197 = vadd.f32 %v10196, %v10024
    %v10198 = vadd.f32 %v10197, %v10027
    %v10199 = vadd.f32 %v10198, %v10032
    %v10200 = vadd.f32 %v10199, %v10035
    %v10201 = vadd.f32 %v10200, %v10040
    %v10202 = vadd.f32 %v10201, %v10043
    %v10203 = vadd.f32 %v10202, %v10048
    %v10204 = vadd.f32 %v10203, %v10051
    %v10205 = vadd.f32 %v10204, %v10056
    %v10206 = vadd.f32 %v10205, %v10059
    %v10207 = vadd.f32 %v10206, %v10064
    %v10208 = vadd.f32 %v10207, %v10067
    %v10209 = vadd.f32 %v10208, %v10072
    %v10210 = vadd.f32 %v10209, %v10075
    %v10211 = vadd.f32 %v10210, %v10080
    %v10212 = vadd.f32 %v10211, %v10083
    %v10213 = vrot.slane %v10212, 4
    %v10214 = vadd.f32 %v10212, %v10213
    %v10215 = vrot.slane %v10214, 2
    %v10216 = vadd.f32 %v10214, %v10215
    %v10217 = vrot.slane %v10216, 1
    %v10218 = vadd.f32 %v10216, %v10217
    %v10219 = vmul.f32 %v9576, %v9576
    %v10220 = vmul.f32 %v9579, %v9579
    %v10221 = vmul.f32 %v9584, %v9584
    %v10222 = vmul.f32 %v9587, %v9587
    %v10223 = vmul.f32 %v9592, %v9592
    %v10224 = vmul.f32 %v9595, %v9595
    %v10225 = vmul.f32 %v9600, %v9600
    %v10226 = vmul.f32 %v9603, %v9603
    %v10227 = vmul.f32 %v9608, %v9608
    %v10228 = vmul.f32 %v9611, %v9611
    %v10229 = vmul.f32 %v9616, %v9616
    %v10230 = vmul.f32 %v9619, %v9619
    %v10231 = vmul.f32 %v9624, %v9624
    %v10232 = vmul.f32 %v9627, %v9627
    %v10233 = vmul.f32 %v9632, %v9632
    %v10234 = vmul.f32 %v9635, %v9635
    %v10235 = vmul.f32 %v9640, %v9640
    %v10236 = vmul.f32 %v9643, %v9643
    %v10237 = vmul.f32 %v9648, %v9648
    %v10238 = vmul.f32 %v9651, %v9651
    %v10239 = vmul.f32 %v9656, %v9656
    %v10240 = vmul.f32 %v9659, %v9659
    %v10241 = vmul.f32 %v9664, %v9664
    %v10242 = vmul.f32 %v9667, %v9667
    %v10243 = vmul.f32 %v9672, %v9672
    %v10244 = vmul.f32 %v9675, %v9675
    %v10245 = vmul.f32 %v9680, %v9680
    %v10246 = vmul.f32 %v9683, %v9683
    %v10247 = vmul.f32 %v9688, %v9688
    %v10248 = vmul.f32 %v9691, %v9691
    %v10249 = vmul.f32 %v9696, %v9696
    %v10250 = vmul.f32 %v9699, %v9699
    %v10251 = vmul.f32 %v9704, %v9704
    %v10252 = vmul.f32 %v9707, %v9707
    %v10253 = vmul.f32 %v9712, %v9712
    %v10254 = vmul.f32 %v9715, %v9715
    %v10255 = vmul.f32 %v9720, %v9720
    %v10256 = vmul.f32 %v9723, %v9723
    %v10257 = vmul.f32 %v9728, %v9728
    %v10258 = vmul.f32 %v9731, %v9731
    %v10259 = vmul.f32 %v9736, %v9736
    %v10260 = vmul.f32 %v9739, %v9739
    %v10261 = vmul.f32 %v9744, %v9744
    %v10262 = vmul.f32 %v9747, %v9747
    %v10263 = vmul.f32 %v9752, %v9752
    %v10264 = vmul.f32 %v9755, %v9755
    %v10265 = vmul.f32 %v9760, %v9760
    %v10266 = vmul.f32 %v9763, %v9763
    %v10267 = vmul.f32 %v9768, %v9768
    %v10268 = vmul.f32 %v9771, %v9771
    %v10269 = vmul.f32 %v9776, %v9776
    %v10270 = vmul.f32 %v9779, %v9779
    %v10271 = vmul.f32 %v9784, %v9784
    %v10272 = vmul.f32 %v9787, %v9787
    %v10273 = vmul.f32 %v9792, %v9792
    %v10274 = vmul.f32 %v9795, %v9795
    %v10275 = vmul.f32 %v9800, %v9800
    %v10276 = vmul.f32 %v9803, %v9803
    %v10277 = vmul.f32 %v9808, %v9808
    %v10278 = vmul.f32 %v9811, %v9811
    %v10279 = vmul.f32 %v9816, %v9816
    %v10280 = vmul.f32 %v9819, %v9819
    %v10281 = vmul.f32 %v9824, %v9824
    %v10282 = vmul.f32 %v9827, %v9827
    %v10283 = vmul.f32 %v9832, %v9832
    %v10284 = vmul.f32 %v9835, %v9835
    %v10285 = vmul.f32 %v9840, %v9840
    %v10286 = vmul.f32 %v9843, %v9843
    %v10287 = vmul.f32 %v9848, %v9848
    %v10288 = vmul.f32 %v9851, %v9851
    %v10289 = vmul.f32 %v9856, %v9856
    %v10290 = vmul.f32 %v9859, %v9859
    %v10291 = vmul.f32 %v9864, %v9864
    %v10292 = vmul.f32 %v9867, %v9867
    %v10293 = vmul.f32 %v9872, %v9872
    %v10294 = vmul.f32 %v9875, %v9875
    %v10295 = vmul.f32 %v9880, %v9880
    %v10296 = vmul.f32 %v9883, %v9883
    %v10297 = vmul.f32 %v9888, %v9888
    %v10298 = vmul.f32 %v9891, %v9891
    %v10299 = vmul.f32 %v9896, %v9896
    %v10300 = vmul.f32 %v9899, %v9899
    %v10301 = vmul.f32 %v9904, %v9904
    %v10302 = vmul.f32 %v9907, %v9907
    %v10303 = vmul.f32 %v9912, %v9912
    %v10304 = vmul.f32 %v9915, %v9915
    %v10305 = vmul.f32 %v9920, %v9920
    %v10306 = vmul.f32 %v9923, %v9923
    %v10307 = vmul.f32 %v9928, %v9928
    %v10308 = vmul.f32 %v9931, %v9931
    %v10309 = vmul.f32 %v9936, %v9936
    %v10310 = vmul.f32 %v9939, %v9939
    %v10311 = vmul.f32 %v9944, %v9944
    %v10312 = vmul.f32 %v9947, %v9947
    %v10313 = vmul.f32 %v9952, %v9952
    %v10314 = vmul.f32 %v9955, %v9955
    %v10315 = vmul.f32 %v9960, %v9960
    %v10316 = vmul.f32 %v9963, %v9963
    %v10317 = vmul.f32 %v9968, %v9968
    %v10318 = vmul.f32 %v9971, %v9971
    %v10319 = vmul.f32 %v9976, %v9976
    %v10320 = vmul.f32 %v9979, %v9979
    %v10321 = vmul.f32 %v9984, %v9984
    %v10322 = vmul.f32 %v9987, %v9987
    %v10323 = vmul.f32 %v9992, %v9992
    %v10324 = vmul.f32 %v9995, %v9995
    %v10325 = vmul.f32 %v10000, %v10000
    %v10326 = vmul.f32 %v10003, %v10003
    %v10327 = vmul.f32 %v10008, %v10008
    %v10328 = vmul.f32 %v10011, %v10011
    %v10329 = vmul.f32 %v10016, %v10016
    %v10330 = vmul.f32 %v10019, %v10019
    %v10331 = vmul.f32 %v10024, %v10024
    %v10332 = vmul.f32 %v10027, %v10027
    %v10333 = vmul.f32 %v10032, %v10032
    %v10334 = vmul.f32 %v10035, %v10035
    %v10335 = vmul.f32 %v10040, %v10040
    %v10336 = vmul.f32 %v10043, %v10043
    %v10337 = vmul.f32 %v10048, %v10048
    %v10338 = vmul.f32 %v10051, %v10051
    %v10339 = vmul.f32 %v10056, %v10056
    %v10340 = vmul.f32 %v10059, %v10059
    %v10341 = vmul.f32 %v10064, %v10064
    %v10342 = vmul.f32 %v10067, %v10067
    %v10343 = vmul.f32 %v10072, %v10072
    %v10344 = vmul.f32 %v10075, %v10075
    %v10345 = vmul.f32 %v10080, %v10080
    %v10346 = vmul.f32 %v10083, %v10083
    %v10347 = vadd.f32 %v10219, %v10220
    %v10348 = vadd.f32 %v10347, %v10221
    %v10349 = vadd.f32 %v10348, %v10222
    %v10350 = vadd.f32 %v10349, %v10223
    %v10351 = vadd.f32 %v10350, %v10224
    %v10352 = vadd.f32 %v10351, %v10225
    %v10353 = vadd.f32 %v10352, %v10226
    %v10354 = vadd.f32 %v10353, %v10227
    %v10355 = vadd.f32 %v10354, %v10228
    %v10356 = vadd.f32 %v10355, %v10229
    %v10357 = vadd.f32 %v10356, %v10230
    %v10358 = vadd.f32 %v10357, %v10231
    %v10359 = vadd.f32 %v10358, %v10232
    %v10360 = vadd.f32 %v10359, %v10233
    %v10361 = vadd.f32 %v10360, %v10234
    %v10362 = vadd.f32 %v10361, %v10235
    %v10363 = vadd.f32 %v10362, %v10236
    %v10364 = vadd.f32 %v10363, %v10237
    %v10365 = vadd.f32 %v10364, %v10238
    %v10366 = vadd.f32 %v10365, %v10239
    %v10367 = vadd.f32 %v10366, %v10240
    %v10368 = vadd.f32 %v10367, %v10241
    %v10369 = vadd.f32 %v10368, %v10242
    %v10370 = vadd.f32 %v10369, %v10243
    %v10371 = vadd.f32 %v10370, %v10244
    %v10372 = vadd.f32 %v10371, %v10245
    %v10373 = vadd.f32 %v10372, %v10246
    %v10374 = vadd.f32 %v10373, %v10247
    %v10375 = vadd.f32 %v10374, %v10248
    %v10376 = vadd.f32 %v10375, %v10249
    %v10377 = vadd.f32 %v10376, %v10250
    %v10378 = vadd.f32 %v10377, %v10251
    %v10379 = vadd.f32 %v10378, %v10252
    %v10380 = vadd.f32 %v10379, %v10253
    %v10381 = vadd.f32 %v10380, %v10254
    %v10382 = vadd.f32 %v10381, %v10255
    %v10383 = vadd.f32 %v10382, %v10256
    %v10384 = vadd.f32 %v10383, %v10257
    %v10385 = vadd.f32 %v10384, %v10258
    %v10386 = vadd.f32 %v10385, %v10259
    %v10387 = vadd.f32 %v10386, %v10260
    %v10388 = vadd.f32 %v10387, %v10261
    %v10389 = vadd.f32 %v10388, %v10262
    %v10390 = vadd.f32 %v10389, %v10263
    %v10391 = vadd.f32 %v10390, %v10264
    %v10392 = vadd.f32 %v10391, %v10265
    %v10393 = vadd.f32 %v10392, %v10266
    %v10394 = vadd.f32 %v10393, %v10267
    %v10395 = vadd.f32 %v10394, %v10268
    %v10396 = vadd.f32 %v10395, %v10269
    %v10397 = vadd.f32 %v10396, %v10270
    %v10398 = vadd.f32 %v10397, %v10271
    %v10399 = vadd.f32 %v10398, %v10272
    %v10400 = vadd.f32 %v10399, %v10273
    %v10401 = vadd.f32 %v10400, %v10274
    %v10402 = vadd.f32 %v10401, %v10275
    %v10403 = vadd.f32 %v10402, %v10276
    %v10404 = vadd.f32 %v10403, %v10277
    %v10405 = vadd.f32 %v10404, %v10278
    %v10406 = vadd.f32 %v10405, %v10279
    %v10407 = vadd.f32 %v10406, %v10280
    %v10408 = vadd.f32 %v10407, %v10281
    %v10409 = vadd.f32 %v10408, %v10282
    %v10410 = vadd.f32 %v10409, %v10283
    %v10411 = vadd.f32 %v10410, %v10284
    %v10412 = vadd.f32 %v10411, %v10285
    %v10413 = vadd.f32 %v10412, %v10286
    %v10414 = vadd.f32 %v10413, %v10287
    %v10415 = vadd.f32 %v10414, %v10288
    %v10416 = vadd.f32 %v10415, %v10289
    %v10417 = vadd.f32 %v10416, %v10290
    %v10418 = vadd.f32 %v10417, %v10291
    %v10419 = vadd.f32 %v10418, %v10292
    %v10420 = vadd.f32 %v10419, %v10293
    %v10421 = vadd.f32 %v10420, %v10294
    %v10422 = vadd.f32 %v10421, %v10295
    %v10423 = vadd.f32 %v10422, %v10296
    %v10424 = vadd.f32 %v10423, %v10297
    %v10425 = vadd.f32 %v10424, %v10298
    %v10426 = vadd.f32 %v10425, %v10299
    %v10427 = vadd.f32 %v10426, %v10300
    %v10428 = vadd.f32 %v10427, %v10301
    %v10429 = vadd.f32 %v10428, %v10302
    %v10430 = vadd.f32 %v10429, %v10303
    %v10431 = vadd.f32 %v10430, %v10304
    %v10432 = vadd.f32 %v10431, %v10305
    %v10433 = vadd.f32 %v10432, %v10306
    %v10434 = vadd.f32 %v10433, %v10307
    %v10435 = vadd.f32 %v10434, %v10308
    %v10436 = vadd.f32 %v10435, %v10309
    %v10437 = vadd.f32 %v10436, %v10310
    %v10438 = vadd.f32 %v10437, %v10311
    %v10439 = vadd.f32 %v10438, %v10312
    %v10440 = vadd.f32 %v10439, %v10313
    %v10441 = vadd.f32 %v10440, %v10314
    %v10442 = vadd.f32 %v10441, %v10315
    %v10443 = vadd.f32 %v10442, %v10316
    %v10444 = vadd.f32 %v10443, %v10317
    %v10445 = vadd.f32 %v10444, %v10318
    %v10446 = vadd.f32 %v10445, %v10319
    %v10447 = vadd.f32 %v10446, %v10320
    %v10448 = vadd.f32 %v10447, %v10321
    %v10449 = vadd.f32 %v10448, %v10322
    %v10450 = vadd.f32 %v10449, %v10323
    %v10451 = vadd.f32 %v10450, %v10324
    %v10452 = vadd.f32 %v10451, %v10325
    %v10453 = vadd.f32 %v10452, %v10326
    %v10454 = vadd.f32 %v10453, %v10327
    %v10455 = vadd.f32 %v10454, %v10328
    %v10456 = vadd.f32 %v10455, %v10329
    %v10457 = vadd.f32 %v10456, %v10330
    %v10458 = vadd.f32 %v10457, %v10331
    %v10459 = vadd.f32 %v10458, %v10332
    %v10460 = vadd.f32 %v10459, %v10333
    %v10461 = vadd.f32 %v10460, %v10334
    %v10462 = vadd.f32 %v10461, %v10335
    %v10463 = vadd.f32 %v10462, %v10336
    %v10464 = vadd.f32 %v10463, %v10337
    %v10465 = vadd.f32 %v10464, %v10338
    %v10466 = vadd.f32 %v10465, %v10339
    %v10467 = vadd.f32 %v10466, %v10340
    %v10468 = vadd.f32 %v10467, %v10341
    %v10469 = vadd.f32 %v10468, %v10342
    %v10470 = vadd.f32 %v10469, %v10343
    %v10471 = vadd.f32 %v10470, %v10344
    %v10472 = vadd.f32 %v10471, %v10345
    %v10473 = vadd.f32 %v10472, %v10346
    %v10474 = vrot.slane %v10473, 4
    %v10475 = vadd.f32 %v10473, %v10474
    %v10476 = vrot.slane %v10475, 2
    %v10477 = vadd.f32 %v10475, %v10476
    %v10478 = vrot.slane %v10477, 1
    %v10479 = vadd.f32 %v10477, %v10478
    %v10480 = vmul.f32 %v10218, 0.0009765625
    %v10481 = vmul.f32 %v10479, 0.0009765625
    %v10482 = vmul.f32 %v10480, %v10480
    %v10483 = vsub.f32 %v10481, %v10482
    %v10484 = vmax.f32 %v10483, 0.0
    %v10485 = vadd.f32 %v10484, 1e-05
    %v10486 = vrsqrt.pop %v10485
    %v10487 = vmul.f32 %v9427, %v10486
    %v10488 = vmul.f32 %v10480, %v10487
    %v10489 = vsub.f32 %v9428, %v10488
    %v10490 = vmul.f32 %v9576, %v10487
    %v10491 = vmul.f32 %v9579, %v10487
    %v10492 = vmul.f32 %v9584, %v10487
    %v10493 = vmul.f32 %v9587, %v10487
    %v10494 = vmul.f32 %v9592, %v10487
    %v10495 = vmul.f32 %v9595, %v10487
    %v10496 = vmul.f32 %v9600, %v10487
    %v10497 = vmul.f32 %v9603, %v10487
    %v10498 = vmul.f32 %v9608, %v10487
    %v10499 = vmul.f32 %v9611, %v10487
    %v10500 = vmul.f32 %v9616, %v10487
    %v10501 = vmul.f32 %v9619, %v10487
    %v10502 = vmul.f32 %v9624, %v10487
    %v10503 = vmul.f32 %v9627, %v10487
    %v10504 = vmul.f32 %v9632, %v10487
    %v10505 = vmul.f32 %v9635, %v10487
    %v10506 = vmul.f32 %v9640, %v10487
    %v10507 = vmul.f32 %v9643, %v10487
    %v10508 = vmul.f32 %v9648, %v10487
    %v10509 = vmul.f32 %v9651, %v10487
    %v10510 = vmul.f32 %v9656, %v10487
    %v10511 = vmul.f32 %v9659, %v10487
    %v10512 = vmul.f32 %v9664, %v10487
    %v10513 = vmul.f32 %v9667, %v10487
    %v10514 = vmul.f32 %v9672, %v10487
    %v10515 = vmul.f32 %v9675, %v10487
    %v10516 = vmul.f32 %v9680, %v10487
    %v10517 = vmul.f32 %v9683, %v10487
    %v10518 = vmul.f32 %v9688, %v10487
    %v10519 = vmul.f32 %v9691, %v10487
    %v10520 = vmul.f32 %v9696, %v10487
    %v10521 = vmul.f32 %v9699, %v10487
    %v10522 = vmul.f32 %v9704, %v10487
    %v10523 = vmul.f32 %v9707, %v10487
    %v10524 = vmul.f32 %v9712, %v10487
    %v10525 = vmul.f32 %v9715, %v10487
    %v10526 = vmul.f32 %v9720, %v10487
    %v10527 = vmul.f32 %v9723, %v10487
    %v10528 = vmul.f32 %v9728, %v10487
    %v10529 = vmul.f32 %v9731, %v10487
    %v10530 = vmul.f32 %v9736, %v10487
    %v10531 = vmul.f32 %v9739, %v10487
    %v10532 = vmul.f32 %v9744, %v10487
    %v10533 = vmul.f32 %v9747, %v10487
    %v10534 = vmul.f32 %v9752, %v10487
    %v10535 = vmul.f32 %v9755, %v10487
    %v10536 = vmul.f32 %v9760, %v10487
    %v10537 = vmul.f32 %v9763, %v10487
    %v10538 = vmul.f32 %v9768, %v10487
    %v10539 = vmul.f32 %v9771, %v10487
    %v10540 = vmul.f32 %v9776, %v10487
    %v10541 = vmul.f32 %v9779, %v10487
    %v10542 = vmul.f32 %v9784, %v10487
    %v10543 = vmul.f32 %v9787, %v10487
    %v10544 = vmul.f32 %v9792, %v10487
    %v10545 = vmul.f32 %v9795, %v10487
    %v10546 = vmul.f32 %v9800, %v10487
    %v10547 = vmul.f32 %v9803, %v10487
    %v10548 = vmul.f32 %v9808, %v10487
    %v10549 = vmul.f32 %v9811, %v10487
    %v10550 = vmul.f32 %v9816, %v10487
    %v10551 = vmul.f32 %v9819, %v10487
    %v10552 = vmul.f32 %v9824, %v10487
    %v10553 = vmul.f32 %v9827, %v10487
    %v10554 = vmul.f32 %v9832, %v10487
    %v10555 = vmul.f32 %v9835, %v10487
    %v10556 = vmul.f32 %v9840, %v10487
    %v10557 = vmul.f32 %v9843, %v10487
    %v10558 = vmul.f32 %v9848, %v10487
    %v10559 = vmul.f32 %v9851, %v10487
    %v10560 = vmul.f32 %v9856, %v10487
    %v10561 = vmul.f32 %v9859, %v10487
    %v10562 = vmul.f32 %v9864, %v10487
    %v10563 = vmul.f32 %v9867, %v10487
    %v10564 = vmul.f32 %v9872, %v10487
    %v10565 = vmul.f32 %v9875, %v10487
    %v10566 = vmul.f32 %v9880, %v10487
    %v10567 = vmul.f32 %v9883, %v10487
    %v10568 = vmul.f32 %v9888, %v10487
    %v10569 = vmul.f32 %v9891, %v10487
    %v10570 = vmul.f32 %v9896, %v10487
    %v10571 = vmul.f32 %v9899, %v10487
    %v10572 = vmul.f32 %v9904, %v10487
    %v10573 = vmul.f32 %v9907, %v10487
    %v10574 = vmul.f32 %v9912, %v10487
    %v10575 = vmul.f32 %v9915, %v10487
    %v10576 = vmul.f32 %v9920, %v10487
    %v10577 = vmul.f32 %v9923, %v10487
    %v10578 = vmul.f32 %v9928, %v10487
    %v10579 = vmul.f32 %v9931, %v10487
    %v10580 = vmul.f32 %v9936, %v10487
    %v10581 = vmul.f32 %v9939, %v10487
    %v10582 = vmul.f32 %v9944, %v10487
    %v10583 = vmul.f32 %v9947, %v10487
    %v10584 = vmul.f32 %v9952, %v10487
    %v10585 = vmul.f32 %v9955, %v10487
    %v10586 = vmul.f32 %v9960, %v10487
    %v10587 = vmul.f32 %v9963, %v10487
    %v10588 = vmul.f32 %v9968, %v10487
    %v10589 = vmul.f32 %v9971, %v10487
    %v10590 = vmul.f32 %v9976, %v10487
    %v10591 = vmul.f32 %v9979, %v10487
    %v10592 = vmul.f32 %v9984, %v10487
    %v10593 = vmul.f32 %v9987, %v10487
    %v10594 = vmul.f32 %v9992, %v10487
    %v10595 = vmul.f32 %v9995, %v10487
    %v10596 = vmul.f32 %v10000, %v10487
    %v10597 = vmul.f32 %v10003, %v10487
    %v10598 = vmul.f32 %v10008, %v10487
    %v10599 = vmul.f32 %v10011, %v10487
    %v10600 = vmul.f32 %v10016, %v10487
    %v10601 = vmul.f32 %v10019, %v10487
    %v10602 = vmul.f32 %v10024, %v10487
    %v10603 = vmul.f32 %v10027, %v10487
    %v10604 = vmul.f32 %v10032, %v10487
    %v10605 = vmul.f32 %v10035, %v10487
    %v10606 = vmul.f32 %v10040, %v10487
    %v10607 = vmul.f32 %v10043, %v10487
    %v10608 = vmul.f32 %v10048, %v10487
    %v10609 = vmul.f32 %v10051, %v10487
    %v10610 = vmul.f32 %v10056, %v10487
    %v10611 = vmul.f32 %v10059, %v10487
    %v10612 = vmul.f32 %v10064, %v10487
    %v10613 = vmul.f32 %v10067, %v10487
    %v10614 = vmul.f32 %v10072, %v10487
    %v10615 = vmul.f32 %v10075, %v10487
    %v10616 = vmul.f32 %v10080, %v10487
    %v10617 = vmul.f32 %v10083, %v10487
    %v10618 = vadd.f32 %v10490, %v10489
    %v10619 = vadd.f32 %v10491, %v10489
    %v10620 = vadd.f32 %v10492, %v10489
    %v10621 = vadd.f32 %v10493, %v10489
    %v10622 = vadd.f32 %v10494, %v10489
    %v10623 = vadd.f32 %v10495, %v10489
    %v10624 = vadd.f32 %v10496, %v10489
    %v10625 = vadd.f32 %v10497, %v10489
    %v10626 = vadd.f32 %v10498, %v10489
    %v10627 = vadd.f32 %v10499, %v10489
    %v10628 = vadd.f32 %v10500, %v10489
    %v10629 = vadd.f32 %v10501, %v10489
    %v10630 = vadd.f32 %v10502, %v10489
    %v10631 = vadd.f32 %v10503, %v10489
    %v10632 = vadd.f32 %v10504, %v10489
    %v10633 = vadd.f32 %v10505, %v10489
    %v10634 = vadd.f32 %v10506, %v10489
    %v10635 = vadd.f32 %v10507, %v10489
    %v10636 = vadd.f32 %v10508, %v10489
    %v10637 = vadd.f32 %v10509, %v10489
    %v10638 = vadd.f32 %v10510, %v10489
    %v10639 = vadd.f32 %v10511, %v10489
    %v10640 = vadd.f32 %v10512, %v10489
    %v10641 = vadd.f32 %v10513, %v10489
    %v10642 = vadd.f32 %v10514, %v10489
    %v10643 = vadd.f32 %v10515, %v10489
    %v10644 = vadd.f32 %v10516, %v10489
    %v10645 = vadd.f32 %v10517, %v10489
    %v10646 = vadd.f32 %v10518, %v10489
    %v10647 = vadd.f32 %v10519, %v10489
    %v10648 = vadd.f32 %v10520, %v10489
    %v10649 = vadd.f32 %v10521, %v10489
    %v10650 = vadd.f32 %v10522, %v10489
    %v10651 = vadd.f32 %v10523, %v10489
    %v10652 = vadd.f32 %v10524, %v10489
    %v10653 = vadd.f32 %v10525, %v10489
    %v10654 = vadd.f32 %v10526, %v10489
    %v10655 = vadd.f32 %v10527, %v10489
    %v10656 = vadd.f32 %v10528, %v10489
    %v10657 = vadd.f32 %v10529, %v10489
    %v10658 = vadd.f32 %v10530, %v10489
    %v10659 = vadd.f32 %v10531, %v10489
    %v10660 = vadd.f32 %v10532, %v10489
    %v10661 = vadd.f32 %v10533, %v10489
    %v10662 = vadd.f32 %v10534, %v10489
    %v10663 = vadd.f32 %v10535, %v10489
    %v10664 = vadd.f32 %v10536, %v10489
    %v10665 = vadd.f32 %v10537, %v10489
    %v10666 = vadd.f32 %v10538, %v10489
    %v10667 = vadd.f32 %v10539, %v10489
    %v10668 = vadd.f32 %v10540, %v10489
    %v10669 = vadd.f32 %v10541, %v10489
    %v10670 = vadd.f32 %v10542, %v10489
    %v10671 = vadd.f32 %v10543, %v10489
    %v10672 = vadd.f32 %v10544, %v10489
    %v10673 = vadd.f32 %v10545, %v10489
    %v10674 = vadd.f32 %v10546, %v10489
    %v10675 = vadd.f32 %v10547, %v10489
    %v10676 = vadd.f32 %v10548, %v10489
    %v10677 = vadd.f32 %v10549, %v10489
    %v10678 = vadd.f32 %v10550, %v10489
    %v10679 = vadd.f32 %v10551, %v10489
    %v10680 = vadd.f32 %v10552, %v10489
    %v10681 = vadd.f32 %v10553, %v10489
    %v10682 = vadd.f32 %v10554, %v10489
    %v10683 = vadd.f32 %v10555, %v10489
    %v10684 = vadd.f32 %v10556, %v10489
    %v10685 = vadd.f32 %v10557, %v10489
    %v10686 = vadd.f32 %v10558, %v10489
    %v10687 = vadd.f32 %v10559, %v10489
    %v10688 = vadd.f32 %v10560, %v10489
    %v10689 = vadd.f32 %v10561, %v10489
    %v10690 = vadd.f32 %v10562, %v10489
    %v10691 = vadd.f32 %v10563, %v10489
    %v10692 = vadd.f32 %v10564, %v10489
    %v10693 = vadd.f32 %v10565, %v10489
    %v10694 = vadd.f32 %v10566, %v10489
    %v10695 = vadd.f32 %v10567, %v10489
    %v10696 = vadd.f32 %v10568, %v10489
    %v10697 = vadd.f32 %v10569, %v10489
    %v10698 = vadd.f32 %v10570, %v10489
    %v10699 = vadd.f32 %v10571, %v10489
    %v10700 = vadd.f32 %v10572, %v10489
    %v10701 = vadd.f32 %v10573, %v10489
    %v10702 = vadd.f32 %v10574, %v10489
    %v10703 = vadd.f32 %v10575, %v10489
    %v10704 = vadd.f32 %v10576, %v10489
    %v10705 = vadd.f32 %v10577, %v10489
    %v10706 = vadd.f32 %v10578, %v10489
    %v10707 = vadd.f32 %v10579, %v10489
    %v10708 = vadd.f32 %v10580, %v10489
    %v10709 = vadd.f32 %v10581, %v10489
    %v10710 = vadd.f32 %v10582, %v10489
    %v10711 = vadd.f32 %v10583, %v10489
    %v10712 = vadd.f32 %v10584, %v10489
    %v10713 = vadd.f32 %v10585, %v10489
    %v10714 = vadd.f32 %v10586, %v10489
    %v10715 = vadd.f32 %v10587, %v10489
    %v10716 = vadd.f32 %v10588, %v10489
    %v10717 = vadd.f32 %v10589, %v10489
    %v10718 = vadd.f32 %v10590, %v10489
    %v10719 = vadd.f32 %v10591, %v10489
    %v10720 = vadd.f32 %v10592, %v10489
    %v10721 = vadd.f32 %v10593, %v10489
    %v10722 = vadd.f32 %v10594, %v10489
    %v10723 = vadd.f32 %v10595, %v10489
    %v10724 = vadd.f32 %v10596, %v10489
    %v10725 = vadd.f32 %v10597, %v10489
    %v10726 = vadd.f32 %v10598, %v10489
    %v10727 = vadd.f32 %v10599, %v10489
    %v10728 = vadd.f32 %v10600, %v10489
    %v10729 = vadd.f32 %v10601, %v10489
    %v10730 = vadd.f32 %v10602, %v10489
    %v10731 = vadd.f32 %v10603, %v10489
    %v10732 = vadd.f32 %v10604, %v10489
    %v10733 = vadd.f32 %v10605, %v10489
    %v10734 = vadd.f32 %v10606, %v10489
    %v10735 = vadd.f32 %v10607, %v10489
    %v10736 = vadd.f32 %v10608, %v10489
    %v10737 = vadd.f32 %v10609, %v10489
    %v10738 = vadd.f32 %v10610, %v10489
    %v10739 = vadd.f32 %v10611, %v10489
    %v10740 = vadd.f32 %v10612, %v10489
    %v10741 = vadd.f32 %v10613, %v10489
    %v10742 = vadd.f32 %v10614, %v10489
    %v10743 = vadd.f32 %v10615, %v10489
    %v10744 = vadd.f32 %v10616, %v10489
    %v10745 = vadd.f32 %v10617, %v10489
    %v10746 = vmax.f32 %v10618, 0.0
    %v10747 = vmax.f32 %v10619, 0.0
    %v10748 = vmax.f32 %v10620, 0.0
    %v10749 = vmax.f32 %v10621, 0.0
    %v10750 = vmax.f32 %v10622, 0.0
    %v10751 = vmax.f32 %v10623, 0.0
    %v10752 = vmax.f32 %v10624, 0.0
    %v10753 = vmax.f32 %v10625, 0.0
    %v10754 = vmax.f32 %v10626, 0.0
    %v10755 = vmax.f32 %v10627, 0.0
    %v10756 = vmax.f32 %v10628, 0.0
    %v10757 = vmax.f32 %v10629, 0.0
    %v10758 = vmax.f32 %v10630, 0.0
    %v10759 = vmax.f32 %v10631, 0.0
    %v10760 = vmax.f32 %v10632, 0.0
    %v10761 = vmax.f32 %v10633, 0.0
    %v10762 = vmax.f32 %v10634, 0.0
    %v10763 = vmax.f32 %v10635, 0.0
    %v10764 = vmax.f32 %v10636, 0.0
    %v10765 = vmax.f32 %v10637, 0.0
    %v10766 = vmax.f32 %v10638, 0.0
    %v10767 = vmax.f32 %v10639, 0.0
    %v10768 = vmax.f32 %v10640, 0.0
    %v10769 = vmax.f32 %v10641, 0.0
    %v10770 = vmax.f32 %v10642, 0.0
    %v10771 = vmax.f32 %v10643, 0.0
    %v10772 = vmax.f32 %v10644, 0.0
    %v10773 = vmax.f32 %v10645, 0.0
    %v10774 = vmax.f32 %v10646, 0.0
    %v10775 = vmax.f32 %v10647, 0.0
    %v10776 = vmax.f32 %v10648, 0.0
    %v10777 = vmax.f32 %v10649, 0.0
    %v10778 = vmax.f32 %v10650, 0.0
    %v10779 = vmax.f32 %v10651, 0.0
    %v10780 = vmax.f32 %v10652, 0.0
    %v10781 = vmax.f32 %v10653, 0.0
    %v10782 = vmax.f32 %v10654, 0.0
    %v10783 = vmax.f32 %v10655, 0.0
    %v10784 = vmax.f32 %v10656, 0.0
    %v10785 = vmax.f32 %v10657, 0.0
    %v10786 = vmax.f32 %v10658, 0.0
    %v10787 = vmax.f32 %v10659, 0.0
    %v10788 = vmax.f32 %v10660, 0.0
    %v10789 = vmax.f32 %v10661, 0.0
    %v10790 = vmax.f32 %v10662, 0.0
    %v10791 = vmax.f32 %v10663, 0.0
    %v10792 = vmax.f32 %v10664, 0.0
    %v10793 = vmax.f32 %v10665, 0.0
    %v10794 = vmax.f32 %v10666, 0.0
    %v10795 = vmax.f32 %v10667, 0.0
    %v10796 = vmax.f32 %v10668, 0.0
    %v10797 = vmax.f32 %v10669, 0.0
    %v10798 = vmax.f32 %v10670, 0.0
    %v10799 = vmax.f32 %v10671, 0.0
    %v10800 = vmax.f32 %v10672, 0.0
    %v10801 = vmax.f32 %v10673, 0.0
    %v10802 = vmax.f32 %v10674, 0.0
    %v10803 = vmax.f32 %v10675, 0.0
    %v10804 = vmax.f32 %v10676, 0.0
    %v10805 = vmax.f32 %v10677, 0.0
    %v10806 = vmax.f32 %v10678, 0.0
    %v10807 = vmax.f32 %v10679, 0.0
    %v10808 = vmax.f32 %v10680, 0.0
    %v10809 = vmax.f32 %v10681, 0.0
    %v10810 = vmax.f32 %v10682, 0.0
    %v10811 = vmax.f32 %v10683, 0.0
    %v10812 = vmax.f32 %v10684, 0.0
    %v10813 = vmax.f32 %v10685, 0.0
    %v10814 = vmax.f32 %v10686, 0.0
    %v10815 = vmax.f32 %v10687, 0.0
    %v10816 = vmax.f32 %v10688, 0.0
    %v10817 = vmax.f32 %v10689, 0.0
    %v10818 = vmax.f32 %v10690, 0.0
    %v10819 = vmax.f32 %v10691, 0.0
    %v10820 = vmax.f32 %v10692, 0.0
    %v10821 = vmax.f32 %v10693, 0.0
    %v10822 = vmax.f32 %v10694, 0.0
    %v10823 = vmax.f32 %v10695, 0.0
    %v10824 = vmax.f32 %v10696, 0.0
    %v10825 = vmax.f32 %v10697, 0.0
    %v10826 = vmax.f32 %v10698, 0.0
    %v10827 = vmax.f32 %v10699, 0.0
    %v10828 = vmax.f32 %v10700, 0.0
    %v10829 = vmax.f32 %v10701, 0.0
    %v10830 = vmax.f32 %v10702, 0.0
    %v10831 = vmax.f32 %v10703, 0.0
    %v10832 = vmax.f32 %v10704, 0.0
    %v10833 = vmax.f32 %v10705, 0.0
    %v10834 = vmax.f32 %v10706, 0.0
    %v10835 = vmax.f32 %v10707, 0.0
    %v10836 = vmax.f32 %v10708, 0.0
    %v10837 = vmax.f32 %v10709, 0.0
    %v10838 = vmax.f32 %v10710, 0.0
    %v10839 = vmax.f32 %v10711, 0.0
    %v10840 = vmax.f32 %v10712, 0.0
    %v10841 = vmax.f32 %v10713, 0.0
    %v10842 = vmax.f32 %v10714, 0.0
    %v10843 = vmax.f32 %v10715, 0.0
    %v10844 = vmax.f32 %v10716, 0.0
    %v10845 = vmax.f32 %v10717, 0.0
    %v10846 = vmax.f32 %v10718, 0.0
    %v10847 = vmax.f32 %v10719, 0.0
    %v10848 = vmax.f32 %v10720, 0.0
    %v10849 = vmax.f32 %v10721, 0.0
    %v10850 = vmax.f32 %v10722, 0.0
    %v10851 = vmax.f32 %v10723, 0.0
    %v10852 = vmax.f32 %v10724, 0.0
    %v10853 = vmax.f32 %v10725, 0.0
    %v10854 = vmax.f32 %v10726, 0.0
    %v10855 = vmax.f32 %v10727, 0.0
    %v10856 = vmax.f32 %v10728, 0.0
    %v10857 = vmax.f32 %v10729, 0.0
    %v10858 = vmax.f32 %v10730, 0.0
    %v10859 = vmax.f32 %v10731, 0.0
    %v10860 = vmax.f32 %v10732, 0.0
    %v10861 = vmax.f32 %v10733, 0.0
    %v10862 = vmax.f32 %v10734, 0.0
    %v10863 = vmax.f32 %v10735, 0.0
    %v10864 = vmax.f32 %v10736, 0.0
    %v10865 = vmax.f32 %v10737, 0.0
    %v10866 = vmax.f32 %v10738, 0.0
    %v10867 = vmax.f32 %v10739, 0.0
    %v10868 = vmax.f32 %v10740, 0.0
    %v10869 = vmax.f32 %v10741, 0.0
    %v10870 = vmax.f32 %v10742, 0.0
    %v10871 = vmax.f32 %v10743, 0.0
    %v10872 = vmax.f32 %v10744, 0.0
    %v10873 = vmax.f32 %v10745, 0.0
    %s10874 = scalar_lea.vmem [#allocation7], 384
    %v10875 = vld [vmem:[%s10874] sm:$0xf]
    %v10876 = vld [vmem:[%s10874 + $0x4] sm:$0xf]
    %v10877 = vld [vmem:[%s10874 + $0x8] sm:$0xf]
    %v10878 = vld [vmem:[%s10874 + $0xc] sm:$0xf]
    %v10879 = vld [vmem:[%s10874 + $0x10] sm:$0xf]
    %v10880 = vld [vmem:[%s10874 + $0x14] sm:$0xf]
    %v10881 = vld [vmem:[%s10874 + $0x18] sm:$0xf]
    %v10882 = vld [vmem:[%s10874 + $0x1c] sm:$0xf]
    %v10883 = vld [vmem:[%s10874 + $0x20] sm:$0xf]
    %v10884 = vld [vmem:[%s10874 + $0x24] sm:$0xf]
    %v10885 = vld [vmem:[%s10874 + $0x28] sm:$0xf]
    %v10886 = vld [vmem:[%s10874 + $0x2c] sm:$0xf]
    %v10887 = vld [vmem:[%s10874 + $0x30] sm:$0xf]
    %v10888 = vld [vmem:[%s10874 + $0x34] sm:$0xf]
    %v10889 = vld [vmem:[%s10874 + $0x38] sm:$0xf]
    %v10890 = vld [vmem:[%s10874 + $0x3c] sm:$0xf]
    %v10891 = vpack.c.bf16 %v10747, %v10746
    %v10892 = vpack.c.bf16 %v10749, %v10748
    %v10893 = vpack.c.bf16 %v10751, %v10750
    %v10894 = vpack.c.bf16 %v10753, %v10752
    %v10895 = vpack.c.bf16 %v10755, %v10754
    %v10896 = vpack.c.bf16 %v10757, %v10756
    %v10897 = vpack.c.bf16 %v10759, %v10758
    %v10898 = vpack.c.bf16 %v10761, %v10760
    %v10899 = vpack.c.bf16 %v10763, %v10762
    %v10900 = vpack.c.bf16 %v10765, %v10764
    %v10901 = vpack.c.bf16 %v10767, %v10766
    %v10902 = vpack.c.bf16 %v10769, %v10768
    %v10903 = vpack.c.bf16 %v10771, %v10770
    %v10904 = vpack.c.bf16 %v10773, %v10772
    %v10905 = vpack.c.bf16 %v10775, %v10774
    %v10906 = vpack.c.bf16 %v10777, %v10776
    %v10907 = vpack.c.bf16 %v10779, %v10778
    %v10908 = vpack.c.bf16 %v10781, %v10780
    %v10909 = vpack.c.bf16 %v10783, %v10782
    %v10910 = vpack.c.bf16 %v10785, %v10784
    %v10911 = vpack.c.bf16 %v10787, %v10786
    %v10912 = vpack.c.bf16 %v10789, %v10788
    %v10913 = vpack.c.bf16 %v10791, %v10790
    %v10914 = vpack.c.bf16 %v10793, %v10792
    %v10915 = vpack.c.bf16 %v10795, %v10794
    %v10916 = vpack.c.bf16 %v10797, %v10796
    %v10917 = vpack.c.bf16 %v10799, %v10798
    %v10918 = vpack.c.bf16 %v10801, %v10800
    %v10919 = vpack.c.bf16 %v10803, %v10802
    %v10920 = vpack.c.bf16 %v10805, %v10804
    %v10921 = vpack.c.bf16 %v10807, %v10806
    %v10922 = vpack.c.bf16 %v10809, %v10808
    %v10923 = vpack.c.bf16 %v10811, %v10810
    %v10924 = vpack.c.bf16 %v10813, %v10812
    %v10925 = vpack.c.bf16 %v10815, %v10814
    %v10926 = vpack.c.bf16 %v10817, %v10816
    %v10927 = vpack.c.bf16 %v10819, %v10818
    %v10928 = vpack.c.bf16 %v10821, %v10820
    %v10929 = vpack.c.bf16 %v10823, %v10822
    %v10930 = vpack.c.bf16 %v10825, %v10824
    %v10931 = vpack.c.bf16 %v10827, %v10826
    %v10932 = vpack.c.bf16 %v10829, %v10828
    %v10933 = vpack.c.bf16 %v10831, %v10830
    %v10934 = vpack.c.bf16 %v10833, %v10832
    %v10935 = vpack.c.bf16 %v10835, %v10834
    %v10936 = vpack.c.bf16 %v10837, %v10836
    %v10937 = vpack.c.bf16 %v10839, %v10838
    %v10938 = vpack.c.bf16 %v10841, %v10840
    %v10939 = vpack.c.bf16 %v10843, %v10842
    %v10940 = vpack.c.bf16 %v10845, %v10844
    %v10941 = vpack.c.bf16 %v10847, %v10846
    %v10942 = vpack.c.bf16 %v10849, %v10848
    %v10943 = vpack.c.bf16 %v10851, %v10850
    %v10944 = vpack.c.bf16 %v10853, %v10852
    %v10945 = vpack.c.bf16 %v10855, %v10854
    %v10946 = vpack.c.bf16 %v10857, %v10856
    %v10947 = vpack.c.bf16 %v10859, %v10858
    %v10948 = vpack.c.bf16 %v10861, %v10860
    %v10949 = vpack.c.bf16 %v10863, %v10862
    %v10950 = vpack.c.bf16 %v10865, %v10864
    %v10951 = vpack.c.bf16 %v10867, %v10866
    %v10952 = vpack.c.bf16 %v10869, %v10868
    %v10953 = vpack.c.bf16 %v10871, %v10870
    %v10954 = vpack.c.bf16 %v10873, %v10872
    %v10955 = vld [vmem:[#allocation10 + $0x15] ss:$0 sm:$0xff]
    %v10972 = vunpack.c.l.b16 %v10875
    %v10973 = vunpack.c.l.b16 %v10876
    %v10974 = vunpack.c.l.b16 %v10877
    %v10975 = vunpack.c.l.b16 %v10878
    %v10976 = vunpack.c.l.b16 %v10879
    %v10977 = vunpack.c.l.b16 %v10880
    %v10978 = vunpack.c.l.b16 %v10881
    %v10979 = vunpack.c.l.b16 %v10882
    %v10980 = vunpack.c.l.b16 %v10883
    %v10981 = vunpack.c.l.b16 %v10884
    %v10982 = vunpack.c.l.b16 %v10885
    %v10983 = vunpack.c.l.b16 %v10886
    %v10984 = vunpack.c.l.b16 %v10887
    %v10985 = vunpack.c.l.b16 %v10888
    %v10986 = vunpack.c.l.b16 %v10889
    %v10987 = vunpack.c.l.b16 %v10890
    %v10988 = vpack.c.b16 %v10973, %v10972
    %v10989 = vpack.c.b16 %v10975, %v10974
    %v10990 = vpack.c.b16 %v10977, %v10976
    %v10991 = vpack.c.b16 %v10979, %v10978
    %v10992 = vpack.c.b16 %v10981, %v10980
    %v10993 = vpack.c.b16 %v10983, %v10982
    %v10994 = vpack.c.b16 %v10985, %v10984
    %v10995 = vpack.c.b16 %v10987, %v10986
    %11004 = vmatprep.subr.bf16.mxu0 0
    %11005 = vmatpush1.bf16.msra.mxu0 %v10988
    %11006 = vmatprep.subr.bf16.mxu0 0
    %11007 = vmatpush1.bf16.msra.mxu0 %v10989
    %11008 = vmatprep.subr.bf16.mxu0 0
    %11009 = vmatpush1.bf16.msra.mxu0 %v10990
    %11010 = vmatprep.subr.bf16.mxu0 0
    %11011 = vmatpush1.bf16.msra.mxu0 %v10991
    %11012 = vmatprep.subr.bf16.mxu0 0
    %11013 = vmatpush1.bf16.msra.mxu0 %v10992
    %11014 = vmatprep.subr.bf16.mxu0 0
    %11015 = vmatpush1.bf16.msra.mxu0 %v10993
    %11016 = vmatprep.subr.bf16.mxu0 0
    %11017 = vmatpush1.bf16.msra.mxu0 %v10994
    %11018 = vmatprep.subr.bf16.mxu0 0
    %11019 = vmatpush1.bf16.msra.mxu0 %v10995
    %11020 = vmatprep.subr.bf16.mxu0 0
    %11021 = vmatpush1.bf16.msra.mxu0 0
    %11022 = vmatprep.subr.bf16.mxu0 0
    %11023 = vmatpush1.bf16.msra.mxu0 0
    %11024 = vmatprep.subr.bf16.mxu0 0
    %11025 = vmatpush1.bf16.msra.mxu0 0
    %11026 = vmatprep.subr.bf16.mxu0 0
    %11027 = vmatpush1.bf16.msra.mxu0 0
    %11028 = vmatprep.subr.bf16.mxu0 0
    %11029 = vmatpush1.bf16.msra.mxu0 0
    %11030 = vmatprep.subr.bf16.mxu0 0
    %11031 = vmatpush1.bf16.msra.mxu0 0
    %11032 = vmatprep.subr.bf16.mxu0 0
    %11033 = vmatpush1.bf16.msra.mxu0 0
    %11034 = vmatprep.subr.bf16.mxu0 0
    %11035 = vmatpush1.bf16.msra.mxu0 0
    %11036 = vmatprep.mubr.bf16.mxu0 0
    %11037 = vmatmul.mubr.bf16.gmra.mrb[0].mxu0 %v10891
    %v11038 = vpop.f32.mrb[0].mxu0
    %v11039 = vadd.f32 %v10955, %v11038
    %v11040 = vpop.f32.mrb[0].mxu0
    %v11041 = vpop.f32.mrb[0].mxu0
    %v11042 = vadd.f32 %v10955, %v11041
    %v11043 = vpop.f32.mrb[0].mxu0
    %11044 = vmatprep.mubr.bf16.mxu0 0
    %11045 = vmatmul.mubr.bf16.gmra.mrb[0].mxu0 %v10892
    %v11046 = vpop.f32.mrb[0].mxu0
    %v11047 = vadd.f32 %v10955, %v11046
    %v11048 = vpop.f32.mrb[0].mxu0
    %v11049 = vpop.f32.mrb[0].mxu0
    %v11050 = vadd.f32 %v10955, %v11049
    %v11051 = vpop.f32.mrb[0].mxu0
    %11052 = vmatprep.mubr.bf16.mxu0 0
    %11053 = vmatmul.mubr.bf16.gmra.mrb[0].mxu0 %v10893
    %v11054 = vpop.f32.mrb[0].mxu0
    %v11055 = vadd.f32 %v10955, %v11054
    %v11056 = vpop.f32.mrb[0].mxu0
    %v11057 = vpop.f32.mrb[0].mxu0
    %v11058 = vadd.f32 %v10955, %v11057
    %v11059 = vpop.f32.mrb[0].mxu0
    %11060 = vmatprep.mubr.bf16.mxu0 0
    %11061 = vmatmul.mubr.bf16.gmra.mrb[0].mxu0 %v10894
    %v11062 = vpop.f32.mrb[0].mxu0
    %v11063 = vadd.f32 %v10955, %v11062
    %v11064 = vpop.f32.mrb[0].mxu0
    %v11065 = vpop.f32.mrb[0].mxu0
    %v11066 = vadd.f32 %v10955, %v11065
    %v11067 = vpop.f32.mrb[0].mxu0
    %11068 = vmatprep.mubr.bf16.mxu0 0
    %11069 = vmatmul.mubr.bf16.gmra.mrb[0].mxu0 %v10895
    %v11070 = vpop.f32.mrb[0].mxu0
    %v11071 = vadd.f32 %v10955, %v11070
    %v11072 = vpop.f32.mrb[0].mxu0
    %v11073 = vpop.f32.mrb[0].mxu0
    %v11074 = vadd.f32 %v10955, %v11073
    %v11075 = vpop.f32.mrb[0].mxu0
    %11076 = vmatprep.mubr.bf16.mxu0 0
    %11077 = vmatmul.mubr.bf16.gmra.mrb[0].mxu0 %v10896
    %v11078 = vpop.f32.mrb[0].mxu0
    %v11079 = vadd.f32 %v10955, %v11078
    %v11080 = vpop.f32.mrb[0].mxu0
    %v11081 = vpop.f32.mrb[0].mxu0
    %v11082 = vadd.f32 %v10955, %v11081
    %v11083 = vpop.f32.mrb[0].mxu0
    %11084 = vmatprep.mubr.bf16.mxu0 0
    %11085 = vmatmul.mubr.bf16.gmra.mrb[0].mxu0 %v10897
    %v11086 = vpop.f32.mrb[0].mxu0
    %v11087 = vadd.f32 %v10955, %v11086
    %v11088 = vpop.f32.mrb[0].mxu0
    %v11089 = vpop.f32.mrb[0].mxu0
    %v11090 = vadd.f32 %v10955, %v11089
    %v11091 = vpop.f32.mrb[0].mxu0
    %11092 = vmatprep.mubr.bf16.mxu0 0
    %11093 = vmatmul.mubr.bf16.gmra.mrb[0].mxu0 %v10898
    %v11094 = vpop.f32.mrb[0].mxu0
    %v11095 = vadd.f32 %v10955, %v11094
    %v11096 = vpop.f32.mrb[0].mxu0
    %v11097 = vpop.f32.mrb[0].mxu0
    %v11098 = vadd.f32 %v10955, %v11097
    %v11099 = vpop.f32.mrb[0].mxu0
    %11100 = vmatprep.mubr.bf16.mxu0 0
    %11101 = vmatmul.mubr.bf16.gmra.mrb[0].mxu0 %v10899
    %v11102 = vpop.f32.mrb[0].mxu0
    %v11103 = vadd.f32 %v10955, %v11102
    %v11104 = vpop.f32.mrb[0].mxu0
    %v11105 = vpop.f32.mrb[0].mxu0
    %v11106 = vadd.f32 %v10955, %v11105
    %v11107 = vpop.f32.mrb[0].mxu0
    %11108 = vmatprep.mubr.bf16.mxu0 0
    %11109 = vmatmul.mubr.bf16.gmra.mrb[0].mxu0 %v10900
    %v11110 = vpop.f32.mrb[0].mxu0
    %v11111 = vadd.f32 %v10955, %v11110
    %v11112 = vpop.f32.mrb[0].mxu0
    %v11113 = vpop.f32.mrb[0].mxu0
    %v11114 = vadd.f32 %v10955, %v11113
    %v11115 = vpop.f32.mrb[0].mxu0
    %11116 = vmatprep.mubr.bf16.mxu0 0
    %11117 = vmatmul.mubr.bf16.gmra.mrb[0].mxu0 %v10901
    %v11118 = vpop.f32.mrb[0].mxu0
    %v11119 = vadd.f32 %v10955, %v11118
    %v11120 = vpop.f32.mrb[0].mxu0
    %v11121 = vpop.f32.mrb[0].mxu0
    %v11122 = vadd.f32 %v10955, %v11121
    %v11123 = vpop.f32.mrb[0].mxu0
    %11124 = vmatprep.mubr.bf16.mxu0 0
    %11125 = vmatmul.mubr.bf16.gmra.mrb[0].mxu0 %v10902
    %v11126 = vpop.f32.mrb[0].mxu0
    %v11127 = vadd.f32 %v10955, %v11126
    %v11128 = vpop.f32.mrb[0].mxu0
    %v11129 = vpop.f32.mrb[0].mxu0
    %v11130 = vadd.f32 %v10955, %v11129
    %v11131 = vpop.f32.mrb[0].mxu0
    %11132 = vmatprep.mubr.bf16.mxu0 0
    %11133 = vmatmul.mubr.bf16.gmra.mrb[0].mxu0 %v10903
    %v11134 = vpop.f32.mrb[0].mxu0
    %v11135 = vadd.f32 %v10955, %v11134
    %v11136 = vpop.f32.mrb[0].mxu0
    %v11137 = vpop.f32.mrb[0].mxu0
    %v11138 = vadd.f32 %v10955, %v11137
    %v11139 = vpop.f32.mrb[0].mxu0
    %11140 = vmatprep.mubr.bf16.mxu0 0
    %11141 = vmatmul.mubr.bf16.gmra.mrb[0].mxu0 %v10904
    %v11142 = vpop.f32.mrb[0].mxu0
    %v11143 = vadd.f32 %v10955, %v11142
    %v11144 = vpop.f32.mrb[0].mxu0
    %v11145 = vpop.f32.mrb[0].mxu0
    %v11146 = vadd.f32 %v10955, %v11145
    %v11147 = vpop.f32.mrb[0].mxu0
    %11148 = vmatprep.mubr.bf16.mxu0 0
    %11149 = vmatmul.mubr.bf16.gmra.mrb[0].mxu0 %v10905
    %v11150 = vpop.f32.mrb[0].mxu0
    %v11151 = vadd.f32 %v10955, %v11150
    %v11152 = vpop.f32.mrb[0].mxu0
    %v11153 = vpop.f32.mrb[0].mxu0
    %v11154 = vadd.f32 %v10955, %v11153
    %v11155 = vpop.f32.mrb[0].mxu0
    %11156 = vmatprep.mubr.bf16.mxu0 0
    %11157 = vmatmul.mubr.bf16.gmra.mrb[0].mxu0 %v10906
    %v11158 = vpop.f32.mrb[0].mxu0
    %v11159 = vadd.f32 %v10955, %v11158
    %v11160 = vpop.f32.mrb[0].mxu0
    %v11161 = vpop.f32.mrb[0].mxu0
    %v11162 = vadd.f32 %v10955, %v11161
    %v11163 = vpop.f32.mrb[0].mxu0
    %11164 = vmatprep.mubr.bf16.mxu0 0
    %11165 = vmatmul.mubr.bf16.gmra.mrb[0].mxu0 %v10907
    %v11166 = vpop.f32.mrb[0].mxu0
    %v11167 = vadd.f32 %v10955, %v11166
    %v11168 = vpop.f32.mrb[0].mxu0
    %v11169 = vpop.f32.mrb[0].mxu0
    %v11170 = vadd.f32 %v10955, %v11169
    %v11171 = vpop.f32.mrb[0].mxu0
    %11172 = vmatprep.mubr.bf16.mxu0 0
    %11173 = vmatmul.mubr.bf16.gmra.mrb[0].mxu0 %v10908
    %v11174 = vpop.f32.mrb[0].mxu0
    %v11175 = vadd.f32 %v10955, %v11174
    %v11176 = vpop.f32.mrb[0].mxu0
    %v11177 = vpop.f32.mrb[0].mxu0
    %v11178 = vadd.f32 %v10955, %v11177
    %v11179 = vpop.f32.mrb[0].mxu0
    %11180 = vmatprep.mubr.bf16.mxu0 0
    %11181 = vmatmul.mubr.bf16.gmra.mrb[0].mxu0 %v10909
    %v11182 = vpop.f32.mrb[0].mxu0
    %v11183 = vadd.f32 %v10955, %v11182
    %v11184 = vpop.f32.mrb[0].mxu0
    %v11185 = vpop.f32.mrb[0].mxu0
    %v11186 = vadd.f32 %v10955, %v11185
    %v11187 = vpop.f32.mrb[0].mxu0
    %11188 = vmatprep.mubr.bf16.mxu0 0
    %11189 = vmatmul.mubr.bf16.gmra.mrb[0].mxu0 %v10910
    %v11190 = vpop.f32.mrb[0].mxu0
    %v11191 = vadd.f32 %v10955, %v11190
    %v11192 = vpop.f32.mrb[0].mxu0
    %v11193 = vpop.f32.mrb[0].mxu0
    %v11194 = vadd.f32 %v10955, %v11193
    %v11195 = vpop.f32.mrb[0].mxu0
    %11196 = vmatprep.mubr.bf16.mxu0 0
    %11197 = vmatmul.mubr.bf16.gmra.mrb[0].mxu0 %v10911
    %v11198 = vpop.f32.mrb[0].mxu0
    %v11199 = vadd.f32 %v10955, %v11198
    %v11200 = vpop.f32.mrb[0].mxu0
    %v11201 = vpop.f32.mrb[0].mxu0
    %v11202 = vadd.f32 %v10955, %v11201
    %v11203 = vpop.f32.mrb[0].mxu0
    %11204 = vmatprep.mubr.bf16.mxu0 0
    %11205 = vmatmul.mubr.bf16.gmra.mrb[0].mxu0 %v10912
    %v11206 = vpop.f32.mrb[0].mxu0
    %v11207 = vadd.f32 %v10955, %v11206
    %v11208 = vpop.f32.mrb[0].mxu0
    %v11209 = vpop.f32.mrb[0].mxu0
    %v11210 = vadd.f32 %v10955, %v11209
    %v11211 = vpop.f32.mrb[0].mxu0
    %11212 = vmatprep.mubr.bf16.mxu0 0
    %11213 = vmatmul.mubr.bf16.gmra.mrb[0].mxu0 %v10913
    %v11214 = vpop.f32.mrb[0].mxu0
    %v11215 = vadd.f32 %v10955, %v11214
    %v11216 = vpop.f32.mrb[0].mxu0
    %v11217 = vpop.f32.mrb[0].mxu0
    %v11218 = vadd.f32 %v10955, %v11217
    %v11219 = vpop.f32.mrb[0].mxu0
    %11220 = vmatprep.mubr.bf16.mxu0 0
    %11221 = vmatmul.mubr.bf16.gmra.mrb[0].mxu0 %v10914
    %v11222 = vpop.f32.mrb[0].mxu0
    %v11223 = vadd.f32 %v10955, %v11222
    %v11224 = vpop.f32.mrb[0].mxu0
    %v11225 = vpop.f32.mrb[0].mxu0
    %v11226 = vadd.f32 %v10955, %v11225
    %v11227 = vpop.f32.mrb[0].mxu0
    %11228 = vmatprep.mubr.bf16.mxu0 0
    %11229 = vmatmul.mubr.bf16.gmra.mrb[0].mxu0 %v10915
    %v11230 = vpop.f32.mrb[0].mxu0
    %v11231 = vadd.f32 %v10955, %v11230
    %v11232 = vpop.f32.mrb[0].mxu0
    %v11233 = vpop.f32.mrb[0].mxu0
    %v11234 = vadd.f32 %v10955, %v11233
    %v11235 = vpop.f32.mrb[0].mxu0
    %11236 = vmatprep.mubr.bf16.mxu0 0
    %11237 = vmatmul.mubr.bf16.gmra.mrb[0].mxu0 %v10916
    %v11238 = vpop.f32.mrb[0].mxu0
    %v11239 = vadd.f32 %v10955, %v11238
    %v11240 = vpop.f32.mrb[0].mxu0
    %v11241 = vpop.f32.mrb[0].mxu0
    %v11242 = vadd.f32 %v10955, %v11241
    %v11243 = vpop.f32.mrb[0].mxu0
    %11244 = vmatprep.mubr.bf16.mxu0 0
    %11245 = vmatmul.mubr.bf16.gmra.mrb[0].mxu0 %v10917
    %v11246 = vpop.f32.mrb[0].mxu0
    %v11247 = vadd.f32 %v10955, %v11246
    %v11248 = vpop.f32.mrb[0].mxu0
    %v11249 = vpop.f32.mrb[0].mxu0
    %v11250 = vadd.f32 %v10955, %v11249
    %v11251 = vpop.f32.mrb[0].mxu0
    %11252 = vmatprep.mubr.bf16.mxu0 0
    %11253 = vmatmul.mubr.bf16.gmra.mrb[0].mxu0 %v10918
    %v11254 = vpop.f32.mrb[0].mxu0
    %v11255 = vadd.f32 %v10955, %v11254
    %v11256 = vpop.f32.mrb[0].mxu0
    %v11257 = vpop.f32.mrb[0].mxu0
    %v11258 = vadd.f32 %v10955, %v11257
    %v11259 = vpop.f32.mrb[0].mxu0
    %11260 = vmatprep.mubr.bf16.mxu0 0
    %11261 = vmatmul.mubr.bf16.gmra.mrb[0].mxu0 %v10919
    %v11262 = vpop.f32.mrb[0].mxu0
    %v11263 = vadd.f32 %v10955, %v11262
    %v11264 = vpop.f32.mrb[0].mxu0
    %v11265 = vpop.f32.mrb[0].mxu0
    %v11266 = vadd.f32 %v10955, %v11265
    %v11267 = vpop.f32.mrb[0].mxu0
    %11268 = vmatprep.mubr.bf16.mxu0 0
    %11269 = vmatmul.mubr.bf16.gmra.mrb[0].mxu0 %v10920
    %v11270 = vpop.f32.mrb[0].mxu0
    %v11271 = vadd.f32 %v10955, %v11270
    %v11272 = vpop.f32.mrb[0].mxu0
    %v11273 = vpop.f32.mrb[0].mxu0
    %v11274 = vadd.f32 %v10955, %v11273
    %v11275 = vpop.f32.mrb[0].mxu0
    %11276 = vmatprep.mubr.bf16.mxu0 0
    %11277 = vmatmul.mubr.bf16.gmra.mrb[0].mxu0 %v10921
    %v11278 = vpop.f32.mrb[0].mxu0
    %v11279 = vadd.f32 %v10955, %v11278
    %v11280 = vpop.f32.mrb[0].mxu0
    %v11281 = vpop.f32.mrb[0].mxu0
    %v11282 = vadd.f32 %v10955, %v11281
    %v11283 = vpop.f32.mrb[0].mxu0
    %11284 = vmatprep.mubr.bf16.mxu0 0
    %11285 = vmatmul.mubr.bf16.gmra.mrb[0].mxu0 %v10922
    %v11286 = vpop.f32.mrb[0].mxu0
    %v11287 = vadd.f32 %v10955, %v11286
    %v11288 = vpop.f32.mrb[0].mxu0
    %v11289 = vpop.f32.mrb[0].mxu0
    %v11290 = vadd.f32 %v10955, %v11289
    %v11291 = vpop.f32.mrb[0].mxu0
    %11292 = vmatprep.mubr.bf16.mxu0 0
    %11293 = vmatmul.mubr.bf16.gmra.mrb[0].mxu0 %v10923
    %v11294 = vpop.f32.mrb[0].mxu0
    %v11295 = vadd.f32 %v10955, %v11294
    %v11296 = vpop.f32.mrb[0].mxu0
    %v11297 = vpop.f32.mrb[0].mxu0
    %v11298 = vadd.f32 %v10955, %v11297
    %v11299 = vpop.f32.mrb[0].mxu0
    %11300 = vmatprep.mubr.bf16.mxu0 0
    %11301 = vmatmul.mubr.bf16.gmra.mrb[0].mxu0 %v10924
    %v11302 = vpop.f32.mrb[0].mxu0
    %v11303 = vadd.f32 %v10955, %v11302
    %v11304 = vpop.f32.mrb[0].mxu0
    %v11305 = vpop.f32.mrb[0].mxu0
    %v11306 = vadd.f32 %v10955, %v11305
    %v11307 = vpop.f32.mrb[0].mxu0
    %11308 = vmatprep.mubr.bf16.mxu0 0
    %11309 = vmatmul.mubr.bf16.gmra.mrb[0].mxu0 %v10925
    %v11310 = vpop.f32.mrb[0].mxu0
    %v11311 = vadd.f32 %v10955, %v11310
    %v11312 = vpop.f32.mrb[0].mxu0
    %v11313 = vpop.f32.mrb[0].mxu0
    %v11314 = vadd.f32 %v10955, %v11313
    %v11315 = vpop.f32.mrb[0].mxu0
    %11316 = vmatprep.mubr.bf16.mxu0 0
    %11317 = vmatmul.mubr.bf16.gmra.mrb[0].mxu0 %v10926
    %v11318 = vpop.f32.mrb[0].mxu0
    %v11319 = vadd.f32 %v10955, %v11318
    %v11320 = vpop.f32.mrb[0].mxu0
    %v11321 = vpop.f32.mrb[0].mxu0
    %v11322 = vadd.f32 %v10955, %v11321
    %v11323 = vpop.f32.mrb[0].mxu0
    %11324 = vmatprep.mubr.bf16.mxu0 0
    %11325 = vmatmul.mubr.bf16.gmra.mrb[0].mxu0 %v10927
    %v11326 = vpop.f32.mrb[0].mxu0
    %v11327 = vadd.f32 %v10955, %v11326
    %v11328 = vpop.f32.mrb[0].mxu0
    %v11329 = vpop.f32.mrb[0].mxu0
    %v11330 = vadd.f32 %v10955, %v11329
    %v11331 = vpop.f32.mrb[0].mxu0
    %11332 = vmatprep.mubr.bf16.mxu0 0
    %11333 = vmatmul.mubr.bf16.gmra.mrb[0].mxu0 %v10928
    %v11334 = vpop.f32.mrb[0].mxu0
    %v11335 = vadd.f32 %v10955, %v11334
    %v11336 = vpop.f32.mrb[0].mxu0
    %v11337 = vpop.f32.mrb[0].mxu0
    %v11338 = vadd.f32 %v10955, %v11337
    %v11339 = vpop.f32.mrb[0].mxu0
    %11340 = vmatprep.mubr.bf16.mxu0 0
    %11341 = vmatmul.mubr.bf16.gmra.mrb[0].mxu0 %v10929
    %v11342 = vpop.f32.mrb[0].mxu0
    %v11343 = vadd.f32 %v10955, %v11342
    %v11344 = vpop.f32.mrb[0].mxu0
    %v11345 = vpop.f32.mrb[0].mxu0
    %v11346 = vadd.f32 %v10955, %v11345
    %v11347 = vpop.f32.mrb[0].mxu0
    %11348 = vmatprep.mubr.bf16.mxu0 0
    %11349 = vmatmul.mubr.bf16.gmra.mrb[0].mxu0 %v10930
    %v11350 = vpop.f32.mrb[0].mxu0
    %v11351 = vadd.f32 %v10955, %v11350
    %v11352 = vpop.f32.mrb[0].mxu0
    %v11353 = vpop.f32.mrb[0].mxu0
    %v11354 = vadd.f32 %v10955, %v11353
    %v11355 = vpop.f32.mrb[0].mxu0
    %11356 = vmatprep.mubr.bf16.mxu0 0
    %11357 = vmatmul.mubr.bf16.gmra.mrb[0].mxu0 %v10931
    %v11358 = vpop.f32.mrb[0].mxu0
    %v11359 = vadd.f32 %v10955, %v11358
    %v11360 = vpop.f32.mrb[0].mxu0
    %v11361 = vpop.f32.mrb[0].mxu0
    %v11362 = vadd.f32 %v10955, %v11361
    %v11363 = vpop.f32.mrb[0].mxu0
    %11364 = vmatprep.mubr.bf16.mxu0 0
    %11365 = vmatmul.mubr.bf16.gmra.mrb[0].mxu0 %v10932
    %v11366 = vpop.f32.mrb[0].mxu0
    %v11367 = vadd.f32 %v10955, %v11366
    %v11368 = vpop.f32.mrb[0].mxu0
    %v11369 = vpop.f32.mrb[0].mxu0
    %v11370 = vadd.f32 %v10955, %v11369
    %v11371 = vpop.f32.mrb[0].mxu0
    %11372 = vmatprep.mubr.bf16.mxu0 0
    %11373 = vmatmul.mubr.bf16.gmra.mrb[0].mxu0 %v10933
    %v11374 = vpop.f32.mrb[0].mxu0
    %v11375 = vadd.f32 %v10955, %v11374
    %v11376 = vpop.f32.mrb[0].mxu0
    %v11377 = vpop.f32.mrb[0].mxu0
    %v11378 = vadd.f32 %v10955, %v11377
    %v11379 = vpop.f32.mrb[0].mxu0
    %11380 = vmatprep.mubr.bf16.mxu0 0
    %11381 = vmatmul.mubr.bf16.gmra.mrb[0].mxu0 %v10934
    %v11382 = vpop.f32.mrb[0].mxu0
    %v11383 = vadd.f32 %v10955, %v11382
    %v11384 = vpop.f32.mrb[0].mxu0
    %v11385 = vpop.f32.mrb[0].mxu0
    %v11386 = vadd.f32 %v10955, %v11385
    %v11387 = vpop.f32.mrb[0].mxu0
    %11388 = vmatprep.mubr.bf16.mxu0 0
    %11389 = vmatmul.mubr.bf16.gmra.mrb[0].mxu0 %v10935
    %v11390 = vpop.f32.mrb[0].mxu0
    %v11391 = vadd.f32 %v10955, %v11390
    %v11392 = vpop.f32.mrb[0].mxu0
    %v11393 = vpop.f32.mrb[0].mxu0
    %v11394 = vadd.f32 %v10955, %v11393
    %v11395 = vpop.f32.mrb[0].mxu0
    %11396 = vmatprep.mubr.bf16.mxu0 0
    %11397 = vmatmul.mubr.bf16.gmra.mrb[0].mxu0 %v10936
    %v11398 = vpop.f32.mrb[0].mxu0
    %v11399 = vadd.f32 %v10955, %v11398
    %v11400 = vpop.f32.mrb[0].mxu0
    %v11401 = vpop.f32.mrb[0].mxu0
    %v11402 = vadd.f32 %v10955, %v11401
    %v11403 = vpop.f32.mrb[0].mxu0
    %11404 = vmatprep.mubr.bf16.mxu0 0
    %11405 = vmatmul.mubr.bf16.gmra.mrb[0].mxu0 %v10937
    %v11406 = vpop.f32.mrb[0].mxu0
    %v11407 = vadd.f32 %v10955, %v11406
    %v11408 = vpop.f32.mrb[0].mxu0
    %v11409 = vpop.f32.mrb[0].mxu0
    %v11410 = vadd.f32 %v10955, %v11409
    %v11411 = vpop.f32.mrb[0].mxu0
    %11412 = vmatprep.mubr.bf16.mxu0 0
    %11413 = vmatmul.mubr.bf16.gmra.mrb[0].mxu0 %v10938
    %v11414 = vpop.f32.mrb[0].mxu0
    %v11415 = vadd.f32 %v10955, %v11414
    %v11416 = vpop.f32.mrb[0].mxu0
    %v11417 = vpop.f32.mrb[0].mxu0
    %v11418 = vadd.f32 %v10955, %v11417
    %v11419 = vpop.f32.mrb[0].mxu0
    %11420 = vmatprep.mubr.bf16.mxu0 0
    %11421 = vmatmul.mubr.bf16.gmra.mrb[0].mxu0 %v10939
    %v11422 = vpop.f32.mrb[0].mxu0
    %v11423 = vadd.f32 %v10955, %v11422
    %v11424 = vpop.f32.mrb[0].mxu0
    %v11425 = vpop.f32.mrb[0].mxu0
    %v11426 = vadd.f32 %v10955, %v11425
    %v11427 = vpop.f32.mrb[0].mxu0
    %11428 = vmatprep.mubr.bf16.mxu0 0
    %11429 = vmatmul.mubr.bf16.gmra.mrb[0].mxu0 %v10940
    %v11430 = vpop.f32.mrb[0].mxu0
    %v11431 = vadd.f32 %v10955, %v11430
    %v11432 = vpop.f32.mrb[0].mxu0
    %v11433 = vpop.f32.mrb[0].mxu0
    %v11434 = vadd.f32 %v10955, %v11433
    %v11435 = vpop.f32.mrb[0].mxu0
    %11436 = vmatprep.mubr.bf16.mxu0 0
    %11437 = vmatmul.mubr.bf16.gmra.mrb[0].mxu0 %v10941
    %v11438 = vpop.f32.mrb[0].mxu0
    %v11439 = vadd.f32 %v10955, %v11438
    %v11440 = vpop.f32.mrb[0].mxu0
    %v11441 = vpop.f32.mrb[0].mxu0
    %v11442 = vadd.f32 %v10955, %v11441
    %v11443 = vpop.f32.mrb[0].mxu0
    %11444 = vmatprep.mubr.bf16.mxu0 0
    %11445 = vmatmul.mubr.bf16.gmra.mrb[0].mxu0 %v10942
    %v11446 = vpop.f32.mrb[0].mxu0
    %v11447 = vadd.f32 %v10955, %v11446
    %v11448 = vpop.f32.mrb[0].mxu0
    %v11449 = vpop.f32.mrb[0].mxu0
    %v11450 = vadd.f32 %v10955, %v11449
    %v11451 = vpop.f32.mrb[0].mxu0
    %11452 = vmatprep.mubr.bf16.mxu0 0
    %11453 = vmatmul.mubr.bf16.gmra.mrb[0].mxu0 %v10943
    %v11454 = vpop.f32.mrb[0].mxu0
    %v11455 = vadd.f32 %v10955, %v11454
    %v11456 = vpop.f32.mrb[0].mxu0
    %v11457 = vpop.f32.mrb[0].mxu0
    %v11458 = vadd.f32 %v10955, %v11457
    %v11459 = vpop.f32.mrb[0].mxu0
    %11460 = vmatprep.mubr.bf16.mxu0 0
    %11461 = vmatmul.mubr.bf16.gmra.mrb[0].mxu0 %v10944
    %v11462 = vpop.f32.mrb[0].mxu0
    %v11463 = vadd.f32 %v10955, %v11462
    %v11464 = vpop.f32.mrb[0].mxu0
    %v11465 = vpop.f32.mrb[0].mxu0
    %v11466 = vadd.f32 %v10955, %v11465
    %v11467 = vpop.f32.mrb[0].mxu0
    %11468 = vmatprep.mubr.bf16.mxu0 0
    %11469 = vmatmul.mubr.bf16.gmra.mrb[0].mxu0 %v10945
    %v11470 = vpop.f32.mrb[0].mxu0
    %v11471 = vadd.f32 %v10955, %v11470
    %v11472 = vpop.f32.mrb[0].mxu0
    %v11473 = vpop.f32.mrb[0].mxu0
    %v11474 = vadd.f32 %v10955, %v11473
    %v11475 = vpop.f32.mrb[0].mxu0
    %11476 = vmatprep.mubr.bf16.mxu0 0
    %11477 = vmatmul.mubr.bf16.gmra.mrb[0].mxu0 %v10946
    %v11478 = vpop.f32.mrb[0].mxu0
    %v11479 = vadd.f32 %v10955, %v11478
    %v11480 = vpop.f32.mrb[0].mxu0
    %v11481 = vpop.f32.mrb[0].mxu0
    %v11482 = vadd.f32 %v10955, %v11481
    %v11483 = vpop.f32.mrb[0].mxu0
    %11484 = vmatprep.mubr.bf16.mxu0 0
    %11485 = vmatmul.mubr.bf16.gmra.mrb[0].mxu0 %v10947
    %v11486 = vpop.f32.mrb[0].mxu0
    %v11487 = vadd.f32 %v10955, %v11486
    %v11488 = vpop.f32.mrb[0].mxu0
    %v11489 = vpop.f32.mrb[0].mxu0
    %v11490 = vadd.f32 %v10955, %v11489
    %v11491 = vpop.f32.mrb[0].mxu0
    %11492 = vmatprep.mubr.bf16.mxu0 0
    %11493 = vmatmul.mubr.bf16.gmra.mrb[0].mxu0 %v10948
    %v11494 = vpop.f32.mrb[0].mxu0
    %v11495 = vadd.f32 %v10955, %v11494
    %v11496 = vpop.f32.mrb[0].mxu0
    %v11497 = vpop.f32.mrb[0].mxu0
    %v11498 = vadd.f32 %v10955, %v11497
    %v11499 = vpop.f32.mrb[0].mxu0
    %11500 = vmatprep.mubr.bf16.mxu0 0
    %11501 = vmatmul.mubr.bf16.gmra.mrb[0].mxu0 %v10949
    %v11502 = vpop.f32.mrb[0].mxu0
    %v11503 = vadd.f32 %v10955, %v11502
    %v11504 = vpop.f32.mrb[0].mxu0
    %v11505 = vpop.f32.mrb[0].mxu0
    %v11506 = vadd.f32 %v10955, %v11505
    %v11507 = vpop.f32.mrb[0].mxu0
    %11508 = vmatprep.mubr.bf16.mxu0 0
    %11509 = vmatmul.mubr.bf16.gmra.mrb[0].mxu0 %v10950
    %v11510 = vpop.f32.mrb[0].mxu0
    %v11511 = vadd.f32 %v10955, %v11510
    %v11512 = vpop.f32.mrb[0].mxu0
    %v11513 = vpop.f32.mrb[0].mxu0
    %v11514 = vadd.f32 %v10955, %v11513
    %v11515 = vpop.f32.mrb[0].mxu0
    %11516 = vmatprep.mubr.bf16.mxu0 0
    %11517 = vmatmul.mubr.bf16.gmra.mrb[0].mxu0 %v10951
    %v11518 = vpop.f32.mrb[0].mxu0
    %v11519 = vadd.f32 %v10955, %v11518
    %v11520 = vpop.f32.mrb[0].mxu0
    %v11521 = vpop.f32.mrb[0].mxu0
    %v11522 = vadd.f32 %v10955, %v11521
    %v11523 = vpop.f32.mrb[0].mxu0
    %11524 = vmatprep.mubr.bf16.mxu0 0
    %11525 = vmatmul.mubr.bf16.gmra.mrb[0].mxu0 %v10952
    %v11526 = vpop.f32.mrb[0].mxu0
    %v11527 = vadd.f32 %v10955, %v11526
    %v11528 = vpop.f32.mrb[0].mxu0
    %v11529 = vpop.f32.mrb[0].mxu0
    %v11530 = vadd.f32 %v10955, %v11529
    %v11531 = vpop.f32.mrb[0].mxu0
    %11532 = vmatprep.mubr.bf16.mxu0 0
    %11533 = vmatmul.mubr.bf16.gmra.mrb[0].mxu0 %v10953
    %v11534 = vpop.f32.mrb[0].mxu0
    %v11535 = vadd.f32 %v10955, %v11534
    %v11536 = vpop.f32.mrb[0].mxu0
    %v11537 = vpop.f32.mrb[0].mxu0
    %v11538 = vadd.f32 %v10955, %v11537
    %v11539 = vpop.f32.mrb[0].mxu0
    %11540 = vmatprep.mubr.bf16.mxu0 0
    %11541 = vmatmul.mubr.bf16.gmra.mrb[0].mxu0 %v10954
    %v11542 = vpop.f32.mrb[0].mxu0
    %v11543 = vadd.f32 %v10955, %v11542
    %v11544 = vpop.f32.mrb[0].mxu0
    %v11545 = vpop.f32.mrb[0].mxu0
    %v11546 = vadd.f32 %v10955, %v11545
    %v11547 = vpop.f32.mrb[0].mxu0
    %11548 = vdwg.mxu0
    %11549 = vst [vmem:[#allocation11] sm:$0xff] %v11039
    %11550 = vst [vmem:[#allocation11 + $0x8] sm:$0xff] %v11042
    %11551 = vst [vmem:[#allocation11 + $0x10] sm:$0xff] %v11047
    %11552 = vst [vmem:[#allocation11 + $0x18] sm:$0xff] %v11050
    %11553 = vst [vmem:[#allocation11 + $0x20] sm:$0xff] %v11055
    %11554 = vst [vmem:[#allocation11 + $0x28] sm:$0xff] %v11058
    %11555 = vst [vmem:[#allocation11 + $0x30] sm:$0xff] %v11063
    %11556 = vst [vmem:[#allocation11 + $0x38] sm:$0xff] %v11066
    %11557 = vst [vmem:[#allocation11 + $0x40] sm:$0xff] %v11071
    %11558 = vst [vmem:[#allocation11 + $0x48] sm:$0xff] %v11074
    %11559 = vst [vmem:[#allocation11 + $0x50] sm:$0xff] %v11079
    %11560 = vst [vmem:[#allocation11 + $0x58] sm:$0xff] %v11082
    %11561 = vst [vmem:[#allocation11 + $0x60] sm:$0xff] %v11087
    %11562 = vst [vmem:[#allocation11 + $0x68] sm:$0xff] %v11090
    %11563 = vst [vmem:[#allocation11 + $0x70] sm:$0xff] %v11095
    %11564 = vst [vmem:[#allocation11 + $0x78] sm:$0xff] %v11098
    %11565 = vst [vmem:[#allocation11 + $0x80] sm:$0xff] %v11103
    %11566 = vst [vmem:[#allocation11 + $0x88] sm:$0xff] %v11106
    %11567 = vst [vmem:[#allocation11 + $0x90] sm:$0xff] %v11111
    %11568 = vst [vmem:[#allocation11 + $0x98] sm:$0xff] %v11114
    %11569 = vst [vmem:[#allocation11 + $0xa0] sm:$0xff] %v11119
    %11570 = vst [vmem:[#allocation11 + $0xa8] sm:$0xff] %v11122
    %11571 = vst [vmem:[#allocation11 + $0xb0] sm:$0xff] %v11127
    %11572 = vst [vmem:[#allocation11 + $0xb8] sm:$0xff] %v11130
    %11573 = vst [vmem:[#allocation11 + $0xc0] sm:$0xff] %v11135
    %11574 = vst [vmem:[#allocation11 + $0xc8] sm:$0xff] %v11138
    %11575 = vst [vmem:[#allocation11 + $0xd0] sm:$0xff] %v11143
    %11576 = vst [vmem:[#allocation11 + $0xd8] sm:$0xff] %v11146
    %11577 = vst [vmem:[#allocation11 + $0xe0] sm:$0xff] %v11151
    %11578 = vst [vmem:[#allocation11 + $0xe8] sm:$0xff] %v11154
    %11579 = vst [vmem:[#allocation11 + $0xf0] sm:$0xff] %v11159
    %11580 = vst [vmem:[#allocation11 + $0xf8] sm:$0xff] %v11162
    %11581 = vst [vmem:[#allocation11 + $0x100] sm:$0xff] %v11167
    %11582 = vst [vmem:[#allocation11 + $0x108] sm:$0xff] %v11170
    %11583 = vst [vmem:[#allocation11 + $0x110] sm:$0xff] %v11175
    %11584 = vst [vmem:[#allocation11 + $0x118] sm:$0xff] %v11178
    %11585 = vst [vmem:[#allocation11 + $0x120] sm:$0xff] %v11183
    %11586 = vst [vmem:[#allocation11 + $0x128] sm:$0xff] %v11186
    %11587 = vst [vmem:[#allocation11 + $0x130] sm:$0xff] %v11191
    %11588 = vst [vmem:[#allocation11 + $0x138] sm:$0xff] %v11194
    %11589 = vst [vmem:[#allocation11 + $0x140] sm:$0xff] %v11199
    %11590 = vst [vmem:[#allocation11 + $0x148] sm:$0xff] %v11202
    %11591 = vst [vmem:[#allocation11 + $0x150] sm:$0xff] %v11207
    %11592 = vst [vmem:[#allocation11 + $0x158] sm:$0xff] %v11210
    %11593 = vst [vmem:[#allocation11 + $0x160] sm:$0xff] %v11215
    %11594 = vst [vmem:[#allocation11 + $0x168] sm:$0xff] %v11218
    %11595 = vst [vmem:[#allocation11 + $0x170] sm:$0xff] %v11223
    %11596 = vst [vmem:[#allocation11 + $0x178] sm:$0xff] %v11226
    %11597 = vst [vmem:[#allocation11 + $0x180] sm:$0xff] %v11231
    %11598 = vst [vmem:[#allocation11 + $0x188] sm:$0xff] %v11234
    %11599 = vst [vmem:[#allocation11 + $0x190] sm:$0xff] %v11239
    %11600 = vst [vmem:[#allocation11 + $0x198] sm:$0xff] %v11242
    %11601 = vst [vmem:[#allocation11 + $0x1a0] sm:$0xff] %v11247
    %11602 = vst [vmem:[#allocation11 + $0x1a8] sm:$0xff] %v11250
    %11603 = vst [vmem:[#allocation11 + $0x1b0] sm:$0xff] %v11255
    %11604 = vst [vmem:[#allocation11 + $0x1b8] sm:$0xff] %v11258
    %11605 = vst [vmem:[#allocation11 + $0x1c0] sm:$0xff] %v11263
    %11606 = vst [vmem:[#allocation11 + $0x1c8] sm:$0xff] %v11266
    %11607 = vst [vmem:[#allocation11 + $0x1d0] sm:$0xff] %v11271
    %11608 = vst [vmem:[#allocation11 + $0x1d8] sm:$0xff] %v11274
    %11609 = vst [vmem:[#allocation11 + $0x1e0] sm:$0xff] %v11279
    %11610 = vst [vmem:[#allocation11 + $0x1e8] sm:$0xff] %v11282
    %11611 = vst [vmem:[#allocation11 + $0x1f0] sm:$0xff] %v11287
    %11612 = vst [vmem:[#allocation11 + $0x1f8] sm:$0xff] %v11290
    %11613 = vst [vmem:[#allocation11 + $0x200] sm:$0xff] %v11295
    %11614 = vst [vmem:[#allocation11 + $0x208] sm:$0xff] %v11298
    %11615 = vst [vmem:[#allocation11 + $0x210] sm:$0xff] %v11303
    %11616 = vst [vmem:[#allocation11 + $0x218] sm:$0xff] %v11306
    %11617 = vst [vmem:[#allocation11 + $0x220] sm:$0xff] %v11311
    %11618 = vst [vmem:[#allocation11 + $0x228] sm:$0xff] %v11314
    %11619 = vst [vmem:[#allocation11 + $0x230] sm:$0xff] %v11319
    %11620 = vst [vmem:[#allocation11 + $0x238] sm:$0xff] %v11322
    %11621 = vst [vmem:[#allocation11 + $0x240] sm:$0xff] %v11327
    %11622 = vst [vmem:[#allocation11 + $0x248] sm:$0xff] %v11330
    %11623 = vst [vmem:[#allocation11 + $0x250] sm:$0xff] %v11335
    %11624 = vst [vmem:[#allocation11 + $0x258] sm:$0xff] %v11338
    %11625 = vst [vmem:[#allocation11 + $0x260] sm:$0xff] %v11343
    %11626 = vst [vmem:[#allocation11 + $0x268] sm:$0xff] %v11346
    %11627 = vst [vmem:[#allocation11 + $0x270] sm:$0xff] %v11351
    %11628 = vst [vmem:[#allocation11 + $0x278] sm:$0xff] %v11354
    %11629 = vst [vmem:[#allocation11 + $0x280] sm:$0xff] %v11359
    %11630 = vst [vmem:[#allocation11 + $0x288] sm:$0xff] %v11362
    %11631 = vst [vmem:[#allocation11 + $0x290] sm:$0xff] %v11367
    %11632 = vst [vmem:[#allocation11 + $0x298] sm:$0xff] %v11370
    %11633 = vst [vmem:[#allocation11 + $0x2a0] sm:$0xff] %v11375
    %11634 = vst [vmem:[#allocation11 + $0x2a8] sm:$0xff] %v11378
    %11635 = vst [vmem:[#allocation11 + $0x2b0] sm:$0xff] %v11383
    %11636 = vst [vmem:[#allocation11 + $0x2b8] sm:$0xff] %v11386
    %11637 = vst [vmem:[#allocation11 + $0x2c0] sm:$0xff] %v11391
    %11638 = vst [vmem:[#allocation11 + $0x2c8] sm:$0xff] %v11394
    %11639 = vst [vmem:[#allocation11 + $0x2d0] sm:$0xff] %v11399
    %11640 = vst [vmem:[#allocation11 + $0x2d8] sm:$0xff] %v11402
    %11641 = vst [vmem:[#allocation11 + $0x2e0] sm:$0xff] %v11407
    %11642 = vst [vmem:[#allocation11 + $0x2e8] sm:$0xff] %v11410
    %11643 = vst [vmem:[#allocation11 + $0x2f0] sm:$0xff] %v11415
    %11644 = vst [vmem:[#allocation11 + $0x2f8] sm:$0xff] %v11418
    %11645 = vst [vmem:[#allocation11 + $0x300] sm:$0xff] %v11423
    %11646 = vst [vmem:[#allocation11 + $0x308] sm:$0xff] %v11426
    %11647 = vst [vmem:[#allocation11 + $0x310] sm:$0xff] %v11431
    %11648 = vst [vmem:[#allocation11 + $0x318] sm:$0xff] %v11434
    %11649 = vst [vmem:[#allocation11 + $0x320] sm:$0xff] %v11439
    %11650 = vst [vmem:[#allocation11 + $0x328] sm:$0xff] %v11442
    %11651 = vst [vmem:[#allocation11 + $0x330] sm:$0xff] %v11447
    %11652 = vst [vmem:[#allocation11 + $0x338] sm:$0xff] %v11450
    %11653 = vst [vmem:[#allocation11 + $0x340] sm:$0xff] %v11455
    %11654 = vst [vmem:[#allocation11 + $0x348] sm:$0xff] %v11458
    %11655 = vst [vmem:[#allocation11 + $0x350] sm:$0xff] %v11463
    %11656 = vst [vmem:[#allocation11 + $0x358] sm:$0xff] %v11466
    %11657 = vst [vmem:[#allocation11 + $0x360] sm:$0xff] %v11471
    %11658 = vst [vmem:[#allocation11 + $0x368] sm:$0xff] %v11474
    %11659 = vst [vmem:[#allocation11 + $0x370] sm:$0xff] %v11479
    %11660 = vst [vmem:[#allocation11 + $0x378] sm:$0xff] %v11482
    %11661 = vst [vmem:[#allocation11 + $0x380] sm:$0xff] %v11487
    %11662 = vst [vmem:[#allocation11 + $0x388] sm:$0xff] %v11490
    %11663 = vst [vmem:[#allocation11 + $0x390] sm:$0xff] %v11495
    %11664 = vst [vmem:[#allocation11 + $0x398] sm:$0xff] %v11498
    %11665 = vst [vmem:[#allocation11 + $0x3a0] sm:$0xff] %v11503
    %11666 = vst [vmem:[#allocation11 + $0x3a8] sm:$0xff] %v11506
    %11667 = vst [vmem:[#allocation11 + $0x3b0] sm:$0xff] %v11511
    %11668 = vst [vmem:[#allocation11 + $0x3b8] sm:$0xff] %v11514
    %11669 = vst [vmem:[#allocation11 + $0x3c0] sm:$0xff] %v11519
    %11670 = vst [vmem:[#allocation11 + $0x3c8] sm:$0xff] %v11522
    %11671 = vst [vmem:[#allocation11 + $0x3d0] sm:$0xff] %v11527
    %11672 = vst [vmem:[#allocation11 + $0x3d8] sm:$0xff] %v11530
    %11673 = vst [vmem:[#allocation11 + $0x3e0] sm:$0xff] %v11535
    %11674 = vst [vmem:[#allocation11 + $0x3e8] sm:$0xff] %v11538
    %11675 = vst [vmem:[#allocation11 + $0x3f0] sm:$0xff] %v11543
    %11676 = vst [vmem:[#allocation11 + $0x3f8] sm:$0xff] %v11546
    // Predicated region
    $region42: #{tpu_custom_call.1} parent=1 // pred_check
      _
    $region43: #{tpu_custom_call.1} parent=1 // pred_check_branch
      %11678 = sbr.rel (0) target = $region45
    $region44: #{tpu_custom_call.1} parent=1 // pred_region
      %s11680 = ssub.s32 16384, 16384
      %11681 = vsyncadd [#allocation4], %s11680
      %s11682 = sshll.u32 [#allocation11], 4
      %s11683 = int_to_ptr.vmem [resolvable:$true] %s11682
      %11688 = dma.vmem_to_hbm [thread:$0]  %s11683, 16384, %s5, [#allocation4], 128, 128, 8
    $region45: #{tpu_custom_call.1} parent=1 // pred_fallthru
      _
    // Predicated region
    $region46: #{tpu_custom_call.1} parent=1 // pred_check
      _
    $region47: #{tpu_custom_call.1} parent=1 // pred_check_branch
      %11690 = sbr.rel (0) target = $region49
    $region48: #{tpu_custom_call.1} parent=1 // pred_region
      %s11692 = ssub.s32 32768, 32768
      %11693 = vsyncadd [#allocation13], %s11692
      %s11694 = sshll.u32 [#allocation12], 4
      %s11695 = int_to_ptr.vmem [resolvable:$true] %s11694
      %11700 = dma.vmem_to_hbm [thread:$0]  %s11695, 32768, %s6, [#allocation13], 256, 256, 16
    $region49: #{tpu_custom_call.1} parent=1 // pred_fallthru
      _
    // Predicated region
    $region50: #{tpu_custom_call.1} parent=1 // pred_check
      _
    $region51: #{tpu_custom_call.1} parent=1 // pred_check_branch
      %11702 = sbr.rel (0) target = $region53
    $region52: #{tpu_custom_call.1} parent=1 // pred_region
      %11703 = dma.done [#allocation4], 16384
    $region53: #{tpu_custom_call.1} parent=1 // pred_fallthru
      _
    // Predicated region
    $region54: #{tpu_custom_call.1} parent=1 // pred_check
      _
    $region55: #{tpu_custom_call.1} parent=1 // pred_check_branch
      %11705 = sbr.rel (0) target = $region57
    $region56: #{tpu_custom_call.1} parent=1 // pred_region
      %11706 = dma.done [#allocation13], 32768
    $region57: #{tpu_custom_call.1} parent=1 // pred_fallthru
      _
    %11707 = vsyncpa [#allocation3], 1
    %11708 = vsyncpa [#allocation6], 1
    %11709 = vsyncpa [#allocation9], 1
    %11710 = vsyncpa [#allocation4], 1
    %11711 = vsyncpa [#allocation13], 1

</llo_original>
